<compile_context>
chip_gen: v7x
topology: tpu7x:2x2x1
jax: 0.10.0
libtpu: 0.0.40
codegen_flags: <defaults>
</compile_context>

<pallas_src>
import functools

import jax
import jax.numpy as jnp
from jax.experimental import pallas as pl
from jax.experimental.pallas import tpu as pltpu


# ---------------------------------------------------------------------------
# small helpers
# ---------------------------------------------------------------------------
def _rup(x, m):
    return ((x + m - 1) // m) * m


def _row_pad(v):
    c = v.shape[0]
    return jnp.pad(v.reshape(1, c).astype(jnp.float32),
                   ((0, 0), (0, _rup(c, 128) - c)))


def _vmem_specs(n):
    return [pl.BlockSpec(memory_space=pltpu.MemorySpace.VMEM) for _ in range(n)]


def _pad_a(a, mp, kp):
    m, k = a.shape
    return jnp.pad(a, ((0, mp - m), (0, kp - k)))


# ---------------------------------------------------------------------------
# Pallas kernels (single-tile: every operand fits VMEM at this problem size)
# ---------------------------------------------------------------------------
def _bn_cols(x, g, b, count, eps):
    # Training-mode BatchNorm2d: biased batch statistics per channel (column).
    # `count` is the TRUE row count; padded rows are zero so the stats stay exact.
    mean = jnp.sum(x, axis=0, keepdims=True) / count
    var = jnp.maximum(jnp.sum(x * x, axis=0, keepdims=True) / count - mean * mean, 0.0)
    return (x - mean) * jax.lax.rsqrt(var + eps) * g + b


def _conv_bn_kernel(a_ref, w_ref, g_ref, b_ref, o_ref, *, count, relu, eps=1e-5):
    # im2col-matmul (bf16 x bf16 -> f32) with fused training-mode BN (+ReLU), bf16 store.
    acc = jnp.dot(a_ref[...], w_ref[...], preferred_element_type=jnp.float32)
    y = _bn_cols(acc, g_ref[...], b_ref[...], count, eps)
    if relu:
        y = jnp.maximum(y, 0.0)
    o_ref[...] = y.astype(o_ref.dtype)


def _conv_bn_add_relu_kernel(a_ref, w_ref, g_ref, b_ref, i_ref, o_ref,
                             *, count, eps=1e-5):
    # conv2 matmul + BN + residual add (identity branch, no BN) + ReLU, fused.
    acc = jnp.dot(a_ref[...], w_ref[...], preferred_element_type=jnp.float32)
    y = _bn_cols(acc, g_ref[...], b_ref[...], count, eps)
    o_ref[...] = jnp.maximum(y + i_ref[...].astype(jnp.float32), 0.0).astype(o_ref.dtype)


def _conv_ds_bn_add_relu_kernel(a_ref, w_ref, g_ref, b_ref,
                                ai_ref, wi_ref, gi_ref, bi_ref, o_ref,
                                *, count, eps=1e-5):
    # conv2 matmul + BN  and  downsample matmul + BN, add, ReLU -- one kernel per block.
    y = _bn_cols(jnp.dot(a_ref[...], w_ref[...], preferred_element_type=jnp.float32),
                 g_ref[...], b_ref[...], count, eps)
    z = _bn_cols(jnp.dot(ai_ref[...], wi_ref[...], preferred_element_type=jnp.float32),
                 gi_ref[...], bi_ref[...], count, eps)
    o_ref[...] = jnp.maximum(y + z, 0.0).astype(o_ref.dtype)


def _head_kernel(x_ref, w_ref, b_ref, r_ref, o_ref, *, hw, apply_range):
    # global avg pool + fc(+bias) + clamp/div fused into one tiny kernel.
    feat = jnp.sum(x_ref[...], axis=1) / hw
    enc = jnp.dot(feat, w_ref[...], preferred_element_type=jnp.float32) + b_ref[...]
    if apply_range:
        enc = enc / jnp.maximum(r_ref[...], 0.1)
    o_ref[...] = enc


# ---------------------------------------------------------------------------
# fused conv + BN wrappers
# ---------------------------------------------------------------------------
def _conv_patches(x_nhwc, w, kh, stride, pad):
    """Pick the weight variant and build the (M, K) bf16 activation matrix."""
    B, H, W, C = x_nhwc.shape
    if kh == 3 and pad == 1 and H == 1 and W == 1:
        # 1x1 spatial: only the centre tap of a 3x3 / pad-1 kernel touches real data.
        return x_nhwc.reshape(B, C), w['wc'], (B, 1, 1)
    if kh == 1:
        xs = x_nhwc[:, ::stride, ::stride, :]
        _, OH, OW, _ = xs.shape
        return xs.reshape(B * OH * OW, C), w['wf'], (B, OH, OW)
    OH = (H + 2 * pad - kh) // stride + 1
    OW = (W + 2 * pad - kh) // stride + 1
    xp = jnp.pad(x_nhwc, ((0, 0), (pad, pad), (pad, pad), (0, 0)))
    taps = []
    for i in range(kh):
        for j in range(kh):
            taps.append(xp[:, i: i + stride * (OH - 1) + 1: stride,
                           j: j + stride * (OW - 1) + 1: stride, :])
    # TODO(synk): im2col for the few remaining spatially-extended convs is built in XLA
    # (tens of KB at this input size); in-kernel tap accumulation would remove it.
    patches = jnp.concatenate(taps, axis=-1).reshape(B * OH * OW, kh * kh * C)
    return patches, w['wf'], (B, OH, OW)


def conv_bn_relu(x_nhwc, w, gamma, beta, *, oc, kh, stride, pad, relu=True):
    patches, wmat, (B, OH, OW) = _conv_patches(x_nhwc, w, kh, stride, pad)
    M = patches.shape[0]
    Kp, Np = wmat.shape
    Mp = _rup(M, 16)
    out = pl.pallas_call(
        functools.partial(_conv_bn_kernel, count=float(M), relu=relu),
        out_shape=jax.ShapeDtypeStruct((Mp, Np), jnp.bfloat16),
        in_specs=_vmem_specs(4),
        out_specs=pl.BlockSpec(memory_space=pltpu.MemorySpace.VMEM),
    )(_pad_a(patches, Mp, Kp), wmat, gamma, beta)
    return out[:M, :oc].reshape(B, OH, OW, oc)


def conv_bn_add_relu(x_nhwc, w, gamma, beta, identity_nhwc, *, oc, kh, stride, pad):
    patches, wmat, (B, OH, OW) = _conv_patches(x_nhwc, w, kh, stride, pad)
    M = patches.shape[0]
    Kp, Np = wmat.shape
    Mp = _rup(M, 16)
    idp = _pad_a(identity_nhwc.reshape(M, oc), Mp, Np)
    out = pl.pallas_call(
        functools.partial(_conv_bn_add_relu_kernel, count=float(M)),
        out_shape=jax.ShapeDtypeStruct((Mp, Np), jnp.bfloat16),
        in_specs=_vmem_specs(5),
        out_specs=pl.BlockSpec(memory_space=pltpu.MemorySpace.VMEM),
    )(_pad_a(patches, Mp, Kp), wmat, gamma, beta, idp)
    return out[:M, :oc].reshape(B, OH, OW, oc)


def conv_ds_bn_add_relu(y_nhwc, w2, g2, b2, x_in_nhwc, wds, gds, bds, *, oc, ds_stride):
    # Fused: BN(conv2(y)) + BN(downsample(x_in)) , ReLU  -- two matmuls, one epilogue.
    patches, wmat, (B, OH, OW) = _conv_patches(y_nhwc, w2, 3, 1, 1)
    dpatches, dwmat, _ = _conv_patches(x_in_nhwc, wds, 1, ds_stride, 0)
    M = patches.shape[0]
    Kp, Np = wmat.shape
    Kdp = dwmat.shape[0]
    Mp = _rup(M, 16)
    out = pl.pallas_call(
        functools.partial(_conv_ds_bn_add_relu_kernel, count=float(M)),
        out_shape=jax.ShapeDtypeStruct((Mp, Np), jnp.bfloat16),
        in_specs=_vmem_specs(8),
        out_specs=pl.BlockSpec(memory_space=pltpu.MemorySpace.VMEM),
    )(_pad_a(patches, Mp, Kp), wmat, g2, b2,
      _pad_a(dpatches, Mp, Kdp), dwmat, gds, bds)
    return out[:M, :oc].reshape(B, OH, OW, oc)


def maxpool_3x3_s2_p1(x_nhwc):
    # TODO(synk): kept as XLA-fused pairwise maxes on a ~32 KB bf16 tensor; fusing it
    # into the stem conv kernel would need strided in-kernel slicing (not verified).
    B, H, W, C = x_nhwc.shape
    OH = (H + 2 - 3) // 2 + 1
    OW = (W + 2 - 3) // 2 + 1
    xp = jnp.pad(x_nhwc, ((0, 0), (1, 1), (1, 1), (0, 0)),
                 constant_values=-jnp.inf)          # torch pads maxpool with -inf
    out = None
    for kh in range(3):
        for kw in range(3):
            tap = xp[:, kh: kh + 2 * (OH - 1) + 1: 2,
                     kw: kw + 2 * (OW - 1) + 1: 2, :]
            out = tap if out is None else jnp.maximum(out, tap)
    return out


def head(x_nhwc, fc_w, fc_b, ranges, apply_range):
    """Fused: adaptive avg pool (1,1) + Linear(512, 2) + clamp/div by range."""
    B, H, W, C = x_nhwc.shape
    Cp, Np = fc_w.shape
    Bp, HWp = _rup(B, 8), _rup(H * W, 8)
    xm = x_nhwc.reshape(B, H * W, C).astype(jnp.float32)
    xp = jnp.pad(xm, ((0, Bp - B), (0, HWp - H * W), (0, Cp - C)))
    rp = jnp.pad(ranges[:, :1].astype(jnp.float32), ((0, Bp - B), (0, 0)),
                 constant_values=1.0)
    out = pl.pallas_call(
        functools.partial(_head_kernel, hw=float(H * W), apply_range=apply_range),
        out_shape=jax.ShapeDtypeStruct((Bp, Np), jnp.float32),
        in_specs=_vmem_specs(4),
        out_specs=pl.BlockSpec(memory_space=pltpu.MemorySpace.VMEM),
    )(xp, fc_w, fc_b, rp)
    return out[:B, :2]        # module's fc is Linear(512, 2)


# ---------------------------------------------------------------------------
# ResNet18 forward (training-mode semantics, range_flag=True)
# ---------------------------------------------------------------------------
def basic_block(x, p, stride, cout):
    y = conv_bn_relu(x, p['conv1'], p['bn1_g'], p['bn1_b'],
                     oc=cout, kh=3, stride=stride, pad=1)
    if 'ds' in p:
        return conv_ds_bn_add_relu(y, p['conv2'], p['bn2_g'], p['bn2_b'],
                                   x, p['ds'], p['ds_g'], p['ds_b'],
                                   oc=cout, ds_stride=stride)
    return conv_bn_add_relu(y, p['conv2'], p['bn2_g'], p['bn2_b'], x,
                            oc=cout, kh=3, stride=1, pad=1)


def resnet18_forward(prep, heatmaps, ranges, training=True, range_flag=True):
    # single layout change at the module boundary: NCHW -> NHWC, bf16 activations.
    x = jnp.transpose(heatmaps, (0, 2, 3, 1)).astype(jnp.bfloat16)
    # stem: conv 7x7/2 (2 -> 64) + BN + ReLU fused, then maxpool 3x3/2
    x = conv_bn_relu(x, prep['conv1'], prep['bn1_g'], prep['bn1_b'],
                     oc=64, kh=7, stride=2, pad=3)
    x = maxpool_3x3_s2_p1(x)
    # 4 stages of 2 BasicBlocks
    for li, (layer, cout) in enumerate(zip(prep['layers'], (64, 128, 256, 512))):
        for bi, bp in enumerate(layer):
            stride = 2 if (li > 0 and bi == 0) else 1
            x = basic_block(x, bp, stride, cout)
    apply_range = bool(training and range_flag)
    enc = head(x, prep['fc_w'], prep['fc_b'], ranges, apply_range)   # (B, 2)
    if apply_range:
        # TODO(synk): arctan applied in plain JAX glue — Mosaic atan lowering not guaranteed.
        return jnp.arctan(enc)
    return enc


# ---------------------------------------------------------------------------
# one-time weight / BN re-layout (outside the per-forward path)
# ---------------------------------------------------------------------------
def prepare_params(params):
    """Transpose conv weights to (KH*KW*IC, OC), cast bf16, pad to lane multiples, and
    pre-slice the centre tap of every 3x3 kernel.  Runs once; the forward never
    re-layouts weights (perf review: was ~22 MB of weight shuffling per forward)."""
    def conv(w):
        oc, ic, khh, kww = w.shape
        wt = jnp.transpose(w, (2, 3, 1, 0)).astype(jnp.bfloat16)      # (KH, KW, IC, OC)
        k = khh * kww * ic
        d = {'wf': jnp.pad(wt.reshape(k, oc),
                           ((0, _rup(k, 128) - k), (0, _rup(oc, 128) - oc)))}
        if khh == 3:
            d['wc'] = jnp.pad(wt[1, 1],
                              ((0, _rup(ic, 128) - ic), (0, _rup(oc, 128) - oc)))
        return d

    prep = {'conv1': conv(params['conv1_w']),
            'bn1_g': _row_pad(params['bn1_g']),
            'bn1_b': _row_pad(params['bn1_b'])}
    layers = []
    for layer in params['layers']:
        blocks = []
        for bp in layer:
            nb = {'conv1': conv(bp['conv1_w']),
                  'bn1_g': _row_pad(bp['bn1_g']), 'bn1_b': _row_pad(bp['bn1_b']),
                  'conv2': conv(bp['conv2_w']),
                  'bn2_g': _row_pad(bp['bn2_g']), 'bn2_b': _row_pad(bp['bn2_b'])}
            if 'ds_w' in bp:
                nb['ds'] = conv(bp['ds_w'])
                nb['ds_g'] = _row_pad(bp['ds_g'])
                nb['ds_b'] = _row_pad(bp['ds_b'])
            blocks.append(nb)
        layers.append(blocks)
    prep['layers'] = layers
    n, c = params['fc_w'].shape       # (2, 512)
    prep['fc_w'] = jnp.pad(params['fc_w'].T.astype(jnp.float32),
                           ((0, _rup(c, 128) - c), (0, _rup(n, 128) - n)))
    prep['fc_b'] = jnp.pad(params['fc_b'].reshape(1, n).astype(jnp.float32),
                           ((0, 0), (0, _rup(n, 128) - n)))
    return prep


# ---------------------------------------------------------------------------
# deterministic parameter init (shapes match the PyTorch module)
# ---------------------------------------------------------------------------
def init_params(key):
    ks = iter(jax.random.split(key, 128))

    def conv_w(oc, ic, k):
        fan_in, fan_out = ic * k * k, oc * k * k
        std = (2.0 / (fan_in + fan_out)) ** 0.5               # xavier_normal
        return std * jax.random.normal(next(ks), (oc, ic, k, k), jnp.float32)

    def bn_params(c):
        g = 1.0 + 0.02 * jax.random.normal(next(ks), (c,), jnp.float32)
        return g, jnp.zeros((c,), jnp.float32)

    params = {}
    params['conv1_w'] = conv_w(64, 2, 7)
    params['bn1_g'], params['bn1_b'] = bn_params(64)

    layers = []
    cin = 64
    for cout in (64, 128, 256, 512):
        blocks = []
        for bi in range(2):
            stride = 2 if (cout != 64 and bi == 0) else 1
            bic = cin if bi == 0 else cout
            bp = {}
            bp['conv1_w'] = conv_w(cout, bic, 3)
            bp['bn1_g'], bp['bn1_b'] = bn_params(cout)
            bp['conv2_w'] = conv_w(cout, cout, 3)
            bp['bn2_g'], bp['bn2_b'] = bn_params(cout)
            if bi == 0 and (stride != 1 or bic != cout):
                bp['ds_w'] = conv_w(cout, bic, 1)
                bp['ds_g'], bp['ds_b'] = bn_params(cout)
            blocks.append(bp)
        layers.append(blocks)
        cin = cout
    params['layers'] = layers

    std = (2.0 / (512 + 2)) ** 0.5
    params['fc_w'] = std * jax.random.normal(next(ks), (2, 512), jnp.float32)
    params['fc_b'] = jax.random.normal(next(ks), (2,), jnp.float32)
    return params


# ---------------------------------------------------------------------------
if __name__ == "__main__":
    params = init_params(jax.random.PRNGKey(42))
    prep = prepare_params(params)          # one-time weight re-layout, outside the forward

    key = jax.random.PRNGKey(0)
    k1, k2 = jax.random.split(key)
    heatmaps = jax.random.normal(k1, (2, 2, 16, 16), jnp.float32)            # input['radar1'] (NCHW)
    ranges = 0.5 + 4.5 * jax.random.uniform(k2, (2, 1), dtype=jnp.float32)   # input['range']

    flow = jax.jit(resnet18_forward)(prep, heatmaps, ranges)
    flow = jax.block_until_ready(flow)
    assert flow.shape == (2, 2), flow.shape
    print("KERNEL_OK")
</pallas_src>

<mosaic_0001>
module attributes {stable_mosaic.version = 11 : i64} {
  func.func @_conv_bn_kernel(%arg0: memref<128x128xbf16, #tpu.memory_space<vmem>>, %arg1: memref<128x128xbf16, #tpu.memory_space<vmem>>, %arg2: memref<1x128xf32, #tpu.memory_space<vmem>>, %arg3: memref<1x128xf32, #tpu.memory_space<vmem>>, %arg4: memref<128x128xbf16, #tpu.memory_space<vmem>>) attributes {dimension_semantics = [], scalar_prefetch = 0 : i64, scratch_operands = 0 : i64, tpu.core_type = #tpu.core_type<tc>} {
    %c0 = arith.constant 0 : index
    %c0_0 = arith.constant 0 : index
    %0 = vector.load %arg0[%c0, %c0_0] : memref<128x128xbf16, #tpu.memory_space<vmem>>, vector<128x128xbf16>
    %c0_1 = arith.constant 0 : index
    %c0_2 = arith.constant 0 : index
    %1 = vector.load %arg1[%c0_1, %c0_2] : memref<128x128xbf16, #tpu.memory_space<vmem>>, vector<128x128xbf16>
    %cst = arith.constant dense<0.000000e+00> : vector<128x128xf32>
    %2 = tpu.matmul %0, %1, %cst {dimension_numbers = #tpu.dot_dimension_numbers<[1], [0], [0], [1], [0, 0, 1, 1], [], []>} : vector<128x128xbf16>, vector<128x128xbf16>, vector<128x128xf32> -> vector<128x128xf32>
    %c0_3 = arith.constant 0 : index
    %c0_4 = arith.constant 0 : index
    %3 = vector.load %arg2[%c0_3, %c0_4] : memref<1x128xf32, #tpu.memory_space<vmem>>, vector<1x128xf32>
    %c0_5 = arith.constant 0 : index
    %c0_6 = arith.constant 0 : index
    %4 = vector.load %arg3[%c0_5, %c0_6] : memref<1x128xf32, #tpu.memory_space<vmem>>, vector<1x128xf32>
    %cst_7 = arith.constant dense<0.000000e+00> : vector<128xf32>
    %5 = vector.multi_reduction <add>, %2, %cst_7 [0] : vector<128x128xf32> to vector<128xf32>
    %6 = vector.shape_cast %5 : vector<128xf32> to vector<1x128xf32>
    %cst_8 = arith.constant 1.280000e+02 : f32
    %7 = vector.broadcast %cst_8 : f32 to vector<1x128xf32>
    %8 = arith.divf %6, %7 : vector<1x128xf32>
    %9 = arith.mulf %2, %2 : vector<128x128xf32>
    %cst_9 = arith.constant dense<0.000000e+00> : vector<128xf32>
    %10 = vector.multi_reduction <add>, %9, %cst_9 [0] : vector<128x128xf32> to vector<128xf32>
    %11 = vector.shape_cast %10 : vector<128xf32> to vector<1x128xf32>
    %cst_10 = arith.constant 1.280000e+02 : f32
    %12 = vector.broadcast %cst_10 : f32 to vector<1x128xf32>
    %13 = arith.divf %11, %12 : vector<1x128xf32>
    %14 = arith.mulf %8, %8 : vector<1x128xf32>
    %15 = arith.subf %13, %14 : vector<1x128xf32>
    %cst_11 = arith.constant 0.000000e+00 : f32
    %16 = vector.broadcast %cst_11 : f32 to vector<1x128xf32>
    %17 = arith.maximumf %15, %16 : vector<1x128xf32>
    %18 = vector.broadcast %8 : vector<1x128xf32> to vector<128x128xf32>
    %19 = arith.subf %2, %18 : vector<128x128xf32>
    %cst_12 = arith.constant 9.99999974E-6 : f32
    %20 = vector.broadcast %cst_12 : f32 to vector<1x128xf32>
    %21 = arith.addf %17, %20 : vector<1x128xf32>
    %22 = math.rsqrt %21 : vector<1x128xf32>
    %23 = vector.broadcast %22 : vector<1x128xf32> to vector<128x128xf32>
    %24 = arith.mulf %19, %23 : vector<128x128xf32>
    %25 = vector.broadcast %3 : vector<1x128xf32> to vector<128x128xf32>
    %26 = arith.mulf %24, %25 : vector<128x128xf32>
    %27 = vector.broadcast %4 : vector<1x128xf32> to vector<128x128xf32>
    %28 = arith.addf %26, %27 : vector<128x128xf32>
    %cst_13 = arith.constant 0.000000e+00 : f32
    %29 = vector.broadcast %cst_13 : f32 to vector<128x128xf32>
    %30 = arith.maximumf %28, %29 : vector<128x128xf32>
    %31 = arith.truncf %30 : vector<128x128xf32> to vector<128x128xbf16>
    %c0_14 = arith.constant 0 : index
    %c0_15 = arith.constant 0 : index
    %32 = vector.load %arg4[%c0_14, %c0_15] : memref<128x128xbf16, #tpu.memory_space<vmem>>, vector<128x128xbf16>
    tpu.vector_store %arg4[%c0_14, %c0_15], %31 {strides = array<i32>} : memref<128x128xbf16, #tpu.memory_space<vmem>>, vector<128x128xbf16>,
    return
  }
}

module attributes {stable_mosaic.version = 11 : i64} {
  func.func @_conv_bn_kernel(%arg0: memref<32x640xbf16, #tpu.memory_space<vmem>>, %arg1: memref<640x128xbf16, #tpu.memory_space<vmem>>, %arg2: memref<1x128xf32, #tpu.memory_space<vmem>>, %arg3: memref<1x128xf32, #tpu.memory_space<vmem>>, %arg4: memref<32x128xbf16, #tpu.memory_space<vmem>>) attributes {dimension_semantics = [], scalar_prefetch = 0 : i64, scratch_operands = 0 : i64, tpu.core_type = #tpu.core_type<tc>} {
    %c0 = arith.constant 0 : index
    %c0_0 = arith.constant 0 : index
    %0 = vector.load %arg0[%c0, %c0_0] : memref<32x640xbf16, #tpu.memory_space<vmem>>, vector<32x640xbf16>
    %c0_1 = arith.constant 0 : index
    %c0_2 = arith.constant 0 : index
    %1 = vector.load %arg1[%c0_1, %c0_2] : memref<640x128xbf16, #tpu.memory_space<vmem>>, vector<640x128xbf16>
    %cst = arith.constant dense<0.000000e+00> : vector<32x128xf32>
    %2 = tpu.matmul %0, %1, %cst {dimension_numbers = #tpu.dot_dimension_numbers<[1], [0], [0], [1], [0, 0, 1, 1], [], []>} : vector<32x640xbf16>, vector<640x128xbf16>, vector<32x128xf32> -> vector<32x128xf32>
    %c0_3 = arith.constant 0 : index
    %c0_4 = arith.constant 0 : index
    %3 = vector.load %arg2[%c0_3, %c0_4] : memref<1x128xf32, #tpu.memory_space<vmem>>, vector<1x128xf32>
    %c0_5 = arith.constant 0 : index
    %c0_6 = arith.constant 0 : index
    %4 = vector.load %arg3[%c0_5, %c0_6] : memref<1x128xf32, #tpu.memory_space<vmem>>, vector<1x128xf32>
    %cst_7 = arith.constant dense<0.000000e+00> : vector<128xf32>
    %5 = vector.multi_reduction <add>, %2, %cst_7 [0] : vector<32x128xf32> to vector<128xf32>
    %6 = vector.shape_cast %5 : vector<128xf32> to vector<1x128xf32>
    %cst_8 = arith.constant 3.200000e+01 : f32
    %7 = vector.broadcast %cst_8 : f32 to vector<1x128xf32>
    %8 = arith.divf %6, %7 : vector<1x128xf32>
    %9 = arith.mulf %2, %2 : vector<32x128xf32>
    %cst_9 = arith.constant dense<0.000000e+00> : vector<128xf32>
    %10 = vector.multi_reduction <add>, %9, %cst_9 [0] : vector<32x128xf32> to vector<128xf32>
    %11 = vector.shape_cast %10 : vector<128xf32> to vector<1x128xf32>
    %cst_10 = arith.constant 3.200000e+01 : f32
    %12 = vector.broadcast %cst_10 : f32 to vector<1x128xf32>
    %13 = arith.divf %11, %12 : vector<1x128xf32>
    %14 = arith.mulf %8, %8 : vector<1x128xf32>
    %15 = arith.subf %13, %14 : vector<1x128xf32>
    %cst_11 = arith.constant 0.000000e+00 : f32
    %16 = vector.broadcast %cst_11 : f32 to vector<1x128xf32>
    %17 = arith.maximumf %15, %16 : vector<1x128xf32>
    %18 = vector.broadcast %8 : vector<1x128xf32> to vector<32x128xf32>
    %19 = arith.subf %2, %18 : vector<32x128xf32>
    %cst_12 = arith.constant 9.99999974E-6 : f32
    %20 = vector.broadcast %cst_12 : f32 to vector<1x128xf32>
    %21 = arith.addf %17, %20 : vector<1x128xf32>
    %22 = math.rsqrt %21 : vector<1x128xf32>
    %23 = vector.broadcast %22 : vector<1x128xf32> to vector<32x128xf32>
    %24 = arith.mulf %19, %23 : vector<32x128xf32>
    %25 = vector.broadcast %3 : vector<1x128xf32> to vector<32x128xf32>
    %26 = arith.mulf %24, %25 : vector<32x128xf32>
    %27 = vector.broadcast %4 : vector<1x128xf32> to vector<32x128xf32>
    %28 = arith.addf %26, %27 : vector<32x128xf32>
    %cst_13 = arith.constant 0.000000e+00 : f32
    %29 = vector.broadcast %cst_13 : f32 to vector<32x128xf32>
    %30 = arith.maximumf %28, %29 : vector<32x128xf32>
    %31 = arith.truncf %30 : vector<32x128xf32> to vector<32x128xbf16>
    %c0_14 = arith.constant 0 : index
    %c0_15 = arith.constant 0 : index
    %32 = vector.load %arg4[%c0_14, %c0_15] : memref<32x128xbf16, #tpu.memory_space<vmem>>, vector<32x128xbf16>
    tpu.vector_store %arg4[%c0_14, %c0_15], %31 {strides = array<i32>} : memref<32x128xbf16, #tpu.memory_space<vmem>>, vector<32x128xbf16>,
    return
  }
}

module attributes {stable_mosaic.version = 11 : i64} {
  func.func @_conv_bn_add_relu_kernel(%arg0: memref<32x640xbf16, #tpu.memory_space<vmem>>, %arg1: memref<640x128xbf16, #tpu.memory_space<vmem>>, %arg2: memref<1x128xf32, #tpu.memory_space<vmem>>, %arg3: memref<1x128xf32, #tpu.memory_space<vmem>>, %arg4: memref<32x128xbf16, #tpu.memory_space<vmem>>, %arg5: memref<32x128xbf16, #tpu.memory_space<vmem>>) attributes {dimension_semantics = [], scalar_prefetch = 0 : i64, scratch_operands = 0 : i64, tpu.core_type = #tpu.core_type<tc>} {
    %c0 = arith.constant 0 : index
    %c0_0 = arith.constant 0 : index
    %0 = vector.load %arg0[%c0, %c0_0] : memref<32x640xbf16, #tpu.memory_space<vmem>>, vector<32x640xbf16>
    %c0_1 = arith.constant 0 : index
    %c0_2 = arith.constant 0 : index
    %1 = vector.load %arg1[%c0_1, %c0_2] : memref<640x128xbf16, #tpu.memory_space<vmem>>, vector<640x128xbf16>
    %cst = arith.constant dense<0.000000e+00> : vector<32x128xf32>
    %2 = tpu.matmul %0, %1, %cst {dimension_numbers = #tpu.dot_dimension_numbers<[1], [0], [0], [1], [0, 0, 1, 1], [], []>} : vector<32x640xbf16>, vector<640x128xbf16>, vector<32x128xf32> -> vector<32x128xf32>
    %c0_3 = arith.constant 0 : index
    %c0_4 = arith.constant 0 : index
    %3 = vector.load %arg2[%c0_3, %c0_4] : memref<1x128xf32, #tpu.memory_space<vmem>>, vector<1x128xf32>
    %c0_5 = arith.constant 0 : index
    %c0_6 = arith.constant 0 : index
    %4 = vector.load %arg3[%c0_5, %c0_6] : memref<1x128xf32, #tpu.memory_space<vmem>>, vector<1x128xf32>
    %cst_7 = arith.constant dense<0.000000e+00> : vector<128xf32>
    %5 = vector.multi_reduction <add>, %2, %cst_7 [0] : vector<32x128xf32> to vector<128xf32>
    %6 = vector.shape_cast %5 : vector<128xf32> to vector<1x128xf32>
    %cst_8 = arith.constant 3.200000e+01 : f32
    %7 = vector.broadcast %cst_8 : f32 to vector<1x128xf32>
    %8 = arith.divf %6, %7 : vector<1x128xf32>
    %9 = arith.mulf %2, %2 : vector<32x128xf32>
    %cst_9 = arith.constant dense<0.000000e+00> : vector<128xf32>
    %10 = vector.multi_reduction <add>, %9, %cst_9 [0] : vector<32x128xf32> to vector<128xf32>
    %11 = vector.shape_cast %10 : vector<128xf32> to vector<1x128xf32>
    %cst_10 = arith.constant 3.200000e+01 : f32
    %12 = vector.broadcast %cst_10 : f32 to vector<1x128xf32>
    %13 = arith.divf %11, %12 : vector<1x128xf32>
    %14 = arith.mulf %8, %8 : vector<1x128xf32>
    %15 = arith.subf %13, %14 : vector<1x128xf32>
    %cst_11 = arith.constant 0.000000e+00 : f32
    %16 = vector.broadcast %cst_11 : f32 to vector<1x128xf32>
    %17 = arith.maximumf %15, %16 : vector<1x128xf32>
    %18 = vector.broadcast %8 : vector<1x128xf32> to vector<32x128xf32>
    %19 = arith.subf %2, %18 : vector<32x128xf32>
    %cst_12 = arith.constant 9.99999974E-6 : f32
    %20 = vector.broadcast %cst_12 : f32 to vector<1x128xf32>
    %21 = arith.addf %17, %20 : vector<1x128xf32>
    %22 = math.rsqrt %21 : vector<1x128xf32>
    %23 = vector.broadcast %22 : vector<1x128xf32> to vector<32x128xf32>
    %24 = arith.mulf %19, %23 : vector<32x128xf32>
    %25 = vector.broadcast %3 : vector<1x128xf32> to vector<32x128xf32>
    %26 = arith.mulf %24, %25 : vector<32x128xf32>
    %27 = vector.broadcast %4 : vector<1x128xf32> to vector<32x128xf32>
    %28 = arith.addf %26, %27 : vector<32x128xf32>
    %c0_13 = arith.constant 0 : index
    %c0_14 = arith.constant 0 : index
    %29 = vector.load %arg4[%c0_13, %c0_14] : memref<32x128xbf16, #tpu.memory_space<vmem>>, vector<32x128xbf16>
    %30 = arith.extf %29 : vector<32x128xbf16> to vector<32x128xf32>
    %31 = arith.addf %28, %30 : vector<32x128xf32>
    %cst_15 = arith.constant 0.000000e+00 : f32
    %32 = vector.broadcast %cst_15 : f32 to vector<32x128xf32>
    %33 = arith.maximumf %31, %32 : vector<32x128xf32>
    %34 = arith.truncf %33 : vector<32x128xf32> to vector<32x128xbf16>
    %c0_16 = arith.constant 0 : index
    %c0_17 = arith.constant 0 : index
    %35 = vector.load %arg5[%c0_16, %c0_17] : memref<32x128xbf16, #tpu.memory_space<vmem>>, vector<32x128xbf16>
    tpu.vector_store %arg5[%c0_16, %c0_17], %34 {strides = array<i32>} : memref<32x128xbf16, #tpu.memory_space<vmem>>, vector<32x128xbf16>,
    return
  }
}

module attributes {stable_mosaic.version = 11 : i64} {
  func.func @_conv_bn_kernel(%arg0: memref<16x640xbf16, #tpu.memory_space<vmem>>, %arg1: memref<640x128xbf16, #tpu.memory_space<vmem>>, %arg2: memref<1x128xf32, #tpu.memory_space<vmem>>, %arg3: memref<1x128xf32, #tpu.memory_space<vmem>>, %arg4: memref<16x128xbf16, #tpu.memory_space<vmem>>) attributes {dimension_semantics = [], scalar_prefetch = 0 : i64, scratch_operands = 0 : i64, tpu.core_type = #tpu.core_type<tc>} {
    %c0 = arith.constant 0 : index
    %c0_0 = arith.constant 0 : index
    %0 = vector.load %arg0[%c0, %c0_0] : memref<16x640xbf16, #tpu.memory_space<vmem>>, vector<16x640xbf16>
    %c0_1 = arith.constant 0 : index
    %c0_2 = arith.constant 0 : index
    %1 = vector.load %arg1[%c0_1, %c0_2] : memref<640x128xbf16, #tpu.memory_space<vmem>>, vector<640x128xbf16>
    %cst = arith.constant dense<0.000000e+00> : vector<16x128xf32>
    %2 = tpu.matmul %0, %1, %cst {dimension_numbers = #tpu.dot_dimension_numbers<[1], [0], [0], [1], [0, 0, 1, 1], [], []>} : vector<16x640xbf16>, vector<640x128xbf16>, vector<16x128xf32> -> vector<16x128xf32>
    %c0_3 = arith.constant 0 : index
    %c0_4 = arith.constant 0 : index
    %3 = vector.load %arg2[%c0_3, %c0_4] : memref<1x128xf32, #tpu.memory_space<vmem>>, vector<1x128xf32>
    %c0_5 = arith.constant 0 : index
    %c0_6 = arith.constant 0 : index
    %4 = vector.load %arg3[%c0_5, %c0_6] : memref<1x128xf32, #tpu.memory_space<vmem>>, vector<1x128xf32>
    %cst_7 = arith.constant dense<0.000000e+00> : vector<128xf32>
    %5 = vector.multi_reduction <add>, %2, %cst_7 [0] : vector<16x128xf32> to vector<128xf32>
    %6 = vector.shape_cast %5 : vector<128xf32> to vector<1x128xf32>
    %cst_8 = arith.constant 8.000000e+00 : f32
    %7 = vector.broadcast %cst_8 : f32 to vector<1x128xf32>
    %8 = arith.divf %6, %7 : vector<1x128xf32>
    %9 = arith.mulf %2, %2 : vector<16x128xf32>
    %cst_9 = arith.constant dense<0.000000e+00> : vector<128xf32>
    %10 = vector.multi_reduction <add>, %9, %cst_9 [0] : vector<16x128xf32> to vector<128xf32>
    %11 = vector.shape_cast %10 : vector<128xf32> to vector<1x128xf32>
    %cst_10 = arith.constant 8.000000e+00 : f32
    %12 = vector.broadcast %cst_10 : f32 to vector<1x128xf32>
    %13 = arith.divf %11, %12 : vector<1x128xf32>
    %14 = arith.mulf %8, %8 : vector<1x128xf32>
    %15 = arith.subf %13, %14 : vector<1x128xf32>
    %cst_11 = arith.constant 0.000000e+00 : f32
    %16 = vector.broadcast %cst_11 : f32 to vector<1x128xf32>
    %17 = arith.maximumf %15, %16 : vector<1x128xf32>
    %18 = vector.broadcast %8 : vector<1x128xf32> to vector<16x128xf32>
    %19 = arith.subf %2, %18 : vector<16x128xf32>
    %cst_12 = arith.constant 9.99999974E-6 : f32
    %20 = vector.broadcast %cst_12 : f32 to vector<1x128xf32>
    %21 = arith.addf %17, %20 : vector<1x128xf32>
    %22 = math.rsqrt %21 : vector<1x128xf32>
    %23 = vector.broadcast %22 : vector<1x128xf32> to vector<16x128xf32>
    %24 = arith.mulf %19, %23 : vector<16x128xf32>
    %25 = vector.broadcast %3 : vector<1x128xf32> to vector<16x128xf32>
    %26 = arith.mulf %24, %25 : vector<16x128xf32>
    %27 = vector.broadcast %4 : vector<1x128xf32> to vector<16x128xf32>
    %28 = arith.addf %26, %27 : vector<16x128xf32>
    %cst_13 = arith.constant 0.000000e+00 : f32
    %29 = vector.broadcast %cst_13 : f32 to vector<16x128xf32>
    %30 = arith.maximumf %28, %29 : vector<16x128xf32>
    %31 = arith.truncf %30 : vector<16x128xf32> to vector<16x128xbf16>
    %c0_14 = arith.constant 0 : index
    %c0_15 = arith.constant 0 : index
    %32 = vector.load %arg4[%c0_14, %c0_15] : memref<16x128xbf16, #tpu.memory_space<vmem>>, vector<16x128xbf16>
    tpu.vector_store %arg4[%c0_14, %c0_15], %31 {strides = array<i32>} : memref<16x128xbf16, #tpu.memory_space<vmem>>, vector<16x128xbf16>,
    return
  }
}

module attributes {stable_mosaic.version = 11 : i64} {
  func.func @_conv_bn_kernel(%arg0: memref<16x1152xbf16, #tpu.memory_space<vmem>>, %arg1: memref<1152x128xbf16, #tpu.memory_space<vmem>>, %arg2: memref<1x128xf32, #tpu.memory_space<vmem>>, %arg3: memref<1x128xf32, #tpu.memory_space<vmem>>, %arg4: memref<16x128xbf16, #tpu.memory_space<vmem>>) attributes {dimension_semantics = [], scalar_prefetch = 0 : i64, scratch_operands = 0 : i64, tpu.core_type = #tpu.core_type<tc>} {
    %c0 = arith.constant 0 : index
    %c0_0 = arith.constant 0 : index
    %0 = vector.load %arg0[%c0, %c0_0] : memref<16x1152xbf16, #tpu.memory_space<vmem>>, vector<16x1152xbf16>
    %c0_1 = arith.constant 0 : index
    %c0_2 = arith.constant 0 : index
    %1 = vector.load %arg1[%c0_1, %c0_2] : memref<1152x128xbf16, #tpu.memory_space<vmem>>, vector<1152x128xbf16>
    %cst = arith.constant dense<0.000000e+00> : vector<16x128xf32>
    %2 = tpu.matmul %0, %1, %cst {dimension_numbers = #tpu.dot_dimension_numbers<[1], [0], [0], [1], [0, 0, 1, 1], [], []>} : vector<16x1152xbf16>, vector<1152x128xbf16>, vector<16x128xf32> -> vector<16x128xf32>
    %c0_3 = arith.constant 0 : index
    %c0_4 = arith.constant 0 : index
    %3 = vector.load %arg2[%c0_3, %c0_4] : memref<1x128xf32, #tpu.memory_space<vmem>>, vector<1x128xf32>
    %c0_5 = arith.constant 0 : index
    %c0_6 = arith.constant 0 : index
    %4 = vector.load %arg3[%c0_5, %c0_6] : memref<1x128xf32, #tpu.memory_space<vmem>>, vector<1x128xf32>
    %cst_7 = arith.constant dense<0.000000e+00> : vector<128xf32>
    %5 = vector.multi_reduction <add>, %2, %cst_7 [0] : vector<16x128xf32> to vector<128xf32>
    %6 = vector.shape_cast %5 : vector<128xf32> to vector<1x128xf32>
    %cst_8 = arith.constant 8.000000e+00 : f32
    %7 = vector.broadcast %cst_8 : f32 to vector<1x128xf32>
    %8 = arith.divf %6, %7 : vector<1x128xf32>
    %9 = arith.mulf %2, %2 : vector<16x128xf32>
    %cst_9 = arith.constant dense<0.000000e+00> : vector<128xf32>
    %10 = vector.multi_reduction <add>, %9, %cst_9 [0] : vector<16x128xf32> to vector<128xf32>
    %11 = vector.shape_cast %10 : vector<128xf32> to vector<1x128xf32>
    %cst_10 = arith.constant 8.000000e+00 : f32
    %12 = vector.broadcast %cst_10 : f32 to vector<1x128xf32>
    %13 = arith.divf %11, %12 : vector<1x128xf32>
    %14 = arith.mulf %8, %8 : vector<1x128xf32>
    %15 = arith.subf %13, %14 : vector<1x128xf32>
    %cst_11 = arith.constant 0.000000e+00 : f32
    %16 = vector.broadcast %cst_11 : f32 to vector<1x128xf32>
    %17 = arith.maximumf %15, %16 : vector<1x128xf32>
    %18 = vector.broadcast %8 : vector<1x128xf32> to vector<16x128xf32>
    %19 = arith.subf %2, %18 : vector<16x128xf32>
    %cst_12 = arith.constant 9.99999974E-6 : f32
    %20 = vector.broadcast %cst_12 : f32 to vector<1x128xf32>
    %21 = arith.addf %17, %20 : vector<1x128xf32>
    %22 = math.rsqrt %21 : vector<1x128xf32>
    %23 = vector.broadcast %22 : vector<1x128xf32> to vector<16x128xf32>
    %24 = arith.mulf %19, %23 : vector<16x128xf32>
    %25 = vector.broadcast %3 : vector<1x128xf32> to vector<16x128xf32>
    %26 = arith.mulf %24, %25 : vector<16x128xf32>
    %27 = vector.broadcast %4 : vector<1x128xf32> to vector<16x128xf32>
    %28 = arith.addf %26, %27 : vector<16x128xf32>
    %cst_13 = arith.constant 0.000000e+00 : f32
    %29 = vector.broadcast %cst_13 : f32 to vector<16x128xf32>
    %30 = arith.maximumf %28, %29 : vector<16x128xf32>
    %31 = arith.truncf %30 : vector<16x128xf32> to vector<16x128xbf16>
    %c0_14 = arith.constant 0 : index
    %c0_15 = arith.constant 0 : index
    %32 = vector.load %arg4[%c0_14, %c0_15] : memref<16x128xbf16, #tpu.memory_space<vmem>>, vector<16x128xbf16>
    tpu.vector_store %arg4[%c0_14, %c0_15], %31 {strides = array<i32>} : memref<16x128xbf16, #tpu.memory_space<vmem>>, vector<16x128xbf16>,
    return
  }
}

module attributes {stable_mosaic.version = 11 : i64} {
  func.func @_conv_ds_bn_add_relu_kernel(%arg0: memref<16x1152xbf16, #tpu.memory_space<vmem>>, %arg1: memref<1152x128xbf16, #tpu.memory_space<vmem>>, %arg2: memref<1x128xf32, #tpu.memory_space<vmem>>, %arg3: memref<1x128xf32, #tpu.memory_space<vmem>>, %arg4: memref<16x128xbf16, #tpu.memory_space<vmem>>, %arg5: memref<128x128xbf16, #tpu.memory_space<vmem>>, %arg6: memref<1x128xf32, #tpu.memory_space<vmem>>, %arg7: memref<1x128xf32, #tpu.memory_space<vmem>>, %arg8: memref<16x128xbf16, #tpu.memory_space<vmem>>) attributes {dimension_semantics = [], scalar_prefetch = 0 : i64, scratch_operands = 0 : i64, tpu.core_type = #tpu.core_type<tc>} {
    %c0 = arith.constant 0 : index
    %c0_0 = arith.constant 0 : index
    %0 = vector.load %arg0[%c0, %c0_0] : memref<16x1152xbf16, #tpu.memory_space<vmem>>, vector<16x1152xbf16>
    %c0_1 = arith.constant 0 : index
    %c0_2 = arith.constant 0 : index
    %1 = vector.load %arg1[%c0_1, %c0_2] : memref<1152x128xbf16, #tpu.memory_space<vmem>>, vector<1152x128xbf16>
    %cst = arith.constant dense<0.000000e+00> : vector<16x128xf32>
    %2 = tpu.matmul %0, %1, %cst {dimension_numbers = #tpu.dot_dimension_numbers<[1], [0], [0], [1], [0, 0, 1, 1], [], []>} : vector<16x1152xbf16>, vector<1152x128xbf16>, vector<16x128xf32> -> vector<16x128xf32>
    %c0_3 = arith.constant 0 : index
    %c0_4 = arith.constant 0 : index
    %3 = vector.load %arg2[%c0_3, %c0_4] : memref<1x128xf32, #tpu.memory_space<vmem>>, vector<1x128xf32>
    %c0_5 = arith.constant 0 : index
    %c0_6 = arith.constant 0 : index
    %4 = vector.load %arg3[%c0_5, %c0_6] : memref<1x128xf32, #tpu.memory_space<vmem>>, vector<1x128xf32>
    %cst_7 = arith.constant dense<0.000000e+00> : vector<128xf32>
    %5 = vector.multi_reduction <add>, %2, %cst_7 [0] : vector<16x128xf32> to vector<128xf32>
    %6 = vector.shape_cast %5 : vector<128xf32> to vector<1x128xf32>
    %cst_8 = arith.constant 8.000000e+00 : f32
    %7 = vector.broadcast %cst_8 : f32 to vector<1x128xf32>
    %8 = arith.divf %6, %7 : vector<1x128xf32>
    %9 = arith.mulf %2, %2 : vector<16x128xf32>
    %cst_9 = arith.constant dense<0.000000e+00> : vector<128xf32>
    %10 = vector.multi_reduction <add>, %9, %cst_9 [0] : vector<16x128xf32> to vector<128xf32>
    %11 = vector.shape_cast %10 : vector<128xf32> to vector<1x128xf32>
    %cst_10 = arith.constant 8.000000e+00 : f32
    %12 = vector.broadcast %cst_10 : f32 to vector<1x128xf32>
    %13 = arith.divf %11, %12 : vector<1x128xf32>
    %14 = arith.mulf %8, %8 : vector<1x128xf32>
    %15 = arith.subf %13, %14 : vector<1x128xf32>
    %cst_11 = arith.constant 0.000000e+00 : f32
    %16 = vector.broadcast %cst_11 : f32 to vector<1x128xf32>
    %17 = arith.maximumf %15, %16 : vector<1x128xf32>
    %18 = vector.broadcast %8 : vector<1x128xf32> to vector<16x128xf32>
    %19 = arith.subf %2, %18 : vector<16x128xf32>
    %cst_12 = arith.constant 9.99999974E-6 : f32
    %20 = vector.broadcast %cst_12 : f32 to vector<1x128xf32>
    %21 = arith.addf %17, %20 : vector<1x128xf32>
    %22 = math.rsqrt %21 : vector<1x128xf32>
    %23 = vector.broadcast %22 : vector<1x128xf32> to vector<16x128xf32>
    %24 = arith.mulf %19, %23 : vector<16x128xf32>
    %25 = vector.broadcast %3 : vector<1x128xf32> to vector<16x128xf32>
    %26 = arith.mulf %24, %25 : vector<16x128xf32>
    %27 = vector.broadcast %4 : vector<1x128xf32> to vector<16x128xf32>
    %28 = arith.addf %26, %27 : vector<16x128xf32>
    %c0_13 = arith.constant 0 : index
    %c0_14 = arith.constant 0 : index
    %29 = vector.load %arg4[%c0_13, %c0_14] : memref<16x128xbf16, #tpu.memory_space<vmem>>, vector<16x128xbf16>
    %c0_15 = arith.constant 0 : index
    %c0_16 = arith.constant 0 : index
    %30 = vector.load %arg5[%c0_15, %c0_16] : memref<128x128xbf16, #tpu.memory_space<vmem>>, vector<128x128xbf16>
    %cst_17 = arith.constant dense<0.000000e+00> : vector<16x128xf32>
    %31 = tpu.matmul %29, %30, %cst_17 {dimension_numbers = #tpu.dot_dimension_numbers<[1], [0], [0], [1], [0, 0, 1, 1], [], []>} : vector<16x128xbf16>, vector<128x128xbf16>, vector<16x128xf32> -> vector<16x128xf32>
    %c0_18 = arith.constant 0 : index
    %c0_19 = arith.constant 0 : index
    %32 = vector.load %arg6[%c0_18, %c0_19] : memref<1x128xf32, #tpu.memory_space<vmem>>, vector<1x128xf32>
    %c0_20 = arith.constant 0 : index
    %c0_21 = arith.constant 0 : index
    %33 = vector.load %arg7[%c0_20, %c0_21] : memref<1x128xf32, #tpu.memory_space<vmem>>, vector<1x128xf32>
    %cst_22 = arith.constant dense<0.000000e+00> : vector<128xf32>
    %34 = vector.multi_reduction <add>, %31, %cst_22 [0] : vector<16x128xf32> to vector<128xf32>
    %35 = vector.shape_cast %34 : vector<128xf32> to vector<1x128xf32>
    %cst_23 = arith.constant 8.000000e+00 : f32
    %36 = vector.broadcast %cst_23 : f32 to vector<1x128xf32>
    %37 = arith.divf %35, %36 : vector<1x128xf32>
    %38 = arith.mulf %31, %31 : vector<16x128xf32>
    %cst_24 = arith.constant dense<0.000000e+00> : vector<128xf32>
    %39 = vector.multi_reduction <add>, %38, %cst_24 [0] : vector<16x128xf32> to vector<128xf32>
    %40 = vector.shape_cast %39 : vector<128xf32> to vector<1x128xf32>
    %cst_25 = arith.constant 8.000000e+00 : f32
    %41 = vector.broadcast %cst_25 : f32 to vector<1x128xf32>
    %42 = arith.divf %40, %41 : vector<1x128xf32>
    %43 = arith.mulf %37, %37 : vector<1x128xf32>
    %44 = arith.subf %42, %43 : vector<1x128xf32>
    %cst_26 = arith.constant 0.000000e+00 : f32
    %45 = vector.broadcast %cst_26 : f32 to vector<1x128xf32>
    %46 = arith.maximumf %44, %45 : vector<1x128xf32>
    %47 = vector.broadcast %37 : vector<1x128xf32> to vector<16x128xf32>
    %48 = arith.subf %31, %47 : vector<16x128xf32>
    %cst_27 = arith.constant 9.99999974E-6 : f32
    %49 = vector.broadcast %cst_27 : f32 to vector<1x128xf32>
    %50 = arith.addf %46, %49 : vector<1x128xf32>
    %51 = math.rsqrt %50 : vector<1x128xf32>
    %52 = vector.broadcast %51 : vector<1x128xf32> to vector<16x128xf32>
    %53 = arith.mulf %48, %52 : vector<16x128xf32>
    %54 = vector.broadcast %32 : vector<1x128xf32> to vector<16x128xf32>
    %55 = arith.mulf %53, %54 : vector<16x128xf32>
    %56 = vector.broadcast %33 : vector<1x128xf32> to vector<16x128xf32>
    %57 = arith.addf %55, %56 : vector<16x128xf32>
    %58 = arith.addf %28, %57 : vector<16x128xf32>
    %cst_28 = arith.constant 0.000000e+00 : f32
    %59 = vector.broadcast %cst_28 : f32 to vector<16x128xf32>
    %60 = arith.maximumf %58, %59 : vector<16x128xf32>
    %61 = arith.truncf %60 : vector<16x128xf32> to vector<16x128xbf16>
    %c0_29 = arith.constant 0 : index
    %c0_30 = arith.constant 0 : index
    %62 = vector.load %arg8[%c0_29, %c0_30] : memref<16x128xbf16, #tpu.memory_space<vmem>>, vector<16x128xbf16>
    tpu.vector_store %arg8[%c0_29, %c0_30], %61 {strides = array<i32>} : memref<16x128xbf16, #tpu.memory_space<vmem>>, vector<16x128xbf16>,
    return
  }
}

module attributes {stable_mosaic.version = 11 : i64} {
  func.func @_conv_bn_add_relu_kernel(%arg0: memref<16x1152xbf16, #tpu.memory_space<vmem>>, %arg1: memref<1152x128xbf16, #tpu.memory_space<vmem>>, %arg2: memref<1x128xf32, #tpu.memory_space<vmem>>, %arg3: memref<1x128xf32, #tpu.memory_space<vmem>>, %arg4: memref<16x128xbf16, #tpu.memory_space<vmem>>, %arg5: memref<16x128xbf16, #tpu.memory_space<vmem>>) attributes {dimension_semantics = [], scalar_prefetch = 0 : i64, scratch_operands = 0 : i64, tpu.core_type = #tpu.core_type<tc>} {
    %c0 = arith.constant 0 : index
    %c0_0 = arith.constant 0 : index
    %0 = vector.load %arg0[%c0, %c0_0] : memref<16x1152xbf16, #tpu.memory_space<vmem>>, vector<16x1152xbf16>
    %c0_1 = arith.constant 0 : index
    %c0_2 = arith.constant 0 : index
    %1 = vector.load %arg1[%c0_1, %c0_2] : memref<1152x128xbf16, #tpu.memory_space<vmem>>, vector<1152x128xbf16>
    %cst = arith.constant dense<0.000000e+00> : vector<16x128xf32>
    %2 = tpu.matmul %0, %1, %cst {dimension_numbers = #tpu.dot_dimension_numbers<[1], [0], [0], [1], [0, 0, 1, 1], [], []>} : vector<16x1152xbf16>, vector<1152x128xbf16>, vector<16x128xf32> -> vector<16x128xf32>
    %c0_3 = arith.constant 0 : index
    %c0_4 = arith.constant 0 : index
    %3 = vector.load %arg2[%c0_3, %c0_4] : memref<1x128xf32, #tpu.memory_space<vmem>>, vector<1x128xf32>
    %c0_5 = arith.constant 0 : index
    %c0_6 = arith.constant 0 : index
    %4 = vector.load %arg3[%c0_5, %c0_6] : memref<1x128xf32, #tpu.memory_space<vmem>>, vector<1x128xf32>
    %cst_7 = arith.constant dense<0.000000e+00> : vector<128xf32>
    %5 = vector.multi_reduction <add>, %2, %cst_7 [0] : vector<16x128xf32> to vector<128xf32>
    %6 = vector.shape_cast %5 : vector<128xf32> to vector<1x128xf32>
    %cst_8 = arith.constant 8.000000e+00 : f32
    %7 = vector.broadcast %cst_8 : f32 to vector<1x128xf32>
    %8 = arith.divf %6, %7 : vector<1x128xf32>
    %9 = arith.mulf %2, %2 : vector<16x128xf32>
    %cst_9 = arith.constant dense<0.000000e+00> : vector<128xf32>
    %10 = vector.multi_reduction <add>, %9, %cst_9 [0] : vector<16x128xf32> to vector<128xf32>
    %11 = vector.shape_cast %10 : vector<128xf32> to vector<1x128xf32>
    %cst_10 = arith.constant 8.000000e+00 : f32
    %12 = vector.broadcast %cst_10 : f32 to vector<1x128xf32>
    %13 = arith.divf %11, %12 : vector<1x128xf32>
    %14 = arith.mulf %8, %8 : vector<1x128xf32>
    %15 = arith.subf %13, %14 : vector<1x128xf32>
    %cst_11 = arith.constant 0.000000e+00 : f32
    %16 = vector.broadcast %cst_11 : f32 to vector<1x128xf32>
    %17 = arith.maximumf %15, %16 : vector<1x128xf32>
    %18 = vector.broadcast %8 : vector<1x128xf32> to vector<16x128xf32>
    %19 = arith.subf %2, %18 : vector<16x128xf32>
    %cst_12 = arith.constant 9.99999974E-6 : f32
    %20 = vector.broadcast %cst_12 : f32 to vector<1x128xf32>
    %21 = arith.addf %17, %20 : vector<1x128xf32>
    %22 = math.rsqrt %21 : vector<1x128xf32>
    %23 = vector.broadcast %22 : vector<1x128xf32> to vector<16x128xf32>
    %24 = arith.mulf %19, %23 : vector<16x128xf32>
    %25 = vector.broadcast %3 : vector<1x128xf32> to vector<16x128xf32>
    %26 = arith.mulf %24, %25 : vector<16x128xf32>
    %27 = vector.broadcast %4 : vector<1x128xf32> to vector<16x128xf32>
    %28 = arith.addf %26, %27 : vector<16x128xf32>
    %c0_13 = arith.constant 0 : index
    %c0_14 = arith.constant 0 : index
    %29 = vector.load %arg4[%c0_13, %c0_14] : memref<16x128xbf16, #tpu.memory_space<vmem>>, vector<16x128xbf16>
    %30 = arith.extf %29 : vector<16x128xbf16> to vector<16x128xf32>
    %31 = arith.addf %28, %30 : vector<16x128xf32>
    %cst_15 = arith.constant 0.000000e+00 : f32
    %32 = vector.broadcast %cst_15 : f32 to vector<16x128xf32>
    %33 = arith.maximumf %31, %32 : vector<16x128xf32>
    %34 = arith.truncf %33 : vector<16x128xf32> to vector<16x128xbf16>
    %c0_16 = arith.constant 0 : index
    %c0_17 = arith.constant 0 : index
    %35 = vector.load %arg5[%c0_16, %c0_17] : memref<16x128xbf16, #tpu.memory_space<vmem>>, vector<16x128xbf16>
    tpu.vector_store %arg5[%c0_16, %c0_17], %34 {strides = array<i32>} : memref<16x128xbf16, #tpu.memory_space<vmem>>, vector<16x128xbf16>,
    return
  }
}

module attributes {stable_mosaic.version = 11 : i64} {
  func.func @_conv_bn_kernel(%arg0: memref<16x1152xbf16, #tpu.memory_space<vmem>>, %arg1: memref<1152x256xbf16, #tpu.memory_space<vmem>>, %arg2: memref<1x256xf32, #tpu.memory_space<vmem>>, %arg3: memref<1x256xf32, #tpu.memory_space<vmem>>, %arg4: memref<16x256xbf16, #tpu.memory_space<vmem>>) attributes {dimension_semantics = [], scalar_prefetch = 0 : i64, scratch_operands = 0 : i64, tpu.core_type = #tpu.core_type<tc>} {
    %c0 = arith.constant 0 : index
    %c0_0 = arith.constant 0 : index
    %0 = vector.load %arg0[%c0, %c0_0] : memref<16x1152xbf16, #tpu.memory_space<vmem>>, vector<16x1152xbf16>
    %c0_1 = arith.constant 0 : index
    %c0_2 = arith.constant 0 : index
    %1 = vector.load %arg1[%c0_1, %c0_2] : memref<1152x256xbf16, #tpu.memory_space<vmem>>, vector<1152x256xbf16>
    %cst = arith.constant dense<0.000000e+00> : vector<16x256xf32>
    %2 = tpu.matmul %0, %1, %cst {dimension_numbers = #tpu.dot_dimension_numbers<[1], [0], [0], [1], [0, 0, 1, 1], [], []>} : vector<16x1152xbf16>, vector<1152x256xbf16>, vector<16x256xf32> -> vector<16x256xf32>
    %c0_3 = arith.constant 0 : index
    %c0_4 = arith.constant 0 : index
    %3 = vector.load %arg2[%c0_3, %c0_4] : memref<1x256xf32, #tpu.memory_space<vmem>>, vector<1x256xf32>
    %c0_5 = arith.constant 0 : index
    %c0_6 = arith.constant 0 : index
    %4 = vector.load %arg3[%c0_5, %c0_6] : memref<1x256xf32, #tpu.memory_space<vmem>>, vector<1x256xf32>
    %cst_7 = arith.constant dense<0.000000e+00> : vector<256xf32>
    %5 = vector.multi_reduction <add>, %2, %cst_7 [0] : vector<16x256xf32> to vector<256xf32>
    %6 = vector.shape_cast %5 : vector<256xf32> to vector<1x256xf32>
    %cst_8 = arith.constant 2.000000e+00 : f32
    %7 = vector.broadcast %cst_8 : f32 to vector<1x256xf32>
    %8 = arith.divf %6, %7 : vector<1x256xf32>
    %9 = arith.mulf %2, %2 : vector<16x256xf32>
    %cst_9 = arith.constant dense<0.000000e+00> : vector<256xf32>
    %10 = vector.multi_reduction <add>, %9, %cst_9 [0] : vector<16x256xf32> to vector<256xf32>
    %11 = vector.shape_cast %10 : vector<256xf32> to vector<1x256xf32>
    %cst_10 = arith.constant 2.000000e+00 : f32
    %12 = vector.broadcast %cst_10 : f32 to vector<1x256xf32>
    %13 = arith.divf %11, %12 : vector<1x256xf32>
    %14 = arith.mulf %8, %8 : vector<1x256xf32>
    %15 = arith.subf %13, %14 : vector<1x256xf32>
    %cst_11 = arith.constant 0.000000e+00 : f32
    %16 = vector.broadcast %cst_11 : f32 to vector<1x256xf32>
    %17 = arith.maximumf %15, %16 : vector<1x256xf32>
    %18 = vector.broadcast %8 : vector<1x256xf32> to vector<16x256xf32>
    %19 = arith.subf %2, %18 : vector<16x256xf32>
    %cst_12 = arith.constant 9.99999974E-6 : f32
    %20 = vector.broadcast %cst_12 : f32 to vector<1x256xf32>
    %21 = arith.addf %17, %20 : vector<1x256xf32>
    %22 = math.rsqrt %21 : vector<1x256xf32>
    %23 = vector.broadcast %22 : vector<1x256xf32> to vector<16x256xf32>
    %24 = arith.mulf %19, %23 : vector<16x256xf32>
    %25 = vector.broadcast %3 : vector<1x256xf32> to vector<16x256xf32>
    %26 = arith.mulf %24, %25 : vector<16x256xf32>
    %27 = vector.broadcast %4 : vector<1x256xf32> to vector<16x256xf32>
    %28 = arith.addf %26, %27 : vector<16x256xf32>
    %cst_13 = arith.constant 0.000000e+00 : f32
    %29 = vector.broadcast %cst_13 : f32 to vector<16x256xf32>
    %30 = arith.maximumf %28, %29 : vector<16x256xf32>
    %31 = arith.truncf %30 : vector<16x256xf32> to vector<16x256xbf16>
    %c0_14 = arith.constant 0 : index
    %c0_15 = arith.constant 0 : index
    %32 = vector.load %arg4[%c0_14, %c0_15] : memref<16x256xbf16, #tpu.memory_space<vmem>>, vector<16x256xbf16>
    tpu.vector_store %arg4[%c0_14, %c0_15], %31 {strides = array<i32>} : memref<16x256xbf16, #tpu.memory_space<vmem>>, vector<16x256xbf16>,
    return
  }
}

module attributes {stable_mosaic.version = 11 : i64} {
  func.func @_conv_ds_bn_add_relu_kernel(%arg0: memref<16x256xbf16, #tpu.memory_space<vmem>>, %arg1: memref<256x256xbf16, #tpu.memory_space<vmem>>, %arg2: memref<1x256xf32, #tpu.memory_space<vmem>>, %arg3: memref<1x256xf32, #tpu.memory_space<vmem>>, %arg4: memref<16x128xbf16, #tpu.memory_space<vmem>>, %arg5: memref<128x256xbf16, #tpu.memory_space<vmem>>, %arg6: memref<1x256xf32, #tpu.memory_space<vmem>>, %arg7: memref<1x256xf32, #tpu.memory_space<vmem>>, %arg8: memref<16x256xbf16, #tpu.memory_space<vmem>>) attributes {dimension_semantics = [], scalar_prefetch = 0 : i64, scratch_operands = 0 : i64, tpu.core_type = #tpu.core_type<tc>} {
    %c0 = arith.constant 0 : index
    %c0_0 = arith.constant 0 : index
    %0 = vector.load %arg0[%c0, %c0_0] : memref<16x256xbf16, #tpu.memory_space<vmem>>, vector<16x256xbf16>
    %c0_1 = arith.constant 0 : index
    %c0_2 = arith.constant 0 : index
    %1 = vector.load %arg1[%c0_1, %c0_2] : memref<256x256xbf16, #tpu.memory_space<vmem>>, vector<256x256xbf16>
    %cst = arith.constant dense<0.000000e+00> : vector<16x256xf32>
    %2 = tpu.matmul %0, %1, %cst {dimension_numbers = #tpu.dot_dimension_numbers<[1], [0], [0], [1], [0, 0, 1, 1], [], []>} : vector<16x256xbf16>, vector<256x256xbf16>, vector<16x256xf32> -> vector<16x256xf32>
    %c0_3 = arith.constant 0 : index
    %c0_4 = arith.constant 0 : index
    %3 = vector.load %arg2[%c0_3, %c0_4] : memref<1x256xf32, #tpu.memory_space<vmem>>, vector<1x256xf32>
    %c0_5 = arith.constant 0 : index
    %c0_6 = arith.constant 0 : index
    %4 = vector.load %arg3[%c0_5, %c0_6] : memref<1x256xf32, #tpu.memory_space<vmem>>, vector<1x256xf32>
    %cst_7 = arith.constant dense<0.000000e+00> : vector<256xf32>
    %5 = vector.multi_reduction <add>, %2, %cst_7 [0] : vector<16x256xf32> to vector<256xf32>
    %6 = vector.shape_cast %5 : vector<256xf32> to vector<1x256xf32>
    %cst_8 = arith.constant 2.000000e+00 : f32
    %7 = vector.broadcast %cst_8 : f32 to vector<1x256xf32>
    %8 = arith.divf %6, %7 : vector<1x256xf32>
    %9 = arith.mulf %2, %2 : vector<16x256xf32>
    %cst_9 = arith.constant dense<0.000000e+00> : vector<256xf32>
    %10 = vector.multi_reduction <add>, %9, %cst_9 [0] : vector<16x256xf32> to vector<256xf32>
    %11 = vector.shape_cast %10 : vector<256xf32> to vector<1x256xf32>
    %cst_10 = arith.constant 2.000000e+00 : f32
    %12 = vector.broadcast %cst_10 : f32 to vector<1x256xf32>
    %13 = arith.divf %11, %12 : vector<1x256xf32>
    %14 = arith.mulf %8, %8 : vector<1x256xf32>
    %15 = arith.subf %13, %14 : vector<1x256xf32>
    %cst_11 = arith.constant 0.000000e+00 : f32
    %16 = vector.broadcast %cst_11 : f32 to vector<1x256xf32>
    %17 = arith.maximumf %15, %16 : vector<1x256xf32>
    %18 = vector.broadcast %8 : vector<1x256xf32> to vector<16x256xf32>
    %19 = arith.subf %2, %18 : vector<16x256xf32>
    %cst_12 = arith.constant 9.99999974E-6 : f32
    %20 = vector.broadcast %cst_12 : f32 to vector<1x256xf32>
    %21 = arith.addf %17, %20 : vector<1x256xf32>
    %22 = math.rsqrt %21 : vector<1x256xf32>
    %23 = vector.broadcast %22 : vector<1x256xf32> to vector<16x256xf32>
    %24 = arith.mulf %19, %23 : vector<16x256xf32>
    %25 = vector.broadcast %3 : vector<1x256xf32> to vector<16x256xf32>
    %26 = arith.mulf %24, %25 : vector<16x256xf32>
    %27 = vector.broadcast %4 : vector<1x256xf32> to vector<16x256xf32>
    %28 = arith.addf %26, %27 : vector<16x256xf32>
    %c0_13 = arith.constant 0 : index
    %c0_14 = arith.constant 0 : index
    %29 = vector.load %arg4[%c0_13, %c0_14] : memref<16x128xbf16, #tpu.memory_space<vmem>>, vector<16x128xbf16>
    %c0_15 = arith.constant 0 : index
    %c0_16 = arith.constant 0 : index
    %30 = vector.load %arg5[%c0_15, %c0_16] : memref<128x256xbf16, #tpu.memory_space<vmem>>, vector<128x256xbf16>
    %cst_17 = arith.constant dense<0.000000e+00> : vector<16x256xf32>
    %31 = tpu.matmul %29, %30, %cst_17 {dimension_numbers = #tpu.dot_dimension_numbers<[1], [0], [0], [1], [0, 0, 1, 1], [], []>} : vector<16x128xbf16>, vector<128x256xbf16>, vector<16x256xf32> -> vector<16x256xf32>
    %c0_18 = arith.constant 0 : index
    %c0_19 = arith.constant 0 : index
    %32 = vector.load %arg6[%c0_18, %c0_19] : memref<1x256xf32, #tpu.memory_space<vmem>>, vector<1x256xf32>
    %c0_20 = arith.constant 0 : index
    %c0_21 = arith.constant 0 : index
    %33 = vector.load %arg7[%c0_20, %c0_21] : memref<1x256xf32, #tpu.memory_space<vmem>>, vector<1x256xf32>
    %cst_22 = arith.constant dense<0.000000e+00> : vector<256xf32>
    %34 = vector.multi_reduction <add>, %31, %cst_22 [0] : vector<16x256xf32> to vector<256xf32>
    %35 = vector.shape_cast %34 : vector<256xf32> to vector<1x256xf32>
    %cst_23 = arith.constant 2.000000e+00 : f32
    %36 = vector.broadcast %cst_23 : f32 to vector<1x256xf32>
    %37 = arith.divf %35, %36 : vector<1x256xf32>
    %38 = arith.mulf %31, %31 : vector<16x256xf32>
    %cst_24 = arith.constant dense<0.000000e+00> : vector<256xf32>
    %39 = vector.multi_reduction <add>, %38, %cst_24 [0] : vector<16x256xf32> to vector<256xf32>
    %40 = vector.shape_cast %39 : vector<256xf32> to vector<1x256xf32>
    %cst_25 = arith.constant 2.000000e+00 : f32
    %41 = vector.broadcast %cst_25 : f32 to vector<1x256xf32>
    %42 = arith.divf %40, %41 : vector<1x256xf32>
    %43 = arith.mulf %37, %37 : vector<1x256xf32>
    %44 = arith.subf %42, %43 : vector<1x256xf32>
    %cst_26 = arith.constant 0.000000e+00 : f32
    %45 = vector.broadcast %cst_26 : f32 to vector<1x256xf32>
    %46 = arith.maximumf %44, %45 : vector<1x256xf32>
    %47 = vector.broadcast %37 : vector<1x256xf32> to vector<16x256xf32>
    %48 = arith.subf %31, %47 : vector<16x256xf32>
    %cst_27 = arith.constant 9.99999974E-6 : f32
    %49 = vector.broadcast %cst_27 : f32 to vector<1x256xf32>
    %50 = arith.addf %46, %49 : vector<1x256xf32>
    %51 = math.rsqrt %50 : vector<1x256xf32>
    %52 = vector.broadcast %51 : vector<1x256xf32> to vector<16x256xf32>
    %53 = arith.mulf %48, %52 : vector<16x256xf32>
    %54 = vector.broadcast %32 : vector<1x256xf32> to vector<16x256xf32>
    %55 = arith.mulf %53, %54 : vector<16x256xf32>
    %56 = vector.broadcast %33 : vector<1x256xf32> to vector<16x256xf32>
    %57 = arith.addf %55, %56 : vector<16x256xf32>
    %58 = arith.addf %28, %57 : vector<16x256xf32>
    %cst_28 = arith.constant 0.000000e+00 : f32
    %59 = vector.broadcast %cst_28 : f32 to vector<16x256xf32>
    %60 = arith.maximumf %58, %59 : vector<16x256xf32>
    %61 = arith.truncf %60 : vector<16x256xf32> to vector<16x256xbf16>
    %c0_29 = arith.constant 0 : index
    %c0_30 = arith.constant 0 : index
    %62 = vector.load %arg8[%c0_29, %c0_30] : memref<16x256xbf16, #tpu.memory_space<vmem>>, vector<16x256xbf16>
    tpu.vector_store %arg8[%c0_29, %c0_30], %61 {strides = array<i32>} : memref<16x256xbf16, #tpu.memory_space<vmem>>, vector<16x256xbf16>,
    return
  }
}

module attributes {stable_mosaic.version = 11 : i64} {
  func.func @_conv_bn_kernel(%arg0: memref<16x256xbf16, #tpu.memory_space<vmem>>, %arg1: memref<256x256xbf16, #tpu.memory_space<vmem>>, %arg2: memref<1x256xf32, #tpu.memory_space<vmem>>, %arg3: memref<1x256xf32, #tpu.memory_space<vmem>>, %arg4: memref<16x256xbf16, #tpu.memory_space<vmem>>) attributes {dimension_semantics = [], scalar_prefetch = 0 : i64, scratch_operands = 0 : i64, tpu.core_type = #tpu.core_type<tc>} {
    %c0 = arith.constant 0 : index
    %c0_0 = arith.constant 0 : index
    %0 = vector.load %arg0[%c0, %c0_0] : memref<16x256xbf16, #tpu.memory_space<vmem>>, vector<16x256xbf16>
    %c0_1 = arith.constant 0 : index
    %c0_2 = arith.constant 0 : index
    %1 = vector.load %arg1[%c0_1, %c0_2] : memref<256x256xbf16, #tpu.memory_space<vmem>>, vector<256x256xbf16>
    %cst = arith.constant dense<0.000000e+00> : vector<16x256xf32>
    %2 = tpu.matmul %0, %1, %cst {dimension_numbers = #tpu.dot_dimension_numbers<[1], [0], [0], [1], [0, 0, 1, 1], [], []>} : vector<16x256xbf16>, vector<256x256xbf16>, vector<16x256xf32> -> vector<16x256xf32>
    %c0_3 = arith.constant 0 : index
    %c0_4 = arith.constant 0 : index
    %3 = vector.load %arg2[%c0_3, %c0_4] : memref<1x256xf32, #tpu.memory_space<vmem>>, vector<1x256xf32>
    %c0_5 = arith.constant 0 : index
    %c0_6 = arith.constant 0 : index
    %4 = vector.load %arg3[%c0_5, %c0_6] : memref<1x256xf32, #tpu.memory_space<vmem>>, vector<1x256xf32>
    %cst_7 = arith.constant dense<0.000000e+00> : vector<256xf32>
    %5 = vector.multi_reduction <add>, %2, %cst_7 [0] : vector<16x256xf32> to vector<256xf32>
    %6 = vector.shape_cast %5 : vector<256xf32> to vector<1x256xf32>
    %cst_8 = arith.constant 2.000000e+00 : f32
    %7 = vector.broadcast %cst_8 : f32 to vector<1x256xf32>
    %8 = arith.divf %6, %7 : vector<1x256xf32>
    %9 = arith.mulf %2, %2 : vector<16x256xf32>
    %cst_9 = arith.constant dense<0.000000e+00> : vector<256xf32>
    %10 = vector.multi_reduction <add>, %9, %cst_9 [0] : vector<16x256xf32> to vector<256xf32>
    %11 = vector.shape_cast %10 : vector<256xf32> to vector<1x256xf32>
    %cst_10 = arith.constant 2.000000e+00 : f32
    %12 = vector.broadcast %cst_10 : f32 to vector<1x256xf32>
    %13 = arith.divf %11, %12 : vector<1x256xf32>
    %14 = arith.mulf %8, %8 : vector<1x256xf32>
    %15 = arith.subf %13, %14 : vector<1x256xf32>
    %cst_11 = arith.constant 0.000000e+00 : f32
    %16 = vector.broadcast %cst_11 : f32 to vector<1x256xf32>
    %17 = arith.maximumf %15, %16 : vector<1x256xf32>
    %18 = vector.broadcast %8 : vector<1x256xf32> to vector<16x256xf32>
    %19 = arith.subf %2, %18 : vector<16x256xf32>
    %cst_12 = arith.constant 9.99999974E-6 : f32
    %20 = vector.broadcast %cst_12 : f32 to vector<1x256xf32>
    %21 = arith.addf %17, %20 : vector<1x256xf32>
    %22 = math.rsqrt %21 : vector<1x256xf32>
    %23 = vector.broadcast %22 : vector<1x256xf32> to vector<16x256xf32>
    %24 = arith.mulf %19, %23 : vector<16x256xf32>
    %25 = vector.broadcast %3 : vector<1x256xf32> to vector<16x256xf32>
    %26 = arith.mulf %24, %25 : vector<16x256xf32>
    %27 = vector.broadcast %4 : vector<1x256xf32> to vector<16x256xf32>
    %28 = arith.addf %26, %27 : vector<16x256xf32>
    %cst_13 = arith.constant 0.000000e+00 : f32
    %29 = vector.broadcast %cst_13 : f32 to vector<16x256xf32>
    %30 = arith.maximumf %28, %29 : vector<16x256xf32>
    %31 = arith.truncf %30 : vector<16x256xf32> to vector<16x256xbf16>
    %c0_14 = arith.constant 0 : index
    %c0_15 = arith.constant 0 : index
    %32 = vector.load %arg4[%c0_14, %c0_15] : memref<16x256xbf16, #tpu.memory_space<vmem>>, vector<16x256xbf16>
    tpu.vector_store %arg4[%c0_14, %c0_15], %31 {strides = array<i32>} : memref<16x256xbf16, #tpu.memory_space<vmem>>, vector<16x256xbf16>,
    return
  }
}

module attributes {stable_mosaic.version = 11 : i64} {
  func.func @_conv_bn_add_relu_kernel(%arg0: memref<16x256xbf16, #tpu.memory_space<vmem>>, %arg1: memref<256x256xbf16, #tpu.memory_space<vmem>>, %arg2: memref<1x256xf32, #tpu.memory_space<vmem>>, %arg3: memref<1x256xf32, #tpu.memory_space<vmem>>, %arg4: memref<16x256xbf16, #tpu.memory_space<vmem>>, %arg5: memref<16x256xbf16, #tpu.memory_space<vmem>>) attributes {dimension_semantics = [], scalar_prefetch = 0 : i64, scratch_operands = 0 : i64, tpu.core_type = #tpu.core_type<tc>} {
    %c0 = arith.constant 0 : index
    %c0_0 = arith.constant 0 : index
    %0 = vector.load %arg0[%c0, %c0_0] : memref<16x256xbf16, #tpu.memory_space<vmem>>, vector<16x256xbf16>
    %c0_1 = arith.constant 0 : index
    %c0_2 = arith.constant 0 : index
    %1 = vector.load %arg1[%c0_1, %c0_2] : memref<256x256xbf16, #tpu.memory_space<vmem>>, vector<256x256xbf16>
    %cst = arith.constant dense<0.000000e+00> : vector<16x256xf32>
    %2 = tpu.matmul %0, %1, %cst {dimension_numbers = #tpu.dot_dimension_numbers<[1], [0], [0], [1], [0, 0, 1, 1], [], []>} : vector<16x256xbf16>, vector<256x256xbf16>, vector<16x256xf32> -> vector<16x256xf32>
    %c0_3 = arith.constant 0 : index
    %c0_4 = arith.constant 0 : index
    %3 = vector.load %arg2[%c0_3, %c0_4] : memref<1x256xf32, #tpu.memory_space<vmem>>, vector<1x256xf32>
    %c0_5 = arith.constant 0 : index
    %c0_6 = arith.constant 0 : index
    %4 = vector.load %arg3[%c0_5, %c0_6] : memref<1x256xf32, #tpu.memory_space<vmem>>, vector<1x256xf32>
    %cst_7 = arith.constant dense<0.000000e+00> : vector<256xf32>
    %5 = vector.multi_reduction <add>, %2, %cst_7 [0] : vector<16x256xf32> to vector<256xf32>
    %6 = vector.shape_cast %5 : vector<256xf32> to vector<1x256xf32>
    %cst_8 = arith.constant 2.000000e+00 : f32
    %7 = vector.broadcast %cst_8 : f32 to vector<1x256xf32>
    %8 = arith.divf %6, %7 : vector<1x256xf32>
    %9 = arith.mulf %2, %2 : vector<16x256xf32>
    %cst_9 = arith.constant dense<0.000000e+00> : vector<256xf32>
    %10 = vector.multi_reduction <add>, %9, %cst_9 [0] : vector<16x256xf32> to vector<256xf32>
    %11 = vector.shape_cast %10 : vector<256xf32> to vector<1x256xf32>
    %cst_10 = arith.constant 2.000000e+00 : f32
    %12 = vector.broadcast %cst_10 : f32 to vector<1x256xf32>
    %13 = arith.divf %11, %12 : vector<1x256xf32>
    %14 = arith.mulf %8, %8 : vector<1x256xf32>
    %15 = arith.subf %13, %14 : vector<1x256xf32>
    %cst_11 = arith.constant 0.000000e+00 : f32
    %16 = vector.broadcast %cst_11 : f32 to vector<1x256xf32>
    %17 = arith.maximumf %15, %16 : vector<1x256xf32>
    %18 = vector.broadcast %8 : vector<1x256xf32> to vector<16x256xf32>
    %19 = arith.subf %2, %18 : vector<16x256xf32>
    %cst_12 = arith.constant 9.99999974E-6 : f32
    %20 = vector.broadcast %cst_12 : f32 to vector<1x256xf32>
    %21 = arith.addf %17, %20 : vector<1x256xf32>
    %22 = math.rsqrt %21 : vector<1x256xf32>
    %23 = vector.broadcast %22 : vector<1x256xf32> to vector<16x256xf32>
    %24 = arith.mulf %19, %23 : vector<16x256xf32>
    %25 = vector.broadcast %3 : vector<1x256xf32> to vector<16x256xf32>
    %26 = arith.mulf %24, %25 : vector<16x256xf32>
    %27 = vector.broadcast %4 : vector<1x256xf32> to vector<16x256xf32>
    %28 = arith.addf %26, %27 : vector<16x256xf32>
    %c0_13 = arith.constant 0 : index
    %c0_14 = arith.constant 0 : index
    %29 = vector.load %arg4[%c0_13, %c0_14] : memref<16x256xbf16, #tpu.memory_space<vmem>>, vector<16x256xbf16>
    %30 = arith.extf %29 : vector<16x256xbf16> to vector<16x256xf32>
    %31 = arith.addf %28, %30 : vector<16x256xf32>
    %cst_15 = arith.constant 0.000000e+00 : f32
    %32 = vector.broadcast %cst_15 : f32 to vector<16x256xf32>
    %33 = arith.maximumf %31, %32 : vector<16x256xf32>
    %34 = arith.truncf %33 : vector<16x256xf32> to vector<16x256xbf16>
    %c0_16 = arith.constant 0 : index
    %c0_17 = arith.constant 0 : index
    %35 = vector.load %arg5[%c0_16, %c0_17] : memref<16x256xbf16, #tpu.memory_space<vmem>>, vector<16x256xbf16>
    tpu.vector_store %arg5[%c0_16, %c0_17], %34 {strides = array<i32>} : memref<16x256xbf16, #tpu.memory_space<vmem>>, vector<16x256xbf16>,
    return
  }
}

module attributes {stable_mosaic.version = 11 : i64} {
  func.func @_conv_bn_kernel(%arg0: memref<16x256xbf16, #tpu.memory_space<vmem>>, %arg1: memref<256x512xbf16, #tpu.memory_space<vmem>>, %arg2: memref<1x512xf32, #tpu.memory_space<vmem>>, %arg3: memref<1x512xf32, #tpu.memory_space<vmem>>, %arg4: memref<16x512xbf16, #tpu.memory_space<vmem>>) attributes {dimension_semantics = [], scalar_prefetch = 0 : i64, scratch_operands = 0 : i64, tpu.core_type = #tpu.core_type<tc>} {
    %c0 = arith.constant 0 : index
    %c0_0 = arith.constant 0 : index
    %0 = vector.load %arg0[%c0, %c0_0] : memref<16x256xbf16, #tpu.memory_space<vmem>>, vector<16x256xbf16>
    %c0_1 = arith.constant 0 : index
    %c0_2 = arith.constant 0 : index
    %1 = vector.load %arg1[%c0_1, %c0_2] : memref<256x512xbf16, #tpu.memory_space<vmem>>, vector<256x512xbf16>
    %cst = arith.constant dense<0.000000e+00> : vector<16x512xf32>
    %2 = tpu.matmul %0, %1, %cst {dimension_numbers = #tpu.dot_dimension_numbers<[1], [0], [0], [1], [0, 0, 1, 1], [], []>} : vector<16x256xbf16>, vector<256x512xbf16>, vector<16x512xf32> -> vector<16x512xf32>
    %c0_3 = arith.constant 0 : index
    %c0_4 = arith.constant 0 : index
    %3 = vector.load %arg2[%c0_3, %c0_4] : memref<1x512xf32, #tpu.memory_space<vmem>>, vector<1x512xf32>
    %c0_5 = arith.constant 0 : index
    %c0_6 = arith.constant 0 : index
    %4 = vector.load %arg3[%c0_5, %c0_6] : memref<1x512xf32, #tpu.memory_space<vmem>>, vector<1x512xf32>
    %cst_7 = arith.constant dense<0.000000e+00> : vector<512xf32>
    %5 = vector.multi_reduction <add>, %2, %cst_7 [0] : vector<16x512xf32> to vector<512xf32>
    %6 = vector.shape_cast %5 : vector<512xf32> to vector<1x512xf32>
    %cst_8 = arith.constant 2.000000e+00 : f32
    %7 = vector.broadcast %cst_8 : f32 to vector<1x512xf32>
    %8 = arith.divf %6, %7 : vector<1x512xf32>
    %9 = arith.mulf %2, %2 : vector<16x512xf32>
    %cst_9 = arith.constant dense<0.000000e+00> : vector<512xf32>
    %10 = vector.multi_reduction <add>, %9, %cst_9 [0] : vector<16x512xf32> to vector<512xf32>
    %11 = vector.shape_cast %10 : vector<512xf32> to vector<1x512xf32>
    %cst_10 = arith.constant 2.000000e+00 : f32
    %12 = vector.broadcast %cst_10 : f32 to vector<1x512xf32>
    %13 = arith.divf %11, %12 : vector<1x512xf32>
    %14 = arith.mulf %8, %8 : vector<1x512xf32>
    %15 = arith.subf %13, %14 : vector<1x512xf32>
    %cst_11 = arith.constant 0.000000e+00 : f32
    %16 = vector.broadcast %cst_11 : f32 to vector<1x512xf32>
    %17 = arith.maximumf %15, %16 : vector<1x512xf32>
    %18 = vector.broadcast %8 : vector<1x512xf32> to vector<16x512xf32>
    %19 = arith.subf %2, %18 : vector<16x512xf32>
    %cst_12 = arith.constant 9.99999974E-6 : f32
    %20 = vector.broadcast %cst_12 : f32 to vector<1x512xf32>
    %21 = arith.addf %17, %20 : vector<1x512xf32>
    %22 = math.rsqrt %21 : vector<1x512xf32>
    %23 = vector.broadcast %22 : vector<1x512xf32> to vector<16x512xf32>
    %24 = arith.mulf %19, %23 : vector<16x512xf32>
    %25 = vector.broadcast %3 : vector<1x512xf32> to vector<16x512xf32>
    %26 = arith.mulf %24, %25 : vector<16x512xf32>
    %27 = vector.broadcast %4 : vector<1x512xf32> to vector<16x512xf32>
    %28 = arith.addf %26, %27 : vector<16x512xf32>
    %cst_13 = arith.constant 0.000000e+00 : f32
    %29 = vector.broadcast %cst_13 : f32 to vector<16x512xf32>
    %30 = arith.maximumf %28, %29 : vector<16x512xf32>
    %31 = arith.truncf %30 : vector<16x512xf32> to vector<16x512xbf16>
    %c0_14 = arith.constant 0 : index
    %c0_15 = arith.constant 0 : index
    %32 = vector.load %arg4[%c0_14, %c0_15] : memref<16x512xbf16, #tpu.memory_space<vmem>>, vector<16x512xbf16>
    tpu.vector_store %arg4[%c0_14, %c0_15], %31 {strides = array<i32>} : memref<16x512xbf16, #tpu.memory_space<vmem>>, vector<16x512xbf16>,
    return
  }
}

module attributes {stable_mosaic.version = 11 : i64} {
  func.func @_conv_ds_bn_add_relu_kernel(%arg0: memref<16x512xbf16, #tpu.memory_space<vmem>>, %arg1: memref<512x512xbf16, #tpu.memory_space<vmem>>, %arg2: memref<1x512xf32, #tpu.memory_space<vmem>>, %arg3: memref<1x512xf32, #tpu.memory_space<vmem>>, %arg4: memref<16x256xbf16, #tpu.memory_space<vmem>>, %arg5: memref<256x512xbf16, #tpu.memory_space<vmem>>, %arg6: memref<1x512xf32, #tpu.memory_space<vmem>>, %arg7: memref<1x512xf32, #tpu.memory_space<vmem>>, %arg8: memref<16x512xbf16, #tpu.memory_space<vmem>>) attributes {dimension_semantics = [], scalar_prefetch = 0 : i64, scratch_operands = 0 : i64, tpu.core_type = #tpu.core_type<tc>} {
    %c0 = arith.constant 0 : index
    %c0_0 = arith.constant 0 : index
    %0 = vector.load %arg0[%c0, %c0_0] : memref<16x512xbf16, #tpu.memory_space<vmem>>, vector<16x512xbf16>
    %c0_1 = arith.constant 0 : index
    %c0_2 = arith.constant 0 : index
    %1 = vector.load %arg1[%c0_1, %c0_2] : memref<512x512xbf16, #tpu.memory_space<vmem>>, vector<512x512xbf16>
    %cst = arith.constant dense<0.000000e+00> : vector<16x512xf32>
    %2 = tpu.matmul %0, %1, %cst {dimension_numbers = #tpu.dot_dimension_numbers<[1], [0], [0], [1], [0, 0, 1, 1], [], []>} : vector<16x512xbf16>, vector<512x512xbf16>, vector<16x512xf32> -> vector<16x512xf32>
    %c0_3 = arith.constant 0 : index
    %c0_4 = arith.constant 0 : index
    %3 = vector.load %arg2[%c0_3, %c0_4] : memref<1x512xf32, #tpu.memory_space<vmem>>, vector<1x512xf32>
    %c0_5 = arith.constant 0 : index
    %c0_6 = arith.constant 0 : index
    %4 = vector.load %arg3[%c0_5, %c0_6] : memref<1x512xf32, #tpu.memory_space<vmem>>, vector<1x512xf32>
    %cst_7 = arith.constant dense<0.000000e+00> : vector<512xf32>
    %5 = vector.multi_reduction <add>, %2, %cst_7 [0] : vector<16x512xf32> to vector<512xf32>
    %6 = vector.shape_cast %5 : vector<512xf32> to vector<1x512xf32>
    %cst_8 = arith.constant 2.000000e+00 : f32
    %7 = vector.broadcast %cst_8 : f32 to vector<1x512xf32>
    %8 = arith.divf %6, %7 : vector<1x512xf32>
    %9 = arith.mulf %2, %2 : vector<16x512xf32>
    %cst_9 = arith.constant dense<0.000000e+00> : vector<512xf32>
    %10 = vector.multi_reduction <add>, %9, %cst_9 [0] : vector<16x512xf32> to vector<512xf32>
    %11 = vector.shape_cast %10 : vector<512xf32> to vector<1x512xf32>
    %cst_10 = arith.constant 2.000000e+00 : f32
    %12 = vector.broadcast %cst_10 : f32 to vector<1x512xf32>
    %13 = arith.divf %11, %12 : vector<1x512xf32>
    %14 = arith.mulf %8, %8 : vector<1x512xf32>
    %15 = arith.subf %13, %14 : vector<1x512xf32>
    %cst_11 = arith.constant 0.000000e+00 : f32
    %16 = vector.broadcast %cst_11 : f32 to vector<1x512xf32>
    %17 = arith.maximumf %15, %16 : vector<1x512xf32>
    %18 = vector.broadcast %8 : vector<1x512xf32> to vector<16x512xf32>
    %19 = arith.subf %2, %18 : vector<16x512xf32>
    %cst_12 = arith.constant 9.99999974E-6 : f32
    %20 = vector.broadcast %cst_12 : f32 to vector<1x512xf32>
    %21 = arith.addf %17, %20 : vector<1x512xf32>
    %22 = math.rsqrt %21 : vector<1x512xf32>
    %23 = vector.broadcast %22 : vector<1x512xf32> to vector<16x512xf32>
    %24 = arith.mulf %19, %23 : vector<16x512xf32>
    %25 = vector.broadcast %3 : vector<1x512xf32> to vector<16x512xf32>
    %26 = arith.mulf %24, %25 : vector<16x512xf32>
    %27 = vector.broadcast %4 : vector<1x512xf32> to vector<16x512xf32>
    %28 = arith.addf %26, %27 : vector<16x512xf32>
    %c0_13 = arith.constant 0 : index
    %c0_14 = arith.constant 0 : index
    %29 = vector.load %arg4[%c0_13, %c0_14] : memref<16x256xbf16, #tpu.memory_space<vmem>>, vector<16x256xbf16>
    %c0_15 = arith.constant 0 : index
    %c0_16 = arith.constant 0 : index
    %30 = vector.load %arg5[%c0_15, %c0_16] : memref<256x512xbf16, #tpu.memory_space<vmem>>, vector<256x512xbf16>
    %cst_17 = arith.constant dense<0.000000e+00> : vector<16x512xf32>
    %31 = tpu.matmul %29, %30, %cst_17 {dimension_numbers = #tpu.dot_dimension_numbers<[1], [0], [0], [1], [0, 0, 1, 1], [], []>} : vector<16x256xbf16>, vector<256x512xbf16>, vector<16x512xf32> -> vector<16x512xf32>
    %c0_18 = arith.constant 0 : index
    %c0_19 = arith.constant 0 : index
    %32 = vector.load %arg6[%c0_18, %c0_19] : memref<1x512xf32, #tpu.memory_space<vmem>>, vector<1x512xf32>
    %c0_20 = arith.constant 0 : index
    %c0_21 = arith.constant 0 : index
    %33 = vector.load %arg7[%c0_20, %c0_21] : memref<1x512xf32, #tpu.memory_space<vmem>>, vector<1x512xf32>
    %cst_22 = arith.constant dense<0.000000e+00> : vector<512xf32>
    %34 = vector.multi_reduction <add>, %31, %cst_22 [0] : vector<16x512xf32> to vector<512xf32>
    %35 = vector.shape_cast %34 : vector<512xf32> to vector<1x512xf32>
    %cst_23 = arith.constant 2.000000e+00 : f32
    %36 = vector.broadcast %cst_23 : f32 to vector<1x512xf32>
    %37 = arith.divf %35, %36 : vector<1x512xf32>
    %38 = arith.mulf %31, %31 : vector<16x512xf32>
    %cst_24 = arith.constant dense<0.000000e+00> : vector<512xf32>
    %39 = vector.multi_reduction <add>, %38, %cst_24 [0] : vector<16x512xf32> to vector<512xf32>
    %40 = vector.shape_cast %39 : vector<512xf32> to vector<1x512xf32>
    %cst_25 = arith.constant 2.000000e+00 : f32
    %41 = vector.broadcast %cst_25 : f32 to vector<1x512xf32>
    %42 = arith.divf %40, %41 : vector<1x512xf32>
    %43 = arith.mulf %37, %37 : vector<1x512xf32>
    %44 = arith.subf %42, %43 : vector<1x512xf32>
    %cst_26 = arith.constant 0.000000e+00 : f32
    %45 = vector.broadcast %cst_26 : f32 to vector<1x512xf32>
    %46 = arith.maximumf %44, %45 : vector<1x512xf32>
    %47 = vector.broadcast %37 : vector<1x512xf32> to vector<16x512xf32>
    %48 = arith.subf %31, %47 : vector<16x512xf32>
    %cst_27 = arith.constant 9.99999974E-6 : f32
    %49 = vector.broadcast %cst_27 : f32 to vector<1x512xf32>
    %50 = arith.addf %46, %49 : vector<1x512xf32>
    %51 = math.rsqrt %50 : vector<1x512xf32>
    %52 = vector.broadcast %51 : vector<1x512xf32> to vector<16x512xf32>
    %53 = arith.mulf %48, %52 : vector<16x512xf32>
    %54 = vector.broadcast %32 : vector<1x512xf32> to vector<16x512xf32>
    %55 = arith.mulf %53, %54 : vector<16x512xf32>
    %56 = vector.broadcast %33 : vector<1x512xf32> to vector<16x512xf32>
    %57 = arith.addf %55, %56 : vector<16x512xf32>
    %58 = arith.addf %28, %57 : vector<16x512xf32>
    %cst_28 = arith.constant 0.000000e+00 : f32
    %59 = vector.broadcast %cst_28 : f32 to vector<16x512xf32>
    %60 = arith.maximumf %58, %59 : vector<16x512xf32>
    %61 = arith.truncf %60 : vector<16x512xf32> to vector<16x512xbf16>
    %c0_29 = arith.constant 0 : index
    %c0_30 = arith.constant 0 : index
    %62 = vector.load %arg8[%c0_29, %c0_30] : memref<16x512xbf16, #tpu.memory_space<vmem>>, vector<16x512xbf16>
    tpu.vector_store %arg8[%c0_29, %c0_30], %61 {strides = array<i32>} : memref<16x512xbf16, #tpu.memory_space<vmem>>, vector<16x512xbf16>,
    return
  }
}

module attributes {stable_mosaic.version = 11 : i64} {
  func.func @_conv_bn_kernel(%arg0: memref<16x512xbf16, #tpu.memory_space<vmem>>, %arg1: memref<512x512xbf16, #tpu.memory_space<vmem>>, %arg2: memref<1x512xf32, #tpu.memory_space<vmem>>, %arg3: memref<1x512xf32, #tpu.memory_space<vmem>>, %arg4: memref<16x512xbf16, #tpu.memory_space<vmem>>) attributes {dimension_semantics = [], scalar_prefetch = 0 : i64, scratch_operands = 0 : i64, tpu.core_type = #tpu.core_type<tc>} {
    %c0 = arith.constant 0 : index
    %c0_0 = arith.constant 0 : index
    %0 = vector.load %arg0[%c0, %c0_0] : memref<16x512xbf16, #tpu.memory_space<vmem>>, vector<16x512xbf16>
    %c0_1 = arith.constant 0 : index
    %c0_2 = arith.constant 0 : index
    %1 = vector.load %arg1[%c0_1, %c0_2] : memref<512x512xbf16, #tpu.memory_space<vmem>>, vector<512x512xbf16>
    %cst = arith.constant dense<0.000000e+00> : vector<16x512xf32>
    %2 = tpu.matmul %0, %1, %cst {dimension_numbers = #tpu.dot_dimension_numbers<[1], [0], [0], [1], [0, 0, 1, 1], [], []>} : vector<16x512xbf16>, vector<512x512xbf16>, vector<16x512xf32> -> vector<16x512xf32>
    %c0_3 = arith.constant 0 : index
    %c0_4 = arith.constant 0 : index
    %3 = vector.load %arg2[%c0_3, %c0_4] : memref<1x512xf32, #tpu.memory_space<vmem>>, vector<1x512xf32>
    %c0_5 = arith.constant 0 : index
    %c0_6 = arith.constant 0 : index
    %4 = vector.load %arg3[%c0_5, %c0_6] : memref<1x512xf32, #tpu.memory_space<vmem>>, vector<1x512xf32>
    %cst_7 = arith.constant dense<0.000000e+00> : vector<512xf32>
    %5 = vector.multi_reduction <add>, %2, %cst_7 [0] : vector<16x512xf32> to vector<512xf32>
    %6 = vector.shape_cast %5 : vector<512xf32> to vector<1x512xf32>
    %cst_8 = arith.constant 2.000000e+00 : f32
    %7 = vector.broadcast %cst_8 : f32 to vector<1x512xf32>
    %8 = arith.divf %6, %7 : vector<1x512xf32>
    %9 = arith.mulf %2, %2 : vector<16x512xf32>
    %cst_9 = arith.constant dense<0.000000e+00> : vector<512xf32>
    %10 = vector.multi_reduction <add>, %9, %cst_9 [0] : vector<16x512xf32> to vector<512xf32>
    %11 = vector.shape_cast %10 : vector<512xf32> to vector<1x512xf32>
    %cst_10 = arith.constant 2.000000e+00 : f32
    %12 = vector.broadcast %cst_10 : f32 to vector<1x512xf32>
    %13 = arith.divf %11, %12 : vector<1x512xf32>
    %14 = arith.mulf %8, %8 : vector<1x512xf32>
    %15 = arith.subf %13, %14 : vector<1x512xf32>
    %cst_11 = arith.constant 0.000000e+00 : f32
    %16 = vector.broadcast %cst_11 : f32 to vector<1x512xf32>
    %17 = arith.maximumf %15, %16 : vector<1x512xf32>
    %18 = vector.broadcast %8 : vector<1x512xf32> to vector<16x512xf32>
    %19 = arith.subf %2, %18 : vector<16x512xf32>
    %cst_12 = arith.constant 9.99999974E-6 : f32
    %20 = vector.broadcast %cst_12 : f32 to vector<1x512xf32>
    %21 = arith.addf %17, %20 : vector<1x512xf32>
    %22 = math.rsqrt %21 : vector<1x512xf32>
    %23 = vector.broadcast %22 : vector<1x512xf32> to vector<16x512xf32>
    %24 = arith.mulf %19, %23 : vector<16x512xf32>
    %25 = vector.broadcast %3 : vector<1x512xf32> to vector<16x512xf32>
    %26 = arith.mulf %24, %25 : vector<16x512xf32>
    %27 = vector.broadcast %4 : vector<1x512xf32> to vector<16x512xf32>
    %28 = arith.addf %26, %27 : vector<16x512xf32>
    %cst_13 = arith.constant 0.000000e+00 : f32
    %29 = vector.broadcast %cst_13 : f32 to vector<16x512xf32>
    %30 = arith.maximumf %28, %29 : vector<16x512xf32>
    %31 = arith.truncf %30 : vector<16x512xf32> to vector<16x512xbf16>
    %c0_14 = arith.constant 0 : index
    %c0_15 = arith.constant 0 : index
    %32 = vector.load %arg4[%c0_14, %c0_15] : memref<16x512xbf16, #tpu.memory_space<vmem>>, vector<16x512xbf16>
    tpu.vector_store %arg4[%c0_14, %c0_15], %31 {strides = array<i32>} : memref<16x512xbf16, #tpu.memory_space<vmem>>, vector<16x512xbf16>,
    return
  }
}

module attributes {stable_mosaic.version = 11 : i64} {
  func.func @_conv_bn_add_relu_kernel(%arg0: memref<16x512xbf16, #tpu.memory_space<vmem>>, %arg1: memref<512x512xbf16, #tpu.memory_space<vmem>>, %arg2: memref<1x512xf32, #tpu.memory_space<vmem>>, %arg3: memref<1x512xf32, #tpu.memory_space<vmem>>, %arg4: memref<16x512xbf16, #tpu.memory_space<vmem>>, %arg5: memref<16x512xbf16, #tpu.memory_space<vmem>>) attributes {dimension_semantics = [], scalar_prefetch = 0 : i64, scratch_operands = 0 : i64, tpu.core_type = #tpu.core_type<tc>} {
    %c0 = arith.constant 0 : index
    %c0_0 = arith.constant 0 : index
    %0 = vector.load %arg0[%c0, %c0_0] : memref<16x512xbf16, #tpu.memory_space<vmem>>, vector<16x512xbf16>
    %c0_1 = arith.constant 0 : index
    %c0_2 = arith.constant 0 : index
    %1 = vector.load %arg1[%c0_1, %c0_2] : memref<512x512xbf16, #tpu.memory_space<vmem>>, vector<512x512xbf16>
    %cst = arith.constant dense<0.000000e+00> : vector<16x512xf32>
    %2 = tpu.matmul %0, %1, %cst {dimension_numbers = #tpu.dot_dimension_numbers<[1], [0], [0], [1], [0, 0, 1, 1], [], []>} : vector<16x512xbf16>, vector<512x512xbf16>, vector<16x512xf32> -> vector<16x512xf32>
    %c0_3 = arith.constant 0 : index
    %c0_4 = arith.constant 0 : index
    %3 = vector.load %arg2[%c0_3, %c0_4] : memref<1x512xf32, #tpu.memory_space<vmem>>, vector<1x512xf32>
    %c0_5 = arith.constant 0 : index
    %c0_6 = arith.constant 0 : index
    %4 = vector.load %arg3[%c0_5, %c0_6] : memref<1x512xf32, #tpu.memory_space<vmem>>, vector<1x512xf32>
    %cst_7 = arith.constant dense<0.000000e+00> : vector<512xf32>
    %5 = vector.multi_reduction <add>, %2, %cst_7 [0] : vector<16x512xf32> to vector<512xf32>
    %6 = vector.shape_cast %5 : vector<512xf32> to vector<1x512xf32>
    %cst_8 = arith.constant 2.000000e+00 : f32
    %7 = vector.broadcast %cst_8 : f32 to vector<1x512xf32>
    %8 = arith.divf %6, %7 : vector<1x512xf32>
    %9 = arith.mulf %2, %2 : vector<16x512xf32>
    %cst_9 = arith.constant dense<0.000000e+00> : vector<512xf32>
    %10 = vector.multi_reduction <add>, %9, %cst_9 [0] : vector<16x512xf32> to vector<512xf32>
    %11 = vector.shape_cast %10 : vector<512xf32> to vector<1x512xf32>
    %cst_10 = arith.constant 2.000000e+00 : f32
    %12 = vector.broadcast %cst_10 : f32 to vector<1x512xf32>
    %13 = arith.divf %11, %12 : vector<1x512xf32>
    %14 = arith.mulf %8, %8 : vector<1x512xf32>
    %15 = arith.subf %13, %14 : vector<1x512xf32>
    %cst_11 = arith.constant 0.000000e+00 : f32
    %16 = vector.broadcast %cst_11 : f32 to vector<1x512xf32>
    %17 = arith.maximumf %15, %16 : vector<1x512xf32>
    %18 = vector.broadcast %8 : vector<1x512xf32> to vector<16x512xf32>
    %19 = arith.subf %2, %18 : vector<16x512xf32>
    %cst_12 = arith.constant 9.99999974E-6 : f32
    %20 = vector.broadcast %cst_12 : f32 to vector<1x512xf32>
    %21 = arith.addf %17, %20 : vector<1x512xf32>
    %22 = math.rsqrt %21 : vector<1x512xf32>
    %23 = vector.broadcast %22 : vector<1x512xf32> to vector<16x512xf32>
    %24 = arith.mulf %19, %23 : vector<16x512xf32>
    %25 = vector.broadcast %3 : vector<1x512xf32> to vector<16x512xf32>
    %26 = arith.mulf %24, %25 : vector<16x512xf32>
    %27 = vector.broadcast %4 : vector<1x512xf32> to vector<16x512xf32>
    %28 = arith.addf %26, %27 : vector<16x512xf32>
    %c0_13 = arith.constant 0 : index
    %c0_14 = arith.constant 0 : index
    %29 = vector.load %arg4[%c0_13, %c0_14] : memref<16x512xbf16, #tpu.memory_space<vmem>>, vector<16x512xbf16>
    %30 = arith.extf %29 : vector<16x512xbf16> to vector<16x512xf32>
    %31 = arith.addf %28, %30 : vector<16x512xf32>
    %cst_15 = arith.constant 0.000000e+00 : f32
    %32 = vector.broadcast %cst_15 : f32 to vector<16x512xf32>
    %33 = arith.maximumf %31, %32 : vector<16x512xf32>
    %34 = arith.truncf %33 : vector<16x512xf32> to vector<16x512xbf16>
    %c0_16 = arith.constant 0 : index
    %c0_17 = arith.constant 0 : index
    %35 = vector.load %arg5[%c0_16, %c0_17] : memref<16x512xbf16, #tpu.memory_space<vmem>>, vector<16x512xbf16>
    tpu.vector_store %arg5[%c0_16, %c0_17], %34 {strides = array<i32>} : memref<16x512xbf16, #tpu.memory_space<vmem>>, vector<16x512xbf16>,
    return
  }
}

module attributes {stable_mosaic.version = 11 : i64} {
  func.func @_head_kernel(%arg0: memref<8x8x512xf32, #tpu.memory_space<vmem>>, %arg1: memref<512x128xf32, #tpu.memory_space<vmem>>, %arg2: memref<1x128xf32, #tpu.memory_space<vmem>>, %arg3: memref<8x1xf32, #tpu.memory_space<vmem>>, %arg4: memref<8x128xf32, #tpu.memory_space<vmem>>) attributes {dimension_semantics = [], scalar_prefetch = 0 : i64, scratch_operands = 0 : i64, tpu.core_type = #tpu.core_type<tc>} {
    %c0 = arith.constant 0 : index
    %c0_0 = arith.constant 0 : index
    %c0_1 = arith.constant 0 : index
    %0 = vector.load %arg0[%c0, %c0_0, %c0_1] : memref<8x8x512xf32, #tpu.memory_space<vmem>>, vector<8x8x512xf32>
    %cst = arith.constant dense<0.000000e+00> : vector<8x512xf32>
    %1 = vector.multi_reduction <add>, %0, %cst [1] : vector<8x8x512xf32> to vector<8x512xf32>
    %cst_2 = arith.constant 1.000000e+00 : f32
    %2 = vector.broadcast %cst_2 : f32 to vector<8x512xf32>
    %3 = arith.divf %1, %2 : vector<8x512xf32>
    %c0_3 = arith.constant 0 : index
    %c0_4 = arith.constant 0 : index
    %4 = vector.load %arg1[%c0_3, %c0_4] : memref<512x128xf32, #tpu.memory_space<vmem>>, vector<512x128xf32>
    %cst_5 = arith.constant dense<0.000000e+00> : vector<8x128xf32>
    %5 = tpu.matmul %3, %4, %cst_5 {dimension_numbers = #tpu.dot_dimension_numbers<[1], [0], [0], [1], [0, 0, 1, 1], [], []>} : vector<8x512xf32>, vector<512x128xf32>, vector<8x128xf32> -> vector<8x128xf32>
    %c0_6 = arith.constant 0 : index
    %c0_7 = arith.constant 0 : index
    %6 = vector.load %arg2[%c0_6, %c0_7] : memref<1x128xf32, #tpu.memory_space<vmem>>, vector<1x128xf32>
    %7 = vector.broadcast %6 : vector<1x128xf32> to vector<8x128xf32>
    %8 = arith.addf %5, %7 : vector<8x128xf32>
    %c0_8 = arith.constant 0 : index
    %c0_9 = arith.constant 0 : index
    %9 = vector.load %arg3[%c0_8, %c0_9] : memref<8x1xf32, #tpu.memory_space<vmem>>, vector<8x1xf32>
    %cst_10 = arith.constant 1.000000e-01 : f32
    %10 = vector.broadcast %cst_10 : f32 to vector<8x1xf32>
    %11 = arith.maximumf %9, %10 : vector<8x1xf32>
    %12 = vector.broadcast %11 : vector<8x1xf32> to vector<8x128xf32>
    %13 = arith.divf %8, %12 : vector<8x128xf32>
    %c0_11 = arith.constant 0 : index
    %c0_12 = arith.constant 0 : index
    %14 = vector.load %arg4[%c0_11, %c0_12] : memref<8x128xf32, #tpu.memory_space<vmem>>, vector<8x128xf32>
    tpu.vector_store %arg4[%c0_11, %c0_12], %13 {strides = array<i32>} : memref<8x128xf32, #tpu.memory_space<vmem>>, vector<8x128xf32>,
    return
  }
}

</mosaic_0001>

<llo_original>
// kernel: resnet18_forward.18
$region0: #{resnet18_forward.18}
  #allocation0 [shape = 'u32[]', space=smem, size = 0x4, offset = 0x4, fixed_abs, tag = 'smem constant byte address 0x4 - core index']
  #allocation1 [shape = 'u32[144,128]{1,0:T(1,128)}', space=vmem, size = 0x12000, scoped, tag = 'internal scratch']
  %s0 = inlined_call_operand.vmem [shape: bf16[128,128], index: 0, kind: input, shape index: {}]
  %s1 = inlined_call_operand.vmem [shape: bf16[128,128], index: 1, kind: input, shape index: {}]
  %s2 = inlined_call_operand.vmem [shape: f32[1,128], index: 2, kind: input, shape index: {}]
  %s3 = inlined_call_operand.vmem [shape: f32[1,128], index: 3, kind: input, shape index: {}]
  %s4 = inlined_call_operand.vmem [shape: bf16[128,128], index: 4, kind: output, shape index: {}]
  %s5 = sld [smem:[#allocation0]]
  $region26: #{resnet18_forward.18} parent=0
    _
  %s7 = ssub.s32 1, %s5
  %s8 = scalar_select 0, %s7, %s5
  // Predicated region
  $region2: #{resnet18_forward.18} parent=0 // pred_check
    _
  $region3: #{resnet18_forward.18} parent=0 // pred_check_branch
    %10 = sbr.rel (0) target = $region5
  $region4: #{resnet18_forward.18} parent=0 // pred_region
    _
  $region5: #{resnet18_forward.18} parent=0 // pred_fallthru
    _
  // Predicated region
  $region6: #{resnet18_forward.18} parent=0 // pred_check
    _
  $region7: #{resnet18_forward.18} parent=0 // pred_check_branch
    %12 = sbr.rel (0) target = $region9
  $region8: #{resnet18_forward.18} parent=0 // pred_region
    _
  $region9: #{resnet18_forward.18} parent=0 // pred_fallthru
    _
  // Predicated region
  $region10: #{resnet18_forward.18} parent=0 // pred_check
    _
  $region11: #{resnet18_forward.18} parent=0 // pred_check_branch
    %14 = sbr.rel (0) target = $region13
  $region12: #{resnet18_forward.18} parent=0 // pred_region
    _
  $region13: #{resnet18_forward.18} parent=0 // pred_fallthru
    _
  // Predicated region
  $region14: #{resnet18_forward.18} parent=0 // pred_check
    _
  $region15: #{resnet18_forward.18} parent=0 // pred_check_branch
    %16 = sbr.rel (0) target = $region17
  $region16: #{resnet18_forward.18} parent=0 // pred_region
    _
  $region17: #{resnet18_forward.18} parent=0 // pred_fallthru
    _
  %v18 = vld [vmem:[%s0] sm:$0xf]
  %v19 = vld [vmem:[%s0 + $0x4] sm:$0xf]
  %v20 = vld [vmem:[%s0 + $0x8] sm:$0xf]
  %v21 = vld [vmem:[%s0 + $0xc] sm:$0xf]
  %v22 = vld [vmem:[%s0 + $0x10] sm:$0xf]
  %v23 = vld [vmem:[%s0 + $0x14] sm:$0xf]
  %v24 = vld [vmem:[%s0 + $0x18] sm:$0xf]
  %v25 = vld [vmem:[%s0 + $0x1c] sm:$0xf]
  %v26 = vld [vmem:[%s0 + $0x20] sm:$0xf]
  %v27 = vld [vmem:[%s0 + $0x24] sm:$0xf]
  %v28 = vld [vmem:[%s0 + $0x28] sm:$0xf]
  %v29 = vld [vmem:[%s0 + $0x2c] sm:$0xf]
  %v30 = vld [vmem:[%s0 + $0x30] sm:$0xf]
  %v31 = vld [vmem:[%s0 + $0x34] sm:$0xf]
  %v32 = vld [vmem:[%s0 + $0x38] sm:$0xf]
  %v33 = vld [vmem:[%s0 + $0x3c] sm:$0xf]
  %v34 = vld [vmem:[%s1] sm:$0xf]
  %v35 = vld [vmem:[%s1 + $0x4] sm:$0xf]
  %v36 = vld [vmem:[%s1 + $0x8] sm:$0xf]
  %v37 = vld [vmem:[%s1 + $0xc] sm:$0xf]
  %v38 = vld [vmem:[%s1 + $0x10] sm:$0xf]
  %v39 = vld [vmem:[%s1 + $0x14] sm:$0xf]
  %v40 = vld [vmem:[%s1 + $0x18] sm:$0xf]
  %v41 = vld [vmem:[%s1 + $0x1c] sm:$0xf]
  %v42 = vld [vmem:[%s1 + $0x20] sm:$0xf]
  %v43 = vld [vmem:[%s1 + $0x24] sm:$0xf]
  %v44 = vld [vmem:[%s1 + $0x28] sm:$0xf]
  %v45 = vld [vmem:[%s1 + $0x2c] sm:$0xf]
  %v46 = vld [vmem:[%s1 + $0x30] sm:$0xf]
  %v47 = vld [vmem:[%s1 + $0x34] sm:$0xf]
  %v48 = vld [vmem:[%s1 + $0x38] sm:$0xf]
  %v49 = vld [vmem:[%s1 + $0x3c] sm:$0xf]
  %v66 = vunpack.c.l.b16 %v18
  %v67 = vunpack.c.l.b16 %v19
  %v68 = vunpack.c.l.b16 %v20
  %v69 = vunpack.c.l.b16 %v21
  %v70 = vunpack.c.l.b16 %v22
  %v71 = vunpack.c.l.b16 %v23
  %v72 = vunpack.c.l.b16 %v24
  %v73 = vunpack.c.l.b16 %v25
  %v74 = vunpack.c.l.b16 %v26
  %v75 = vunpack.c.l.b16 %v27
  %v76 = vunpack.c.l.b16 %v28
  %v77 = vunpack.c.l.b16 %v29
  %v78 = vunpack.c.l.b16 %v30
  %v79 = vunpack.c.l.b16 %v31
  %v80 = vunpack.c.l.b16 %v32
  %v81 = vunpack.c.l.b16 %v33
  %v82 = vpack.c.b16 %v67, %v66
  %v83 = vpack.c.b16 %v69, %v68
  %v84 = vpack.c.b16 %v71, %v70
  %v85 = vpack.c.b16 %v73, %v72
  %v86 = vpack.c.b16 %v75, %v74
  %v87 = vpack.c.b16 %v77, %v76
  %v88 = vpack.c.b16 %v79, %v78
  %v89 = vpack.c.b16 %v81, %v80
  %v114 = vunpack.c.l.b16 %v34
  %v115 = vunpack.c.l.b16 %v35
  %v116 = vunpack.c.l.b16 %v36
  %v117 = vunpack.c.l.b16 %v37
  %v118 = vunpack.c.l.b16 %v38
  %v119 = vunpack.c.l.b16 %v39
  %v120 = vunpack.c.l.b16 %v40
  %v121 = vunpack.c.l.b16 %v41
  %v122 = vunpack.c.l.b16 %v42
  %v123 = vunpack.c.l.b16 %v43
  %v124 = vunpack.c.l.b16 %v44
  %v125 = vunpack.c.l.b16 %v45
  %v126 = vunpack.c.l.b16 %v46
  %v127 = vunpack.c.l.b16 %v47
  %v128 = vunpack.c.l.b16 %v48
  %v129 = vunpack.c.l.b16 %v49
  %v130 = vpack.c.b16 %v115, %v114
  %v131 = vpack.c.b16 %v117, %v116
  %v132 = vpack.c.b16 %v119, %v118
  %v133 = vpack.c.b16 %v121, %v120
  %v134 = vpack.c.b16 %v123, %v122
  %v135 = vpack.c.b16 %v125, %v124
  %v136 = vpack.c.b16 %v127, %v126
  %v137 = vpack.c.b16 %v129, %v128
  %146 = vmatprep.subr.bf16.mxu0 0
  %147 = vmatpush1.bf16.msra.mxu0 %v130
  %148 = vmatprep.subr.bf16.mxu0 0
  %149 = vmatpush1.bf16.msra.mxu0 %v131
  %150 = vmatprep.subr.bf16.mxu0 0
  %151 = vmatpush1.bf16.msra.mxu0 %v132
  %152 = vmatprep.subr.bf16.mxu0 0
  %153 = vmatpush1.bf16.msra.mxu0 %v133
  %154 = vmatprep.subr.bf16.mxu0 0
  %155 = vmatpush1.bf16.msra.mxu0 %v134
  %156 = vmatprep.subr.bf16.mxu0 0
  %157 = vmatpush1.bf16.msra.mxu0 %v135
  %158 = vmatprep.subr.bf16.mxu0 0
  %159 = vmatpush1.bf16.msra.mxu0 %v136
  %160 = vmatprep.subr.bf16.mxu0 0
  %161 = vmatpush1.bf16.msra.mxu0 %v137
  %162 = vmatprep.subr.bf16.mxu0 0
  %163 = vmatpush1.bf16.msra.mxu0 0
  %164 = vmatprep.subr.bf16.mxu0 0
  %165 = vmatpush1.bf16.msra.mxu0 0
  %166 = vmatprep.subr.bf16.mxu0 0
  %167 = vmatpush1.bf16.msra.mxu0 0
  %168 = vmatprep.subr.bf16.mxu0 0
  %169 = vmatpush1.bf16.msra.mxu0 0
  %170 = vmatprep.subr.bf16.mxu0 0
  %171 = vmatpush1.bf16.msra.mxu0 0
  %172 = vmatprep.subr.bf16.mxu0 0
  %173 = vmatpush1.bf16.msra.mxu0 0
  %174 = vmatprep.subr.bf16.mxu0 0
  %175 = vmatpush1.bf16.msra.mxu0 0
  %176 = vmatprep.subr.bf16.mxu0 0
  %177 = vmatpush1.bf16.msra.mxu0 0
  %178 = vmatprep.mubr.bf16.mxu0 0
  %179 = vmatmul.mubr.bf16.gmra.mrb[0].mxu0 %v82
  %v180 = vpop.f32.mrb[0].mxu0
  %v181 = vadd.f32 0.0, %v180
  %v182 = vpop.f32.mrb[0].mxu0
  %v183 = vpop.f32.mrb[0].mxu0
  %v184 = vadd.f32 0.0, %v183
  %v185 = vpop.f32.mrb[0].mxu0
  %186 = vmatprep.mubr.bf16.mxu0 0
  %187 = vmatmul.mubr.bf16.gmra.mrb[0].mxu0 %v83
  %v188 = vpop.f32.mrb[0].mxu0
  %v189 = vadd.f32 0.0, %v188
  %v190 = vpop.f32.mrb[0].mxu0
  %v191 = vpop.f32.mrb[0].mxu0
  %v192 = vadd.f32 0.0, %v191
  %v193 = vpop.f32.mrb[0].mxu0
  %194 = vmatprep.mubr.bf16.mxu0 0
  %195 = vmatmul.mubr.bf16.gmra.mrb[0].mxu0 %v84
  %v196 = vpop.f32.mrb[0].mxu0
  %v197 = vadd.f32 0.0, %v196
  %v198 = vpop.f32.mrb[0].mxu0
  %v199 = vpop.f32.mrb[0].mxu0
  %v200 = vadd.f32 0.0, %v199
  %v201 = vpop.f32.mrb[0].mxu0
  %202 = vmatprep.mubr.bf16.mxu0 0
  %203 = vmatmul.mubr.bf16.gmra.mrb[0].mxu0 %v85
  %v204 = vpop.f32.mrb[0].mxu0
  %v205 = vadd.f32 0.0, %v204
  %v206 = vpop.f32.mrb[0].mxu0
  %v207 = vpop.f32.mrb[0].mxu0
  %v208 = vadd.f32 0.0, %v207
  %v209 = vpop.f32.mrb[0].mxu0
  %210 = vmatprep.mubr.bf16.mxu0 0
  %211 = vmatmul.mubr.bf16.gmra.mrb[0].mxu0 %v86
  %v212 = vpop.f32.mrb[0].mxu0
  %v213 = vadd.f32 0.0, %v212
  %v214 = vpop.f32.mrb[0].mxu0
  %v215 = vpop.f32.mrb[0].mxu0
  %v216 = vadd.f32 0.0, %v215
  %v217 = vpop.f32.mrb[0].mxu0
  %218 = vmatprep.mubr.bf16.mxu0 0
  %219 = vmatmul.mubr.bf16.gmra.mrb[0].mxu0 %v87
  %v220 = vpop.f32.mrb[0].mxu0
  %v221 = vadd.f32 0.0, %v220
  %v222 = vpop.f32.mrb[0].mxu0
  %v223 = vpop.f32.mrb[0].mxu0
  %v224 = vadd.f32 0.0, %v223
  %v225 = vpop.f32.mrb[0].mxu0
  %226 = vmatprep.mubr.bf16.mxu0 0
  %227 = vmatmul.mubr.bf16.gmra.mrb[0].mxu0 %v88
  %v228 = vpop.f32.mrb[0].mxu0
  %v229 = vadd.f32 0.0, %v228
  %v230 = vpop.f32.mrb[0].mxu0
  %v231 = vpop.f32.mrb[0].mxu0
  %v232 = vadd.f32 0.0, %v231
  %v233 = vpop.f32.mrb[0].mxu0
  %234 = vmatprep.mubr.bf16.mxu0 0
  %235 = vmatmul.mubr.bf16.gmra.mrb[0].mxu0 %v89
  %v236 = vpop.f32.mrb[0].mxu0
  %v237 = vadd.f32 0.0, %v236
  %v238 = vpop.f32.mrb[0].mxu0
  %v239 = vpop.f32.mrb[0].mxu0
  %v240 = vadd.f32 0.0, %v239
  %v241 = vpop.f32.mrb[0].mxu0
  %242 = vdwg.mxu0
  %v243 = vld [vmem:[%s2] sm:$0x1]
  %v244 = vld [vmem:[%s3] sm:$0x1]
  %v245 = vadd.f32 %v181, %v184
  %v246 = vadd.f32 %v245, %v189
  %v247 = vadd.f32 %v246, %v192
  %v248 = vadd.f32 %v247, %v197
  %v249 = vadd.f32 %v248, %v200
  %v250 = vadd.f32 %v249, %v205
  %v251 = vadd.f32 %v250, %v208
  %v252 = vadd.f32 %v251, %v213
  %v253 = vadd.f32 %v252, %v216
  %v254 = vadd.f32 %v253, %v221
  %v255 = vadd.f32 %v254, %v224
  %v256 = vadd.f32 %v255, %v229
  %v257 = vadd.f32 %v256, %v232
  %v258 = vadd.f32 %v257, %v237
  %v259 = vadd.f32 %v258, %v240
  %v260 = vrot.slane %v259, 4
  %v261 = vadd.f32 %v259, %v260
  %v262 = vrot.slane %v261, 2
  %v263 = vadd.f32 %v261, %v262
  %v264 = vrot.slane %v263, 1
  %v265 = vadd.f32 %v263, %v264
  %v266 = vrcp.pop 128.0
  %v267 = vmul.f32 %v265, %v266
  %v268 = vmul.f32 %v181, %v181
  %v269 = vmul.f32 %v184, %v184
  %v270 = vmul.f32 %v189, %v189
  %v271 = vmul.f32 %v192, %v192
  %v272 = vmul.f32 %v197, %v197
  %v273 = vmul.f32 %v200, %v200
  %v274 = vmul.f32 %v205, %v205
  %v275 = vmul.f32 %v208, %v208
  %v276 = vmul.f32 %v213, %v213
  %v277 = vmul.f32 %v216, %v216
  %v278 = vmul.f32 %v221, %v221
  %v279 = vmul.f32 %v224, %v224
  %v280 = vmul.f32 %v229, %v229
  %v281 = vmul.f32 %v232, %v232
  %v282 = vmul.f32 %v237, %v237
  %v283 = vmul.f32 %v240, %v240
  %v284 = vadd.f32 %v268, %v269
  %v285 = vadd.f32 %v284, %v270
  %v286 = vadd.f32 %v285, %v271
  %v287 = vadd.f32 %v286, %v272
  %v288 = vadd.f32 %v287, %v273
  %v289 = vadd.f32 %v288, %v274
  %v290 = vadd.f32 %v289, %v275
  %v291 = vadd.f32 %v290, %v276
  %v292 = vadd.f32 %v291, %v277
  %v293 = vadd.f32 %v292, %v278
  %v294 = vadd.f32 %v293, %v279
  %v295 = vadd.f32 %v294, %v280
  %v296 = vadd.f32 %v295, %v281
  %v297 = vadd.f32 %v296, %v282
  %v298 = vadd.f32 %v297, %v283
  %v299 = vrot.slane %v298, 4
  %v300 = vadd.f32 %v298, %v299
  %v301 = vrot.slane %v300, 2
  %v302 = vadd.f32 %v300, %v301
  %v303 = vrot.slane %v302, 1
  %v304 = vadd.f32 %v302, %v303
  %v305 = vmul.f32 %v304, %v266
  %v306 = vmul.f32 %v267, %v267
  %v307 = vsub.f32 %v305, %v306
  %v308 = vmax.f32 %v307, 0.0
  %v309 = vsub.f32 %v181, %v267
  %v310 = vsub.f32 %v184, %v267
  %v311 = vsub.f32 %v189, %v267
  %v312 = vsub.f32 %v192, %v267
  %v313 = vsub.f32 %v197, %v267
  %v314 = vsub.f32 %v200, %v267
  %v315 = vsub.f32 %v205, %v267
  %v316 = vsub.f32 %v208, %v267
  %v317 = vsub.f32 %v213, %v267
  %v318 = vsub.f32 %v216, %v267
  %v319 = vsub.f32 %v221, %v267
  %v320 = vsub.f32 %v224, %v267
  %v321 = vsub.f32 %v229, %v267
  %v322 = vsub.f32 %v232, %v267
  %v323 = vsub.f32 %v237, %v267
  %v324 = vsub.f32 %v240, %v267
  %v325 = vadd.f32 %v308, 1e-05
  %v326 = vrsqrt.pop %v325
  %v327 = vmul.f32 %v309, %v326
  %v328 = vmul.f32 %v310, %v326
  %v329 = vmul.f32 %v311, %v326
  %v330 = vmul.f32 %v312, %v326
  %v331 = vmul.f32 %v313, %v326
  %v332 = vmul.f32 %v314, %v326
  %v333 = vmul.f32 %v315, %v326
  %v334 = vmul.f32 %v316, %v326
  %v335 = vmul.f32 %v317, %v326
  %v336 = vmul.f32 %v318, %v326
  %v337 = vmul.f32 %v319, %v326
  %v338 = vmul.f32 %v320, %v326
  %v339 = vmul.f32 %v321, %v326
  %v340 = vmul.f32 %v322, %v326
  %v341 = vmul.f32 %v323, %v326
  %v342 = vmul.f32 %v324, %v326
  %v344 = vlaneseq
  %v345 = vshrl.u32 %v344, 7
  %v346 = vsub.s32 0, %v345
  %v347 = vrot.slane %v243, %v346
  %v349 = vmul.f32 %v327, %v347
  %v350 = vmul.f32 %v328, %v347
  %v351 = vmul.f32 %v329, %v347
  %v352 = vmul.f32 %v330, %v347
  %v353 = vmul.f32 %v331, %v347
  %v354 = vmul.f32 %v332, %v347
  %v355 = vmul.f32 %v333, %v347
  %v356 = vmul.f32 %v334, %v347
  %v357 = vmul.f32 %v335, %v347
  %v358 = vmul.f32 %v336, %v347
  %v359 = vmul.f32 %v337, %v347
  %v360 = vmul.f32 %v338, %v347
  %v361 = vmul.f32 %v339, %v347
  %v362 = vmul.f32 %v340, %v347
  %v363 = vmul.f32 %v341, %v347
  %v364 = vmul.f32 %v342, %v347
  %v366 = vlaneseq
  %v367 = vshrl.u32 %v366, 7
  %v368 = vsub.s32 0, %v367
  %v369 = vrot.slane %v244, %v368
  %v371 = vadd.f32 %v349, %v369
  %v372 = vadd.f32 %v350, %v369
  %v373 = vadd.f32 %v351, %v369
  %v374 = vadd.f32 %v352, %v369
  %v375 = vadd.f32 %v353, %v369
  %v376 = vadd.f32 %v354, %v369
  %v377 = vadd.f32 %v355, %v369
  %v378 = vadd.f32 %v356, %v369
  %v379 = vadd.f32 %v357, %v369
  %v380 = vadd.f32 %v358, %v369
  %v381 = vadd.f32 %v359, %v369
  %v382 = vadd.f32 %v360, %v369
  %v383 = vadd.f32 %v361, %v369
  %v384 = vadd.f32 %v362, %v369
  %v385 = vadd.f32 %v363, %v369
  %v386 = vadd.f32 %v364, %v369
  %v387 = vmax.f32 %v371, 0.0
  %v388 = vmax.f32 %v372, 0.0
  %v389 = vmax.f32 %v373, 0.0
  %v390 = vmax.f32 %v374, 0.0
  %v391 = vmax.f32 %v375, 0.0
  %v392 = vmax.f32 %v376, 0.0
  %v393 = vmax.f32 %v377, 0.0
  %v394 = vmax.f32 %v378, 0.0
  %v395 = vmax.f32 %v379, 0.0
  %v396 = vmax.f32 %v380, 0.0
  %v397 = vmax.f32 %v381, 0.0
  %v398 = vmax.f32 %v382, 0.0
  %v399 = vmax.f32 %v383, 0.0
  %v400 = vmax.f32 %v384, 0.0
  %v401 = vmax.f32 %v385, 0.0
  %v402 = vmax.f32 %v386, 0.0
  %v403 = vpack.c.bf16 %v388, %v387
  %v404 = vpack.c.bf16 %v390, %v389
  %v405 = vpack.c.bf16 %v392, %v391
  %v406 = vpack.c.bf16 %v394, %v393
  %v407 = vpack.c.bf16 %v396, %v395
  %v408 = vpack.c.bf16 %v398, %v397
  %v409 = vpack.c.bf16 %v400, %v399
  %v410 = vpack.c.bf16 %v402, %v401
  %v419 = vunpack.c.l.b16 %v403
  %v420 = vunpack.c.h.b16 %v403
  %v421 = vunpack.c.l.b16 %v404
  %v422 = vunpack.c.h.b16 %v404
  %v423 = vunpack.c.l.b16 %v405
  %v424 = vunpack.c.h.b16 %v405
  %v425 = vunpack.c.l.b16 %v406
  %v426 = vunpack.c.h.b16 %v406
  %v427 = vunpack.c.l.b16 %v407
  %v428 = vunpack.c.h.b16 %v407
  %v429 = vunpack.c.l.b16 %v408
  %v430 = vunpack.c.h.b16 %v408
  %v431 = vunpack.c.l.b16 %v409
  %v432 = vunpack.c.h.b16 %v409
  %v433 = vunpack.c.l.b16 %v410
  %v434 = vunpack.c.h.b16 %v410
  %v435 = vpack.c.b16 %v419, %v419
  %v436 = vpack.c.b16 %v420, %v420
  %v437 = vpack.c.b16 %v421, %v421
  %v438 = vpack.c.b16 %v422, %v422
  %v439 = vpack.c.b16 %v423, %v423
  %v440 = vpack.c.b16 %v424, %v424
  %v441 = vpack.c.b16 %v425, %v425
  %v442 = vpack.c.b16 %v426, %v426
  %v443 = vpack.c.b16 %v427, %v427
  %v444 = vpack.c.b16 %v428, %v428
  %v445 = vpack.c.b16 %v429, %v429
  %v446 = vpack.c.b16 %v430, %v430
  %v447 = vpack.c.b16 %v431, %v431
  %v448 = vpack.c.b16 %v432, %v432
  %v449 = vpack.c.b16 %v433, %v433
  %v450 = vpack.c.b16 %v434, %v434
  %467 = vst [vmem:[%s4] sm:$0xf] %v435
  %468 = vst [vmem:[%s4 + $0x4] sm:$0xf] %v436
  %469 = vst [vmem:[%s4 + $0x8] sm:$0xf] %v437
  %470 = vst [vmem:[%s4 + $0xc] sm:$0xf] %v438
  %471 = vst [vmem:[%s4 + $0x10] sm:$0xf] %v439
  %472 = vst [vmem:[%s4 + $0x14] sm:$0xf] %v440
  %473 = vst [vmem:[%s4 + $0x18] sm:$0xf] %v441
  %474 = vst [vmem:[%s4 + $0x1c] sm:$0xf] %v442
  %475 = vst [vmem:[%s4 + $0x20] sm:$0xf] %v443
  %476 = vst [vmem:[%s4 + $0x24] sm:$0xf] %v444
  %477 = vst [vmem:[%s4 + $0x28] sm:$0xf] %v445
  %478 = vst [vmem:[%s4 + $0x2c] sm:$0xf] %v446
  %479 = vst [vmem:[%s4 + $0x30] sm:$0xf] %v447
  %480 = vst [vmem:[%s4 + $0x34] sm:$0xf] %v448
  %481 = vst [vmem:[%s4 + $0x38] sm:$0xf] %v449
  %482 = vst [vmem:[%s4 + $0x3c] sm:$0xf] %v450
  // Predicated region
  $region18: #{resnet18_forward.18} parent=0 // pred_check
    _
  $region19: #{resnet18_forward.18} parent=0 // pred_check_branch
    %484 = sbr.rel (0) target = $region21
  $region20: #{resnet18_forward.18} parent=0 // pred_region
    _
  $region21: #{resnet18_forward.18} parent=0 // pred_fallthru
    _
  // Predicated region
  $region22: #{resnet18_forward.18} parent=0 // pred_check
    _
  $region23: #{resnet18_forward.18} parent=0 // pred_check_branch
    %486 = sbr.rel (0) target = $region25
  $region24: #{resnet18_forward.18} parent=0 // pred_region
    _
  $region25: #{resnet18_forward.18} parent=0 // pred_fallthru
    _

// kernel: resnet18_forward.19
$region0: #{resnet18_forward.19}
  #allocation0 [shape = 'u32[]', space=smem, size = 0x4, offset = 0x4, fixed_abs, tag = 'smem constant byte address 0x4 - core index']
  #allocation1 [shape = 'u32[144,128]{1,0:T(1,128)}', space=vmem, size = 0x12000, scoped, tag = 'internal scratch']
  %s0 = inlined_call_operand.vmem [shape: bf16[32,640], index: 0, kind: input, shape index: {}]
  %s1 = inlined_call_operand.vmem [shape: bf16[640,128], index: 1, kind: input, shape index: {}]
  %s2 = inlined_call_operand.vmem [shape: f32[1,128], index: 2, kind: input, shape index: {}]
  %s3 = inlined_call_operand.vmem [shape: f32[1,128], index: 3, kind: input, shape index: {}]
  %s4 = inlined_call_operand.vmem [shape: bf16[32,128], index: 4, kind: output, shape index: {}]
  %s5 = sld [smem:[#allocation0]]
  $region26: #{resnet18_forward.19} parent=0
    _
  %s7 = ssub.s32 1, %s5
  %s8 = scalar_select 0, %s7, %s5
  // Predicated region
  $region2: #{resnet18_forward.19} parent=0 // pred_check
    _
  $region3: #{resnet18_forward.19} parent=0 // pred_check_branch
    %10 = sbr.rel (0) target = $region5
  $region4: #{resnet18_forward.19} parent=0 // pred_region
    _
  $region5: #{resnet18_forward.19} parent=0 // pred_fallthru
    _
  // Predicated region
  $region6: #{resnet18_forward.19} parent=0 // pred_check
    _
  $region7: #{resnet18_forward.19} parent=0 // pred_check_branch
    %12 = sbr.rel (0) target = $region9
  $region8: #{resnet18_forward.19} parent=0 // pred_region
    _
  $region9: #{resnet18_forward.19} parent=0 // pred_fallthru
    _
  // Predicated region
  $region10: #{resnet18_forward.19} parent=0 // pred_check
    _
  $region11: #{resnet18_forward.19} parent=0 // pred_check_branch
    %14 = sbr.rel (0) target = $region13
  $region12: #{resnet18_forward.19} parent=0 // pred_region
    _
  $region13: #{resnet18_forward.19} parent=0 // pred_fallthru
    _
  // Predicated region
  $region14: #{resnet18_forward.19} parent=0 // pred_check
    _
  $region15: #{resnet18_forward.19} parent=0 // pred_check_branch
    %16 = sbr.rel (0) target = $region17
  $region16: #{resnet18_forward.19} parent=0 // pred_region
    _
  $region17: #{resnet18_forward.19} parent=0 // pred_fallthru
    _
  %v18 = vld [vmem:[%s0] sm:$0xff]
  %v19 = vld [vmem:[%s0 + $0x8] sm:$0xff]
  %v20 = vld [vmem:[%s0 + $0x10] sm:$0xf]
  %v21 = vld [vmem:[%s0 + $0x14] sm:$0xff]
  %v22 = vld [vmem:[%s0 + $0x1c] sm:$0xff]
  %v23 = vld [vmem:[%s0 + $0x24] sm:$0xf]
  %v24 = vld [vmem:[%s0 + $0x28] sm:$0xff]
  %v25 = vld [vmem:[%s0 + $0x30] sm:$0xff]
  %v26 = vld [vmem:[%s0 + $0x38] sm:$0xf]
  %v27 = vld [vmem:[%s0 + $0x3c] sm:$0xff]
  %v28 = vld [vmem:[%s0 + $0x44] sm:$0xff]
  %v29 = vld [vmem:[%s0 + $0x4c] sm:$0xf]
  %v30 = vld [vmem:[%s1] sm:$0xf]
  %v31 = vld [vmem:[%s1 + $0x4] sm:$0xf]
  %v32 = vld [vmem:[%s1 + $0x8] sm:$0xf]
  %v33 = vld [vmem:[%s1 + $0xc] sm:$0xf]
  %v34 = vld [vmem:[%s1 + $0x10] sm:$0xf]
  %v35 = vld [vmem:[%s1 + $0x14] sm:$0xf]
  %v36 = vld [vmem:[%s1 + $0x18] sm:$0xf]
  %v37 = vld [vmem:[%s1 + $0x1c] sm:$0xf]
  %v38 = vld [vmem:[%s1 + $0x20] sm:$0xf]
  %v39 = vld [vmem:[%s1 + $0x24] sm:$0xf]
  %v40 = vld [vmem:[%s1 + $0x28] sm:$0xf]
  %v41 = vld [vmem:[%s1 + $0x2c] sm:$0xf]
  %v42 = vld [vmem:[%s1 + $0x30] sm:$0xf]
  %v43 = vld [vmem:[%s1 + $0x34] sm:$0xf]
  %v44 = vld [vmem:[%s1 + $0x38] sm:$0xf]
  %v45 = vld [vmem:[%s1 + $0x3c] sm:$0xf]
  %v46 = vld [vmem:[%s1 + $0x40] sm:$0xf]
  %v47 = vld [vmem:[%s1 + $0x44] sm:$0xf]
  %v48 = vld [vmem:[%s1 + $0x48] sm:$0xf]
  %v49 = vld [vmem:[%s1 + $0x4c] sm:$0xf]
  %v50 = vld [vmem:[%s1 + $0x50] sm:$0xf]
  %v51 = vld [vmem:[%s1 + $0x54] sm:$0xf]
  %v52 = vld [vmem:[%s1 + $0x58] sm:$0xf]
  %v53 = vld [vmem:[%s1 + $0x5c] sm:$0xf]
  %v54 = vld [vmem:[%s1 + $0x60] sm:$0xf]
  %v55 = vld [vmem:[%s1 + $0x64] sm:$0xf]
  %v56 = vld [vmem:[%s1 + $0x68] sm:$0xf]
  %v57 = vld [vmem:[%s1 + $0x6c] sm:$0xf]
  %v58 = vld [vmem:[%s1 + $0x70] sm:$0xf]
  %v59 = vld [vmem:[%s1 + $0x74] sm:$0xf]
  %v60 = vld [vmem:[%s1 + $0x78] sm:$0xf]
  %v61 = vld [vmem:[%s1 + $0x7c] sm:$0xf]
  %v62 = vld [vmem:[%s1 + $0x80] sm:$0xf]
  %v63 = vld [vmem:[%s1 + $0x84] sm:$0xf]
  %v64 = vld [vmem:[%s1 + $0x88] sm:$0xf]
  %v65 = vld [vmem:[%s1 + $0x8c] sm:$0xf]
  %v66 = vld [vmem:[%s1 + $0x90] sm:$0xf]
  %v67 = vld [vmem:[%s1 + $0x94] sm:$0xf]
  %v68 = vld [vmem:[%s1 + $0x98] sm:$0xf]
  %v69 = vld [vmem:[%s1 + $0x9c] sm:$0xf]
  %v70 = vld [vmem:[%s1 + $0xa0] sm:$0xf]
  %v71 = vld [vmem:[%s1 + $0xa4] sm:$0xf]
  %v72 = vld [vmem:[%s1 + $0xa8] sm:$0xf]
  %v73 = vld [vmem:[%s1 + $0xac] sm:$0xf]
  %v74 = vld [vmem:[%s1 + $0xb0] sm:$0xf]
  %v75 = vld [vmem:[%s1 + $0xb4] sm:$0xf]
  %v76 = vld [vmem:[%s1 + $0xb8] sm:$0xf]
  %v77 = vld [vmem:[%s1 + $0xbc] sm:$0xf]
  %v78 = vld [vmem:[%s1 + $0xc0] sm:$0xf]
  %v79 = vld [vmem:[%s1 + $0xc4] sm:$0xf]
  %v80 = vld [vmem:[%s1 + $0xc8] sm:$0xf]
  %v81 = vld [vmem:[%s1 + $0xcc] sm:$0xf]
  %v82 = vld [vmem:[%s1 + $0xd0] sm:$0xf]
  %v83 = vld [vmem:[%s1 + $0xd4] sm:$0xf]
  %v84 = vld [vmem:[%s1 + $0xd8] sm:$0xf]
  %v85 = vld [vmem:[%s1 + $0xdc] sm:$0xf]
  %v86 = vld [vmem:[%s1 + $0xe0] sm:$0xf]
  %v87 = vld [vmem:[%s1 + $0xe4] sm:$0xf]
  %v88 = vld [vmem:[%s1 + $0xe8] sm:$0xf]
  %v89 = vld [vmem:[%s1 + $0xec] sm:$0xf]
  %v90 = vld [vmem:[%s1 + $0xf0] sm:$0xf]
  %v91 = vld [vmem:[%s1 + $0xf4] sm:$0xf]
  %v92 = vld [vmem:[%s1 + $0xf8] sm:$0xf]
  %v93 = vld [vmem:[%s1 + $0xfc] sm:$0xf]
  %v94 = vld [vmem:[%s1 + $0x100] sm:$0xf]
  %v95 = vld [vmem:[%s1 + $0x104] sm:$0xf]
  %v96 = vld [vmem:[%s1 + $0x108] sm:$0xf]
  %v97 = vld [vmem:[%s1 + $0x10c] sm:$0xf]
  %v98 = vld [vmem:[%s1 + $0x110] sm:$0xf]
  %v99 = vld [vmem:[%s1 + $0x114] sm:$0xf]
  %v100 = vld [vmem:[%s1 + $0x118] sm:$0xf]
  %v101 = vld [vmem:[%s1 + $0x11c] sm:$0xf]
  %v102 = vld [vmem:[%s1 + $0x120] sm:$0xf]
  %v103 = vld [vmem:[%s1 + $0x124] sm:$0xf]
  %v104 = vld [vmem:[%s1 + $0x128] sm:$0xf]
  %v105 = vld [vmem:[%s1 + $0x12c] sm:$0xf]
  %v106 = vld [vmem:[%s1 + $0x130] sm:$0xf]
  %v107 = vld [vmem:[%s1 + $0x134] sm:$0xf]
  %v108 = vld [vmem:[%s1 + $0x138] sm:$0xf]
  %v109 = vld [vmem:[%s1 + $0x13c] sm:$0xf]
  %v122 = vunpack.c.l.b16 %v18
  %v123 = vunpack.c.h.b16 %v18
  %v124 = vunpack.c.l.b16 %v19
  %v125 = vunpack.c.h.b16 %v19
  %v126 = vunpack.c.l.b16 %v20
  %v127 = vunpack.c.l.b16 %v21
  %v128 = vunpack.c.h.b16 %v21
  %v129 = vunpack.c.l.b16 %v22
  %v130 = vunpack.c.h.b16 %v22
  %v131 = vunpack.c.l.b16 %v23
  %v132 = vunpack.c.l.b16 %v24
  %v133 = vunpack.c.h.b16 %v24
  %v134 = vunpack.c.l.b16 %v25
  %v135 = vunpack.c.h.b16 %v25
  %v136 = vunpack.c.l.b16 %v26
  %v137 = vunpack.c.l.b16 %v27
  %v138 = vunpack.c.h.b16 %v27
  %v139 = vunpack.c.l.b16 %v28
  %v140 = vunpack.c.h.b16 %v28
  %v141 = vunpack.c.l.b16 %v29
  %v142 = vpack.c.b16 %v127, %v122
  %v143 = vpack.c.b16 %v128, %v123
  %v144 = vpack.c.b16 %v129, %v124
  %v145 = vpack.c.b16 %v130, %v125
  %v146 = vpack.c.b16 %v131, %v126
  %v147 = vpack.c.b16 %v137, %v132
  %v148 = vpack.c.b16 %v138, %v133
  %v149 = vpack.c.b16 %v139, %v134
  %v150 = vpack.c.b16 %v140, %v135
  %v151 = vpack.c.b16 %v141, %v136
  %v242 = vunpack.c.l.b16 %v30
  %v243 = vunpack.c.l.b16 %v31
  %v244 = vunpack.c.l.b16 %v32
  %v245 = vunpack.c.l.b16 %v33
  %v246 = vunpack.c.l.b16 %v34
  %v247 = vunpack.c.l.b16 %v35
  %v248 = vunpack.c.l.b16 %v36
  %v249 = vunpack.c.l.b16 %v37
  %v250 = vunpack.c.l.b16 %v38
  %v251 = vunpack.c.l.b16 %v39
  %v252 = vunpack.c.l.b16 %v40
  %v253 = vunpack.c.l.b16 %v41
  %v254 = vunpack.c.l.b16 %v42
  %v255 = vunpack.c.l.b16 %v43
  %v256 = vunpack.c.l.b16 %v44
  %v257 = vunpack.c.l.b16 %v45
  %v258 = vunpack.c.l.b16 %v46
  %v259 = vunpack.c.l.b16 %v47
  %v260 = vunpack.c.l.b16 %v48
  %v261 = vunpack.c.l.b16 %v49
  %v262 = vunpack.c.l.b16 %v50
  %v263 = vunpack.c.l.b16 %v51
  %v264 = vunpack.c.l.b16 %v52
  %v265 = vunpack.c.l.b16 %v53
  %v266 = vunpack.c.l.b16 %v54
  %v267 = vunpack.c.l.b16 %v55
  %v268 = vunpack.c.l.b16 %v56
  %v269 = vunpack.c.l.b16 %v57
  %v270 = vunpack.c.l.b16 %v58
  %v271 = vunpack.c.l.b16 %v59
  %v272 = vunpack.c.l.b16 %v60
  %v273 = vunpack.c.l.b16 %v61
  %v274 = vunpack.c.l.b16 %v62
  %v275 = vunpack.c.l.b16 %v63
  %v276 = vunpack.c.l.b16 %v64
  %v277 = vunpack.c.l.b16 %v65
  %v278 = vunpack.c.l.b16 %v66
  %v279 = vunpack.c.l.b16 %v67
  %v280 = vunpack.c.l.b16 %v68
  %v281 = vunpack.c.l.b16 %v69
  %v282 = vunpack.c.l.b16 %v70
  %v283 = vunpack.c.l.b16 %v71
  %v284 = vunpack.c.l.b16 %v72
  %v285 = vunpack.c.l.b16 %v73
  %v286 = vunpack.c.l.b16 %v74
  %v287 = vunpack.c.l.b16 %v75
  %v288 = vunpack.c.l.b16 %v76
  %v289 = vunpack.c.l.b16 %v77
  %v290 = vunpack.c.l.b16 %v78
  %v291 = vunpack.c.l.b16 %v79
  %v292 = vunpack.c.l.b16 %v80
  %v293 = vunpack.c.l.b16 %v81
  %v294 = vunpack.c.l.b16 %v82
  %v295 = vunpack.c.l.b16 %v83
  %v296 = vunpack.c.l.b16 %v84
  %v297 = vunpack.c.l.b16 %v85
  %v298 = vunpack.c.l.b16 %v86
  %v299 = vunpack.c.l.b16 %v87
  %v300 = vunpack.c.l.b16 %v88
  %v301 = vunpack.c.l.b16 %v89
  %v302 = vunpack.c.l.b16 %v90
  %v303 = vunpack.c.l.b16 %v91
  %v304 = vunpack.c.l.b16 %v92
  %v305 = vunpack.c.l.b16 %v93
  %v306 = vunpack.c.l.b16 %v94
  %v307 = vunpack.c.l.b16 %v95
  %v308 = vunpack.c.l.b16 %v96
  %v309 = vunpack.c.l.b16 %v97
  %v310 = vunpack.c.l.b16 %v98
  %v311 = vunpack.c.l.b16 %v99
  %v312 = vunpack.c.l.b16 %v100
  %v313 = vunpack.c.l.b16 %v101
  %v314 = vunpack.c.l.b16 %v102
  %v315 = vunpack.c.l.b16 %v103
  %v316 = vunpack.c.l.b16 %v104
  %v317 = vunpack.c.l.b16 %v105
  %v318 = vunpack.c.l.b16 %v106
  %v319 = vunpack.c.l.b16 %v107
  %v320 = vunpack.c.l.b16 %v108
  %v321 = vunpack.c.l.b16 %v109
  %v322 = vpack.c.b16 %v243, %v242
  %v323 = vpack.c.b16 %v245, %v244
  %v324 = vpack.c.b16 %v247, %v246
  %v325 = vpack.c.b16 %v249, %v248
  %v326 = vpack.c.b16 %v251, %v250
  %v327 = vpack.c.b16 %v253, %v252
  %v328 = vpack.c.b16 %v255, %v254
  %v329 = vpack.c.b16 %v257, %v256
  %v330 = vpack.c.b16 %v259, %v258
  %v331 = vpack.c.b16 %v261, %v260
  %v332 = vpack.c.b16 %v263, %v262
  %v333 = vpack.c.b16 %v265, %v264
  %v334 = vpack.c.b16 %v267, %v266
  %v335 = vpack.c.b16 %v269, %v268
  %v336 = vpack.c.b16 %v271, %v270
  %v337 = vpack.c.b16 %v273, %v272
  %v338 = vpack.c.b16 %v275, %v274
  %v339 = vpack.c.b16 %v277, %v276
  %v340 = vpack.c.b16 %v279, %v278
  %v341 = vpack.c.b16 %v281, %v280
  %v342 = vpack.c.b16 %v283, %v282
  %v343 = vpack.c.b16 %v285, %v284
  %v344 = vpack.c.b16 %v287, %v286
  %v345 = vpack.c.b16 %v289, %v288
  %v346 = vpack.c.b16 %v291, %v290
  %v347 = vpack.c.b16 %v293, %v292
  %v348 = vpack.c.b16 %v295, %v294
  %v349 = vpack.c.b16 %v297, %v296
  %v350 = vpack.c.b16 %v299, %v298
  %v351 = vpack.c.b16 %v301, %v300
  %v352 = vpack.c.b16 %v303, %v302
  %v353 = vpack.c.b16 %v305, %v304
  %v354 = vpack.c.b16 %v307, %v306
  %v355 = vpack.c.b16 %v309, %v308
  %v356 = vpack.c.b16 %v311, %v310
  %v357 = vpack.c.b16 %v313, %v312
  %v358 = vpack.c.b16 %v315, %v314
  %v359 = vpack.c.b16 %v317, %v316
  %v360 = vpack.c.b16 %v319, %v318
  %v361 = vpack.c.b16 %v321, %v320
  %402 = vmatprep.subr.bf16.mxu0 0
  %403 = vmatpush1.bf16.msra.mxu0 %v322
  %404 = vmatprep.subr.bf16.mxu0 0
  %405 = vmatpush1.bf16.msra.mxu0 %v323
  %406 = vmatprep.subr.bf16.mxu0 0
  %407 = vmatpush1.bf16.msra.mxu0 %v324
  %408 = vmatprep.subr.bf16.mxu0 0
  %409 = vmatpush1.bf16.msra.mxu0 %v325
  %410 = vmatprep.subr.bf16.mxu0 0
  %411 = vmatpush1.bf16.msra.mxu0 %v326
  %412 = vmatprep.subr.bf16.mxu0 0
  %413 = vmatpush1.bf16.msra.mxu0 %v327
  %414 = vmatprep.subr.bf16.mxu0 0
  %415 = vmatpush1.bf16.msra.mxu0 %v328
  %416 = vmatprep.subr.bf16.mxu0 0
  %417 = vmatpush1.bf16.msra.mxu0 %v329
  %418 = vmatprep.subr.bf16.mxu0 0
  %419 = vmatpush1.bf16.msra.mxu0 %v330
  %420 = vmatprep.subr.bf16.mxu0 0
  %421 = vmatpush1.bf16.msra.mxu0 %v331
  %422 = vmatprep.subr.bf16.mxu0 0
  %423 = vmatpush1.bf16.msra.mxu0 %v332
  %424 = vmatprep.subr.bf16.mxu0 0
  %425 = vmatpush1.bf16.msra.mxu0 %v333
  %426 = vmatprep.subr.bf16.mxu0 0
  %427 = vmatpush1.bf16.msra.mxu0 %v334
  %428 = vmatprep.subr.bf16.mxu0 0
  %429 = vmatpush1.bf16.msra.mxu0 %v335
  %430 = vmatprep.subr.bf16.mxu0 0
  %431 = vmatpush1.bf16.msra.mxu0 %v336
  %432 = vmatprep.subr.bf16.mxu0 0
  %433 = vmatpush1.bf16.msra.mxu0 %v337
  %434 = vmatprep.mubr.bf16.mxu0 %v143
  %435 = vmatmul.mubr.bf16.gmra.mrb[0].mxu0 %v142
  %v436 = vpop.f32.mrb[0].mxu0
  %v437 = vadd.f32 0.0, %v436
  %v438 = vpop.f32.mrb[0].mxu0
  %v439 = vpop.f32.mrb[0].mxu0
  %v440 = vadd.f32 0.0, %v439
  %v441 = vpop.f32.mrb[0].mxu0
  %442 = vmatprep.mubr.bf16.mxu0 %v148
  %443 = vmatmul.mubr.bf16.gmra.mrb[0].mxu0 %v147
  %v444 = vpop.f32.mrb[0].mxu0
  %v445 = vadd.f32 0.0, %v444
  %v446 = vpop.f32.mrb[0].mxu0
  %v447 = vpop.f32.mrb[0].mxu0
  %v448 = vadd.f32 0.0, %v447
  %v449 = vpop.f32.mrb[0].mxu0
  %450 = vdwg.mxu0
  %451 = vmatprep.subr.bf16.mxu0 0
  %452 = vmatpush1.bf16.msra.mxu0 %v338
  %453 = vmatprep.subr.bf16.mxu0 0
  %454 = vmatpush1.bf16.msra.mxu0 %v339
  %455 = vmatprep.subr.bf16.mxu0 0
  %456 = vmatpush1.bf16.msra.mxu0 %v340
  %457 = vmatprep.subr.bf16.mxu0 0
  %458 = vmatpush1.bf16.msra.mxu0 %v341
  %459 = vmatprep.subr.bf16.mxu0 0
  %460 = vmatpush1.bf16.msra.mxu0 %v342
  %461 = vmatprep.subr.bf16.mxu0 0
  %462 = vmatpush1.bf16.msra.mxu0 %v343
  %463 = vmatprep.subr.bf16.mxu0 0
  %464 = vmatpush1.bf16.msra.mxu0 %v344
  %465 = vmatprep.subr.bf16.mxu0 0
  %466 = vmatpush1.bf16.msra.mxu0 %v345
  %467 = vmatprep.subr.bf16.mxu0 0
  %468 = vmatpush1.bf16.msra.mxu0 %v346
  %469 = vmatprep.subr.bf16.mxu0 0
  %470 = vmatpush1.bf16.msra.mxu0 %v347
  %471 = vmatprep.subr.bf16.mxu0 0
  %472 = vmatpush1.bf16.msra.mxu0 %v348
  %473 = vmatprep.subr.bf16.mxu0 0
  %474 = vmatpush1.bf16.msra.mxu0 %v349
  %475 = vmatprep.subr.bf16.mxu0 0
  %476 = vmatpush1.bf16.msra.mxu0 %v350
  %477 = vmatprep.subr.bf16.mxu0 0
  %478 = vmatpush1.bf16.msra.mxu0 %v351
  %479 = vmatprep.subr.bf16.mxu0 0
  %480 = vmatpush1.bf16.msra.mxu0 %v352
  %481 = vmatprep.subr.bf16.mxu0 0
  %482 = vmatpush1.bf16.msra.mxu0 %v353
  %483 = vmatprep.mubr.bf16.mxu0 %v145
  %484 = vmatmul.mubr.bf16.gmra.mrb[0].mxu0 %v144
  %v485 = vpop.f32.mrb[0].mxu0
  %v486 = vadd.f32 %v437, %v485
  %v487 = vpop.f32.mrb[0].mxu0
  %v488 = vpop.f32.mrb[0].mxu0
  %v489 = vadd.f32 %v440, %v488
  %v490 = vpop.f32.mrb[0].mxu0
  %491 = vmatprep.mubr.bf16.mxu0 %v150
  %492 = vmatmul.mubr.bf16.gmra.mrb[0].mxu0 %v149
  %v493 = vpop.f32.mrb[0].mxu0
  %v494 = vadd.f32 %v445, %v493
  %v495 = vpop.f32.mrb[0].mxu0
  %v496 = vpop.f32.mrb[0].mxu0
  %v497 = vadd.f32 %v448, %v496
  %v498 = vpop.f32.mrb[0].mxu0
  %499 = vdwg.mxu0
  %500 = vmatprep.subr.bf16.mxu0 0
  %501 = vmatpush1.bf16.msra.mxu0 %v354
  %502 = vmatprep.subr.bf16.mxu0 0
  %503 = vmatpush1.bf16.msra.mxu0 %v355
  %504 = vmatprep.subr.bf16.mxu0 0
  %505 = vmatpush1.bf16.msra.mxu0 %v356
  %506 = vmatprep.subr.bf16.mxu0 0
  %507 = vmatpush1.bf16.msra.mxu0 %v357
  %508 = vmatprep.subr.bf16.mxu0 0
  %509 = vmatpush1.bf16.msra.mxu0 %v358
  %510 = vmatprep.subr.bf16.mxu0 0
  %511 = vmatpush1.bf16.msra.mxu0 %v359
  %512 = vmatprep.subr.bf16.mxu0 0
  %513 = vmatpush1.bf16.msra.mxu0 %v360
  %514 = vmatprep.subr.bf16.mxu0 0
  %515 = vmatpush1.bf16.msra.mxu0 %v361
  %516 = vmatprep.subr.bf16.mxu0 0
  %517 = vmatpush1.bf16.msra.mxu0 0
  %518 = vmatprep.subr.bf16.mxu0 0
  %519 = vmatpush1.bf16.msra.mxu0 0
  %520 = vmatprep.subr.bf16.mxu0 0
  %521 = vmatpush1.bf16.msra.mxu0 0
  %522 = vmatprep.subr.bf16.mxu0 0
  %523 = vmatpush1.bf16.msra.mxu0 0
  %524 = vmatprep.subr.bf16.mxu0 0
  %525 = vmatpush1.bf16.msra.mxu0 0
  %526 = vmatprep.subr.bf16.mxu0 0
  %527 = vmatpush1.bf16.msra.mxu0 0
  %528 = vmatprep.subr.bf16.mxu0 0
  %529 = vmatpush1.bf16.msra.mxu0 0
  %530 = vmatprep.subr.bf16.mxu0 0
  %531 = vmatpush1.bf16.msra.mxu0 0
  %532 = vmatprep.mubr.bf16.mxu0 0
  %533 = vmatmul.mubr.bf16.gmra.mrb[0].mxu0 %v146
  %v534 = vpop.f32.mrb[0].mxu0
  %v535 = vadd.f32 %v486, %v534
  %v536 = vpop.f32.mrb[0].mxu0
  %v537 = vpop.f32.mrb[0].mxu0
  %v538 = vadd.f32 %v489, %v537
  %v539 = vpop.f32.mrb[0].mxu0
  %540 = vmatprep.mubr.bf16.mxu0 0
  %541 = vmatmul.mubr.bf16.gmra.mrb[0].mxu0 %v151
  %v542 = vpop.f32.mrb[0].mxu0
  %v543 = vadd.f32 %v494, %v542
  %v544 = vpop.f32.mrb[0].mxu0
  %v545 = vpop.f32.mrb[0].mxu0
  %v546 = vadd.f32 %v497, %v545
  %v547 = vpop.f32.mrb[0].mxu0
  %548 = vdwg.mxu0
  %v549 = vld [vmem:[%s2] sm:$0x1]
  %v550 = vld [vmem:[%s3] sm:$0x1]
  %v551 = vadd.f32 %v535, %v538
  %v552 = vadd.f32 %v551, %v543
  %v553 = vadd.f32 %v552, %v546
  %v554 = vrot.slane %v553, 4
  %v555 = vadd.f32 %v553, %v554
  %v556 = vrot.slane %v555, 2
  %v557 = vadd.f32 %v555, %v556
  %v558 = vrot.slane %v557, 1
  %v559 = vadd.f32 %v557, %v558
  %v560 = vrcp.pop 32.0
  %v561 = vmul.f32 %v559, %v560
  %v562 = vmul.f32 %v535, %v535
  %v563 = vmul.f32 %v538, %v538
  %v564 = vmul.f32 %v543, %v543
  %v565 = vmul.f32 %v546, %v546
  %v566 = vadd.f32 %v562, %v563
  %v567 = vadd.f32 %v566, %v564
  %v568 = vadd.f32 %v567, %v565
  %v569 = vrot.slane %v568, 4
  %v570 = vadd.f32 %v568, %v569
  %v571 = vrot.slane %v570, 2
  %v572 = vadd.f32 %v570, %v571
  %v573 = vrot.slane %v572, 1
  %v574 = vadd.f32 %v572, %v573
  %v575 = vmul.f32 %v574, %v560
  %v576 = vmul.f32 %v561, %v561
  %v577 = vsub.f32 %v575, %v576
  %v578 = vmax.f32 %v577, 0.0
  %v579 = vsub.f32 %v535, %v561
  %v580 = vsub.f32 %v538, %v561
  %v581 = vsub.f32 %v543, %v561
  %v582 = vsub.f32 %v546, %v561
  %v583 = vadd.f32 %v578, 1e-05
  %v584 = vrsqrt.pop %v583
  %v585 = vmul.f32 %v579, %v584
  %v586 = vmul.f32 %v580, %v584
  %v587 = vmul.f32 %v581, %v584
  %v588 = vmul.f32 %v582, %v584
  %v590 = vlaneseq
  %v591 = vshrl.u32 %v590, 7
  %v592 = vsub.s32 0, %v591
  %v593 = vrot.slane %v549, %v592
  %v595 = vmul.f32 %v585, %v593
  %v596 = vmul.f32 %v586, %v593
  %v597 = vmul.f32 %v587, %v593
  %v598 = vmul.f32 %v588, %v593
  %v600 = vlaneseq
  %v601 = vshrl.u32 %v600, 7
  %v602 = vsub.s32 0, %v601
  %v603 = vrot.slane %v550, %v602
  %v605 = vadd.f32 %v595, %v603
  %v606 = vadd.f32 %v596, %v603
  %v607 = vadd.f32 %v597, %v603
  %v608 = vadd.f32 %v598, %v603
  %v609 = vmax.f32 %v605, 0.0
  %v610 = vmax.f32 %v606, 0.0
  %v611 = vmax.f32 %v607, 0.0
  %v612 = vmax.f32 %v608, 0.0
  %v613 = vpack.c.bf16 %v610, %v609
  %v614 = vpack.c.bf16 %v612, %v611
  %v617 = vunpack.c.l.b16 %v613
  %v618 = vunpack.c.h.b16 %v613
  %v619 = vunpack.c.l.b16 %v614
  %v620 = vunpack.c.h.b16 %v614
  %v621 = vpack.c.b16 %v617, %v617
  %v622 = vpack.c.b16 %v618, %v618
  %v623 = vpack.c.b16 %v619, %v619
  %v624 = vpack.c.b16 %v620, %v620
  %629 = vst [vmem:[%s4] sm:$0xf] %v621
  %630 = vst [vmem:[%s4 + $0x4] sm:$0xf] %v622
  %631 = vst [vmem:[%s4 + $0x8] sm:$0xf] %v623
  %632 = vst [vmem:[%s4 + $0xc] sm:$0xf] %v624
  // Predicated region
  $region18: #{resnet18_forward.19} parent=0 // pred_check
    _
  $region19: #{resnet18_forward.19} parent=0 // pred_check_branch
    %634 = sbr.rel (0) target = $region21
  $region20: #{resnet18_forward.19} parent=0 // pred_region
    _
  $region21: #{resnet18_forward.19} parent=0 // pred_fallthru
    _
  // Predicated region
  $region22: #{resnet18_forward.19} parent=0 // pred_check
    _
  $region23: #{resnet18_forward.19} parent=0 // pred_check_branch
    %636 = sbr.rel (0) target = $region25
  $region24: #{resnet18_forward.19} parent=0 // pred_region
    _
  $region25: #{resnet18_forward.19} parent=0 // pred_fallthru
    _

// kernel: resnet18_forward.20
$region0: #{resnet18_forward.20}
  #allocation0 [shape = 'u32[]', space=smem, size = 0x4, offset = 0x4, fixed_abs, tag = 'smem constant byte address 0x4 - core index']
  #allocation1 [shape = 'u32[144,128]{1,0:T(1,128)}', space=vmem, size = 0x12000, scoped, tag = 'internal scratch']
  %s0 = inlined_call_operand.vmem [shape: bf16[32,640], index: 0, kind: input, shape index: {}]
  %s1 = inlined_call_operand.vmem [shape: bf16[640,128], index: 1, kind: input, shape index: {}]
  %s2 = inlined_call_operand.vmem [shape: f32[1,128], index: 2, kind: input, shape index: {}]
  %s3 = inlined_call_operand.vmem [shape: f32[1,128], index: 3, kind: input, shape index: {}]
  %s4 = inlined_call_operand.vmem [shape: bf16[32,128], index: 4, kind: input, shape index: {}]
  %s5 = inlined_call_operand.vmem [shape: bf16[32,128], index: 5, kind: output, shape index: {}]
  %s6 = sld [smem:[#allocation0]]
  $region30: #{resnet18_forward.20} parent=0
    _
  %s8 = ssub.s32 1, %s6
  %s9 = scalar_select 0, %s8, %s6
  // Predicated region
  $region2: #{resnet18_forward.20} parent=0 // pred_check
    _
  $region3: #{resnet18_forward.20} parent=0 // pred_check_branch
    %11 = sbr.rel (0) target = $region5
  $region4: #{resnet18_forward.20} parent=0 // pred_region
    _
  $region5: #{resnet18_forward.20} parent=0 // pred_fallthru
    _
  // Predicated region
  $region6: #{resnet18_forward.20} parent=0 // pred_check
    _
  $region7: #{resnet18_forward.20} parent=0 // pred_check_branch
    %13 = sbr.rel (0) target = $region9
  $region8: #{resnet18_forward.20} parent=0 // pred_region
    _
  $region9: #{resnet18_forward.20} parent=0 // pred_fallthru
    _
  // Predicated region
  $region10: #{resnet18_forward.20} parent=0 // pred_check
    _
  $region11: #{resnet18_forward.20} parent=0 // pred_check_branch
    %15 = sbr.rel (0) target = $region13
  $region12: #{resnet18_forward.20} parent=0 // pred_region
    _
  $region13: #{resnet18_forward.20} parent=0 // pred_fallthru
    _
  // Predicated region
  $region14: #{resnet18_forward.20} parent=0 // pred_check
    _
  $region15: #{resnet18_forward.20} parent=0 // pred_check_branch
    %17 = sbr.rel (0) target = $region17
  $region16: #{resnet18_forward.20} parent=0 // pred_region
    _
  $region17: #{resnet18_forward.20} parent=0 // pred_fallthru
    _
  // Predicated region
  $region18: #{resnet18_forward.20} parent=0 // pred_check
    _
  $region19: #{resnet18_forward.20} parent=0 // pred_check_branch
    %19 = sbr.rel (0) target = $region21
  $region20: #{resnet18_forward.20} parent=0 // pred_region
    _
  $region21: #{resnet18_forward.20} parent=0 // pred_fallthru
    _
  %v21 = vld [vmem:[%s0] sm:$0xff]
  %v22 = vld [vmem:[%s0 + $0x8] sm:$0xff]
  %v23 = vld [vmem:[%s0 + $0x10] sm:$0xf]
  %v24 = vld [vmem:[%s0 + $0x14] sm:$0xff]
  %v25 = vld [vmem:[%s0 + $0x1c] sm:$0xff]
  %v26 = vld [vmem:[%s0 + $0x24] sm:$0xf]
  %v27 = vld [vmem:[%s0 + $0x28] sm:$0xff]
  %v28 = vld [vmem:[%s0 + $0x30] sm:$0xff]
  %v29 = vld [vmem:[%s0 + $0x38] sm:$0xf]
  %v30 = vld [vmem:[%s0 + $0x3c] sm:$0xff]
  %v31 = vld [vmem:[%s0 + $0x44] sm:$0xff]
  %v32 = vld [vmem:[%s0 + $0x4c] sm:$0xf]
  %v33 = vld [vmem:[%s1] sm:$0xf]
  %v34 = vld [vmem:[%s1 + $0x4] sm:$0xf]
  %v35 = vld [vmem:[%s1 + $0x8] sm:$0xf]
  %v36 = vld [vmem:[%s1 + $0xc] sm:$0xf]
  %v37 = vld [vmem:[%s1 + $0x10] sm:$0xf]
  %v38 = vld [vmem:[%s1 + $0x14] sm:$0xf]
  %v39 = vld [vmem:[%s1 + $0x18] sm:$0xf]
  %v40 = vld [vmem:[%s1 + $0x1c] sm:$0xf]
  %v41 = vld [vmem:[%s1 + $0x20] sm:$0xf]
  %v42 = vld [vmem:[%s1 + $0x24] sm:$0xf]
  %v43 = vld [vmem:[%s1 + $0x28] sm:$0xf]
  %v44 = vld [vmem:[%s1 + $0x2c] sm:$0xf]
  %v45 = vld [vmem:[%s1 + $0x30] sm:$0xf]
  %v46 = vld [vmem:[%s1 + $0x34] sm:$0xf]
  %v47 = vld [vmem:[%s1 + $0x38] sm:$0xf]
  %v48 = vld [vmem:[%s1 + $0x3c] sm:$0xf]
  %v49 = vld [vmem:[%s1 + $0x40] sm:$0xf]
  %v50 = vld [vmem:[%s1 + $0x44] sm:$0xf]
  %v51 = vld [vmem:[%s1 + $0x48] sm:$0xf]
  %v52 = vld [vmem:[%s1 + $0x4c] sm:$0xf]
  %v53 = vld [vmem:[%s1 + $0x50] sm:$0xf]
  %v54 = vld [vmem:[%s1 + $0x54] sm:$0xf]
  %v55 = vld [vmem:[%s1 + $0x58] sm:$0xf]
  %v56 = vld [vmem:[%s1 + $0x5c] sm:$0xf]
  %v57 = vld [vmem:[%s1 + $0x60] sm:$0xf]
  %v58 = vld [vmem:[%s1 + $0x64] sm:$0xf]
  %v59 = vld [vmem:[%s1 + $0x68] sm:$0xf]
  %v60 = vld [vmem:[%s1 + $0x6c] sm:$0xf]
  %v61 = vld [vmem:[%s1 + $0x70] sm:$0xf]
  %v62 = vld [vmem:[%s1 + $0x74] sm:$0xf]
  %v63 = vld [vmem:[%s1 + $0x78] sm:$0xf]
  %v64 = vld [vmem:[%s1 + $0x7c] sm:$0xf]
  %v65 = vld [vmem:[%s1 + $0x80] sm:$0xf]
  %v66 = vld [vmem:[%s1 + $0x84] sm:$0xf]
  %v67 = vld [vmem:[%s1 + $0x88] sm:$0xf]
  %v68 = vld [vmem:[%s1 + $0x8c] sm:$0xf]
  %v69 = vld [vmem:[%s1 + $0x90] sm:$0xf]
  %v70 = vld [vmem:[%s1 + $0x94] sm:$0xf]
  %v71 = vld [vmem:[%s1 + $0x98] sm:$0xf]
  %v72 = vld [vmem:[%s1 + $0x9c] sm:$0xf]
  %v73 = vld [vmem:[%s1 + $0xa0] sm:$0xf]
  %v74 = vld [vmem:[%s1 + $0xa4] sm:$0xf]
  %v75 = vld [vmem:[%s1 + $0xa8] sm:$0xf]
  %v76 = vld [vmem:[%s1 + $0xac] sm:$0xf]
  %v77 = vld [vmem:[%s1 + $0xb0] sm:$0xf]
  %v78 = vld [vmem:[%s1 + $0xb4] sm:$0xf]
  %v79 = vld [vmem:[%s1 + $0xb8] sm:$0xf]
  %v80 = vld [vmem:[%s1 + $0xbc] sm:$0xf]
  %v81 = vld [vmem:[%s1 + $0xc0] sm:$0xf]
  %v82 = vld [vmem:[%s1 + $0xc4] sm:$0xf]
  %v83 = vld [vmem:[%s1 + $0xc8] sm:$0xf]
  %v84 = vld [vmem:[%s1 + $0xcc] sm:$0xf]
  %v85 = vld [vmem:[%s1 + $0xd0] sm:$0xf]
  %v86 = vld [vmem:[%s1 + $0xd4] sm:$0xf]
  %v87 = vld [vmem:[%s1 + $0xd8] sm:$0xf]
  %v88 = vld [vmem:[%s1 + $0xdc] sm:$0xf]
  %v89 = vld [vmem:[%s1 + $0xe0] sm:$0xf]
  %v90 = vld [vmem:[%s1 + $0xe4] sm:$0xf]
  %v91 = vld [vmem:[%s1 + $0xe8] sm:$0xf]
  %v92 = vld [vmem:[%s1 + $0xec] sm:$0xf]
  %v93 = vld [vmem:[%s1 + $0xf0] sm:$0xf]
  %v94 = vld [vmem:[%s1 + $0xf4] sm:$0xf]
  %v95 = vld [vmem:[%s1 + $0xf8] sm:$0xf]
  %v96 = vld [vmem:[%s1 + $0xfc] sm:$0xf]
  %v97 = vld [vmem:[%s1 + $0x100] sm:$0xf]
  %v98 = vld [vmem:[%s1 + $0x104] sm:$0xf]
  %v99 = vld [vmem:[%s1 + $0x108] sm:$0xf]
  %v100 = vld [vmem:[%s1 + $0x10c] sm:$0xf]
  %v101 = vld [vmem:[%s1 + $0x110] sm:$0xf]
  %v102 = vld [vmem:[%s1 + $0x114] sm:$0xf]
  %v103 = vld [vmem:[%s1 + $0x118] sm:$0xf]
  %v104 = vld [vmem:[%s1 + $0x11c] sm:$0xf]
  %v105 = vld [vmem:[%s1 + $0x120] sm:$0xf]
  %v106 = vld [vmem:[%s1 + $0x124] sm:$0xf]
  %v107 = vld [vmem:[%s1 + $0x128] sm:$0xf]
  %v108 = vld [vmem:[%s1 + $0x12c] sm:$0xf]
  %v109 = vld [vmem:[%s1 + $0x130] sm:$0xf]
  %v110 = vld [vmem:[%s1 + $0x134] sm:$0xf]
  %v111 = vld [vmem:[%s1 + $0x138] sm:$0xf]
  %v112 = vld [vmem:[%s1 + $0x13c] sm:$0xf]
  %v125 = vunpack.c.l.b16 %v21
  %v126 = vunpack.c.h.b16 %v21
  %v127 = vunpack.c.l.b16 %v22
  %v128 = vunpack.c.h.b16 %v22
  %v129 = vunpack.c.l.b16 %v23
  %v130 = vunpack.c.l.b16 %v24
  %v131 = vunpack.c.h.b16 %v24
  %v132 = vunpack.c.l.b16 %v25
  %v133 = vunpack.c.h.b16 %v25
  %v134 = vunpack.c.l.b16 %v26
  %v135 = vunpack.c.l.b16 %v27
  %v136 = vunpack.c.h.b16 %v27
  %v137 = vunpack.c.l.b16 %v28
  %v138 = vunpack.c.h.b16 %v28
  %v139 = vunpack.c.l.b16 %v29
  %v140 = vunpack.c.l.b16 %v30
  %v141 = vunpack.c.h.b16 %v30
  %v142 = vunpack.c.l.b16 %v31
  %v143 = vunpack.c.h.b16 %v31
  %v144 = vunpack.c.l.b16 %v32
  %v145 = vpack.c.b16 %v130, %v125
  %v146 = vpack.c.b16 %v131, %v126
  %v147 = vpack.c.b16 %v132, %v127
  %v148 = vpack.c.b16 %v133, %v128
  %v149 = vpack.c.b16 %v134, %v129
  %v150 = vpack.c.b16 %v140, %v135
  %v151 = vpack.c.b16 %v141, %v136
  %v152 = vpack.c.b16 %v142, %v137
  %v153 = vpack.c.b16 %v143, %v138
  %v154 = vpack.c.b16 %v144, %v139
  %v245 = vunpack.c.l.b16 %v33
  %v246 = vunpack.c.l.b16 %v34
  %v247 = vunpack.c.l.b16 %v35
  %v248 = vunpack.c.l.b16 %v36
  %v249 = vunpack.c.l.b16 %v37
  %v250 = vunpack.c.l.b16 %v38
  %v251 = vunpack.c.l.b16 %v39
  %v252 = vunpack.c.l.b16 %v40
  %v253 = vunpack.c.l.b16 %v41
  %v254 = vunpack.c.l.b16 %v42
  %v255 = vunpack.c.l.b16 %v43
  %v256 = vunpack.c.l.b16 %v44
  %v257 = vunpack.c.l.b16 %v45
  %v258 = vunpack.c.l.b16 %v46
  %v259 = vunpack.c.l.b16 %v47
  %v260 = vunpack.c.l.b16 %v48
  %v261 = vunpack.c.l.b16 %v49
  %v262 = vunpack.c.l.b16 %v50
  %v263 = vunpack.c.l.b16 %v51
  %v264 = vunpack.c.l.b16 %v52
  %v265 = vunpack.c.l.b16 %v53
  %v266 = vunpack.c.l.b16 %v54
  %v267 = vunpack.c.l.b16 %v55
  %v268 = vunpack.c.l.b16 %v56
  %v269 = vunpack.c.l.b16 %v57
  %v270 = vunpack.c.l.b16 %v58
  %v271 = vunpack.c.l.b16 %v59
  %v272 = vunpack.c.l.b16 %v60
  %v273 = vunpack.c.l.b16 %v61
  %v274 = vunpack.c.l.b16 %v62
  %v275 = vunpack.c.l.b16 %v63
  %v276 = vunpack.c.l.b16 %v64
  %v277 = vunpack.c.l.b16 %v65
  %v278 = vunpack.c.l.b16 %v66
  %v279 = vunpack.c.l.b16 %v67
  %v280 = vunpack.c.l.b16 %v68
  %v281 = vunpack.c.l.b16 %v69
  %v282 = vunpack.c.l.b16 %v70
  %v283 = vunpack.c.l.b16 %v71
  %v284 = vunpack.c.l.b16 %v72
  %v285 = vunpack.c.l.b16 %v73
  %v286 = vunpack.c.l.b16 %v74
  %v287 = vunpack.c.l.b16 %v75
  %v288 = vunpack.c.l.b16 %v76
  %v289 = vunpack.c.l.b16 %v77
  %v290 = vunpack.c.l.b16 %v78
  %v291 = vunpack.c.l.b16 %v79
  %v292 = vunpack.c.l.b16 %v80
  %v293 = vunpack.c.l.b16 %v81
  %v294 = vunpack.c.l.b16 %v82
  %v295 = vunpack.c.l.b16 %v83
  %v296 = vunpack.c.l.b16 %v84
  %v297 = vunpack.c.l.b16 %v85
  %v298 = vunpack.c.l.b16 %v86
  %v299 = vunpack.c.l.b16 %v87
  %v300 = vunpack.c.l.b16 %v88
  %v301 = vunpack.c.l.b16 %v89
  %v302 = vunpack.c.l.b16 %v90
  %v303 = vunpack.c.l.b16 %v91
  %v304 = vunpack.c.l.b16 %v92
  %v305 = vunpack.c.l.b16 %v93
  %v306 = vunpack.c.l.b16 %v94
  %v307 = vunpack.c.l.b16 %v95
  %v308 = vunpack.c.l.b16 %v96
  %v309 = vunpack.c.l.b16 %v97
  %v310 = vunpack.c.l.b16 %v98
  %v311 = vunpack.c.l.b16 %v99
  %v312 = vunpack.c.l.b16 %v100
  %v313 = vunpack.c.l.b16 %v101
  %v314 = vunpack.c.l.b16 %v102
  %v315 = vunpack.c.l.b16 %v103
  %v316 = vunpack.c.l.b16 %v104
  %v317 = vunpack.c.l.b16 %v105
  %v318 = vunpack.c.l.b16 %v106
  %v319 = vunpack.c.l.b16 %v107
  %v320 = vunpack.c.l.b16 %v108
  %v321 = vunpack.c.l.b16 %v109
  %v322 = vunpack.c.l.b16 %v110
  %v323 = vunpack.c.l.b16 %v111
  %v324 = vunpack.c.l.b16 %v112
  %v325 = vpack.c.b16 %v246, %v245
  %v326 = vpack.c.b16 %v248, %v247
  %v327 = vpack.c.b16 %v250, %v249
  %v328 = vpack.c.b16 %v252, %v251
  %v329 = vpack.c.b16 %v254, %v253
  %v330 = vpack.c.b16 %v256, %v255
  %v331 = vpack.c.b16 %v258, %v257
  %v332 = vpack.c.b16 %v260, %v259
  %v333 = vpack.c.b16 %v262, %v261
  %v334 = vpack.c.b16 %v264, %v263
  %v335 = vpack.c.b16 %v266, %v265
  %v336 = vpack.c.b16 %v268, %v267
  %v337 = vpack.c.b16 %v270, %v269
  %v338 = vpack.c.b16 %v272, %v271
  %v339 = vpack.c.b16 %v274, %v273
  %v340 = vpack.c.b16 %v276, %v275
  %v341 = vpack.c.b16 %v278, %v277
  %v342 = vpack.c.b16 %v280, %v279
  %v343 = vpack.c.b16 %v282, %v281
  %v344 = vpack.c.b16 %v284, %v283
  %v345 = vpack.c.b16 %v286, %v285
  %v346 = vpack.c.b16 %v288, %v287
  %v347 = vpack.c.b16 %v290, %v289
  %v348 = vpack.c.b16 %v292, %v291
  %v349 = vpack.c.b16 %v294, %v293
  %v350 = vpack.c.b16 %v296, %v295
  %v351 = vpack.c.b16 %v298, %v297
  %v352 = vpack.c.b16 %v300, %v299
  %v353 = vpack.c.b16 %v302, %v301
  %v354 = vpack.c.b16 %v304, %v303
  %v355 = vpack.c.b16 %v306, %v305
  %v356 = vpack.c.b16 %v308, %v307
  %v357 = vpack.c.b16 %v310, %v309
  %v358 = vpack.c.b16 %v312, %v311
  %v359 = vpack.c.b16 %v314, %v313
  %v360 = vpack.c.b16 %v316, %v315
  %v361 = vpack.c.b16 %v318, %v317
  %v362 = vpack.c.b16 %v320, %v319
  %v363 = vpack.c.b16 %v322, %v321
  %v364 = vpack.c.b16 %v324, %v323
  %405 = vmatprep.subr.bf16.mxu0 0
  %406 = vmatpush1.bf16.msra.mxu0 %v325
  %407 = vmatprep.subr.bf16.mxu0 0
  %408 = vmatpush1.bf16.msra.mxu0 %v326
  %409 = vmatprep.subr.bf16.mxu0 0
  %410 = vmatpush1.bf16.msra.mxu0 %v327
  %411 = vmatprep.subr.bf16.mxu0 0
  %412 = vmatpush1.bf16.msra.mxu0 %v328
  %413 = vmatprep.subr.bf16.mxu0 0
  %414 = vmatpush1.bf16.msra.mxu0 %v329
  %415 = vmatprep.subr.bf16.mxu0 0
  %416 = vmatpush1.bf16.msra.mxu0 %v330
  %417 = vmatprep.subr.bf16.mxu0 0
  %418 = vmatpush1.bf16.msra.mxu0 %v331
  %419 = vmatprep.subr.bf16.mxu0 0
  %420 = vmatpush1.bf16.msra.mxu0 %v332
  %421 = vmatprep.subr.bf16.mxu0 0
  %422 = vmatpush1.bf16.msra.mxu0 %v333
  %423 = vmatprep.subr.bf16.mxu0 0
  %424 = vmatpush1.bf16.msra.mxu0 %v334
  %425 = vmatprep.subr.bf16.mxu0 0
  %426 = vmatpush1.bf16.msra.mxu0 %v335
  %427 = vmatprep.subr.bf16.mxu0 0
  %428 = vmatpush1.bf16.msra.mxu0 %v336
  %429 = vmatprep.subr.bf16.mxu0 0
  %430 = vmatpush1.bf16.msra.mxu0 %v337
  %431 = vmatprep.subr.bf16.mxu0 0
  %432 = vmatpush1.bf16.msra.mxu0 %v338
  %433 = vmatprep.subr.bf16.mxu0 0
  %434 = vmatpush1.bf16.msra.mxu0 %v339
  %435 = vmatprep.subr.bf16.mxu0 0
  %436 = vmatpush1.bf16.msra.mxu0 %v340
  %437 = vmatprep.mubr.bf16.mxu0 %v146
  %438 = vmatmul.mubr.bf16.gmra.mrb[0].mxu0 %v145
  %v439 = vpop.f32.mrb[0].mxu0
  %v440 = vadd.f32 0.0, %v439
  %v441 = vpop.f32.mrb[0].mxu0
  %v442 = vpop.f32.mrb[0].mxu0
  %v443 = vadd.f32 0.0, %v442
  %v444 = vpop.f32.mrb[0].mxu0
  %445 = vmatprep.mubr.bf16.mxu0 %v151
  %446 = vmatmul.mubr.bf16.gmra.mrb[0].mxu0 %v150
  %v447 = vpop.f32.mrb[0].mxu0
  %v448 = vadd.f32 0.0, %v447
  %v449 = vpop.f32.mrb[0].mxu0
  %v450 = vpop.f32.mrb[0].mxu0
  %v451 = vadd.f32 0.0, %v450
  %v452 = vpop.f32.mrb[0].mxu0
  %453 = vdwg.mxu0
  %454 = vmatprep.subr.bf16.mxu0 0
  %455 = vmatpush1.bf16.msra.mxu0 %v341
  %456 = vmatprep.subr.bf16.mxu0 0
  %457 = vmatpush1.bf16.msra.mxu0 %v342
  %458 = vmatprep.subr.bf16.mxu0 0
  %459 = vmatpush1.bf16.msra.mxu0 %v343
  %460 = vmatprep.subr.bf16.mxu0 0
  %461 = vmatpush1.bf16.msra.mxu0 %v344
  %462 = vmatprep.subr.bf16.mxu0 0
  %463 = vmatpush1.bf16.msra.mxu0 %v345
  %464 = vmatprep.subr.bf16.mxu0 0
  %465 = vmatpush1.bf16.msra.mxu0 %v346
  %466 = vmatprep.subr.bf16.mxu0 0
  %467 = vmatpush1.bf16.msra.mxu0 %v347
  %468 = vmatprep.subr.bf16.mxu0 0
  %469 = vmatpush1.bf16.msra.mxu0 %v348
  %470 = vmatprep.subr.bf16.mxu0 0
  %471 = vmatpush1.bf16.msra.mxu0 %v349
  %472 = vmatprep.subr.bf16.mxu0 0
  %473 = vmatpush1.bf16.msra.mxu0 %v350
  %474 = vmatprep.subr.bf16.mxu0 0
  %475 = vmatpush1.bf16.msra.mxu0 %v351
  %476 = vmatprep.subr.bf16.mxu0 0
  %477 = vmatpush1.bf16.msra.mxu0 %v352
  %478 = vmatprep.subr.bf16.mxu0 0
  %479 = vmatpush1.bf16.msra.mxu0 %v353
  %480 = vmatprep.subr.bf16.mxu0 0
  %481 = vmatpush1.bf16.msra.mxu0 %v354
  %482 = vmatprep.subr.bf16.mxu0 0
  %483 = vmatpush1.bf16.msra.mxu0 %v355
  %484 = vmatprep.subr.bf16.mxu0 0
  %485 = vmatpush1.bf16.msra.mxu0 %v356
  %486 = vmatprep.mubr.bf16.mxu0 %v148
  %487 = vmatmul.mubr.bf16.gmra.mrb[0].mxu0 %v147
  %v488 = vpop.f32.mrb[0].mxu0
  %v489 = vadd.f32 %v440, %v488
  %v490 = vpop.f32.mrb[0].mxu0
  %v491 = vpop.f32.mrb[0].mxu0
  %v492 = vadd.f32 %v443, %v491
  %v493 = vpop.f32.mrb[0].mxu0
  %494 = vmatprep.mubr.bf16.mxu0 %v153
  %495 = vmatmul.mubr.bf16.gmra.mrb[0].mxu0 %v152
  %v496 = vpop.f32.mrb[0].mxu0
  %v497 = vadd.f32 %v448, %v496
  %v498 = vpop.f32.mrb[0].mxu0
  %v499 = vpop.f32.mrb[0].mxu0
  %v500 = vadd.f32 %v451, %v499
  %v501 = vpop.f32.mrb[0].mxu0
  %502 = vdwg.mxu0
  %503 = vmatprep.subr.bf16.mxu0 0
  %504 = vmatpush1.bf16.msra.mxu0 %v357
  %505 = vmatprep.subr.bf16.mxu0 0
  %506 = vmatpush1.bf16.msra.mxu0 %v358
  %507 = vmatprep.subr.bf16.mxu0 0
  %508 = vmatpush1.bf16.msra.mxu0 %v359
  %509 = vmatprep.subr.bf16.mxu0 0
  %510 = vmatpush1.bf16.msra.mxu0 %v360
  %511 = vmatprep.subr.bf16.mxu0 0
  %512 = vmatpush1.bf16.msra.mxu0 %v361
  %513 = vmatprep.subr.bf16.mxu0 0
  %514 = vmatpush1.bf16.msra.mxu0 %v362
  %515 = vmatprep.subr.bf16.mxu0 0
  %516 = vmatpush1.bf16.msra.mxu0 %v363
  %517 = vmatprep.subr.bf16.mxu0 0
  %518 = vmatpush1.bf16.msra.mxu0 %v364
  %519 = vmatprep.subr.bf16.mxu0 0
  %520 = vmatpush1.bf16.msra.mxu0 0
  %521 = vmatprep.subr.bf16.mxu0 0
  %522 = vmatpush1.bf16.msra.mxu0 0
  %523 = vmatprep.subr.bf16.mxu0 0
  %524 = vmatpush1.bf16.msra.mxu0 0
  %525 = vmatprep.subr.bf16.mxu0 0
  %526 = vmatpush1.bf16.msra.mxu0 0
  %527 = vmatprep.subr.bf16.mxu0 0
  %528 = vmatpush1.bf16.msra.mxu0 0
  %529 = vmatprep.subr.bf16.mxu0 0
  %530 = vmatpush1.bf16.msra.mxu0 0
  %531 = vmatprep.subr.bf16.mxu0 0
  %532 = vmatpush1.bf16.msra.mxu0 0
  %533 = vmatprep.subr.bf16.mxu0 0
  %534 = vmatpush1.bf16.msra.mxu0 0
  %535 = vmatprep.mubr.bf16.mxu0 0
  %536 = vmatmul.mubr.bf16.gmra.mrb[0].mxu0 %v149
  %v537 = vpop.f32.mrb[0].mxu0
  %v538 = vadd.f32 %v489, %v537
  %v539 = vpop.f32.mrb[0].mxu0
  %v540 = vpop.f32.mrb[0].mxu0
  %v541 = vadd.f32 %v492, %v540
  %v542 = vpop.f32.mrb[0].mxu0
  %543 = vmatprep.mubr.bf16.mxu0 0
  %544 = vmatmul.mubr.bf16.gmra.mrb[0].mxu0 %v154
  %v545 = vpop.f32.mrb[0].mxu0
  %v546 = vadd.f32 %v497, %v545
  %v547 = vpop.f32.mrb[0].mxu0
  %v548 = vpop.f32.mrb[0].mxu0
  %v549 = vadd.f32 %v500, %v548
  %v550 = vpop.f32.mrb[0].mxu0
  %551 = vdwg.mxu0
  %v552 = vld [vmem:[%s2] sm:$0x1]
  %v553 = vld [vmem:[%s3] sm:$0x1]
  %v554 = vadd.f32 %v538, %v541
  %v555 = vadd.f32 %v554, %v546
  %v556 = vadd.f32 %v555, %v549
  %v557 = vrot.slane %v556, 4
  %v558 = vadd.f32 %v556, %v557
  %v559 = vrot.slane %v558, 2
  %v560 = vadd.f32 %v558, %v559
  %v561 = vrot.slane %v560, 1
  %v562 = vadd.f32 %v560, %v561
  %v563 = vrcp.pop 32.0
  %v564 = vmul.f32 %v562, %v563
  %v565 = vmul.f32 %v538, %v538
  %v566 = vmul.f32 %v541, %v541
  %v567 = vmul.f32 %v546, %v546
  %v568 = vmul.f32 %v549, %v549
  %v569 = vadd.f32 %v565, %v566
  %v570 = vadd.f32 %v569, %v567
  %v571 = vadd.f32 %v570, %v568
  %v572 = vrot.slane %v571, 4
  %v573 = vadd.f32 %v571, %v572
  %v574 = vrot.slane %v573, 2
  %v575 = vadd.f32 %v573, %v574
  %v576 = vrot.slane %v575, 1
  %v577 = vadd.f32 %v575, %v576
  %v578 = vmul.f32 %v577, %v563
  %v579 = vmul.f32 %v564, %v564
  %v580 = vsub.f32 %v578, %v579
  %v581 = vmax.f32 %v580, 0.0
  %v582 = vsub.f32 %v538, %v564
  %v583 = vsub.f32 %v541, %v564
  %v584 = vsub.f32 %v546, %v564
  %v585 = vsub.f32 %v549, %v564
  %v586 = vadd.f32 %v581, 1e-05
  %v587 = vrsqrt.pop %v586
  %v588 = vmul.f32 %v582, %v587
  %v589 = vmul.f32 %v583, %v587
  %v590 = vmul.f32 %v584, %v587
  %v591 = vmul.f32 %v585, %v587
  %v593 = vlaneseq
  %v594 = vshrl.u32 %v593, 7
  %v595 = vsub.s32 0, %v594
  %v596 = vrot.slane %v552, %v595
  %v598 = vmul.f32 %v588, %v596
  %v599 = vmul.f32 %v589, %v596
  %v600 = vmul.f32 %v590, %v596
  %v601 = vmul.f32 %v591, %v596
  %v603 = vlaneseq
  %v604 = vshrl.u32 %v603, 7
  %v605 = vsub.s32 0, %v604
  %v606 = vrot.slane %v553, %v605
  %v608 = vadd.f32 %v598, %v606
  %v609 = vadd.f32 %v599, %v606
  %v610 = vadd.f32 %v600, %v606
  %v611 = vadd.f32 %v601, %v606
  %v612 = vld [vmem:[%s4] sm:$0xf]
  %v613 = vld [vmem:[%s4 + $0x4] sm:$0xf]
  %v614 = vld [vmem:[%s4 + $0x8] sm:$0xf]
  %v615 = vld [vmem:[%s4 + $0xc] sm:$0xf]
  %v616 = vunpack.c.l.bf16 %v612
  %v617 = vunpack.c.l.bf16 %v613
  %v618 = vunpack.c.l.bf16 %v614
  %v619 = vunpack.c.l.bf16 %v615
  %v620 = vadd.f32 %v608, %v616
  %v621 = vadd.f32 %v609, %v617
  %v622 = vadd.f32 %v610, %v618
  %v623 = vadd.f32 %v611, %v619
  %v624 = vmax.f32 %v620, 0.0
  %v625 = vmax.f32 %v621, 0.0
  %v626 = vmax.f32 %v622, 0.0
  %v627 = vmax.f32 %v623, 0.0
  %v628 = vpack.c.bf16 %v625, %v624
  %v629 = vpack.c.bf16 %v627, %v626
  %v632 = vunpack.c.l.b16 %v628
  %v633 = vunpack.c.h.b16 %v628
  %v634 = vunpack.c.l.b16 %v629
  %v635 = vunpack.c.h.b16 %v629
  %v636 = vpack.c.b16 %v632, %v632
  %v637 = vpack.c.b16 %v633, %v633
  %v638 = vpack.c.b16 %v634, %v634
  %v639 = vpack.c.b16 %v635, %v635
  %644 = vst [vmem:[%s5] sm:$0xf] %v636
  %645 = vst [vmem:[%s5 + $0x4] sm:$0xf] %v637
  %646 = vst [vmem:[%s5 + $0x8] sm:$0xf] %v638
  %647 = vst [vmem:[%s5 + $0xc] sm:$0xf] %v639
  // Predicated region
  $region22: #{resnet18_forward.20} parent=0 // pred_check
    _
  $region23: #{resnet18_forward.20} parent=0 // pred_check_branch
    %649 = sbr.rel (0) target = $region25
  $region24: #{resnet18_forward.20} parent=0 // pred_region
    _
  $region25: #{resnet18_forward.20} parent=0 // pred_fallthru
    _
  // Predicated region
  $region26: #{resnet18_forward.20} parent=0 // pred_check
    _
  $region27: #{resnet18_forward.20} parent=0 // pred_check_branch
    %651 = sbr.rel (0) target = $region29
  $region28: #{resnet18_forward.20} parent=0 // pred_region
    _
  $region29: #{resnet18_forward.20} parent=0 // pred_fallthru
    _

// kernel: resnet18_forward.23
$region0: #{resnet18_forward.23}
  #allocation0 [shape = 'u32[]', space=smem, size = 0x4, offset = 0x4, fixed_abs, tag = 'smem constant byte address 0x4 - core index']
  #allocation1 [shape = 'u32[144,128]{1,0:T(1,128)}', space=vmem, size = 0x12000, scoped, tag = 'internal scratch']
  %s0 = inlined_call_operand.vmem [shape: bf16[16,640], index: 0, kind: input, shape index: {}]
  %s1 = inlined_call_operand.vmem [shape: bf16[640,128], index: 1, kind: input, shape index: {}]
  %s2 = inlined_call_operand.vmem [shape: f32[1,128], index: 2, kind: input, shape index: {}]
  %s3 = inlined_call_operand.vmem [shape: f32[1,128], index: 3, kind: input, shape index: {}]
  %s4 = inlined_call_operand.vmem [shape: bf16[16,128], index: 4, kind: output, shape index: {}]
  %s5 = sld [smem:[#allocation0]]
  $region26: #{resnet18_forward.23} parent=0
    _
  %s7 = ssub.s32 1, %s5
  %s8 = scalar_select 0, %s7, %s5
  // Predicated region
  $region2: #{resnet18_forward.23} parent=0 // pred_check
    _
  $region3: #{resnet18_forward.23} parent=0 // pred_check_branch
    %10 = sbr.rel (0) target = $region5
  $region4: #{resnet18_forward.23} parent=0 // pred_region
    _
  $region5: #{resnet18_forward.23} parent=0 // pred_fallthru
    _
  // Predicated region
  $region6: #{resnet18_forward.23} parent=0 // pred_check
    _
  $region7: #{resnet18_forward.23} parent=0 // pred_check_branch
    %12 = sbr.rel (0) target = $region9
  $region8: #{resnet18_forward.23} parent=0 // pred_region
    _
  $region9: #{resnet18_forward.23} parent=0 // pred_fallthru
    _
  // Predicated region
  $region10: #{resnet18_forward.23} parent=0 // pred_check
    _
  $region11: #{resnet18_forward.23} parent=0 // pred_check_branch
    %14 = sbr.rel (0) target = $region13
  $region12: #{resnet18_forward.23} parent=0 // pred_region
    _
  $region13: #{resnet18_forward.23} parent=0 // pred_fallthru
    _
  // Predicated region
  $region14: #{resnet18_forward.23} parent=0 // pred_check
    _
  $region15: #{resnet18_forward.23} parent=0 // pred_check_branch
    %16 = sbr.rel (0) target = $region17
  $region16: #{resnet18_forward.23} parent=0 // pred_region
    _
  $region17: #{resnet18_forward.23} parent=0 // pred_fallthru
    _
  %v18 = vld [vmem:[%s0] sm:$0xff]
  %v19 = vld [vmem:[%s0 + $0x8] sm:$0xff]
  %v20 = vld [vmem:[%s0 + $0x10] sm:$0xf]
  %v21 = vld [vmem:[%s0 + $0x14] sm:$0xff]
  %v22 = vld [vmem:[%s0 + $0x1c] sm:$0xff]
  %v23 = vld [vmem:[%s0 + $0x24] sm:$0xf]
  %v24 = vld [vmem:[%s1] sm:$0xf]
  %v25 = vld [vmem:[%s1 + $0x4] sm:$0xf]
  %v26 = vld [vmem:[%s1 + $0x8] sm:$0xf]
  %v27 = vld [vmem:[%s1 + $0xc] sm:$0xf]
  %v28 = vld [vmem:[%s1 + $0x10] sm:$0xf]
  %v29 = vld [vmem:[%s1 + $0x14] sm:$0xf]
  %v30 = vld [vmem:[%s1 + $0x18] sm:$0xf]
  %v31 = vld [vmem:[%s1 + $0x1c] sm:$0xf]
  %v32 = vld [vmem:[%s1 + $0x20] sm:$0xf]
  %v33 = vld [vmem:[%s1 + $0x24] sm:$0xf]
  %v34 = vld [vmem:[%s1 + $0x28] sm:$0xf]
  %v35 = vld [vmem:[%s1 + $0x2c] sm:$0xf]
  %v36 = vld [vmem:[%s1 + $0x30] sm:$0xf]
  %v37 = vld [vmem:[%s1 + $0x34] sm:$0xf]
  %v38 = vld [vmem:[%s1 + $0x38] sm:$0xf]
  %v39 = vld [vmem:[%s1 + $0x3c] sm:$0xf]
  %v40 = vld [vmem:[%s1 + $0x40] sm:$0xf]
  %v41 = vld [vmem:[%s1 + $0x44] sm:$0xf]
  %v42 = vld [vmem:[%s1 + $0x48] sm:$0xf]
  %v43 = vld [vmem:[%s1 + $0x4c] sm:$0xf]
  %v44 = vld [vmem:[%s1 + $0x50] sm:$0xf]
  %v45 = vld [vmem:[%s1 + $0x54] sm:$0xf]
  %v46 = vld [vmem:[%s1 + $0x58] sm:$0xf]
  %v47 = vld [vmem:[%s1 + $0x5c] sm:$0xf]
  %v48 = vld [vmem:[%s1 + $0x60] sm:$0xf]
  %v49 = vld [vmem:[%s1 + $0x64] sm:$0xf]
  %v50 = vld [vmem:[%s1 + $0x68] sm:$0xf]
  %v51 = vld [vmem:[%s1 + $0x6c] sm:$0xf]
  %v52 = vld [vmem:[%s1 + $0x70] sm:$0xf]
  %v53 = vld [vmem:[%s1 + $0x74] sm:$0xf]
  %v54 = vld [vmem:[%s1 + $0x78] sm:$0xf]
  %v55 = vld [vmem:[%s1 + $0x7c] sm:$0xf]
  %v56 = vld [vmem:[%s1 + $0x80] sm:$0xf]
  %v57 = vld [vmem:[%s1 + $0x84] sm:$0xf]
  %v58 = vld [vmem:[%s1 + $0x88] sm:$0xf]
  %v59 = vld [vmem:[%s1 + $0x8c] sm:$0xf]
  %v60 = vld [vmem:[%s1 + $0x90] sm:$0xf]
  %v61 = vld [vmem:[%s1 + $0x94] sm:$0xf]
  %v62 = vld [vmem:[%s1 + $0x98] sm:$0xf]
  %v63 = vld [vmem:[%s1 + $0x9c] sm:$0xf]
  %v64 = vld [vmem:[%s1 + $0xa0] sm:$0xf]
  %v65 = vld [vmem:[%s1 + $0xa4] sm:$0xf]
  %v66 = vld [vmem:[%s1 + $0xa8] sm:$0xf]
  %v67 = vld [vmem:[%s1 + $0xac] sm:$0xf]
  %v68 = vld [vmem:[%s1 + $0xb0] sm:$0xf]
  %v69 = vld [vmem:[%s1 + $0xb4] sm:$0xf]
  %v70 = vld [vmem:[%s1 + $0xb8] sm:$0xf]
  %v71 = vld [vmem:[%s1 + $0xbc] sm:$0xf]
  %v72 = vld [vmem:[%s1 + $0xc0] sm:$0xf]
  %v73 = vld [vmem:[%s1 + $0xc4] sm:$0xf]
  %v74 = vld [vmem:[%s1 + $0xc8] sm:$0xf]
  %v75 = vld [vmem:[%s1 + $0xcc] sm:$0xf]
  %v76 = vld [vmem:[%s1 + $0xd0] sm:$0xf]
  %v77 = vld [vmem:[%s1 + $0xd4] sm:$0xf]
  %v78 = vld [vmem:[%s1 + $0xd8] sm:$0xf]
  %v79 = vld [vmem:[%s1 + $0xdc] sm:$0xf]
  %v80 = vld [vmem:[%s1 + $0xe0] sm:$0xf]
  %v81 = vld [vmem:[%s1 + $0xe4] sm:$0xf]
  %v82 = vld [vmem:[%s1 + $0xe8] sm:$0xf]
  %v83 = vld [vmem:[%s1 + $0xec] sm:$0xf]
  %v84 = vld [vmem:[%s1 + $0xf0] sm:$0xf]
  %v85 = vld [vmem:[%s1 + $0xf4] sm:$0xf]
  %v86 = vld [vmem:[%s1 + $0xf8] sm:$0xf]
  %v87 = vld [vmem:[%s1 + $0xfc] sm:$0xf]
  %v88 = vld [vmem:[%s1 + $0x100] sm:$0xf]
  %v89 = vld [vmem:[%s1 + $0x104] sm:$0xf]
  %v90 = vld [vmem:[%s1 + $0x108] sm:$0xf]
  %v91 = vld [vmem:[%s1 + $0x10c] sm:$0xf]
  %v92 = vld [vmem:[%s1 + $0x110] sm:$0xf]
  %v93 = vld [vmem:[%s1 + $0x114] sm:$0xf]
  %v94 = vld [vmem:[%s1 + $0x118] sm:$0xf]
  %v95 = vld [vmem:[%s1 + $0x11c] sm:$0xf]
  %v96 = vld [vmem:[%s1 + $0x120] sm:$0xf]
  %v97 = vld [vmem:[%s1 + $0x124] sm:$0xf]
  %v98 = vld [vmem:[%s1 + $0x128] sm:$0xf]
  %v99 = vld [vmem:[%s1 + $0x12c] sm:$0xf]
  %v100 = vld [vmem:[%s1 + $0x130] sm:$0xf]
  %v101 = vld [vmem:[%s1 + $0x134] sm:$0xf]
  %v102 = vld [vmem:[%s1 + $0x138] sm:$0xf]
  %v103 = vld [vmem:[%s1 + $0x13c] sm:$0xf]
  %v110 = vunpack.c.l.b16 %v18
  %v111 = vunpack.c.h.b16 %v18
  %v112 = vunpack.c.l.b16 %v19
  %v113 = vunpack.c.h.b16 %v19
  %v114 = vunpack.c.l.b16 %v20
  %v115 = vunpack.c.l.b16 %v21
  %v116 = vunpack.c.h.b16 %v21
  %v117 = vunpack.c.l.b16 %v22
  %v118 = vunpack.c.h.b16 %v22
  %v119 = vunpack.c.l.b16 %v23
  %v120 = vpack.c.b16 %v115, %v110
  %v121 = vpack.c.b16 %v116, %v111
  %v122 = vpack.c.b16 %v117, %v112
  %v123 = vpack.c.b16 %v118, %v113
  %v124 = vpack.c.b16 %v119, %v114
  %v210 = vunpack.c.l.b16 %v24
  %v211 = vunpack.c.l.b16 %v25
  %v212 = vunpack.c.l.b16 %v26
  %v213 = vunpack.c.l.b16 %v27
  %v214 = vunpack.c.l.b16 %v28
  %v215 = vunpack.c.l.b16 %v29
  %v216 = vunpack.c.l.b16 %v30
  %v217 = vunpack.c.l.b16 %v31
  %v218 = vunpack.c.l.b16 %v32
  %v219 = vunpack.c.l.b16 %v33
  %v220 = vunpack.c.l.b16 %v34
  %v221 = vunpack.c.l.b16 %v35
  %v222 = vunpack.c.l.b16 %v36
  %v223 = vunpack.c.l.b16 %v37
  %v224 = vunpack.c.l.b16 %v38
  %v225 = vunpack.c.l.b16 %v39
  %v226 = vunpack.c.l.b16 %v40
  %v227 = vunpack.c.l.b16 %v41
  %v228 = vunpack.c.l.b16 %v42
  %v229 = vunpack.c.l.b16 %v43
  %v230 = vunpack.c.l.b16 %v44
  %v231 = vunpack.c.l.b16 %v45
  %v232 = vunpack.c.l.b16 %v46
  %v233 = vunpack.c.l.b16 %v47
  %v234 = vunpack.c.l.b16 %v48
  %v235 = vunpack.c.l.b16 %v49
  %v236 = vunpack.c.l.b16 %v50
  %v237 = vunpack.c.l.b16 %v51
  %v238 = vunpack.c.l.b16 %v52
  %v239 = vunpack.c.l.b16 %v53
  %v240 = vunpack.c.l.b16 %v54
  %v241 = vunpack.c.l.b16 %v55
  %v242 = vunpack.c.l.b16 %v56
  %v243 = vunpack.c.l.b16 %v57
  %v244 = vunpack.c.l.b16 %v58
  %v245 = vunpack.c.l.b16 %v59
  %v246 = vunpack.c.l.b16 %v60
  %v247 = vunpack.c.l.b16 %v61
  %v248 = vunpack.c.l.b16 %v62
  %v249 = vunpack.c.l.b16 %v63
  %v250 = vunpack.c.l.b16 %v64
  %v251 = vunpack.c.l.b16 %v65
  %v252 = vunpack.c.l.b16 %v66
  %v253 = vunpack.c.l.b16 %v67
  %v254 = vunpack.c.l.b16 %v68
  %v255 = vunpack.c.l.b16 %v69
  %v256 = vunpack.c.l.b16 %v70
  %v257 = vunpack.c.l.b16 %v71
  %v258 = vunpack.c.l.b16 %v72
  %v259 = vunpack.c.l.b16 %v73
  %v260 = vunpack.c.l.b16 %v74
  %v261 = vunpack.c.l.b16 %v75
  %v262 = vunpack.c.l.b16 %v76
  %v263 = vunpack.c.l.b16 %v77
  %v264 = vunpack.c.l.b16 %v78
  %v265 = vunpack.c.l.b16 %v79
  %v266 = vunpack.c.l.b16 %v80
  %v267 = vunpack.c.l.b16 %v81
  %v268 = vunpack.c.l.b16 %v82
  %v269 = vunpack.c.l.b16 %v83
  %v270 = vunpack.c.l.b16 %v84
  %v271 = vunpack.c.l.b16 %v85
  %v272 = vunpack.c.l.b16 %v86
  %v273 = vunpack.c.l.b16 %v87
  %v274 = vunpack.c.l.b16 %v88
  %v275 = vunpack.c.l.b16 %v89
  %v276 = vunpack.c.l.b16 %v90
  %v277 = vunpack.c.l.b16 %v91
  %v278 = vunpack.c.l.b16 %v92
  %v279 = vunpack.c.l.b16 %v93
  %v280 = vunpack.c.l.b16 %v94
  %v281 = vunpack.c.l.b16 %v95
  %v282 = vunpack.c.l.b16 %v96
  %v283 = vunpack.c.l.b16 %v97
  %v284 = vunpack.c.l.b16 %v98
  %v285 = vunpack.c.l.b16 %v99
  %v286 = vunpack.c.l.b16 %v100
  %v287 = vunpack.c.l.b16 %v101
  %v288 = vunpack.c.l.b16 %v102
  %v289 = vunpack.c.l.b16 %v103
  %v290 = vpack.c.b16 %v211, %v210
  %v291 = vpack.c.b16 %v213, %v212
  %v292 = vpack.c.b16 %v215, %v214
  %v293 = vpack.c.b16 %v217, %v216
  %v294 = vpack.c.b16 %v219, %v218
  %v295 = vpack.c.b16 %v221, %v220
  %v296 = vpack.c.b16 %v223, %v222
  %v297 = vpack.c.b16 %v225, %v224
  %v298 = vpack.c.b16 %v227, %v226
  %v299 = vpack.c.b16 %v229, %v228
  %v300 = vpack.c.b16 %v231, %v230
  %v301 = vpack.c.b16 %v233, %v232
  %v302 = vpack.c.b16 %v235, %v234
  %v303 = vpack.c.b16 %v237, %v236
  %v304 = vpack.c.b16 %v239, %v238
  %v305 = vpack.c.b16 %v241, %v240
  %v306 = vpack.c.b16 %v243, %v242
  %v307 = vpack.c.b16 %v245, %v244
  %v308 = vpack.c.b16 %v247, %v246
  %v309 = vpack.c.b16 %v249, %v248
  %v310 = vpack.c.b16 %v251, %v250
  %v311 = vpack.c.b16 %v253, %v252
  %v312 = vpack.c.b16 %v255, %v254
  %v313 = vpack.c.b16 %v257, %v256
  %v314 = vpack.c.b16 %v259, %v258
  %v315 = vpack.c.b16 %v261, %v260
  %v316 = vpack.c.b16 %v263, %v262
  %v317 = vpack.c.b16 %v265, %v264
  %v318 = vpack.c.b16 %v267, %v266
  %v319 = vpack.c.b16 %v269, %v268
  %v320 = vpack.c.b16 %v271, %v270
  %v321 = vpack.c.b16 %v273, %v272
  %v322 = vpack.c.b16 %v275, %v274
  %v323 = vpack.c.b16 %v277, %v276
  %v324 = vpack.c.b16 %v279, %v278
  %v325 = vpack.c.b16 %v281, %v280
  %v326 = vpack.c.b16 %v283, %v282
  %v327 = vpack.c.b16 %v285, %v284
  %v328 = vpack.c.b16 %v287, %v286
  %v329 = vpack.c.b16 %v289, %v288
  %370 = vmatprep.subr.bf16.mxu0 0
  %371 = vmatpush1.bf16.msra.mxu0 %v290
  %372 = vmatprep.subr.bf16.mxu0 0
  %373 = vmatpush1.bf16.msra.mxu0 %v291
  %374 = vmatprep.subr.bf16.mxu0 0
  %375 = vmatpush1.bf16.msra.mxu0 %v292
  %376 = vmatprep.subr.bf16.mxu0 0
  %377 = vmatpush1.bf16.msra.mxu0 %v293
  %378 = vmatprep.subr.bf16.mxu0 0
  %379 = vmatpush1.bf16.msra.mxu0 %v294
  %380 = vmatprep.subr.bf16.mxu0 0
  %381 = vmatpush1.bf16.msra.mxu0 %v295
  %382 = vmatprep.subr.bf16.mxu0 0
  %383 = vmatpush1.bf16.msra.mxu0 %v296
  %384 = vmatprep.subr.bf16.mxu0 0
  %385 = vmatpush1.bf16.msra.mxu0 %v297
  %386 = vmatprep.subr.bf16.mxu0 0
  %387 = vmatpush1.bf16.msra.mxu0 %v298
  %388 = vmatprep.subr.bf16.mxu0 0
  %389 = vmatpush1.bf16.msra.mxu0 %v299
  %390 = vmatprep.subr.bf16.mxu0 0
  %391 = vmatpush1.bf16.msra.mxu0 %v300
  %392 = vmatprep.subr.bf16.mxu0 0
  %393 = vmatpush1.bf16.msra.mxu0 %v301
  %394 = vmatprep.subr.bf16.mxu0 0
  %395 = vmatpush1.bf16.msra.mxu0 %v302
  %396 = vmatprep.subr.bf16.mxu0 0
  %397 = vmatpush1.bf16.msra.mxu0 %v303
  %398 = vmatprep.subr.bf16.mxu0 0
  %399 = vmatpush1.bf16.msra.mxu0 %v304
  %400 = vmatprep.subr.bf16.mxu0 0
  %401 = vmatpush1.bf16.msra.mxu0 %v305
  %402 = vmatprep.mubr.bf16.mxu0 %v121
  %403 = vmatmul.mubr.bf16.gmra.mrb[0].mxu0 %v120
  %v404 = vpop.f32.mrb[0].mxu0
  %v405 = vadd.f32 0.0, %v404
  %v406 = vpop.f32.mrb[0].mxu0
  %v407 = vpop.f32.mrb[0].mxu0
  %v408 = vadd.f32 0.0, %v407
  %v409 = vpop.f32.mrb[0].mxu0
  %410 = vdwg.mxu0
  %411 = vmatprep.subr.bf16.mxu0 0
  %412 = vmatpush1.bf16.msra.mxu0 %v306
  %413 = vmatprep.subr.bf16.mxu0 0
  %414 = vmatpush1.bf16.msra.mxu0 %v307
  %415 = vmatprep.subr.bf16.mxu0 0
  %416 = vmatpush1.bf16.msra.mxu0 %v308
  %417 = vmatprep.subr.bf16.mxu0 0
  %418 = vmatpush1.bf16.msra.mxu0 %v309
  %419 = vmatprep.subr.bf16.mxu0 0
  %420 = vmatpush1.bf16.msra.mxu0 %v310
  %421 = vmatprep.subr.bf16.mxu0 0
  %422 = vmatpush1.bf16.msra.mxu0 %v311
  %423 = vmatprep.subr.bf16.mxu0 0
  %424 = vmatpush1.bf16.msra.mxu0 %v312
  %425 = vmatprep.subr.bf16.mxu0 0
  %426 = vmatpush1.bf16.msra.mxu0 %v313
  %427 = vmatprep.subr.bf16.mxu0 0
  %428 = vmatpush1.bf16.msra.mxu0 %v314
  %429 = vmatprep.subr.bf16.mxu0 0
  %430 = vmatpush1.bf16.msra.mxu0 %v315
  %431 = vmatprep.subr.bf16.mxu0 0
  %432 = vmatpush1.bf16.msra.mxu0 %v316
  %433 = vmatprep.subr.bf16.mxu0 0
  %434 = vmatpush1.bf16.msra.mxu0 %v317
  %435 = vmatprep.subr.bf16.mxu0 0
  %436 = vmatpush1.bf16.msra.mxu0 %v318
  %437 = vmatprep.subr.bf16.mxu0 0
  %438 = vmatpush1.bf16.msra.mxu0 %v319
  %439 = vmatprep.subr.bf16.mxu0 0
  %440 = vmatpush1.bf16.msra.mxu0 %v320
  %441 = vmatprep.subr.bf16.mxu0 0
  %442 = vmatpush1.bf16.msra.mxu0 %v321
  %443 = vmatprep.mubr.bf16.mxu0 %v123
  %444 = vmatmul.mubr.bf16.gmra.mrb[0].mxu0 %v122
  %v445 = vpop.f32.mrb[0].mxu0
  %v446 = vadd.f32 %v405, %v445
  %v447 = vpop.f32.mrb[0].mxu0
  %v448 = vpop.f32.mrb[0].mxu0
  %v449 = vadd.f32 %v408, %v448
  %v450 = vpop.f32.mrb[0].mxu0
  %451 = vdwg.mxu0
  %452 = vmatprep.subr.bf16.mxu0 0
  %453 = vmatpush1.bf16.msra.mxu0 %v322
  %454 = vmatprep.subr.bf16.mxu0 0
  %455 = vmatpush1.bf16.msra.mxu0 %v323
  %456 = vmatprep.subr.bf16.mxu0 0
  %457 = vmatpush1.bf16.msra.mxu0 %v324
  %458 = vmatprep.subr.bf16.mxu0 0
  %459 = vmatpush1.bf16.msra.mxu0 %v325
  %460 = vmatprep.subr.bf16.mxu0 0
  %461 = vmatpush1.bf16.msra.mxu0 %v326
  %462 = vmatprep.subr.bf16.mxu0 0
  %463 = vmatpush1.bf16.msra.mxu0 %v327
  %464 = vmatprep.subr.bf16.mxu0 0
  %465 = vmatpush1.bf16.msra.mxu0 %v328
  %466 = vmatprep.subr.bf16.mxu0 0
  %467 = vmatpush1.bf16.msra.mxu0 %v329
  %468 = vmatprep.subr.bf16.mxu0 0
  %469 = vmatpush1.bf16.msra.mxu0 0
  %470 = vmatprep.subr.bf16.mxu0 0
  %471 = vmatpush1.bf16.msra.mxu0 0
  %472 = vmatprep.subr.bf16.mxu0 0
  %473 = vmatpush1.bf16.msra.mxu0 0
  %474 = vmatprep.subr.bf16.mxu0 0
  %475 = vmatpush1.bf16.msra.mxu0 0
  %476 = vmatprep.subr.bf16.mxu0 0
  %477 = vmatpush1.bf16.msra.mxu0 0
  %478 = vmatprep.subr.bf16.mxu0 0
  %479 = vmatpush1.bf16.msra.mxu0 0
  %480 = vmatprep.subr.bf16.mxu0 0
  %481 = vmatpush1.bf16.msra.mxu0 0
  %482 = vmatprep.subr.bf16.mxu0 0
  %483 = vmatpush1.bf16.msra.mxu0 0
  %484 = vmatprep.mubr.bf16.mxu0 0
  %485 = vmatmul.mubr.bf16.gmra.mrb[0].mxu0 %v124
  %v486 = vpop.f32.mrb[0].mxu0
  %v487 = vadd.f32 %v446, %v486
  %v488 = vpop.f32.mrb[0].mxu0
  %v489 = vpop.f32.mrb[0].mxu0
  %v490 = vadd.f32 %v449, %v489
  %v491 = vpop.f32.mrb[0].mxu0
  %492 = vdwg.mxu0
  %v493 = vld [vmem:[%s2] sm:$0x1]
  %v494 = vld [vmem:[%s3] sm:$0x1]
  %v495 = vadd.f32 %v487, %v490
  %v496 = vrot.slane %v495, 4
  %v497 = vadd.f32 %v495, %v496
  %v498 = vrot.slane %v497, 2
  %v499 = vadd.f32 %v497, %v498
  %v500 = vrot.slane %v499, 1
  %v501 = vadd.f32 %v499, %v500
  %v502 = vrcp.pop 8.0
  %v503 = vmul.f32 %v501, %v502
  %v504 = vmul.f32 %v487, %v487
  %v505 = vmul.f32 %v490, %v490
  %v506 = vadd.f32 %v504, %v505
  %v507 = vrot.slane %v506, 4
  %v508 = vadd.f32 %v506, %v507
  %v509 = vrot.slane %v508, 2
  %v510 = vadd.f32 %v508, %v509
  %v511 = vrot.slane %v510, 1
  %v512 = vadd.f32 %v510, %v511
  %v513 = vmul.f32 %v512, %v502
  %v514 = vmul.f32 %v503, %v503
  %v515 = vsub.f32 %v513, %v514
  %v516 = vmax.f32 %v515, 0.0
  %v517 = vsub.f32 %v487, %v503
  %v518 = vsub.f32 %v490, %v503
  %v519 = vadd.f32 %v516, 1e-05
  %v520 = vrsqrt.pop %v519
  %v521 = vmul.f32 %v517, %v520
  %v522 = vmul.f32 %v518, %v520
  %v524 = vlaneseq
  %v525 = vshrl.u32 %v524, 7
  %v526 = vsub.s32 0, %v525
  %v527 = vrot.slane %v493, %v526
  %v529 = vmul.f32 %v521, %v527
  %v530 = vmul.f32 %v522, %v527
  %v532 = vlaneseq
  %v533 = vshrl.u32 %v532, 7
  %v534 = vsub.s32 0, %v533
  %v535 = vrot.slane %v494, %v534
  %v537 = vadd.f32 %v529, %v535
  %v538 = vadd.f32 %v530, %v535
  %v539 = vmax.f32 %v537, 0.0
  %v540 = vmax.f32 %v538, 0.0
  %v541 = vpack.c.bf16 %v540, %v539
  %v543 = vunpack.c.l.b16 %v541
  %v544 = vunpack.c.h.b16 %v541
  %v545 = vpack.c.b16 %v543, %v543
  %v546 = vpack.c.b16 %v544, %v544
  %549 = vst [vmem:[%s4] sm:$0xf] %v545
  %550 = vst [vmem:[%s4 + $0x4] sm:$0xf] %v546
  // Predicated region
  $region18: #{resnet18_forward.23} parent=0 // pred_check
    _
  $region19: #{resnet18_forward.23} parent=0 // pred_check_branch
    %552 = sbr.rel (0) target = $region21
  $region20: #{resnet18_forward.23} parent=0 // pred_region
    _
  $region21: #{resnet18_forward.23} parent=0 // pred_fallthru
    _
  // Predicated region
  $region22: #{resnet18_forward.23} parent=0 // pred_check
    _
  $region23: #{resnet18_forward.23} parent=0 // pred_check_branch
    %554 = sbr.rel (0) target = $region25
  $region24: #{resnet18_forward.23} parent=0 // pred_region
    _
  $region25: #{resnet18_forward.23} parent=0 // pred_fallthru
    _

// kernel: resnet18_forward.25
$region0: #{resnet18_forward.25}
  #allocation0 [shape = 'u32[]', space=smem, size = 0x4, offset = 0x4, fixed_abs, tag = 'smem constant byte address 0x4 - core index']
  #allocation1 [shape = 'u32[144,128]{1,0:T(1,128)}', space=vmem, size = 0x12000, scoped, tag = 'internal scratch']
  %s0 = inlined_call_operand.vmem [shape: bf16[16,1152], index: 0, kind: input, shape index: {}]
  %s1 = inlined_call_operand.vmem [shape: bf16[1152,128], index: 1, kind: input, shape index: {}]
  %s2 = inlined_call_operand.vmem [shape: f32[1,128], index: 2, kind: input, shape index: {}]
  %s3 = inlined_call_operand.vmem [shape: f32[1,128], index: 3, kind: input, shape index: {}]
  %s4 = inlined_call_operand.vmem [shape: bf16[16,128], index: 4, kind: output, shape index: {}]
  %s5 = sld [smem:[#allocation0]]
  $region26: #{resnet18_forward.25} parent=0
    _
  %s7 = ssub.s32 1, %s5
  %s8 = scalar_select 0, %s7, %s5
  // Predicated region
  $region2: #{resnet18_forward.25} parent=0 // pred_check
    _
  $region3: #{resnet18_forward.25} parent=0 // pred_check_branch
    %10 = sbr.rel (0) target = $region5
  $region4: #{resnet18_forward.25} parent=0 // pred_region
    _
  $region5: #{resnet18_forward.25} parent=0 // pred_fallthru
    _
  // Predicated region
  $region6: #{resnet18_forward.25} parent=0 // pred_check
    _
  $region7: #{resnet18_forward.25} parent=0 // pred_check_branch
    %12 = sbr.rel (0) target = $region9
  $region8: #{resnet18_forward.25} parent=0 // pred_region
    _
  $region9: #{resnet18_forward.25} parent=0 // pred_fallthru
    _
  // Predicated region
  $region10: #{resnet18_forward.25} parent=0 // pred_check
    _
  $region11: #{resnet18_forward.25} parent=0 // pred_check_branch
    %14 = sbr.rel (0) target = $region13
  $region12: #{resnet18_forward.25} parent=0 // pred_region
    _
  $region13: #{resnet18_forward.25} parent=0 // pred_fallthru
    _
  // Predicated region
  $region14: #{resnet18_forward.25} parent=0 // pred_check
    _
  $region15: #{resnet18_forward.25} parent=0 // pred_check_branch
    %16 = sbr.rel (0) target = $region17
  $region16: #{resnet18_forward.25} parent=0 // pred_region
    _
  $region17: #{resnet18_forward.25} parent=0 // pred_fallthru
    _
  %v18 = vld [vmem:[%s0] sm:$0xff]
  %v19 = vld [vmem:[%s0 + $0x8] sm:$0xff]
  %v20 = vld [vmem:[%s0 + $0x10] sm:$0xff]
  %v21 = vld [vmem:[%s0 + $0x18] sm:$0xff]
  %v22 = vld [vmem:[%s0 + $0x20] sm:$0xf]
  %v23 = vld [vmem:[%s0 + $0x24] sm:$0xff]
  %v24 = vld [vmem:[%s0 + $0x2c] sm:$0xff]
  %v25 = vld [vmem:[%s0 + $0x34] sm:$0xff]
  %v26 = vld [vmem:[%s0 + $0x3c] sm:$0xff]
  %v27 = vld [vmem:[%s0 + $0x44] sm:$0xf]
  %v28 = vld [vmem:[%s1] sm:$0xf]
  %v29 = vld [vmem:[%s1 + $0x4] sm:$0xf]
  %v30 = vld [vmem:[%s1 + $0x8] sm:$0xf]
  %v31 = vld [vmem:[%s1 + $0xc] sm:$0xf]
  %v32 = vld [vmem:[%s1 + $0x10] sm:$0xf]
  %v33 = vld [vmem:[%s1 + $0x14] sm:$0xf]
  %v34 = vld [vmem:[%s1 + $0x18] sm:$0xf]
  %v35 = vld [vmem:[%s1 + $0x1c] sm:$0xf]
  %v36 = vld [vmem:[%s1 + $0x20] sm:$0xf]
  %v37 = vld [vmem:[%s1 + $0x24] sm:$0xf]
  %v38 = vld [vmem:[%s1 + $0x28] sm:$0xf]
  %v39 = vld [vmem:[%s1 + $0x2c] sm:$0xf]
  %v40 = vld [vmem:[%s1 + $0x30] sm:$0xf]
  %v41 = vld [vmem:[%s1 + $0x34] sm:$0xf]
  %v42 = vld [vmem:[%s1 + $0x38] sm:$0xf]
  %v43 = vld [vmem:[%s1 + $0x3c] sm:$0xf]
  %v44 = vld [vmem:[%s1 + $0x40] sm:$0xf]
  %v45 = vld [vmem:[%s1 + $0x44] sm:$0xf]
  %v46 = vld [vmem:[%s1 + $0x48] sm:$0xf]
  %v47 = vld [vmem:[%s1 + $0x4c] sm:$0xf]
  %v48 = vld [vmem:[%s1 + $0x50] sm:$0xf]
  %v49 = vld [vmem:[%s1 + $0x54] sm:$0xf]
  %v50 = vld [vmem:[%s1 + $0x58] sm:$0xf]
  %v51 = vld [vmem:[%s1 + $0x5c] sm:$0xf]
  %v52 = vld [vmem:[%s1 + $0x60] sm:$0xf]
  %v53 = vld [vmem:[%s1 + $0x64] sm:$0xf]
  %v54 = vld [vmem:[%s1 + $0x68] sm:$0xf]
  %v55 = vld [vmem:[%s1 + $0x6c] sm:$0xf]
  %v56 = vld [vmem:[%s1 + $0x70] sm:$0xf]
  %v57 = vld [vmem:[%s1 + $0x74] sm:$0xf]
  %v58 = vld [vmem:[%s1 + $0x78] sm:$0xf]
  %v59 = vld [vmem:[%s1 + $0x7c] sm:$0xf]
  %v60 = vld [vmem:[%s1 + $0x80] sm:$0xf]
  %v61 = vld [vmem:[%s1 + $0x84] sm:$0xf]
  %v62 = vld [vmem:[%s1 + $0x88] sm:$0xf]
  %v63 = vld [vmem:[%s1 + $0x8c] sm:$0xf]
  %v64 = vld [vmem:[%s1 + $0x90] sm:$0xf]
  %v65 = vld [vmem:[%s1 + $0x94] sm:$0xf]
  %v66 = vld [vmem:[%s1 + $0x98] sm:$0xf]
  %v67 = vld [vmem:[%s1 + $0x9c] sm:$0xf]
  %v68 = vld [vmem:[%s1 + $0xa0] sm:$0xf]
  %v69 = vld [vmem:[%s1 + $0xa4] sm:$0xf]
  %v70 = vld [vmem:[%s1 + $0xa8] sm:$0xf]
  %v71 = vld [vmem:[%s1 + $0xac] sm:$0xf]
  %v72 = vld [vmem:[%s1 + $0xb0] sm:$0xf]
  %v73 = vld [vmem:[%s1 + $0xb4] sm:$0xf]
  %v74 = vld [vmem:[%s1 + $0xb8] sm:$0xf]
  %v75 = vld [vmem:[%s1 + $0xbc] sm:$0xf]
  %v76 = vld [vmem:[%s1 + $0xc0] sm:$0xf]
  %v77 = vld [vmem:[%s1 + $0xc4] sm:$0xf]
  %v78 = vld [vmem:[%s1 + $0xc8] sm:$0xf]
  %v79 = vld [vmem:[%s1 + $0xcc] sm:$0xf]
  %v80 = vld [vmem:[%s1 + $0xd0] sm:$0xf]
  %v81 = vld [vmem:[%s1 + $0xd4] sm:$0xf]
  %v82 = vld [vmem:[%s1 + $0xd8] sm:$0xf]
  %v83 = vld [vmem:[%s1 + $0xdc] sm:$0xf]
  %v84 = vld [vmem:[%s1 + $0xe0] sm:$0xf]
  %v85 = vld [vmem:[%s1 + $0xe4] sm:$0xf]
  %v86 = vld [vmem:[%s1 + $0xe8] sm:$0xf]
  %v87 = vld [vmem:[%s1 + $0xec] sm:$0xf]
  %v88 = vld [vmem:[%s1 + $0xf0] sm:$0xf]
  %v89 = vld [vmem:[%s1 + $0xf4] sm:$0xf]
  %v90 = vld [vmem:[%s1 + $0xf8] sm:$0xf]
  %v91 = vld [vmem:[%s1 + $0xfc] sm:$0xf]
  %v92 = vld [vmem:[%s1 + $0x100] sm:$0xf]
  %v93 = vld [vmem:[%s1 + $0x104] sm:$0xf]
  %v94 = vld [vmem:[%s1 + $0x108] sm:$0xf]
  %v95 = vld [vmem:[%s1 + $0x10c] sm:$0xf]
  %v96 = vld [vmem:[%s1 + $0x110] sm:$0xf]
  %v97 = vld [vmem:[%s1 + $0x114] sm:$0xf]
  %v98 = vld [vmem:[%s1 + $0x118] sm:$0xf]
  %v99 = vld [vmem:[%s1 + $0x11c] sm:$0xf]
  %v100 = vld [vmem:[%s1 + $0x120] sm:$0xf]
  %v101 = vld [vmem:[%s1 + $0x124] sm:$0xf]
  %v102 = vld [vmem:[%s1 + $0x128] sm:$0xf]
  %v103 = vld [vmem:[%s1 + $0x12c] sm:$0xf]
  %v104 = vld [vmem:[%s1 + $0x130] sm:$0xf]
  %v105 = vld [vmem:[%s1 + $0x134] sm:$0xf]
  %v106 = vld [vmem:[%s1 + $0x138] sm:$0xf]
  %v107 = vld [vmem:[%s1 + $0x13c] sm:$0xf]
  %v108 = vld [vmem:[%s1 + $0x140] sm:$0xf]
  %v109 = vld [vmem:[%s1 + $0x144] sm:$0xf]
  %v110 = vld [vmem:[%s1 + $0x148] sm:$0xf]
  %v111 = vld [vmem:[%s1 + $0x14c] sm:$0xf]
  %v112 = vld [vmem:[%s1 + $0x150] sm:$0xf]
  %v113 = vld [vmem:[%s1 + $0x154] sm:$0xf]
  %v114 = vld [vmem:[%s1 + $0x158] sm:$0xf]
  %v115 = vld [vmem:[%s1 + $0x15c] sm:$0xf]
  %v116 = vld [vmem:[%s1 + $0x160] sm:$0xf]
  %v117 = vld [vmem:[%s1 + $0x164] sm:$0xf]
  %v118 = vld [vmem:[%s1 + $0x168] sm:$0xf]
  %v119 = vld [vmem:[%s1 + $0x16c] sm:$0xf]
  %v120 = vld [vmem:[%s1 + $0x170] sm:$0xf]
  %v121 = vld [vmem:[%s1 + $0x174] sm:$0xf]
  %v122 = vld [vmem:[%s1 + $0x178] sm:$0xf]
  %v123 = vld [vmem:[%s1 + $0x17c] sm:$0xf]
  %v124 = vld [vmem:[%s1 + $0x180] sm:$0xf]
  %v125 = vld [vmem:[%s1 + $0x184] sm:$0xf]
  %v126 = vld [vmem:[%s1 + $0x188] sm:$0xf]
  %v127 = vld [vmem:[%s1 + $0x18c] sm:$0xf]
  %v128 = vld [vmem:[%s1 + $0x190] sm:$0xf]
  %v129 = vld [vmem:[%s1 + $0x194] sm:$0xf]
  %v130 = vld [vmem:[%s1 + $0x198] sm:$0xf]
  %v131 = vld [vmem:[%s1 + $0x19c] sm:$0xf]
  %v132 = vld [vmem:[%s1 + $0x1a0] sm:$0xf]
  %v133 = vld [vmem:[%s1 + $0x1a4] sm:$0xf]
  %v134 = vld [vmem:[%s1 + $0x1a8] sm:$0xf]
  %v135 = vld [vmem:[%s1 + $0x1ac] sm:$0xf]
  %v136 = vld [vmem:[%s1 + $0x1b0] sm:$0xf]
  %v137 = vld [vmem:[%s1 + $0x1b4] sm:$0xf]
  %v138 = vld [vmem:[%s1 + $0x1b8] sm:$0xf]
  %v139 = vld [vmem:[%s1 + $0x1bc] sm:$0xf]
  %v140 = vld [vmem:[%s1 + $0x1c0] sm:$0xf]
  %v141 = vld [vmem:[%s1 + $0x1c4] sm:$0xf]
  %v142 = vld [vmem:[%s1 + $0x1c8] sm:$0xf]
  %v143 = vld [vmem:[%s1 + $0x1cc] sm:$0xf]
  %v144 = vld [vmem:[%s1 + $0x1d0] sm:$0xf]
  %v145 = vld [vmem:[%s1 + $0x1d4] sm:$0xf]
  %v146 = vld [vmem:[%s1 + $0x1d8] sm:$0xf]
  %v147 = vld [vmem:[%s1 + $0x1dc] sm:$0xf]
  %v148 = vld [vmem:[%s1 + $0x1e0] sm:$0xf]
  %v149 = vld [vmem:[%s1 + $0x1e4] sm:$0xf]
  %v150 = vld [vmem:[%s1 + $0x1e8] sm:$0xf]
  %v151 = vld [vmem:[%s1 + $0x1ec] sm:$0xf]
  %v152 = vld [vmem:[%s1 + $0x1f0] sm:$0xf]
  %v153 = vld [vmem:[%s1 + $0x1f4] sm:$0xf]
  %v154 = vld [vmem:[%s1 + $0x1f8] sm:$0xf]
  %v155 = vld [vmem:[%s1 + $0x1fc] sm:$0xf]
  %v156 = vld [vmem:[%s1 + $0x200] sm:$0xf]
  %v157 = vld [vmem:[%s1 + $0x204] sm:$0xf]
  %v158 = vld [vmem:[%s1 + $0x208] sm:$0xf]
  %v159 = vld [vmem:[%s1 + $0x20c] sm:$0xf]
  %v160 = vld [vmem:[%s1 + $0x210] sm:$0xf]
  %v161 = vld [vmem:[%s1 + $0x214] sm:$0xf]
  %v162 = vld [vmem:[%s1 + $0x218] sm:$0xf]
  %v163 = vld [vmem:[%s1 + $0x21c] sm:$0xf]
  %v164 = vld [vmem:[%s1 + $0x220] sm:$0xf]
  %v165 = vld [vmem:[%s1 + $0x224] sm:$0xf]
  %v166 = vld [vmem:[%s1 + $0x228] sm:$0xf]
  %v167 = vld [vmem:[%s1 + $0x22c] sm:$0xf]
  %v168 = vld [vmem:[%s1 + $0x230] sm:$0xf]
  %v169 = vld [vmem:[%s1 + $0x234] sm:$0xf]
  %v170 = vld [vmem:[%s1 + $0x238] sm:$0xf]
  %v171 = vld [vmem:[%s1 + $0x23c] sm:$0xf]
  %v182 = vunpack.c.l.b16 %v18
  %v183 = vunpack.c.h.b16 %v18
  %v184 = vunpack.c.l.b16 %v19
  %v185 = vunpack.c.h.b16 %v19
  %v186 = vunpack.c.l.b16 %v20
  %v187 = vunpack.c.h.b16 %v20
  %v188 = vunpack.c.l.b16 %v21
  %v189 = vunpack.c.h.b16 %v21
  %v190 = vunpack.c.l.b16 %v22
  %v191 = vunpack.c.l.b16 %v23
  %v192 = vunpack.c.h.b16 %v23
  %v193 = vunpack.c.l.b16 %v24
  %v194 = vunpack.c.h.b16 %v24
  %v195 = vunpack.c.l.b16 %v25
  %v196 = vunpack.c.h.b16 %v25
  %v197 = vunpack.c.l.b16 %v26
  %v198 = vunpack.c.h.b16 %v26
  %v199 = vunpack.c.l.b16 %v27
  %v200 = vpack.c.b16 %v191, %v182
  %v201 = vpack.c.b16 %v192, %v183
  %v202 = vpack.c.b16 %v193, %v184
  %v203 = vpack.c.b16 %v194, %v185
  %v204 = vpack.c.b16 %v195, %v186
  %v205 = vpack.c.b16 %v196, %v187
  %v206 = vpack.c.b16 %v197, %v188
  %v207 = vpack.c.b16 %v198, %v189
  %v208 = vpack.c.b16 %v199, %v190
  %v362 = vunpack.c.l.b16 %v28
  %v363 = vunpack.c.l.b16 %v29
  %v364 = vunpack.c.l.b16 %v30
  %v365 = vunpack.c.l.b16 %v31
  %v366 = vunpack.c.l.b16 %v32
  %v367 = vunpack.c.l.b16 %v33
  %v368 = vunpack.c.l.b16 %v34
  %v369 = vunpack.c.l.b16 %v35
  %v370 = vunpack.c.l.b16 %v36
  %v371 = vunpack.c.l.b16 %v37
  %v372 = vunpack.c.l.b16 %v38
  %v373 = vunpack.c.l.b16 %v39
  %v374 = vunpack.c.l.b16 %v40
  %v375 = vunpack.c.l.b16 %v41
  %v376 = vunpack.c.l.b16 %v42
  %v377 = vunpack.c.l.b16 %v43
  %v378 = vunpack.c.l.b16 %v44
  %v379 = vunpack.c.l.b16 %v45
  %v380 = vunpack.c.l.b16 %v46
  %v381 = vunpack.c.l.b16 %v47
  %v382 = vunpack.c.l.b16 %v48
  %v383 = vunpack.c.l.b16 %v49
  %v384 = vunpack.c.l.b16 %v50
  %v385 = vunpack.c.l.b16 %v51
  %v386 = vunpack.c.l.b16 %v52
  %v387 = vunpack.c.l.b16 %v53
  %v388 = vunpack.c.l.b16 %v54
  %v389 = vunpack.c.l.b16 %v55
  %v390 = vunpack.c.l.b16 %v56
  %v391 = vunpack.c.l.b16 %v57
  %v392 = vunpack.c.l.b16 %v58
  %v393 = vunpack.c.l.b16 %v59
  %v394 = vunpack.c.l.b16 %v60
  %v395 = vunpack.c.l.b16 %v61
  %v396 = vunpack.c.l.b16 %v62
  %v397 = vunpack.c.l.b16 %v63
  %v398 = vunpack.c.l.b16 %v64
  %v399 = vunpack.c.l.b16 %v65
  %v400 = vunpack.c.l.b16 %v66
  %v401 = vunpack.c.l.b16 %v67
  %v402 = vunpack.c.l.b16 %v68
  %v403 = vunpack.c.l.b16 %v69
  %v404 = vunpack.c.l.b16 %v70
  %v405 = vunpack.c.l.b16 %v71
  %v406 = vunpack.c.l.b16 %v72
  %v407 = vunpack.c.l.b16 %v73
  %v408 = vunpack.c.l.b16 %v74
  %v409 = vunpack.c.l.b16 %v75
  %v410 = vunpack.c.l.b16 %v76
  %v411 = vunpack.c.l.b16 %v77
  %v412 = vunpack.c.l.b16 %v78
  %v413 = vunpack.c.l.b16 %v79
  %v414 = vunpack.c.l.b16 %v80
  %v415 = vunpack.c.l.b16 %v81
  %v416 = vunpack.c.l.b16 %v82
  %v417 = vunpack.c.l.b16 %v83
  %v418 = vunpack.c.l.b16 %v84
  %v419 = vunpack.c.l.b16 %v85
  %v420 = vunpack.c.l.b16 %v86
  %v421 = vunpack.c.l.b16 %v87
  %v422 = vunpack.c.l.b16 %v88
  %v423 = vunpack.c.l.b16 %v89
  %v424 = vunpack.c.l.b16 %v90
  %v425 = vunpack.c.l.b16 %v91
  %v426 = vunpack.c.l.b16 %v92
  %v427 = vunpack.c.l.b16 %v93
  %v428 = vunpack.c.l.b16 %v94
  %v429 = vunpack.c.l.b16 %v95
  %v430 = vunpack.c.l.b16 %v96
  %v431 = vunpack.c.l.b16 %v97
  %v432 = vunpack.c.l.b16 %v98
  %v433 = vunpack.c.l.b16 %v99
  %v434 = vunpack.c.l.b16 %v100
  %v435 = vunpack.c.l.b16 %v101
  %v436 = vunpack.c.l.b16 %v102
  %v437 = vunpack.c.l.b16 %v103
  %v438 = vunpack.c.l.b16 %v104
  %v439 = vunpack.c.l.b16 %v105
  %v440 = vunpack.c.l.b16 %v106
  %v441 = vunpack.c.l.b16 %v107
  %v442 = vunpack.c.l.b16 %v108
  %v443 = vunpack.c.l.b16 %v109
  %v444 = vunpack.c.l.b16 %v110
  %v445 = vunpack.c.l.b16 %v111
  %v446 = vunpack.c.l.b16 %v112
  %v447 = vunpack.c.l.b16 %v113
  %v448 = vunpack.c.l.b16 %v114
  %v449 = vunpack.c.l.b16 %v115
  %v450 = vunpack.c.l.b16 %v116
  %v451 = vunpack.c.l.b16 %v117
  %v452 = vunpack.c.l.b16 %v118
  %v453 = vunpack.c.l.b16 %v119
  %v454 = vunpack.c.l.b16 %v120
  %v455 = vunpack.c.l.b16 %v121
  %v456 = vunpack.c.l.b16 %v122
  %v457 = vunpack.c.l.b16 %v123
  %v458 = vunpack.c.l.b16 %v124
  %v459 = vunpack.c.l.b16 %v125
  %v460 = vunpack.c.l.b16 %v126
  %v461 = vunpack.c.l.b16 %v127
  %v462 = vunpack.c.l.b16 %v128
  %v463 = vunpack.c.l.b16 %v129
  %v464 = vunpack.c.l.b16 %v130
  %v465 = vunpack.c.l.b16 %v131
  %v466 = vunpack.c.l.b16 %v132
  %v467 = vunpack.c.l.b16 %v133
  %v468 = vunpack.c.l.b16 %v134
  %v469 = vunpack.c.l.b16 %v135
  %v470 = vunpack.c.l.b16 %v136
  %v471 = vunpack.c.l.b16 %v137
  %v472 = vunpack.c.l.b16 %v138
  %v473 = vunpack.c.l.b16 %v139
  %v474 = vunpack.c.l.b16 %v140
  %v475 = vunpack.c.l.b16 %v141
  %v476 = vunpack.c.l.b16 %v142
  %v477 = vunpack.c.l.b16 %v143
  %v478 = vunpack.c.l.b16 %v144
  %v479 = vunpack.c.l.b16 %v145
  %v480 = vunpack.c.l.b16 %v146
  %v481 = vunpack.c.l.b16 %v147
  %v482 = vunpack.c.l.b16 %v148
  %v483 = vunpack.c.l.b16 %v149
  %v484 = vunpack.c.l.b16 %v150
  %v485 = vunpack.c.l.b16 %v151
  %v486 = vunpack.c.l.b16 %v152
  %v487 = vunpack.c.l.b16 %v153
  %v488 = vunpack.c.l.b16 %v154
  %v489 = vunpack.c.l.b16 %v155
  %v490 = vunpack.c.l.b16 %v156
  %v491 = vunpack.c.l.b16 %v157
  %v492 = vunpack.c.l.b16 %v158
  %v493 = vunpack.c.l.b16 %v159
  %v494 = vunpack.c.l.b16 %v160
  %v495 = vunpack.c.l.b16 %v161
  %v496 = vunpack.c.l.b16 %v162
  %v497 = vunpack.c.l.b16 %v163
  %v498 = vunpack.c.l.b16 %v164
  %v499 = vunpack.c.l.b16 %v165
  %v500 = vunpack.c.l.b16 %v166
  %v501 = vunpack.c.l.b16 %v167
  %v502 = vunpack.c.l.b16 %v168
  %v503 = vunpack.c.l.b16 %v169
  %v504 = vunpack.c.l.b16 %v170
  %v505 = vunpack.c.l.b16 %v171
  %v506 = vpack.c.b16 %v363, %v362
  %v507 = vpack.c.b16 %v365, %v364
  %v508 = vpack.c.b16 %v367, %v366
  %v509 = vpack.c.b16 %v369, %v368
  %v510 = vpack.c.b16 %v371, %v370
  %v511 = vpack.c.b16 %v373, %v372
  %v512 = vpack.c.b16 %v375, %v374
  %v513 = vpack.c.b16 %v377, %v376
  %v514 = vpack.c.b16 %v379, %v378
  %v515 = vpack.c.b16 %v381, %v380
  %v516 = vpack.c.b16 %v383, %v382
  %v517 = vpack.c.b16 %v385, %v384
  %v518 = vpack.c.b16 %v387, %v386
  %v519 = vpack.c.b16 %v389, %v388
  %v520 = vpack.c.b16 %v391, %v390
  %v521 = vpack.c.b16 %v393, %v392
  %v522 = vpack.c.b16 %v395, %v394
  %v523 = vpack.c.b16 %v397, %v396
  %v524 = vpack.c.b16 %v399, %v398
  %v525 = vpack.c.b16 %v401, %v400
  %v526 = vpack.c.b16 %v403, %v402
  %v527 = vpack.c.b16 %v405, %v404
  %v528 = vpack.c.b16 %v407, %v406
  %v529 = vpack.c.b16 %v409, %v408
  %v530 = vpack.c.b16 %v411, %v410
  %v531 = vpack.c.b16 %v413, %v412
  %v532 = vpack.c.b16 %v415, %v414
  %v533 = vpack.c.b16 %v417, %v416
  %v534 = vpack.c.b16 %v419, %v418
  %v535 = vpack.c.b16 %v421, %v420
  %v536 = vpack.c.b16 %v423, %v422
  %v537 = vpack.c.b16 %v425, %v424
  %v538 = vpack.c.b16 %v427, %v426
  %v539 = vpack.c.b16 %v429, %v428
  %v540 = vpack.c.b16 %v431, %v430
  %v541 = vpack.c.b16 %v433, %v432
  %v542 = vpack.c.b16 %v435, %v434
  %v543 = vpack.c.b16 %v437, %v436
  %v544 = vpack.c.b16 %v439, %v438
  %v545 = vpack.c.b16 %v441, %v440
  %v546 = vpack.c.b16 %v443, %v442
  %v547 = vpack.c.b16 %v445, %v444
  %v548 = vpack.c.b16 %v447, %v446
  %v549 = vpack.c.b16 %v449, %v448
  %v550 = vpack.c.b16 %v451, %v450
  %v551 = vpack.c.b16 %v453, %v452
  %v552 = vpack.c.b16 %v455, %v454
  %v553 = vpack.c.b16 %v457, %v456
  %v554 = vpack.c.b16 %v459, %v458
  %v555 = vpack.c.b16 %v461, %v460
  %v556 = vpack.c.b16 %v463, %v462
  %v557 = vpack.c.b16 %v465, %v464
  %v558 = vpack.c.b16 %v467, %v466
  %v559 = vpack.c.b16 %v469, %v468
  %v560 = vpack.c.b16 %v471, %v470
  %v561 = vpack.c.b16 %v473, %v472
  %v562 = vpack.c.b16 %v475, %v474
  %v563 = vpack.c.b16 %v477, %v476
  %v564 = vpack.c.b16 %v479, %v478
  %v565 = vpack.c.b16 %v481, %v480
  %v566 = vpack.c.b16 %v483, %v482
  %v567 = vpack.c.b16 %v485, %v484
  %v568 = vpack.c.b16 %v487, %v486
  %v569 = vpack.c.b16 %v489, %v488
  %v570 = vpack.c.b16 %v491, %v490
  %v571 = vpack.c.b16 %v493, %v492
  %v572 = vpack.c.b16 %v495, %v494
  %v573 = vpack.c.b16 %v497, %v496
  %v574 = vpack.c.b16 %v499, %v498
  %v575 = vpack.c.b16 %v501, %v500
  %v576 = vpack.c.b16 %v503, %v502
  %v577 = vpack.c.b16 %v505, %v504
  %650 = vmatprep.subr.bf16.mxu0 0
  %651 = vmatpush1.bf16.msra.mxu0 %v506
  %652 = vmatprep.subr.bf16.mxu0 0
  %653 = vmatpush1.bf16.msra.mxu0 %v507
  %654 = vmatprep.subr.bf16.mxu0 0
  %655 = vmatpush1.bf16.msra.mxu0 %v508
  %656 = vmatprep.subr.bf16.mxu0 0
  %657 = vmatpush1.bf16.msra.mxu0 %v509
  %658 = vmatprep.subr.bf16.mxu0 0
  %659 = vmatpush1.bf16.msra.mxu0 %v510
  %660 = vmatprep.subr.bf16.mxu0 0
  %661 = vmatpush1.bf16.msra.mxu0 %v511
  %662 = vmatprep.subr.bf16.mxu0 0
  %663 = vmatpush1.bf16.msra.mxu0 %v512
  %664 = vmatprep.subr.bf16.mxu0 0
  %665 = vmatpush1.bf16.msra.mxu0 %v513
  %666 = vmatprep.subr.bf16.mxu0 0
  %667 = vmatpush1.bf16.msra.mxu0 %v514
  %668 = vmatprep.subr.bf16.mxu0 0
  %669 = vmatpush1.bf16.msra.mxu0 %v515
  %670 = vmatprep.subr.bf16.mxu0 0
  %671 = vmatpush1.bf16.msra.mxu0 %v516
  %672 = vmatprep.subr.bf16.mxu0 0
  %673 = vmatpush1.bf16.msra.mxu0 %v517
  %674 = vmatprep.subr.bf16.mxu0 0
  %675 = vmatpush1.bf16.msra.mxu0 %v518
  %676 = vmatprep.subr.bf16.mxu0 0
  %677 = vmatpush1.bf16.msra.mxu0 %v519
  %678 = vmatprep.subr.bf16.mxu0 0
  %679 = vmatpush1.bf16.msra.mxu0 %v520
  %680 = vmatprep.subr.bf16.mxu0 0
  %681 = vmatpush1.bf16.msra.mxu0 %v521
  %682 = vmatprep.mubr.bf16.mxu0 %v201
  %683 = vmatmul.mubr.bf16.gmra.mrb[0].mxu0 %v200
  %v684 = vpop.f32.mrb[0].mxu0
  %v685 = vadd.f32 0.0, %v684
  %v686 = vpop.f32.mrb[0].mxu0
  %v687 = vpop.f32.mrb[0].mxu0
  %v688 = vadd.f32 0.0, %v687
  %v689 = vpop.f32.mrb[0].mxu0
  %690 = vdwg.mxu0
  %691 = vmatprep.subr.bf16.mxu0 0
  %692 = vmatpush1.bf16.msra.mxu0 %v522
  %693 = vmatprep.subr.bf16.mxu0 0
  %694 = vmatpush1.bf16.msra.mxu0 %v523
  %695 = vmatprep.subr.bf16.mxu0 0
  %696 = vmatpush1.bf16.msra.mxu0 %v524
  %697 = vmatprep.subr.bf16.mxu0 0
  %698 = vmatpush1.bf16.msra.mxu0 %v525
  %699 = vmatprep.subr.bf16.mxu0 0
  %700 = vmatpush1.bf16.msra.mxu0 %v526
  %701 = vmatprep.subr.bf16.mxu0 0
  %702 = vmatpush1.bf16.msra.mxu0 %v527
  %703 = vmatprep.subr.bf16.mxu0 0
  %704 = vmatpush1.bf16.msra.mxu0 %v528
  %705 = vmatprep.subr.bf16.mxu0 0
  %706 = vmatpush1.bf16.msra.mxu0 %v529
  %707 = vmatprep.subr.bf16.mxu0 0
  %708 = vmatpush1.bf16.msra.mxu0 %v530
  %709 = vmatprep.subr.bf16.mxu0 0
  %710 = vmatpush1.bf16.msra.mxu0 %v531
  %711 = vmatprep.subr.bf16.mxu0 0
  %712 = vmatpush1.bf16.msra.mxu0 %v532
  %713 = vmatprep.subr.bf16.mxu0 0
  %714 = vmatpush1.bf16.msra.mxu0 %v533
  %715 = vmatprep.subr.bf16.mxu0 0
  %716 = vmatpush1.bf16.msra.mxu0 %v534
  %717 = vmatprep.subr.bf16.mxu0 0
  %718 = vmatpush1.bf16.msra.mxu0 %v535
  %719 = vmatprep.subr.bf16.mxu0 0
  %720 = vmatpush1.bf16.msra.mxu0 %v536
  %721 = vmatprep.subr.bf16.mxu0 0
  %722 = vmatpush1.bf16.msra.mxu0 %v537
  %723 = vmatprep.mubr.bf16.mxu0 %v203
  %724 = vmatmul.mubr.bf16.gmra.mrb[0].mxu0 %v202
  %v725 = vpop.f32.mrb[0].mxu0
  %v726 = vadd.f32 %v685, %v725
  %v727 = vpop.f32.mrb[0].mxu0
  %v728 = vpop.f32.mrb[0].mxu0
  %v729 = vadd.f32 %v688, %v728
  %v730 = vpop.f32.mrb[0].mxu0
  %731 = vdwg.mxu0
  %732 = vmatprep.subr.bf16.mxu0 0
  %733 = vmatpush1.bf16.msra.mxu0 %v538
  %734 = vmatprep.subr.bf16.mxu0 0
  %735 = vmatpush1.bf16.msra.mxu0 %v539
  %736 = vmatprep.subr.bf16.mxu0 0
  %737 = vmatpush1.bf16.msra.mxu0 %v540
  %738 = vmatprep.subr.bf16.mxu0 0
  %739 = vmatpush1.bf16.msra.mxu0 %v541
  %740 = vmatprep.subr.bf16.mxu0 0
  %741 = vmatpush1.bf16.msra.mxu0 %v542
  %742 = vmatprep.subr.bf16.mxu0 0
  %743 = vmatpush1.bf16.msra.mxu0 %v543
  %744 = vmatprep.subr.bf16.mxu0 0
  %745 = vmatpush1.bf16.msra.mxu0 %v544
  %746 = vmatprep.subr.bf16.mxu0 0
  %747 = vmatpush1.bf16.msra.mxu0 %v545
  %748 = vmatprep.subr.bf16.mxu0 0
  %749 = vmatpush1.bf16.msra.mxu0 %v546
  %750 = vmatprep.subr.bf16.mxu0 0
  %751 = vmatpush1.bf16.msra.mxu0 %v547
  %752 = vmatprep.subr.bf16.mxu0 0
  %753 = vmatpush1.bf16.msra.mxu0 %v548
  %754 = vmatprep.subr.bf16.mxu0 0
  %755 = vmatpush1.bf16.msra.mxu0 %v549
  %756 = vmatprep.subr.bf16.mxu0 0
  %757 = vmatpush1.bf16.msra.mxu0 %v550
  %758 = vmatprep.subr.bf16.mxu0 0
  %759 = vmatpush1.bf16.msra.mxu0 %v551
  %760 = vmatprep.subr.bf16.mxu0 0
  %761 = vmatpush1.bf16.msra.mxu0 %v552
  %762 = vmatprep.subr.bf16.mxu0 0
  %763 = vmatpush1.bf16.msra.mxu0 %v553
  %764 = vmatprep.mubr.bf16.mxu0 %v205
  %765 = vmatmul.mubr.bf16.gmra.mrb[0].mxu0 %v204
  %v766 = vpop.f32.mrb[0].mxu0
  %v767 = vadd.f32 %v726, %v766
  %v768 = vpop.f32.mrb[0].mxu0
  %v769 = vpop.f32.mrb[0].mxu0
  %v770 = vadd.f32 %v729, %v769
  %v771 = vpop.f32.mrb[0].mxu0
  %772 = vdwg.mxu0
  %773 = vmatprep.subr.bf16.mxu0 0
  %774 = vmatpush1.bf16.msra.mxu0 %v554
  %775 = vmatprep.subr.bf16.mxu0 0
  %776 = vmatpush1.bf16.msra.mxu0 %v555
  %777 = vmatprep.subr.bf16.mxu0 0
  %778 = vmatpush1.bf16.msra.mxu0 %v556
  %779 = vmatprep.subr.bf16.mxu0 0
  %780 = vmatpush1.bf16.msra.mxu0 %v557
  %781 = vmatprep.subr.bf16.mxu0 0
  %782 = vmatpush1.bf16.msra.mxu0 %v558
  %783 = vmatprep.subr.bf16.mxu0 0
  %784 = vmatpush1.bf16.msra.mxu0 %v559
  %785 = vmatprep.subr.bf16.mxu0 0
  %786 = vmatpush1.bf16.msra.mxu0 %v560
  %787 = vmatprep.subr.bf16.mxu0 0
  %788 = vmatpush1.bf16.msra.mxu0 %v561
  %789 = vmatprep.subr.bf16.mxu0 0
  %790 = vmatpush1.bf16.msra.mxu0 %v562
  %791 = vmatprep.subr.bf16.mxu0 0
  %792 = vmatpush1.bf16.msra.mxu0 %v563
  %793 = vmatprep.subr.bf16.mxu0 0
  %794 = vmatpush1.bf16.msra.mxu0 %v564
  %795 = vmatprep.subr.bf16.mxu0 0
  %796 = vmatpush1.bf16.msra.mxu0 %v565
  %797 = vmatprep.subr.bf16.mxu0 0
  %798 = vmatpush1.bf16.msra.mxu0 %v566
  %799 = vmatprep.subr.bf16.mxu0 0
  %800 = vmatpush1.bf16.msra.mxu0 %v567
  %801 = vmatprep.subr.bf16.mxu0 0
  %802 = vmatpush1.bf16.msra.mxu0 %v568
  %803 = vmatprep.subr.bf16.mxu0 0
  %804 = vmatpush1.bf16.msra.mxu0 %v569
  %805 = vmatprep.mubr.bf16.mxu0 %v207
  %806 = vmatmul.mubr.bf16.gmra.mrb[0].mxu0 %v206
  %v807 = vpop.f32.mrb[0].mxu0
  %v808 = vadd.f32 %v767, %v807
  %v809 = vpop.f32.mrb[0].mxu0
  %v810 = vpop.f32.mrb[0].mxu0
  %v811 = vadd.f32 %v770, %v810
  %v812 = vpop.f32.mrb[0].mxu0
  %813 = vdwg.mxu0
  %814 = vmatprep.subr.bf16.mxu0 0
  %815 = vmatpush1.bf16.msra.mxu0 %v570
  %816 = vmatprep.subr.bf16.mxu0 0
  %817 = vmatpush1.bf16.msra.mxu0 %v571
  %818 = vmatprep.subr.bf16.mxu0 0
  %819 = vmatpush1.bf16.msra.mxu0 %v572
  %820 = vmatprep.subr.bf16.mxu0 0
  %821 = vmatpush1.bf16.msra.mxu0 %v573
  %822 = vmatprep.subr.bf16.mxu0 0
  %823 = vmatpush1.bf16.msra.mxu0 %v574
  %824 = vmatprep.subr.bf16.mxu0 0
  %825 = vmatpush1.bf16.msra.mxu0 %v575
  %826 = vmatprep.subr.bf16.mxu0 0
  %827 = vmatpush1.bf16.msra.mxu0 %v576
  %828 = vmatprep.subr.bf16.mxu0 0
  %829 = vmatpush1.bf16.msra.mxu0 %v577
  %830 = vmatprep.subr.bf16.mxu0 0
  %831 = vmatpush1.bf16.msra.mxu0 0
  %832 = vmatprep.subr.bf16.mxu0 0
  %833 = vmatpush1.bf16.msra.mxu0 0
  %834 = vmatprep.subr.bf16.mxu0 0
  %835 = vmatpush1.bf16.msra.mxu0 0
  %836 = vmatprep.subr.bf16.mxu0 0
  %837 = vmatpush1.bf16.msra.mxu0 0
  %838 = vmatprep.subr.bf16.mxu0 0
  %839 = vmatpush1.bf16.msra.mxu0 0
  %840 = vmatprep.subr.bf16.mxu0 0
  %841 = vmatpush1.bf16.msra.mxu0 0
  %842 = vmatprep.subr.bf16.mxu0 0
  %843 = vmatpush1.bf16.msra.mxu0 0
  %844 = vmatprep.subr.bf16.mxu0 0
  %845 = vmatpush1.bf16.msra.mxu0 0
  %846 = vmatprep.mubr.bf16.mxu0 0
  %847 = vmatmul.mubr.bf16.gmra.mrb[0].mxu0 %v208
  %v848 = vpop.f32.mrb[0].mxu0
  %v849 = vadd.f32 %v808, %v848
  %v850 = vpop.f32.mrb[0].mxu0
  %v851 = vpop.f32.mrb[0].mxu0
  %v852 = vadd.f32 %v811, %v851
  %v853 = vpop.f32.mrb[0].mxu0
  %854 = vdwg.mxu0
  %v855 = vld [vmem:[%s2] sm:$0x1]
  %v856 = vld [vmem:[%s3] sm:$0x1]
  %v857 = vadd.f32 %v849, %v852
  %v858 = vrot.slane %v857, 4
  %v859 = vadd.f32 %v857, %v858
  %v860 = vrot.slane %v859, 2
  %v861 = vadd.f32 %v859, %v860
  %v862 = vrot.slane %v861, 1
  %v863 = vadd.f32 %v861, %v862
  %v864 = vrcp.pop 8.0
  %v865 = vmul.f32 %v863, %v864
  %v866 = vmul.f32 %v849, %v849
  %v867 = vmul.f32 %v852, %v852
  %v868 = vadd.f32 %v866, %v867
  %v869 = vrot.slane %v868, 4
  %v870 = vadd.f32 %v868, %v869
  %v871 = vrot.slane %v870, 2
  %v872 = vadd.f32 %v870, %v871
  %v873 = vrot.slane %v872, 1
  %v874 = vadd.f32 %v872, %v873
  %v875 = vmul.f32 %v874, %v864
  %v876 = vmul.f32 %v865, %v865
  %v877 = vsub.f32 %v875, %v876
  %v878 = vmax.f32 %v877, 0.0
  %v879 = vsub.f32 %v849, %v865
  %v880 = vsub.f32 %v852, %v865
  %v881 = vadd.f32 %v878, 1e-05
  %v882 = vrsqrt.pop %v881
  %v883 = vmul.f32 %v879, %v882
  %v884 = vmul.f32 %v880, %v882
  %v886 = vlaneseq
  %v887 = vshrl.u32 %v886, 7
  %v888 = vsub.s32 0, %v887
  %v889 = vrot.slane %v855, %v888
  %v891 = vmul.f32 %v883, %v889
  %v892 = vmul.f32 %v884, %v889
  %v894 = vlaneseq
  %v895 = vshrl.u32 %v894, 7
  %v896 = vsub.s32 0, %v895
  %v897 = vrot.slane %v856, %v896
  %v899 = vadd.f32 %v891, %v897
  %v900 = vadd.f32 %v892, %v897
  %v901 = vmax.f32 %v899, 0.0
  %v902 = vmax.f32 %v900, 0.0
  %v903 = vpack.c.bf16 %v902, %v901
  %v905 = vunpack.c.l.b16 %v903
  %v906 = vunpack.c.h.b16 %v903
  %v907 = vpack.c.b16 %v905, %v905
  %v908 = vpack.c.b16 %v906, %v906
  %911 = vst [vmem:[%s4] sm:$0xf] %v907
  %912 = vst [vmem:[%s4 + $0x4] sm:$0xf] %v908
  // Predicated region
  $region18: #{resnet18_forward.25} parent=0 // pred_check
    _
  $region19: #{resnet18_forward.25} parent=0 // pred_check_branch
    %914 = sbr.rel (0) target = $region21
  $region20: #{resnet18_forward.25} parent=0 // pred_region
    _
  $region21: #{resnet18_forward.25} parent=0 // pred_fallthru
    _
  // Predicated region
  $region22: #{resnet18_forward.25} parent=0 // pred_check
    _
  $region23: #{resnet18_forward.25} parent=0 // pred_check_branch
    %916 = sbr.rel (0) target = $region25
  $region24: #{resnet18_forward.25} parent=0 // pred_region
    _
  $region25: #{resnet18_forward.25} parent=0 // pred_fallthru
    _

// kernel: resnet18_forward.26
$region0: #{resnet18_forward.26}
  #allocation0 [shape = 'u32[]', space=smem, size = 0x4, offset = 0x4, fixed_abs, tag = 'smem constant byte address 0x4 - core index']
  #allocation1 [shape = 'u32[144,128]{1,0:T(1,128)}', space=vmem, size = 0x12000, scoped, tag = 'internal scratch']
  %s0 = inlined_call_operand.vmem [shape: bf16[16,1152], index: 0, kind: input, shape index: {}]
  %s1 = inlined_call_operand.vmem [shape: bf16[1152,128], index: 1, kind: input, shape index: {}]
  %s2 = inlined_call_operand.vmem [shape: f32[1,128], index: 2, kind: input, shape index: {}]
  %s3 = inlined_call_operand.vmem [shape: f32[1,128], index: 3, kind: input, shape index: {}]
  %s4 = inlined_call_operand.vmem [shape: bf16[16,128], index: 4, kind: input, shape index: {}]
  %s5 = inlined_call_operand.vmem [shape: bf16[16,128], index: 5, kind: output, shape index: {}]
  %s6 = sld [smem:[#allocation0]]
  $region30: #{resnet18_forward.26} parent=0
    _
  %s8 = ssub.s32 1, %s6
  %s9 = scalar_select 0, %s8, %s6
  // Predicated region
  $region2: #{resnet18_forward.26} parent=0 // pred_check
    _
  $region3: #{resnet18_forward.26} parent=0 // pred_check_branch
    %11 = sbr.rel (0) target = $region5
  $region4: #{resnet18_forward.26} parent=0 // pred_region
    _
  $region5: #{resnet18_forward.26} parent=0 // pred_fallthru
    _
  // Predicated region
  $region6: #{resnet18_forward.26} parent=0 // pred_check
    _
  $region7: #{resnet18_forward.26} parent=0 // pred_check_branch
    %13 = sbr.rel (0) target = $region9
  $region8: #{resnet18_forward.26} parent=0 // pred_region
    _
  $region9: #{resnet18_forward.26} parent=0 // pred_fallthru
    _
  // Predicated region
  $region10: #{resnet18_forward.26} parent=0 // pred_check
    _
  $region11: #{resnet18_forward.26} parent=0 // pred_check_branch
    %15 = sbr.rel (0) target = $region13
  $region12: #{resnet18_forward.26} parent=0 // pred_region
    _
  $region13: #{resnet18_forward.26} parent=0 // pred_fallthru
    _
  // Predicated region
  $region14: #{resnet18_forward.26} parent=0 // pred_check
    _
  $region15: #{resnet18_forward.26} parent=0 // pred_check_branch
    %17 = sbr.rel (0) target = $region17
  $region16: #{resnet18_forward.26} parent=0 // pred_region
    _
  $region17: #{resnet18_forward.26} parent=0 // pred_fallthru
    _
  // Predicated region
  $region18: #{resnet18_forward.26} parent=0 // pred_check
    _
  $region19: #{resnet18_forward.26} parent=0 // pred_check_branch
    %19 = sbr.rel (0) target = $region21
  $region20: #{resnet18_forward.26} parent=0 // pred_region
    _
  $region21: #{resnet18_forward.26} parent=0 // pred_fallthru
    _
  %v21 = vld [vmem:[%s0] sm:$0xff]
  %v22 = vld [vmem:[%s0 + $0x8] sm:$0xff]
  %v23 = vld [vmem:[%s0 + $0x10] sm:$0xff]
  %v24 = vld [vmem:[%s0 + $0x18] sm:$0xff]
  %v25 = vld [vmem:[%s0 + $0x20] sm:$0xf]
  %v26 = vld [vmem:[%s0 + $0x24] sm:$0xff]
  %v27 = vld [vmem:[%s0 + $0x2c] sm:$0xff]
  %v28 = vld [vmem:[%s0 + $0x34] sm:$0xff]
  %v29 = vld [vmem:[%s0 + $0x3c] sm:$0xff]
  %v30 = vld [vmem:[%s0 + $0x44] sm:$0xf]
  %v31 = vld [vmem:[%s1] sm:$0xf]
  %v32 = vld [vmem:[%s1 + $0x4] sm:$0xf]
  %v33 = vld [vmem:[%s1 + $0x8] sm:$0xf]
  %v34 = vld [vmem:[%s1 + $0xc] sm:$0xf]
  %v35 = vld [vmem:[%s1 + $0x10] sm:$0xf]
  %v36 = vld [vmem:[%s1 + $0x14] sm:$0xf]
  %v37 = vld [vmem:[%s1 + $0x18] sm:$0xf]
  %v38 = vld [vmem:[%s1 + $0x1c] sm:$0xf]
  %v39 = vld [vmem:[%s1 + $0x20] sm:$0xf]
  %v40 = vld [vmem:[%s1 + $0x24] sm:$0xf]
  %v41 = vld [vmem:[%s1 + $0x28] sm:$0xf]
  %v42 = vld [vmem:[%s1 + $0x2c] sm:$0xf]
  %v43 = vld [vmem:[%s1 + $0x30] sm:$0xf]
  %v44 = vld [vmem:[%s1 + $0x34] sm:$0xf]
  %v45 = vld [vmem:[%s1 + $0x38] sm:$0xf]
  %v46 = vld [vmem:[%s1 + $0x3c] sm:$0xf]
  %v47 = vld [vmem:[%s1 + $0x40] sm:$0xf]
  %v48 = vld [vmem:[%s1 + $0x44] sm:$0xf]
  %v49 = vld [vmem:[%s1 + $0x48] sm:$0xf]
  %v50 = vld [vmem:[%s1 + $0x4c] sm:$0xf]
  %v51 = vld [vmem:[%s1 + $0x50] sm:$0xf]
  %v52 = vld [vmem:[%s1 + $0x54] sm:$0xf]
  %v53 = vld [vmem:[%s1 + $0x58] sm:$0xf]
  %v54 = vld [vmem:[%s1 + $0x5c] sm:$0xf]
  %v55 = vld [vmem:[%s1 + $0x60] sm:$0xf]
  %v56 = vld [vmem:[%s1 + $0x64] sm:$0xf]
  %v57 = vld [vmem:[%s1 + $0x68] sm:$0xf]
  %v58 = vld [vmem:[%s1 + $0x6c] sm:$0xf]
  %v59 = vld [vmem:[%s1 + $0x70] sm:$0xf]
  %v60 = vld [vmem:[%s1 + $0x74] sm:$0xf]
  %v61 = vld [vmem:[%s1 + $0x78] sm:$0xf]
  %v62 = vld [vmem:[%s1 + $0x7c] sm:$0xf]
  %v63 = vld [vmem:[%s1 + $0x80] sm:$0xf]
  %v64 = vld [vmem:[%s1 + $0x84] sm:$0xf]
  %v65 = vld [vmem:[%s1 + $0x88] sm:$0xf]
  %v66 = vld [vmem:[%s1 + $0x8c] sm:$0xf]
  %v67 = vld [vmem:[%s1 + $0x90] sm:$0xf]
  %v68 = vld [vmem:[%s1 + $0x94] sm:$0xf]
  %v69 = vld [vmem:[%s1 + $0x98] sm:$0xf]
  %v70 = vld [vmem:[%s1 + $0x9c] sm:$0xf]
  %v71 = vld [vmem:[%s1 + $0xa0] sm:$0xf]
  %v72 = vld [vmem:[%s1 + $0xa4] sm:$0xf]
  %v73 = vld [vmem:[%s1 + $0xa8] sm:$0xf]
  %v74 = vld [vmem:[%s1 + $0xac] sm:$0xf]
  %v75 = vld [vmem:[%s1 + $0xb0] sm:$0xf]
  %v76 = vld [vmem:[%s1 + $0xb4] sm:$0xf]
  %v77 = vld [vmem:[%s1 + $0xb8] sm:$0xf]
  %v78 = vld [vmem:[%s1 + $0xbc] sm:$0xf]
  %v79 = vld [vmem:[%s1 + $0xc0] sm:$0xf]
  %v80 = vld [vmem:[%s1 + $0xc4] sm:$0xf]
  %v81 = vld [vmem:[%s1 + $0xc8] sm:$0xf]
  %v82 = vld [vmem:[%s1 + $0xcc] sm:$0xf]
  %v83 = vld [vmem:[%s1 + $0xd0] sm:$0xf]
  %v84 = vld [vmem:[%s1 + $0xd4] sm:$0xf]
  %v85 = vld [vmem:[%s1 + $0xd8] sm:$0xf]
  %v86 = vld [vmem:[%s1 + $0xdc] sm:$0xf]
  %v87 = vld [vmem:[%s1 + $0xe0] sm:$0xf]
  %v88 = vld [vmem:[%s1 + $0xe4] sm:$0xf]
  %v89 = vld [vmem:[%s1 + $0xe8] sm:$0xf]
  %v90 = vld [vmem:[%s1 + $0xec] sm:$0xf]
  %v91 = vld [vmem:[%s1 + $0xf0] sm:$0xf]
  %v92 = vld [vmem:[%s1 + $0xf4] sm:$0xf]
  %v93 = vld [vmem:[%s1 + $0xf8] sm:$0xf]
  %v94 = vld [vmem:[%s1 + $0xfc] sm:$0xf]
  %v95 = vld [vmem:[%s1 + $0x100] sm:$0xf]
  %v96 = vld [vmem:[%s1 + $0x104] sm:$0xf]
  %v97 = vld [vmem:[%s1 + $0x108] sm:$0xf]
  %v98 = vld [vmem:[%s1 + $0x10c] sm:$0xf]
  %v99 = vld [vmem:[%s1 + $0x110] sm:$0xf]
  %v100 = vld [vmem:[%s1 + $0x114] sm:$0xf]
  %v101 = vld [vmem:[%s1 + $0x118] sm:$0xf]
  %v102 = vld [vmem:[%s1 + $0x11c] sm:$0xf]
  %v103 = vld [vmem:[%s1 + $0x120] sm:$0xf]
  %v104 = vld [vmem:[%s1 + $0x124] sm:$0xf]
  %v105 = vld [vmem:[%s1 + $0x128] sm:$0xf]
  %v106 = vld [vmem:[%s1 + $0x12c] sm:$0xf]
  %v107 = vld [vmem:[%s1 + $0x130] sm:$0xf]
  %v108 = vld [vmem:[%s1 + $0x134] sm:$0xf]
  %v109 = vld [vmem:[%s1 + $0x138] sm:$0xf]
  %v110 = vld [vmem:[%s1 + $0x13c] sm:$0xf]
  %v111 = vld [vmem:[%s1 + $0x140] sm:$0xf]
  %v112 = vld [vmem:[%s1 + $0x144] sm:$0xf]
  %v113 = vld [vmem:[%s1 + $0x148] sm:$0xf]
  %v114 = vld [vmem:[%s1 + $0x14c] sm:$0xf]
  %v115 = vld [vmem:[%s1 + $0x150] sm:$0xf]
  %v116 = vld [vmem:[%s1 + $0x154] sm:$0xf]
  %v117 = vld [vmem:[%s1 + $0x158] sm:$0xf]
  %v118 = vld [vmem:[%s1 + $0x15c] sm:$0xf]
  %v119 = vld [vmem:[%s1 + $0x160] sm:$0xf]
  %v120 = vld [vmem:[%s1 + $0x164] sm:$0xf]
  %v121 = vld [vmem:[%s1 + $0x168] sm:$0xf]
  %v122 = vld [vmem:[%s1 + $0x16c] sm:$0xf]
  %v123 = vld [vmem:[%s1 + $0x170] sm:$0xf]
  %v124 = vld [vmem:[%s1 + $0x174] sm:$0xf]
  %v125 = vld [vmem:[%s1 + $0x178] sm:$0xf]
  %v126 = vld [vmem:[%s1 + $0x17c] sm:$0xf]
  %v127 = vld [vmem:[%s1 + $0x180] sm:$0xf]
  %v128 = vld [vmem:[%s1 + $0x184] sm:$0xf]
  %v129 = vld [vmem:[%s1 + $0x188] sm:$0xf]
  %v130 = vld [vmem:[%s1 + $0x18c] sm:$0xf]
  %v131 = vld [vmem:[%s1 + $0x190] sm:$0xf]
  %v132 = vld [vmem:[%s1 + $0x194] sm:$0xf]
  %v133 = vld [vmem:[%s1 + $0x198] sm:$0xf]
  %v134 = vld [vmem:[%s1 + $0x19c] sm:$0xf]
  %v135 = vld [vmem:[%s1 + $0x1a0] sm:$0xf]
  %v136 = vld [vmem:[%s1 + $0x1a4] sm:$0xf]
  %v137 = vld [vmem:[%s1 + $0x1a8] sm:$0xf]
  %v138 = vld [vmem:[%s1 + $0x1ac] sm:$0xf]
  %v139 = vld [vmem:[%s1 + $0x1b0] sm:$0xf]
  %v140 = vld [vmem:[%s1 + $0x1b4] sm:$0xf]
  %v141 = vld [vmem:[%s1 + $0x1b8] sm:$0xf]
  %v142 = vld [vmem:[%s1 + $0x1bc] sm:$0xf]
  %v143 = vld [vmem:[%s1 + $0x1c0] sm:$0xf]
  %v144 = vld [vmem:[%s1 + $0x1c4] sm:$0xf]
  %v145 = vld [vmem:[%s1 + $0x1c8] sm:$0xf]
  %v146 = vld [vmem:[%s1 + $0x1cc] sm:$0xf]
  %v147 = vld [vmem:[%s1 + $0x1d0] sm:$0xf]
  %v148 = vld [vmem:[%s1 + $0x1d4] sm:$0xf]
  %v149 = vld [vmem:[%s1 + $0x1d8] sm:$0xf]
  %v150 = vld [vmem:[%s1 + $0x1dc] sm:$0xf]
  %v151 = vld [vmem:[%s1 + $0x1e0] sm:$0xf]
  %v152 = vld [vmem:[%s1 + $0x1e4] sm:$0xf]
  %v153 = vld [vmem:[%s1 + $0x1e8] sm:$0xf]
  %v154 = vld [vmem:[%s1 + $0x1ec] sm:$0xf]
  %v155 = vld [vmem:[%s1 + $0x1f0] sm:$0xf]
  %v156 = vld [vmem:[%s1 + $0x1f4] sm:$0xf]
  %v157 = vld [vmem:[%s1 + $0x1f8] sm:$0xf]
  %v158 = vld [vmem:[%s1 + $0x1fc] sm:$0xf]
  %v159 = vld [vmem:[%s1 + $0x200] sm:$0xf]
  %v160 = vld [vmem:[%s1 + $0x204] sm:$0xf]
  %v161 = vld [vmem:[%s1 + $0x208] sm:$0xf]
  %v162 = vld [vmem:[%s1 + $0x20c] sm:$0xf]
  %v163 = vld [vmem:[%s1 + $0x210] sm:$0xf]
  %v164 = vld [vmem:[%s1 + $0x214] sm:$0xf]
  %v165 = vld [vmem:[%s1 + $0x218] sm:$0xf]
  %v166 = vld [vmem:[%s1 + $0x21c] sm:$0xf]
  %v167 = vld [vmem:[%s1 + $0x220] sm:$0xf]
  %v168 = vld [vmem:[%s1 + $0x224] sm:$0xf]
  %v169 = vld [vmem:[%s1 + $0x228] sm:$0xf]
  %v170 = vld [vmem:[%s1 + $0x22c] sm:$0xf]
  %v171 = vld [vmem:[%s1 + $0x230] sm:$0xf]
  %v172 = vld [vmem:[%s1 + $0x234] sm:$0xf]
  %v173 = vld [vmem:[%s1 + $0x238] sm:$0xf]
  %v174 = vld [vmem:[%s1 + $0x23c] sm:$0xf]
  %v185 = vunpack.c.l.b16 %v21
  %v186 = vunpack.c.h.b16 %v21
  %v187 = vunpack.c.l.b16 %v22
  %v188 = vunpack.c.h.b16 %v22
  %v189 = vunpack.c.l.b16 %v23
  %v190 = vunpack.c.h.b16 %v23
  %v191 = vunpack.c.l.b16 %v24
  %v192 = vunpack.c.h.b16 %v24
  %v193 = vunpack.c.l.b16 %v25
  %v194 = vunpack.c.l.b16 %v26
  %v195 = vunpack.c.h.b16 %v26
  %v196 = vunpack.c.l.b16 %v27
  %v197 = vunpack.c.h.b16 %v27
  %v198 = vunpack.c.l.b16 %v28
  %v199 = vunpack.c.h.b16 %v28
  %v200 = vunpack.c.l.b16 %v29
  %v201 = vunpack.c.h.b16 %v29
  %v202 = vunpack.c.l.b16 %v30
  %v203 = vpack.c.b16 %v194, %v185
  %v204 = vpack.c.b16 %v195, %v186
  %v205 = vpack.c.b16 %v196, %v187
  %v206 = vpack.c.b16 %v197, %v188
  %v207 = vpack.c.b16 %v198, %v189
  %v208 = vpack.c.b16 %v199, %v190
  %v209 = vpack.c.b16 %v200, %v191
  %v210 = vpack.c.b16 %v201, %v192
  %v211 = vpack.c.b16 %v202, %v193
  %v365 = vunpack.c.l.b16 %v31
  %v366 = vunpack.c.l.b16 %v32
  %v367 = vunpack.c.l.b16 %v33
  %v368 = vunpack.c.l.b16 %v34
  %v369 = vunpack.c.l.b16 %v35
  %v370 = vunpack.c.l.b16 %v36
  %v371 = vunpack.c.l.b16 %v37
  %v372 = vunpack.c.l.b16 %v38
  %v373 = vunpack.c.l.b16 %v39
  %v374 = vunpack.c.l.b16 %v40
  %v375 = vunpack.c.l.b16 %v41
  %v376 = vunpack.c.l.b16 %v42
  %v377 = vunpack.c.l.b16 %v43
  %v378 = vunpack.c.l.b16 %v44
  %v379 = vunpack.c.l.b16 %v45
  %v380 = vunpack.c.l.b16 %v46
  %v381 = vunpack.c.l.b16 %v47
  %v382 = vunpack.c.l.b16 %v48
  %v383 = vunpack.c.l.b16 %v49
  %v384 = vunpack.c.l.b16 %v50
  %v385 = vunpack.c.l.b16 %v51
  %v386 = vunpack.c.l.b16 %v52
  %v387 = vunpack.c.l.b16 %v53
  %v388 = vunpack.c.l.b16 %v54
  %v389 = vunpack.c.l.b16 %v55
  %v390 = vunpack.c.l.b16 %v56
  %v391 = vunpack.c.l.b16 %v57
  %v392 = vunpack.c.l.b16 %v58
  %v393 = vunpack.c.l.b16 %v59
  %v394 = vunpack.c.l.b16 %v60
  %v395 = vunpack.c.l.b16 %v61
  %v396 = vunpack.c.l.b16 %v62
  %v397 = vunpack.c.l.b16 %v63
  %v398 = vunpack.c.l.b16 %v64
  %v399 = vunpack.c.l.b16 %v65
  %v400 = vunpack.c.l.b16 %v66
  %v401 = vunpack.c.l.b16 %v67
  %v402 = vunpack.c.l.b16 %v68
  %v403 = vunpack.c.l.b16 %v69
  %v404 = vunpack.c.l.b16 %v70
  %v405 = vunpack.c.l.b16 %v71
  %v406 = vunpack.c.l.b16 %v72
  %v407 = vunpack.c.l.b16 %v73
  %v408 = vunpack.c.l.b16 %v74
  %v409 = vunpack.c.l.b16 %v75
  %v410 = vunpack.c.l.b16 %v76
  %v411 = vunpack.c.l.b16 %v77
  %v412 = vunpack.c.l.b16 %v78
  %v413 = vunpack.c.l.b16 %v79
  %v414 = vunpack.c.l.b16 %v80
  %v415 = vunpack.c.l.b16 %v81
  %v416 = vunpack.c.l.b16 %v82
  %v417 = vunpack.c.l.b16 %v83
  %v418 = vunpack.c.l.b16 %v84
  %v419 = vunpack.c.l.b16 %v85
  %v420 = vunpack.c.l.b16 %v86
  %v421 = vunpack.c.l.b16 %v87
  %v422 = vunpack.c.l.b16 %v88
  %v423 = vunpack.c.l.b16 %v89
  %v424 = vunpack.c.l.b16 %v90
  %v425 = vunpack.c.l.b16 %v91
  %v426 = vunpack.c.l.b16 %v92
  %v427 = vunpack.c.l.b16 %v93
  %v428 = vunpack.c.l.b16 %v94
  %v429 = vunpack.c.l.b16 %v95
  %v430 = vunpack.c.l.b16 %v96
  %v431 = vunpack.c.l.b16 %v97
  %v432 = vunpack.c.l.b16 %v98
  %v433 = vunpack.c.l.b16 %v99
  %v434 = vunpack.c.l.b16 %v100
  %v435 = vunpack.c.l.b16 %v101
  %v436 = vunpack.c.l.b16 %v102
  %v437 = vunpack.c.l.b16 %v103
  %v438 = vunpack.c.l.b16 %v104
  %v439 = vunpack.c.l.b16 %v105
  %v440 = vunpack.c.l.b16 %v106
  %v441 = vunpack.c.l.b16 %v107
  %v442 = vunpack.c.l.b16 %v108
  %v443 = vunpack.c.l.b16 %v109
  %v444 = vunpack.c.l.b16 %v110
  %v445 = vunpack.c.l.b16 %v111
  %v446 = vunpack.c.l.b16 %v112
  %v447 = vunpack.c.l.b16 %v113
  %v448 = vunpack.c.l.b16 %v114
  %v449 = vunpack.c.l.b16 %v115
  %v450 = vunpack.c.l.b16 %v116
  %v451 = vunpack.c.l.b16 %v117
  %v452 = vunpack.c.l.b16 %v118
  %v453 = vunpack.c.l.b16 %v119
  %v454 = vunpack.c.l.b16 %v120
  %v455 = vunpack.c.l.b16 %v121
  %v456 = vunpack.c.l.b16 %v122
  %v457 = vunpack.c.l.b16 %v123
  %v458 = vunpack.c.l.b16 %v124
  %v459 = vunpack.c.l.b16 %v125
  %v460 = vunpack.c.l.b16 %v126
  %v461 = vunpack.c.l.b16 %v127
  %v462 = vunpack.c.l.b16 %v128
  %v463 = vunpack.c.l.b16 %v129
  %v464 = vunpack.c.l.b16 %v130
  %v465 = vunpack.c.l.b16 %v131
  %v466 = vunpack.c.l.b16 %v132
  %v467 = vunpack.c.l.b16 %v133
  %v468 = vunpack.c.l.b16 %v134
  %v469 = vunpack.c.l.b16 %v135
  %v470 = vunpack.c.l.b16 %v136
  %v471 = vunpack.c.l.b16 %v137
  %v472 = vunpack.c.l.b16 %v138
  %v473 = vunpack.c.l.b16 %v139
  %v474 = vunpack.c.l.b16 %v140
  %v475 = vunpack.c.l.b16 %v141
  %v476 = vunpack.c.l.b16 %v142
  %v477 = vunpack.c.l.b16 %v143
  %v478 = vunpack.c.l.b16 %v144
  %v479 = vunpack.c.l.b16 %v145
  %v480 = vunpack.c.l.b16 %v146
  %v481 = vunpack.c.l.b16 %v147
  %v482 = vunpack.c.l.b16 %v148
  %v483 = vunpack.c.l.b16 %v149
  %v484 = vunpack.c.l.b16 %v150
  %v485 = vunpack.c.l.b16 %v151
  %v486 = vunpack.c.l.b16 %v152
  %v487 = vunpack.c.l.b16 %v153
  %v488 = vunpack.c.l.b16 %v154
  %v489 = vunpack.c.l.b16 %v155
  %v490 = vunpack.c.l.b16 %v156
  %v491 = vunpack.c.l.b16 %v157
  %v492 = vunpack.c.l.b16 %v158
  %v493 = vunpack.c.l.b16 %v159
  %v494 = vunpack.c.l.b16 %v160
  %v495 = vunpack.c.l.b16 %v161
  %v496 = vunpack.c.l.b16 %v162
  %v497 = vunpack.c.l.b16 %v163
  %v498 = vunpack.c.l.b16 %v164
  %v499 = vunpack.c.l.b16 %v165
  %v500 = vunpack.c.l.b16 %v166
  %v501 = vunpack.c.l.b16 %v167
  %v502 = vunpack.c.l.b16 %v168
  %v503 = vunpack.c.l.b16 %v169
  %v504 = vunpack.c.l.b16 %v170
  %v505 = vunpack.c.l.b16 %v171
  %v506 = vunpack.c.l.b16 %v172
  %v507 = vunpack.c.l.b16 %v173
  %v508 = vunpack.c.l.b16 %v174
  %v509 = vpack.c.b16 %v366, %v365
  %v510 = vpack.c.b16 %v368, %v367
  %v511 = vpack.c.b16 %v370, %v369
  %v512 = vpack.c.b16 %v372, %v371
  %v513 = vpack.c.b16 %v374, %v373
  %v514 = vpack.c.b16 %v376, %v375
  %v515 = vpack.c.b16 %v378, %v377
  %v516 = vpack.c.b16 %v380, %v379
  %v517 = vpack.c.b16 %v382, %v381
  %v518 = vpack.c.b16 %v384, %v383
  %v519 = vpack.c.b16 %v386, %v385
  %v520 = vpack.c.b16 %v388, %v387
  %v521 = vpack.c.b16 %v390, %v389
  %v522 = vpack.c.b16 %v392, %v391
  %v523 = vpack.c.b16 %v394, %v393
  %v524 = vpack.c.b16 %v396, %v395
  %v525 = vpack.c.b16 %v398, %v397
  %v526 = vpack.c.b16 %v400, %v399
  %v527 = vpack.c.b16 %v402, %v401
  %v528 = vpack.c.b16 %v404, %v403
  %v529 = vpack.c.b16 %v406, %v405
  %v530 = vpack.c.b16 %v408, %v407
  %v531 = vpack.c.b16 %v410, %v409
  %v532 = vpack.c.b16 %v412, %v411
  %v533 = vpack.c.b16 %v414, %v413
  %v534 = vpack.c.b16 %v416, %v415
  %v535 = vpack.c.b16 %v418, %v417
  %v536 = vpack.c.b16 %v420, %v419
  %v537 = vpack.c.b16 %v422, %v421
  %v538 = vpack.c.b16 %v424, %v423
  %v539 = vpack.c.b16 %v426, %v425
  %v540 = vpack.c.b16 %v428, %v427
  %v541 = vpack.c.b16 %v430, %v429
  %v542 = vpack.c.b16 %v432, %v431
  %v543 = vpack.c.b16 %v434, %v433
  %v544 = vpack.c.b16 %v436, %v435
  %v545 = vpack.c.b16 %v438, %v437
  %v546 = vpack.c.b16 %v440, %v439
  %v547 = vpack.c.b16 %v442, %v441
  %v548 = vpack.c.b16 %v444, %v443
  %v549 = vpack.c.b16 %v446, %v445
  %v550 = vpack.c.b16 %v448, %v447
  %v551 = vpack.c.b16 %v450, %v449
  %v552 = vpack.c.b16 %v452, %v451
  %v553 = vpack.c.b16 %v454, %v453
  %v554 = vpack.c.b16 %v456, %v455
  %v555 = vpack.c.b16 %v458, %v457
  %v556 = vpack.c.b16 %v460, %v459
  %v557 = vpack.c.b16 %v462, %v461
  %v558 = vpack.c.b16 %v464, %v463
  %v559 = vpack.c.b16 %v466, %v465
  %v560 = vpack.c.b16 %v468, %v467
  %v561 = vpack.c.b16 %v470, %v469
  %v562 = vpack.c.b16 %v472, %v471
  %v563 = vpack.c.b16 %v474, %v473
  %v564 = vpack.c.b16 %v476, %v475
  %v565 = vpack.c.b16 %v478, %v477
  %v566 = vpack.c.b16 %v480, %v479
  %v567 = vpack.c.b16 %v482, %v481
  %v568 = vpack.c.b16 %v484, %v483
  %v569 = vpack.c.b16 %v486, %v485
  %v570 = vpack.c.b16 %v488, %v487
  %v571 = vpack.c.b16 %v490, %v489
  %v572 = vpack.c.b16 %v492, %v491
  %v573 = vpack.c.b16 %v494, %v493
  %v574 = vpack.c.b16 %v496, %v495
  %v575 = vpack.c.b16 %v498, %v497
  %v576 = vpack.c.b16 %v500, %v499
  %v577 = vpack.c.b16 %v502, %v501
  %v578 = vpack.c.b16 %v504, %v503
  %v579 = vpack.c.b16 %v506, %v505
  %v580 = vpack.c.b16 %v508, %v507
  %653 = vmatprep.subr.bf16.mxu0 0
  %654 = vmatpush1.bf16.msra.mxu0 %v509
  %655 = vmatprep.subr.bf16.mxu0 0
  %656 = vmatpush1.bf16.msra.mxu0 %v510
  %657 = vmatprep.subr.bf16.mxu0 0
  %658 = vmatpush1.bf16.msra.mxu0 %v511
  %659 = vmatprep.subr.bf16.mxu0 0
  %660 = vmatpush1.bf16.msra.mxu0 %v512
  %661 = vmatprep.subr.bf16.mxu0 0
  %662 = vmatpush1.bf16.msra.mxu0 %v513
  %663 = vmatprep.subr.bf16.mxu0 0
  %664 = vmatpush1.bf16.msra.mxu0 %v514
  %665 = vmatprep.subr.bf16.mxu0 0
  %666 = vmatpush1.bf16.msra.mxu0 %v515
  %667 = vmatprep.subr.bf16.mxu0 0
  %668 = vmatpush1.bf16.msra.mxu0 %v516
  %669 = vmatprep.subr.bf16.mxu0 0
  %670 = vmatpush1.bf16.msra.mxu0 %v517
  %671 = vmatprep.subr.bf16.mxu0 0
  %672 = vmatpush1.bf16.msra.mxu0 %v518
  %673 = vmatprep.subr.bf16.mxu0 0
  %674 = vmatpush1.bf16.msra.mxu0 %v519
  %675 = vmatprep.subr.bf16.mxu0 0
  %676 = vmatpush1.bf16.msra.mxu0 %v520
  %677 = vmatprep.subr.bf16.mxu0 0
  %678 = vmatpush1.bf16.msra.mxu0 %v521
  %679 = vmatprep.subr.bf16.mxu0 0
  %680 = vmatpush1.bf16.msra.mxu0 %v522
  %681 = vmatprep.subr.bf16.mxu0 0
  %682 = vmatpush1.bf16.msra.mxu0 %v523
  %683 = vmatprep.subr.bf16.mxu0 0
  %684 = vmatpush1.bf16.msra.mxu0 %v524
  %685 = vmatprep.mubr.bf16.mxu0 %v204
  %686 = vmatmul.mubr.bf16.gmra.mrb[0].mxu0 %v203
  %v687 = vpop.f32.mrb[0].mxu0
  %v688 = vadd.f32 0.0, %v687
  %v689 = vpop.f32.mrb[0].mxu0
  %v690 = vpop.f32.mrb[0].mxu0
  %v691 = vadd.f32 0.0, %v690
  %v692 = vpop.f32.mrb[0].mxu0
  %693 = vdwg.mxu0
  %694 = vmatprep.subr.bf16.mxu0 0
  %695 = vmatpush1.bf16.msra.mxu0 %v525
  %696 = vmatprep.subr.bf16.mxu0 0
  %697 = vmatpush1.bf16.msra.mxu0 %v526
  %698 = vmatprep.subr.bf16.mxu0 0
  %699 = vmatpush1.bf16.msra.mxu0 %v527
  %700 = vmatprep.subr.bf16.mxu0 0
  %701 = vmatpush1.bf16.msra.mxu0 %v528
  %702 = vmatprep.subr.bf16.mxu0 0
  %703 = vmatpush1.bf16.msra.mxu0 %v529
  %704 = vmatprep.subr.bf16.mxu0 0
  %705 = vmatpush1.bf16.msra.mxu0 %v530
  %706 = vmatprep.subr.bf16.mxu0 0
  %707 = vmatpush1.bf16.msra.mxu0 %v531
  %708 = vmatprep.subr.bf16.mxu0 0
  %709 = vmatpush1.bf16.msra.mxu0 %v532
  %710 = vmatprep.subr.bf16.mxu0 0
  %711 = vmatpush1.bf16.msra.mxu0 %v533
  %712 = vmatprep.subr.bf16.mxu0 0
  %713 = vmatpush1.bf16.msra.mxu0 %v534
  %714 = vmatprep.subr.bf16.mxu0 0
  %715 = vmatpush1.bf16.msra.mxu0 %v535
  %716 = vmatprep.subr.bf16.mxu0 0
  %717 = vmatpush1.bf16.msra.mxu0 %v536
  %718 = vmatprep.subr.bf16.mxu0 0
  %719 = vmatpush1.bf16.msra.mxu0 %v537
  %720 = vmatprep.subr.bf16.mxu0 0
  %721 = vmatpush1.bf16.msra.mxu0 %v538
  %722 = vmatprep.subr.bf16.mxu0 0
  %723 = vmatpush1.bf16.msra.mxu0 %v539
  %724 = vmatprep.subr.bf16.mxu0 0
  %725 = vmatpush1.bf16.msra.mxu0 %v540
  %726 = vmatprep.mubr.bf16.mxu0 %v206
  %727 = vmatmul.mubr.bf16.gmra.mrb[0].mxu0 %v205
  %v728 = vpop.f32.mrb[0].mxu0
  %v729 = vadd.f32 %v688, %v728
  %v730 = vpop.f32.mrb[0].mxu0
  %v731 = vpop.f32.mrb[0].mxu0
  %v732 = vadd.f32 %v691, %v731
  %v733 = vpop.f32.mrb[0].mxu0
  %734 = vdwg.mxu0
  %735 = vmatprep.subr.bf16.mxu0 0
  %736 = vmatpush1.bf16.msra.mxu0 %v541
  %737 = vmatprep.subr.bf16.mxu0 0
  %738 = vmatpush1.bf16.msra.mxu0 %v542
  %739 = vmatprep.subr.bf16.mxu0 0
  %740 = vmatpush1.bf16.msra.mxu0 %v543
  %741 = vmatprep.subr.bf16.mxu0 0
  %742 = vmatpush1.bf16.msra.mxu0 %v544
  %743 = vmatprep.subr.bf16.mxu0 0
  %744 = vmatpush1.bf16.msra.mxu0 %v545
  %745 = vmatprep.subr.bf16.mxu0 0
  %746 = vmatpush1.bf16.msra.mxu0 %v546
  %747 = vmatprep.subr.bf16.mxu0 0
  %748 = vmatpush1.bf16.msra.mxu0 %v547
  %749 = vmatprep.subr.bf16.mxu0 0
  %750 = vmatpush1.bf16.msra.mxu0 %v548
  %751 = vmatprep.subr.bf16.mxu0 0
  %752 = vmatpush1.bf16.msra.mxu0 %v549
  %753 = vmatprep.subr.bf16.mxu0 0
  %754 = vmatpush1.bf16.msra.mxu0 %v550
  %755 = vmatprep.subr.bf16.mxu0 0
  %756 = vmatpush1.bf16.msra.mxu0 %v551
  %757 = vmatprep.subr.bf16.mxu0 0
  %758 = vmatpush1.bf16.msra.mxu0 %v552
  %759 = vmatprep.subr.bf16.mxu0 0
  %760 = vmatpush1.bf16.msra.mxu0 %v553
  %761 = vmatprep.subr.bf16.mxu0 0
  %762 = vmatpush1.bf16.msra.mxu0 %v554
  %763 = vmatprep.subr.bf16.mxu0 0
  %764 = vmatpush1.bf16.msra.mxu0 %v555
  %765 = vmatprep.subr.bf16.mxu0 0
  %766 = vmatpush1.bf16.msra.mxu0 %v556
  %767 = vmatprep.mubr.bf16.mxu0 %v208
  %768 = vmatmul.mubr.bf16.gmra.mrb[0].mxu0 %v207
  %v769 = vpop.f32.mrb[0].mxu0
  %v770 = vadd.f32 %v729, %v769
  %v771 = vpop.f32.mrb[0].mxu0
  %v772 = vpop.f32.mrb[0].mxu0
  %v773 = vadd.f32 %v732, %v772
  %v774 = vpop.f32.mrb[0].mxu0
  %775 = vdwg.mxu0
  %776 = vmatprep.subr.bf16.mxu0 0
  %777 = vmatpush1.bf16.msra.mxu0 %v557
  %778 = vmatprep.subr.bf16.mxu0 0
  %779 = vmatpush1.bf16.msra.mxu0 %v558
  %780 = vmatprep.subr.bf16.mxu0 0
  %781 = vmatpush1.bf16.msra.mxu0 %v559
  %782 = vmatprep.subr.bf16.mxu0 0
  %783 = vmatpush1.bf16.msra.mxu0 %v560
  %784 = vmatprep.subr.bf16.mxu0 0
  %785 = vmatpush1.bf16.msra.mxu0 %v561
  %786 = vmatprep.subr.bf16.mxu0 0
  %787 = vmatpush1.bf16.msra.mxu0 %v562
  %788 = vmatprep.subr.bf16.mxu0 0
  %789 = vmatpush1.bf16.msra.mxu0 %v563
  %790 = vmatprep.subr.bf16.mxu0 0
  %791 = vmatpush1.bf16.msra.mxu0 %v564
  %792 = vmatprep.subr.bf16.mxu0 0
  %793 = vmatpush1.bf16.msra.mxu0 %v565
  %794 = vmatprep.subr.bf16.mxu0 0
  %795 = vmatpush1.bf16.msra.mxu0 %v566
  %796 = vmatprep.subr.bf16.mxu0 0
  %797 = vmatpush1.bf16.msra.mxu0 %v567
  %798 = vmatprep.subr.bf16.mxu0 0
  %799 = vmatpush1.bf16.msra.mxu0 %v568
  %800 = vmatprep.subr.bf16.mxu0 0
  %801 = vmatpush1.bf16.msra.mxu0 %v569
  %802 = vmatprep.subr.bf16.mxu0 0
  %803 = vmatpush1.bf16.msra.mxu0 %v570
  %804 = vmatprep.subr.bf16.mxu0 0
  %805 = vmatpush1.bf16.msra.mxu0 %v571
  %806 = vmatprep.subr.bf16.mxu0 0
  %807 = vmatpush1.bf16.msra.mxu0 %v572
  %808 = vmatprep.mubr.bf16.mxu0 %v210
  %809 = vmatmul.mubr.bf16.gmra.mrb[0].mxu0 %v209
  %v810 = vpop.f32.mrb[0].mxu0
  %v811 = vadd.f32 %v770, %v810
  %v812 = vpop.f32.mrb[0].mxu0
  %v813 = vpop.f32.mrb[0].mxu0
  %v814 = vadd.f32 %v773, %v813
  %v815 = vpop.f32.mrb[0].mxu0
  %816 = vdwg.mxu0
  %817 = vmatprep.subr.bf16.mxu0 0
  %818 = vmatpush1.bf16.msra.mxu0 %v573
  %819 = vmatprep.subr.bf16.mxu0 0
  %820 = vmatpush1.bf16.msra.mxu0 %v574
  %821 = vmatprep.subr.bf16.mxu0 0
  %822 = vmatpush1.bf16.msra.mxu0 %v575
  %823 = vmatprep.subr.bf16.mxu0 0
  %824 = vmatpush1.bf16.msra.mxu0 %v576
  %825 = vmatprep.subr.bf16.mxu0 0
  %826 = vmatpush1.bf16.msra.mxu0 %v577
  %827 = vmatprep.subr.bf16.mxu0 0
  %828 = vmatpush1.bf16.msra.mxu0 %v578
  %829 = vmatprep.subr.bf16.mxu0 0
  %830 = vmatpush1.bf16.msra.mxu0 %v579
  %831 = vmatprep.subr.bf16.mxu0 0
  %832 = vmatpush1.bf16.msra.mxu0 %v580
  %833 = vmatprep.subr.bf16.mxu0 0
  %834 = vmatpush1.bf16.msra.mxu0 0
  %835 = vmatprep.subr.bf16.mxu0 0
  %836 = vmatpush1.bf16.msra.mxu0 0
  %837 = vmatprep.subr.bf16.mxu0 0
  %838 = vmatpush1.bf16.msra.mxu0 0
  %839 = vmatprep.subr.bf16.mxu0 0
  %840 = vmatpush1.bf16.msra.mxu0 0
  %841 = vmatprep.subr.bf16.mxu0 0
  %842 = vmatpush1.bf16.msra.mxu0 0
  %843 = vmatprep.subr.bf16.mxu0 0
  %844 = vmatpush1.bf16.msra.mxu0 0
  %845 = vmatprep.subr.bf16.mxu0 0
  %846 = vmatpush1.bf16.msra.mxu0 0
  %847 = vmatprep.subr.bf16.mxu0 0
  %848 = vmatpush1.bf16.msra.mxu0 0
  %849 = vmatprep.mubr.bf16.mxu0 0
  %850 = vmatmul.mubr.bf16.gmra.mrb[0].mxu0 %v211
  %v851 = vpop.f32.mrb[0].mxu0
  %v852 = vadd.f32 %v811, %v851
  %v853 = vpop.f32.mrb[0].mxu0
  %v854 = vpop.f32.mrb[0].mxu0
  %v855 = vadd.f32 %v814, %v854
  %v856 = vpop.f32.mrb[0].mxu0
  %857 = vdwg.mxu0
  %v858 = vld [vmem:[%s2] sm:$0x1]
  %v859 = vld [vmem:[%s3] sm:$0x1]
  %v860 = vadd.f32 %v852, %v855
  %v861 = vrot.slane %v860, 4
  %v862 = vadd.f32 %v860, %v861
  %v863 = vrot.slane %v862, 2
  %v864 = vadd.f32 %v862, %v863
  %v865 = vrot.slane %v864, 1
  %v866 = vadd.f32 %v864, %v865
  %v867 = vrcp.pop 8.0
  %v868 = vmul.f32 %v866, %v867
  %v869 = vmul.f32 %v852, %v852
  %v870 = vmul.f32 %v855, %v855
  %v871 = vadd.f32 %v869, %v870
  %v872 = vrot.slane %v871, 4
  %v873 = vadd.f32 %v871, %v872
  %v874 = vrot.slane %v873, 2
  %v875 = vadd.f32 %v873, %v874
  %v876 = vrot.slane %v875, 1
  %v877 = vadd.f32 %v875, %v876
  %v878 = vmul.f32 %v877, %v867
  %v879 = vmul.f32 %v868, %v868
  %v880 = vsub.f32 %v878, %v879
  %v881 = vmax.f32 %v880, 0.0
  %v882 = vsub.f32 %v852, %v868
  %v883 = vsub.f32 %v855, %v868
  %v884 = vadd.f32 %v881, 1e-05
  %v885 = vrsqrt.pop %v884
  %v886 = vmul.f32 %v882, %v885
  %v887 = vmul.f32 %v883, %v885
  %v889 = vlaneseq
  %v890 = vshrl.u32 %v889, 7
  %v891 = vsub.s32 0, %v890
  %v892 = vrot.slane %v858, %v891
  %v894 = vmul.f32 %v886, %v892
  %v895 = vmul.f32 %v887, %v892
  %v897 = vlaneseq
  %v898 = vshrl.u32 %v897, 7
  %v899 = vsub.s32 0, %v898
  %v900 = vrot.slane %v859, %v899
  %v902 = vadd.f32 %v894, %v900
  %v903 = vadd.f32 %v895, %v900
  %v904 = vld [vmem:[%s4] sm:$0xf]
  %v905 = vld [vmem:[%s4 + $0x4] sm:$0xf]
  %v906 = vunpack.c.l.bf16 %v904
  %v907 = vunpack.c.l.bf16 %v905
  %v908 = vadd.f32 %v902, %v906
  %v909 = vadd.f32 %v903, %v907
  %v910 = vmax.f32 %v908, 0.0
  %v911 = vmax.f32 %v909, 0.0
  %v912 = vpack.c.bf16 %v911, %v910
  %v914 = vunpack.c.l.b16 %v912
  %v915 = vunpack.c.h.b16 %v912
  %v916 = vpack.c.b16 %v914, %v914
  %v917 = vpack.c.b16 %v915, %v915
  %920 = vst [vmem:[%s5] sm:$0xf] %v916
  %921 = vst [vmem:[%s5 + $0x4] sm:$0xf] %v917
  // Predicated region
  $region22: #{resnet18_forward.26} parent=0 // pred_check
    _
  $region23: #{resnet18_forward.26} parent=0 // pred_check_branch
    %923 = sbr.rel (0) target = $region25
  $region24: #{resnet18_forward.26} parent=0 // pred_region
    _
  $region25: #{resnet18_forward.26} parent=0 // pred_fallthru
    _
  // Predicated region
  $region26: #{resnet18_forward.26} parent=0 // pred_check
    _
  $region27: #{resnet18_forward.26} parent=0 // pred_check_branch
    %925 = sbr.rel (0) target = $region29
  $region28: #{resnet18_forward.26} parent=0 // pred_region
    _
  $region29: #{resnet18_forward.26} parent=0 // pred_fallthru
    _

// kernel: resnet18_forward.24
$region0: #{resnet18_forward.24}
  #allocation0 [shape = 'u32[]', space=smem, size = 0x4, offset = 0x4, fixed_abs, tag = 'smem constant byte address 0x4 - core index']
  #allocation1 [shape = 'u32[144,128]{1,0:T(1,128)}', space=vmem, size = 0x12000, scoped, tag = 'internal scratch']
  %s0 = inlined_call_operand.vmem [shape: bf16[16,1152], index: 0, kind: input, shape index: {}]
  %s1 = inlined_call_operand.vmem [shape: bf16[1152,128], index: 1, kind: input, shape index: {}]
  %s2 = inlined_call_operand.vmem [shape: f32[1,128], index: 2, kind: input, shape index: {}]
  %s3 = inlined_call_operand.vmem [shape: f32[1,128], index: 3, kind: input, shape index: {}]
  %s4 = inlined_call_operand.vmem [shape: bf16[16,128], index: 4, kind: input, shape index: {}]
  %s5 = inlined_call_operand.vmem [shape: bf16[128,128], index: 5, kind: input, shape index: {}]
  %s6 = inlined_call_operand.vmem [shape: f32[1,128], index: 6, kind: input, shape index: {}]
  %s7 = inlined_call_operand.vmem [shape: f32[1,128], index: 7, kind: input, shape index: {}]
  %s8 = inlined_call_operand.vmem [shape: bf16[16,128], index: 8, kind: output, shape index: {}]
  %s9 = sld [smem:[#allocation0]]
  $region42: #{resnet18_forward.24} parent=0
    _
  %s11 = ssub.s32 1, %s9
  %s12 = scalar_select 0, %s11, %s9
  // Predicated region
  $region2: #{resnet18_forward.24} parent=0 // pred_check
    _
  $region3: #{resnet18_forward.24} parent=0 // pred_check_branch
    %14 = sbr.rel (0) target = $region5
  $region4: #{resnet18_forward.24} parent=0 // pred_region
    _
  $region5: #{resnet18_forward.24} parent=0 // pred_fallthru
    _
  // Predicated region
  $region6: #{resnet18_forward.24} parent=0 // pred_check
    _
  $region7: #{resnet18_forward.24} parent=0 // pred_check_branch
    %16 = sbr.rel (0) target = $region9
  $region8: #{resnet18_forward.24} parent=0 // pred_region
    _
  $region9: #{resnet18_forward.24} parent=0 // pred_fallthru
    _
  // Predicated region
  $region10: #{resnet18_forward.24} parent=0 // pred_check
    _
  $region11: #{resnet18_forward.24} parent=0 // pred_check_branch
    %18 = sbr.rel (0) target = $region13
  $region12: #{resnet18_forward.24} parent=0 // pred_region
    _
  $region13: #{resnet18_forward.24} parent=0 // pred_fallthru
    _
  // Predicated region
  $region14: #{resnet18_forward.24} parent=0 // pred_check
    _
  $region15: #{resnet18_forward.24} parent=0 // pred_check_branch
    %20 = sbr.rel (0) target = $region17
  $region16: #{resnet18_forward.24} parent=0 // pred_region
    _
  $region17: #{resnet18_forward.24} parent=0 // pred_fallthru
    _
  // Predicated region
  $region18: #{resnet18_forward.24} parent=0 // pred_check
    _
  $region19: #{resnet18_forward.24} parent=0 // pred_check_branch
    %22 = sbr.rel (0) target = $region21
  $region20: #{resnet18_forward.24} parent=0 // pred_region
    _
  $region21: #{resnet18_forward.24} parent=0 // pred_fallthru
    _
  // Predicated region
  $region22: #{resnet18_forward.24} parent=0 // pred_check
    _
  $region23: #{resnet18_forward.24} parent=0 // pred_check_branch
    %24 = sbr.rel (0) target = $region25
  $region24: #{resnet18_forward.24} parent=0 // pred_region
    _
  $region25: #{resnet18_forward.24} parent=0 // pred_fallthru
    _
  // Predicated region
  $region26: #{resnet18_forward.24} parent=0 // pred_check
    _
  $region27: #{resnet18_forward.24} parent=0 // pred_check_branch
    %26 = sbr.rel (0) target = $region29
  $region28: #{resnet18_forward.24} parent=0 // pred_region
    _
  $region29: #{resnet18_forward.24} parent=0 // pred_fallthru
    _
  // Predicated region
  $region30: #{resnet18_forward.24} parent=0 // pred_check
    _
  $region31: #{resnet18_forward.24} parent=0 // pred_check_branch
    %28 = sbr.rel (0) target = $region33
  $region32: #{resnet18_forward.24} parent=0 // pred_region
    _
  $region33: #{resnet18_forward.24} parent=0 // pred_fallthru
    _
  %v30 = vld [vmem:[%s0] sm:$0xff]
  %v31 = vld [vmem:[%s0 + $0x8] sm:$0xff]
  %v32 = vld [vmem:[%s0 + $0x10] sm:$0xff]
  %v33 = vld [vmem:[%s0 + $0x18] sm:$0xff]
  %v34 = vld [vmem:[%s0 + $0x20] sm:$0xf]
  %v35 = vld [vmem:[%s0 + $0x24] sm:$0xff]
  %v36 = vld [vmem:[%s0 + $0x2c] sm:$0xff]
  %v37 = vld [vmem:[%s0 + $0x34] sm:$0xff]
  %v38 = vld [vmem:[%s0 + $0x3c] sm:$0xff]
  %v39 = vld [vmem:[%s0 + $0x44] sm:$0xf]
  %v40 = vld [vmem:[%s1] sm:$0xf]
  %v41 = vld [vmem:[%s1 + $0x4] sm:$0xf]
  %v42 = vld [vmem:[%s1 + $0x8] sm:$0xf]
  %v43 = vld [vmem:[%s1 + $0xc] sm:$0xf]
  %v44 = vld [vmem:[%s1 + $0x10] sm:$0xf]
  %v45 = vld [vmem:[%s1 + $0x14] sm:$0xf]
  %v46 = vld [vmem:[%s1 + $0x18] sm:$0xf]
  %v47 = vld [vmem:[%s1 + $0x1c] sm:$0xf]
  %v48 = vld [vmem:[%s1 + $0x20] sm:$0xf]
  %v49 = vld [vmem:[%s1 + $0x24] sm:$0xf]
  %v50 = vld [vmem:[%s1 + $0x28] sm:$0xf]
  %v51 = vld [vmem:[%s1 + $0x2c] sm:$0xf]
  %v52 = vld [vmem:[%s1 + $0x30] sm:$0xf]
  %v53 = vld [vmem:[%s1 + $0x34] sm:$0xf]
  %v54 = vld [vmem:[%s1 + $0x38] sm:$0xf]
  %v55 = vld [vmem:[%s1 + $0x3c] sm:$0xf]
  %v56 = vld [vmem:[%s1 + $0x40] sm:$0xf]
  %v57 = vld [vmem:[%s1 + $0x44] sm:$0xf]
  %v58 = vld [vmem:[%s1 + $0x48] sm:$0xf]
  %v59 = vld [vmem:[%s1 + $0x4c] sm:$0xf]
  %v60 = vld [vmem:[%s1 + $0x50] sm:$0xf]
  %v61 = vld [vmem:[%s1 + $0x54] sm:$0xf]
  %v62 = vld [vmem:[%s1 + $0x58] sm:$0xf]
  %v63 = vld [vmem:[%s1 + $0x5c] sm:$0xf]
  %v64 = vld [vmem:[%s1 + $0x60] sm:$0xf]
  %v65 = vld [vmem:[%s1 + $0x64] sm:$0xf]
  %v66 = vld [vmem:[%s1 + $0x68] sm:$0xf]
  %v67 = vld [vmem:[%s1 + $0x6c] sm:$0xf]
  %v68 = vld [vmem:[%s1 + $0x70] sm:$0xf]
  %v69 = vld [vmem:[%s1 + $0x74] sm:$0xf]
  %v70 = vld [vmem:[%s1 + $0x78] sm:$0xf]
  %v71 = vld [vmem:[%s1 + $0x7c] sm:$0xf]
  %v72 = vld [vmem:[%s1 + $0x80] sm:$0xf]
  %v73 = vld [vmem:[%s1 + $0x84] sm:$0xf]
  %v74 = vld [vmem:[%s1 + $0x88] sm:$0xf]
  %v75 = vld [vmem:[%s1 + $0x8c] sm:$0xf]
  %v76 = vld [vmem:[%s1 + $0x90] sm:$0xf]
  %v77 = vld [vmem:[%s1 + $0x94] sm:$0xf]
  %v78 = vld [vmem:[%s1 + $0x98] sm:$0xf]
  %v79 = vld [vmem:[%s1 + $0x9c] sm:$0xf]
  %v80 = vld [vmem:[%s1 + $0xa0] sm:$0xf]
  %v81 = vld [vmem:[%s1 + $0xa4] sm:$0xf]
  %v82 = vld [vmem:[%s1 + $0xa8] sm:$0xf]
  %v83 = vld [vmem:[%s1 + $0xac] sm:$0xf]
  %v84 = vld [vmem:[%s1 + $0xb0] sm:$0xf]
  %v85 = vld [vmem:[%s1 + $0xb4] sm:$0xf]
  %v86 = vld [vmem:[%s1 + $0xb8] sm:$0xf]
  %v87 = vld [vmem:[%s1 + $0xbc] sm:$0xf]
  %v88 = vld [vmem:[%s1 + $0xc0] sm:$0xf]
  %v89 = vld [vmem:[%s1 + $0xc4] sm:$0xf]
  %v90 = vld [vmem:[%s1 + $0xc8] sm:$0xf]
  %v91 = vld [vmem:[%s1 + $0xcc] sm:$0xf]
  %v92 = vld [vmem:[%s1 + $0xd0] sm:$0xf]
  %v93 = vld [vmem:[%s1 + $0xd4] sm:$0xf]
  %v94 = vld [vmem:[%s1 + $0xd8] sm:$0xf]
  %v95 = vld [vmem:[%s1 + $0xdc] sm:$0xf]
  %v96 = vld [vmem:[%s1 + $0xe0] sm:$0xf]
  %v97 = vld [vmem:[%s1 + $0xe4] sm:$0xf]
  %v98 = vld [vmem:[%s1 + $0xe8] sm:$0xf]
  %v99 = vld [vmem:[%s1 + $0xec] sm:$0xf]
  %v100 = vld [vmem:[%s1 + $0xf0] sm:$0xf]
  %v101 = vld [vmem:[%s1 + $0xf4] sm:$0xf]
  %v102 = vld [vmem:[%s1 + $0xf8] sm:$0xf]
  %v103 = vld [vmem:[%s1 + $0xfc] sm:$0xf]
  %v104 = vld [vmem:[%s1 + $0x100] sm:$0xf]
  %v105 = vld [vmem:[%s1 + $0x104] sm:$0xf]
  %v106 = vld [vmem:[%s1 + $0x108] sm:$0xf]
  %v107 = vld [vmem:[%s1 + $0x10c] sm:$0xf]
  %v108 = vld [vmem:[%s1 + $0x110] sm:$0xf]
  %v109 = vld [vmem:[%s1 + $0x114] sm:$0xf]
  %v110 = vld [vmem:[%s1 + $0x118] sm:$0xf]
  %v111 = vld [vmem:[%s1 + $0x11c] sm:$0xf]
  %v112 = vld [vmem:[%s1 + $0x120] sm:$0xf]
  %v113 = vld [vmem:[%s1 + $0x124] sm:$0xf]
  %v114 = vld [vmem:[%s1 + $0x128] sm:$0xf]
  %v115 = vld [vmem:[%s1 + $0x12c] sm:$0xf]
  %v116 = vld [vmem:[%s1 + $0x130] sm:$0xf]
  %v117 = vld [vmem:[%s1 + $0x134] sm:$0xf]
  %v118 = vld [vmem:[%s1 + $0x138] sm:$0xf]
  %v119 = vld [vmem:[%s1 + $0x13c] sm:$0xf]
  %v120 = vld [vmem:[%s1 + $0x140] sm:$0xf]
  %v121 = vld [vmem:[%s1 + $0x144] sm:$0xf]
  %v122 = vld [vmem:[%s1 + $0x148] sm:$0xf]
  %v123 = vld [vmem:[%s1 + $0x14c] sm:$0xf]
  %v124 = vld [vmem:[%s1 + $0x150] sm:$0xf]
  %v125 = vld [vmem:[%s1 + $0x154] sm:$0xf]
  %v126 = vld [vmem:[%s1 + $0x158] sm:$0xf]
  %v127 = vld [vmem:[%s1 + $0x15c] sm:$0xf]
  %v128 = vld [vmem:[%s1 + $0x160] sm:$0xf]
  %v129 = vld [vmem:[%s1 + $0x164] sm:$0xf]
  %v130 = vld [vmem:[%s1 + $0x168] sm:$0xf]
  %v131 = vld [vmem:[%s1 + $0x16c] sm:$0xf]
  %v132 = vld [vmem:[%s1 + $0x170] sm:$0xf]
  %v133 = vld [vmem:[%s1 + $0x174] sm:$0xf]
  %v134 = vld [vmem:[%s1 + $0x178] sm:$0xf]
  %v135 = vld [vmem:[%s1 + $0x17c] sm:$0xf]
  %v136 = vld [vmem:[%s1 + $0x180] sm:$0xf]
  %v137 = vld [vmem:[%s1 + $0x184] sm:$0xf]
  %v138 = vld [vmem:[%s1 + $0x188] sm:$0xf]
  %v139 = vld [vmem:[%s1 + $0x18c] sm:$0xf]
  %v140 = vld [vmem:[%s1 + $0x190] sm:$0xf]
  %v141 = vld [vmem:[%s1 + $0x194] sm:$0xf]
  %v142 = vld [vmem:[%s1 + $0x198] sm:$0xf]
  %v143 = vld [vmem:[%s1 + $0x19c] sm:$0xf]
  %v144 = vld [vmem:[%s1 + $0x1a0] sm:$0xf]
  %v145 = vld [vmem:[%s1 + $0x1a4] sm:$0xf]
  %v146 = vld [vmem:[%s1 + $0x1a8] sm:$0xf]
  %v147 = vld [vmem:[%s1 + $0x1ac] sm:$0xf]
  %v148 = vld [vmem:[%s1 + $0x1b0] sm:$0xf]
  %v149 = vld [vmem:[%s1 + $0x1b4] sm:$0xf]
  %v150 = vld [vmem:[%s1 + $0x1b8] sm:$0xf]
  %v151 = vld [vmem:[%s1 + $0x1bc] sm:$0xf]
  %v152 = vld [vmem:[%s1 + $0x1c0] sm:$0xf]
  %v153 = vld [vmem:[%s1 + $0x1c4] sm:$0xf]
  %v154 = vld [vmem:[%s1 + $0x1c8] sm:$0xf]
  %v155 = vld [vmem:[%s1 + $0x1cc] sm:$0xf]
  %v156 = vld [vmem:[%s1 + $0x1d0] sm:$0xf]
  %v157 = vld [vmem:[%s1 + $0x1d4] sm:$0xf]
  %v158 = vld [vmem:[%s1 + $0x1d8] sm:$0xf]
  %v159 = vld [vmem:[%s1 + $0x1dc] sm:$0xf]
  %v160 = vld [vmem:[%s1 + $0x1e0] sm:$0xf]
  %v161 = vld [vmem:[%s1 + $0x1e4] sm:$0xf]
  %v162 = vld [vmem:[%s1 + $0x1e8] sm:$0xf]
  %v163 = vld [vmem:[%s1 + $0x1ec] sm:$0xf]
  %v164 = vld [vmem:[%s1 + $0x1f0] sm:$0xf]
  %v165 = vld [vmem:[%s1 + $0x1f4] sm:$0xf]
  %v166 = vld [vmem:[%s1 + $0x1f8] sm:$0xf]
  %v167 = vld [vmem:[%s1 + $0x1fc] sm:$0xf]
  %v168 = vld [vmem:[%s1 + $0x200] sm:$0xf]
  %v169 = vld [vmem:[%s1 + $0x204] sm:$0xf]
  %v170 = vld [vmem:[%s1 + $0x208] sm:$0xf]
  %v171 = vld [vmem:[%s1 + $0x20c] sm:$0xf]
  %v172 = vld [vmem:[%s1 + $0x210] sm:$0xf]
  %v173 = vld [vmem:[%s1 + $0x214] sm:$0xf]
  %v174 = vld [vmem:[%s1 + $0x218] sm:$0xf]
  %v175 = vld [vmem:[%s1 + $0x21c] sm:$0xf]
  %v176 = vld [vmem:[%s1 + $0x220] sm:$0xf]
  %v177 = vld [vmem:[%s1 + $0x224] sm:$0xf]
  %v178 = vld [vmem:[%s1 + $0x228] sm:$0xf]
  %v179 = vld [vmem:[%s1 + $0x22c] sm:$0xf]
  %v180 = vld [vmem:[%s1 + $0x230] sm:$0xf]
  %v181 = vld [vmem:[%s1 + $0x234] sm:$0xf]
  %v182 = vld [vmem:[%s1 + $0x238] sm:$0xf]
  %v183 = vld [vmem:[%s1 + $0x23c] sm:$0xf]
  %v194 = vunpack.c.l.b16 %v30
  %v195 = vunpack.c.h.b16 %v30
  %v196 = vunpack.c.l.b16 %v31
  %v197 = vunpack.c.h.b16 %v31
  %v198 = vunpack.c.l.b16 %v32
  %v199 = vunpack.c.h.b16 %v32
  %v200 = vunpack.c.l.b16 %v33
  %v201 = vunpack.c.h.b16 %v33
  %v202 = vunpack.c.l.b16 %v34
  %v203 = vunpack.c.l.b16 %v35
  %v204 = vunpack.c.h.b16 %v35
  %v205 = vunpack.c.l.b16 %v36
  %v206 = vunpack.c.h.b16 %v36
  %v207 = vunpack.c.l.b16 %v37
  %v208 = vunpack.c.h.b16 %v37
  %v209 = vunpack.c.l.b16 %v38
  %v210 = vunpack.c.h.b16 %v38
  %v211 = vunpack.c.l.b16 %v39
  %v212 = vpack.c.b16 %v203, %v194
  %v213 = vpack.c.b16 %v204, %v195
  %v214 = vpack.c.b16 %v205, %v196
  %v215 = vpack.c.b16 %v206, %v197
  %v216 = vpack.c.b16 %v207, %v198
  %v217 = vpack.c.b16 %v208, %v199
  %v218 = vpack.c.b16 %v209, %v200
  %v219 = vpack.c.b16 %v210, %v201
  %v220 = vpack.c.b16 %v211, %v202
  %v374 = vunpack.c.l.b16 %v40
  %v375 = vunpack.c.l.b16 %v41
  %v376 = vunpack.c.l.b16 %v42
  %v377 = vunpack.c.l.b16 %v43
  %v378 = vunpack.c.l.b16 %v44
  %v379 = vunpack.c.l.b16 %v45
  %v380 = vunpack.c.l.b16 %v46
  %v381 = vunpack.c.l.b16 %v47
  %v382 = vunpack.c.l.b16 %v48
  %v383 = vunpack.c.l.b16 %v49
  %v384 = vunpack.c.l.b16 %v50
  %v385 = vunpack.c.l.b16 %v51
  %v386 = vunpack.c.l.b16 %v52
  %v387 = vunpack.c.l.b16 %v53
  %v388 = vunpack.c.l.b16 %v54
  %v389 = vunpack.c.l.b16 %v55
  %v390 = vunpack.c.l.b16 %v56
  %v391 = vunpack.c.l.b16 %v57
  %v392 = vunpack.c.l.b16 %v58
  %v393 = vunpack.c.l.b16 %v59
  %v394 = vunpack.c.l.b16 %v60
  %v395 = vunpack.c.l.b16 %v61
  %v396 = vunpack.c.l.b16 %v62
  %v397 = vunpack.c.l.b16 %v63
  %v398 = vunpack.c.l.b16 %v64
  %v399 = vunpack.c.l.b16 %v65
  %v400 = vunpack.c.l.b16 %v66
  %v401 = vunpack.c.l.b16 %v67
  %v402 = vunpack.c.l.b16 %v68
  %v403 = vunpack.c.l.b16 %v69
  %v404 = vunpack.c.l.b16 %v70
  %v405 = vunpack.c.l.b16 %v71
  %v406 = vunpack.c.l.b16 %v72
  %v407 = vunpack.c.l.b16 %v73
  %v408 = vunpack.c.l.b16 %v74
  %v409 = vunpack.c.l.b16 %v75
  %v410 = vunpack.c.l.b16 %v76
  %v411 = vunpack.c.l.b16 %v77
  %v412 = vunpack.c.l.b16 %v78
  %v413 = vunpack.c.l.b16 %v79
  %v414 = vunpack.c.l.b16 %v80
  %v415 = vunpack.c.l.b16 %v81
  %v416 = vunpack.c.l.b16 %v82
  %v417 = vunpack.c.l.b16 %v83
  %v418 = vunpack.c.l.b16 %v84
  %v419 = vunpack.c.l.b16 %v85
  %v420 = vunpack.c.l.b16 %v86
  %v421 = vunpack.c.l.b16 %v87
  %v422 = vunpack.c.l.b16 %v88
  %v423 = vunpack.c.l.b16 %v89
  %v424 = vunpack.c.l.b16 %v90
  %v425 = vunpack.c.l.b16 %v91
  %v426 = vunpack.c.l.b16 %v92
  %v427 = vunpack.c.l.b16 %v93
  %v428 = vunpack.c.l.b16 %v94
  %v429 = vunpack.c.l.b16 %v95
  %v430 = vunpack.c.l.b16 %v96
  %v431 = vunpack.c.l.b16 %v97
  %v432 = vunpack.c.l.b16 %v98
  %v433 = vunpack.c.l.b16 %v99
  %v434 = vunpack.c.l.b16 %v100
  %v435 = vunpack.c.l.b16 %v101
  %v436 = vunpack.c.l.b16 %v102
  %v437 = vunpack.c.l.b16 %v103
  %v438 = vunpack.c.l.b16 %v104
  %v439 = vunpack.c.l.b16 %v105
  %v440 = vunpack.c.l.b16 %v106
  %v441 = vunpack.c.l.b16 %v107
  %v442 = vunpack.c.l.b16 %v108
  %v443 = vunpack.c.l.b16 %v109
  %v444 = vunpack.c.l.b16 %v110
  %v445 = vunpack.c.l.b16 %v111
  %v446 = vunpack.c.l.b16 %v112
  %v447 = vunpack.c.l.b16 %v113
  %v448 = vunpack.c.l.b16 %v114
  %v449 = vunpack.c.l.b16 %v115
  %v450 = vunpack.c.l.b16 %v116
  %v451 = vunpack.c.l.b16 %v117
  %v452 = vunpack.c.l.b16 %v118
  %v453 = vunpack.c.l.b16 %v119
  %v454 = vunpack.c.l.b16 %v120
  %v455 = vunpack.c.l.b16 %v121
  %v456 = vunpack.c.l.b16 %v122
  %v457 = vunpack.c.l.b16 %v123
  %v458 = vunpack.c.l.b16 %v124
  %v459 = vunpack.c.l.b16 %v125
  %v460 = vunpack.c.l.b16 %v126
  %v461 = vunpack.c.l.b16 %v127
  %v462 = vunpack.c.l.b16 %v128
  %v463 = vunpack.c.l.b16 %v129
  %v464 = vunpack.c.l.b16 %v130
  %v465 = vunpack.c.l.b16 %v131
  %v466 = vunpack.c.l.b16 %v132
  %v467 = vunpack.c.l.b16 %v133
  %v468 = vunpack.c.l.b16 %v134
  %v469 = vunpack.c.l.b16 %v135
  %v470 = vunpack.c.l.b16 %v136
  %v471 = vunpack.c.l.b16 %v137
  %v472 = vunpack.c.l.b16 %v138
  %v473 = vunpack.c.l.b16 %v139
  %v474 = vunpack.c.l.b16 %v140
  %v475 = vunpack.c.l.b16 %v141
  %v476 = vunpack.c.l.b16 %v142
  %v477 = vunpack.c.l.b16 %v143
  %v478 = vunpack.c.l.b16 %v144
  %v479 = vunpack.c.l.b16 %v145
  %v480 = vunpack.c.l.b16 %v146
  %v481 = vunpack.c.l.b16 %v147
  %v482 = vunpack.c.l.b16 %v148
  %v483 = vunpack.c.l.b16 %v149
  %v484 = vunpack.c.l.b16 %v150
  %v485 = vunpack.c.l.b16 %v151
  %v486 = vunpack.c.l.b16 %v152
  %v487 = vunpack.c.l.b16 %v153
  %v488 = vunpack.c.l.b16 %v154
  %v489 = vunpack.c.l.b16 %v155
  %v490 = vunpack.c.l.b16 %v156
  %v491 = vunpack.c.l.b16 %v157
  %v492 = vunpack.c.l.b16 %v158
  %v493 = vunpack.c.l.b16 %v159
  %v494 = vunpack.c.l.b16 %v160
  %v495 = vunpack.c.l.b16 %v161
  %v496 = vunpack.c.l.b16 %v162
  %v497 = vunpack.c.l.b16 %v163
  %v498 = vunpack.c.l.b16 %v164
  %v499 = vunpack.c.l.b16 %v165
  %v500 = vunpack.c.l.b16 %v166
  %v501 = vunpack.c.l.b16 %v167
  %v502 = vunpack.c.l.b16 %v168
  %v503 = vunpack.c.l.b16 %v169
  %v504 = vunpack.c.l.b16 %v170
  %v505 = vunpack.c.l.b16 %v171
  %v506 = vunpack.c.l.b16 %v172
  %v507 = vunpack.c.l.b16 %v173
  %v508 = vunpack.c.l.b16 %v174
  %v509 = vunpack.c.l.b16 %v175
  %v510 = vunpack.c.l.b16 %v176
  %v511 = vunpack.c.l.b16 %v177
  %v512 = vunpack.c.l.b16 %v178
  %v513 = vunpack.c.l.b16 %v179
  %v514 = vunpack.c.l.b16 %v180
  %v515 = vunpack.c.l.b16 %v181
  %v516 = vunpack.c.l.b16 %v182
  %v517 = vunpack.c.l.b16 %v183
  %v518 = vpack.c.b16 %v375, %v374
  %v519 = vpack.c.b16 %v377, %v376
  %v520 = vpack.c.b16 %v379, %v378
  %v521 = vpack.c.b16 %v381, %v380
  %v522 = vpack.c.b16 %v383, %v382
  %v523 = vpack.c.b16 %v385, %v384
  %v524 = vpack.c.b16 %v387, %v386
  %v525 = vpack.c.b16 %v389, %v388
  %v526 = vpack.c.b16 %v391, %v390
  %v527 = vpack.c.b16 %v393, %v392
  %v528 = vpack.c.b16 %v395, %v394
  %v529 = vpack.c.b16 %v397, %v396
  %v530 = vpack.c.b16 %v399, %v398
  %v531 = vpack.c.b16 %v401, %v400
  %v532 = vpack.c.b16 %v403, %v402
  %v533 = vpack.c.b16 %v405, %v404
  %v534 = vpack.c.b16 %v407, %v406
  %v535 = vpack.c.b16 %v409, %v408
  %v536 = vpack.c.b16 %v411, %v410
  %v537 = vpack.c.b16 %v413, %v412
  %v538 = vpack.c.b16 %v415, %v414
  %v539 = vpack.c.b16 %v417, %v416
  %v540 = vpack.c.b16 %v419, %v418
  %v541 = vpack.c.b16 %v421, %v420
  %v542 = vpack.c.b16 %v423, %v422
  %v543 = vpack.c.b16 %v425, %v424
  %v544 = vpack.c.b16 %v427, %v426
  %v545 = vpack.c.b16 %v429, %v428
  %v546 = vpack.c.b16 %v431, %v430
  %v547 = vpack.c.b16 %v433, %v432
  %v548 = vpack.c.b16 %v435, %v434
  %v549 = vpack.c.b16 %v437, %v436
  %v550 = vpack.c.b16 %v439, %v438
  %v551 = vpack.c.b16 %v441, %v440
  %v552 = vpack.c.b16 %v443, %v442
  %v553 = vpack.c.b16 %v445, %v444
  %v554 = vpack.c.b16 %v447, %v446
  %v555 = vpack.c.b16 %v449, %v448
  %v556 = vpack.c.b16 %v451, %v450
  %v557 = vpack.c.b16 %v453, %v452
  %v558 = vpack.c.b16 %v455, %v454
  %v559 = vpack.c.b16 %v457, %v456
  %v560 = vpack.c.b16 %v459, %v458
  %v561 = vpack.c.b16 %v461, %v460
  %v562 = vpack.c.b16 %v463, %v462
  %v563 = vpack.c.b16 %v465, %v464
  %v564 = vpack.c.b16 %v467, %v466
  %v565 = vpack.c.b16 %v469, %v468
  %v566 = vpack.c.b16 %v471, %v470
  %v567 = vpack.c.b16 %v473, %v472
  %v568 = vpack.c.b16 %v475, %v474
  %v569 = vpack.c.b16 %v477, %v476
  %v570 = vpack.c.b16 %v479, %v478
  %v571 = vpack.c.b16 %v481, %v480
  %v572 = vpack.c.b16 %v483, %v482
  %v573 = vpack.c.b16 %v485, %v484
  %v574 = vpack.c.b16 %v487, %v486
  %v575 = vpack.c.b16 %v489, %v488
  %v576 = vpack.c.b16 %v491, %v490
  %v577 = vpack.c.b16 %v493, %v492
  %v578 = vpack.c.b16 %v495, %v494
  %v579 = vpack.c.b16 %v497, %v496
  %v580 = vpack.c.b16 %v499, %v498
  %v581 = vpack.c.b16 %v501, %v500
  %v582 = vpack.c.b16 %v503, %v502
  %v583 = vpack.c.b16 %v505, %v504
  %v584 = vpack.c.b16 %v507, %v506
  %v585 = vpack.c.b16 %v509, %v508
  %v586 = vpack.c.b16 %v511, %v510
  %v587 = vpack.c.b16 %v513, %v512
  %v588 = vpack.c.b16 %v515, %v514
  %v589 = vpack.c.b16 %v517, %v516
  %662 = vmatprep.subr.bf16.mxu0 0
  %663 = vmatpush1.bf16.msra.mxu0 %v518
  %664 = vmatprep.subr.bf16.mxu0 0
  %665 = vmatpush1.bf16.msra.mxu0 %v519
  %666 = vmatprep.subr.bf16.mxu0 0
  %667 = vmatpush1.bf16.msra.mxu0 %v520
  %668 = vmatprep.subr.bf16.mxu0 0
  %669 = vmatpush1.bf16.msra.mxu0 %v521
  %670 = vmatprep.subr.bf16.mxu0 0
  %671 = vmatpush1.bf16.msra.mxu0 %v522
  %672 = vmatprep.subr.bf16.mxu0 0
  %673 = vmatpush1.bf16.msra.mxu0 %v523
  %674 = vmatprep.subr.bf16.mxu0 0
  %675 = vmatpush1.bf16.msra.mxu0 %v524
  %676 = vmatprep.subr.bf16.mxu0 0
  %677 = vmatpush1.bf16.msra.mxu0 %v525
  %678 = vmatprep.subr.bf16.mxu0 0
  %679 = vmatpush1.bf16.msra.mxu0 %v526
  %680 = vmatprep.subr.bf16.mxu0 0
  %681 = vmatpush1.bf16.msra.mxu0 %v527
  %682 = vmatprep.subr.bf16.mxu0 0
  %683 = vmatpush1.bf16.msra.mxu0 %v528
  %684 = vmatprep.subr.bf16.mxu0 0
  %685 = vmatpush1.bf16.msra.mxu0 %v529
  %686 = vmatprep.subr.bf16.mxu0 0
  %687 = vmatpush1.bf16.msra.mxu0 %v530
  %688 = vmatprep.subr.bf16.mxu0 0
  %689 = vmatpush1.bf16.msra.mxu0 %v531
  %690 = vmatprep.subr.bf16.mxu0 0
  %691 = vmatpush1.bf16.msra.mxu0 %v532
  %692 = vmatprep.subr.bf16.mxu0 0
  %693 = vmatpush1.bf16.msra.mxu0 %v533
  %694 = vmatprep.mubr.bf16.mxu0 %v213
  %695 = vmatmul.mubr.bf16.gmra.mrb[0].mxu0 %v212
  %v696 = vpop.f32.mrb[0].mxu0
  %v697 = vadd.f32 0.0, %v696
  %v698 = vpop.f32.mrb[0].mxu0
  %v699 = vpop.f32.mrb[0].mxu0
  %v700 = vadd.f32 0.0, %v699
  %v701 = vpop.f32.mrb[0].mxu0
  %702 = vdwg.mxu0
  %703 = vmatprep.subr.bf16.mxu0 0
  %704 = vmatpush1.bf16.msra.mxu0 %v534
  %705 = vmatprep.subr.bf16.mxu0 0
  %706 = vmatpush1.bf16.msra.mxu0 %v535
  %707 = vmatprep.subr.bf16.mxu0 0
  %708 = vmatpush1.bf16.msra.mxu0 %v536
  %709 = vmatprep.subr.bf16.mxu0 0
  %710 = vmatpush1.bf16.msra.mxu0 %v537
  %711 = vmatprep.subr.bf16.mxu0 0
  %712 = vmatpush1.bf16.msra.mxu0 %v538
  %713 = vmatprep.subr.bf16.mxu0 0
  %714 = vmatpush1.bf16.msra.mxu0 %v539
  %715 = vmatprep.subr.bf16.mxu0 0
  %716 = vmatpush1.bf16.msra.mxu0 %v540
  %717 = vmatprep.subr.bf16.mxu0 0
  %718 = vmatpush1.bf16.msra.mxu0 %v541
  %719 = vmatprep.subr.bf16.mxu0 0
  %720 = vmatpush1.bf16.msra.mxu0 %v542
  %721 = vmatprep.subr.bf16.mxu0 0
  %722 = vmatpush1.bf16.msra.mxu0 %v543
  %723 = vmatprep.subr.bf16.mxu0 0
  %724 = vmatpush1.bf16.msra.mxu0 %v544
  %725 = vmatprep.subr.bf16.mxu0 0
  %726 = vmatpush1.bf16.msra.mxu0 %v545
  %727 = vmatprep.subr.bf16.mxu0 0
  %728 = vmatpush1.bf16.msra.mxu0 %v546
  %729 = vmatprep.subr.bf16.mxu0 0
  %730 = vmatpush1.bf16.msra.mxu0 %v547
  %731 = vmatprep.subr.bf16.mxu0 0
  %732 = vmatpush1.bf16.msra.mxu0 %v548
  %733 = vmatprep.subr.bf16.mxu0 0
  %734 = vmatpush1.bf16.msra.mxu0 %v549
  %735 = vmatprep.mubr.bf16.mxu0 %v215
  %736 = vmatmul.mubr.bf16.gmra.mrb[0].mxu0 %v214
  %v737 = vpop.f32.mrb[0].mxu0
  %v738 = vadd.f32 %v697, %v737
  %v739 = vpop.f32.mrb[0].mxu0
  %v740 = vpop.f32.mrb[0].mxu0
  %v741 = vadd.f32 %v700, %v740
  %v742 = vpop.f32.mrb[0].mxu0
  %743 = vdwg.mxu0
  %744 = vmatprep.subr.bf16.mxu0 0
  %745 = vmatpush1.bf16.msra.mxu0 %v550
  %746 = vmatprep.subr.bf16.mxu0 0
  %747 = vmatpush1.bf16.msra.mxu0 %v551
  %748 = vmatprep.subr.bf16.mxu0 0
  %749 = vmatpush1.bf16.msra.mxu0 %v552
  %750 = vmatprep.subr.bf16.mxu0 0
  %751 = vmatpush1.bf16.msra.mxu0 %v553
  %752 = vmatprep.subr.bf16.mxu0 0
  %753 = vmatpush1.bf16.msra.mxu0 %v554
  %754 = vmatprep.subr.bf16.mxu0 0
  %755 = vmatpush1.bf16.msra.mxu0 %v555
  %756 = vmatprep.subr.bf16.mxu0 0
  %757 = vmatpush1.bf16.msra.mxu0 %v556
  %758 = vmatprep.subr.bf16.mxu0 0
  %759 = vmatpush1.bf16.msra.mxu0 %v557
  %760 = vmatprep.subr.bf16.mxu0 0
  %761 = vmatpush1.bf16.msra.mxu0 %v558
  %762 = vmatprep.subr.bf16.mxu0 0
  %763 = vmatpush1.bf16.msra.mxu0 %v559
  %764 = vmatprep.subr.bf16.mxu0 0
  %765 = vmatpush1.bf16.msra.mxu0 %v560
  %766 = vmatprep.subr.bf16.mxu0 0
  %767 = vmatpush1.bf16.msra.mxu0 %v561
  %768 = vmatprep.subr.bf16.mxu0 0
  %769 = vmatpush1.bf16.msra.mxu0 %v562
  %770 = vmatprep.subr.bf16.mxu0 0
  %771 = vmatpush1.bf16.msra.mxu0 %v563
  %772 = vmatprep.subr.bf16.mxu0 0
  %773 = vmatpush1.bf16.msra.mxu0 %v564
  %774 = vmatprep.subr.bf16.mxu0 0
  %775 = vmatpush1.bf16.msra.mxu0 %v565
  %776 = vmatprep.mubr.bf16.mxu0 %v217
  %777 = vmatmul.mubr.bf16.gmra.mrb[0].mxu0 %v216
  %v778 = vpop.f32.mrb[0].mxu0
  %v779 = vadd.f32 %v738, %v778
  %v780 = vpop.f32.mrb[0].mxu0
  %v781 = vpop.f32.mrb[0].mxu0
  %v782 = vadd.f32 %v741, %v781
  %v783 = vpop.f32.mrb[0].mxu0
  %784 = vdwg.mxu0
  %785 = vmatprep.subr.bf16.mxu0 0
  %786 = vmatpush1.bf16.msra.mxu0 %v566
  %787 = vmatprep.subr.bf16.mxu0 0
  %788 = vmatpush1.bf16.msra.mxu0 %v567
  %789 = vmatprep.subr.bf16.mxu0 0
  %790 = vmatpush1.bf16.msra.mxu0 %v568
  %791 = vmatprep.subr.bf16.mxu0 0
  %792 = vmatpush1.bf16.msra.mxu0 %v569
  %793 = vmatprep.subr.bf16.mxu0 0
  %794 = vmatpush1.bf16.msra.mxu0 %v570
  %795 = vmatprep.subr.bf16.mxu0 0
  %796 = vmatpush1.bf16.msra.mxu0 %v571
  %797 = vmatprep.subr.bf16.mxu0 0
  %798 = vmatpush1.bf16.msra.mxu0 %v572
  %799 = vmatprep.subr.bf16.mxu0 0
  %800 = vmatpush1.bf16.msra.mxu0 %v573
  %801 = vmatprep.subr.bf16.mxu0 0
  %802 = vmatpush1.bf16.msra.mxu0 %v574
  %803 = vmatprep.subr.bf16.mxu0 0
  %804 = vmatpush1.bf16.msra.mxu0 %v575
  %805 = vmatprep.subr.bf16.mxu0 0
  %806 = vmatpush1.bf16.msra.mxu0 %v576
  %807 = vmatprep.subr.bf16.mxu0 0
  %808 = vmatpush1.bf16.msra.mxu0 %v577
  %809 = vmatprep.subr.bf16.mxu0 0
  %810 = vmatpush1.bf16.msra.mxu0 %v578
  %811 = vmatprep.subr.bf16.mxu0 0
  %812 = vmatpush1.bf16.msra.mxu0 %v579
  %813 = vmatprep.subr.bf16.mxu0 0
  %814 = vmatpush1.bf16.msra.mxu0 %v580
  %815 = vmatprep.subr.bf16.mxu0 0
  %816 = vmatpush1.bf16.msra.mxu0 %v581
  %817 = vmatprep.mubr.bf16.mxu0 %v219
  %818 = vmatmul.mubr.bf16.gmra.mrb[0].mxu0 %v218
  %v819 = vpop.f32.mrb[0].mxu0
  %v820 = vadd.f32 %v779, %v819
  %v821 = vpop.f32.mrb[0].mxu0
  %v822 = vpop.f32.mrb[0].mxu0
  %v823 = vadd.f32 %v782, %v822
  %v824 = vpop.f32.mrb[0].mxu0
  %825 = vdwg.mxu0
  %826 = vmatprep.subr.bf16.mxu0 0
  %827 = vmatpush1.bf16.msra.mxu0 %v582
  %828 = vmatprep.subr.bf16.mxu0 0
  %829 = vmatpush1.bf16.msra.mxu0 %v583
  %830 = vmatprep.subr.bf16.mxu0 0
  %831 = vmatpush1.bf16.msra.mxu0 %v584
  %832 = vmatprep.subr.bf16.mxu0 0
  %833 = vmatpush1.bf16.msra.mxu0 %v585
  %834 = vmatprep.subr.bf16.mxu0 0
  %835 = vmatpush1.bf16.msra.mxu0 %v586
  %836 = vmatprep.subr.bf16.mxu0 0
  %837 = vmatpush1.bf16.msra.mxu0 %v587
  %838 = vmatprep.subr.bf16.mxu0 0
  %839 = vmatpush1.bf16.msra.mxu0 %v588
  %840 = vmatprep.subr.bf16.mxu0 0
  %841 = vmatpush1.bf16.msra.mxu0 %v589
  %842 = vmatprep.subr.bf16.mxu0 0
  %843 = vmatpush1.bf16.msra.mxu0 0
  %844 = vmatprep.subr.bf16.mxu0 0
  %845 = vmatpush1.bf16.msra.mxu0 0
  %846 = vmatprep.subr.bf16.mxu0 0
  %847 = vmatpush1.bf16.msra.mxu0 0
  %848 = vmatprep.subr.bf16.mxu0 0
  %849 = vmatpush1.bf16.msra.mxu0 0
  %850 = vmatprep.subr.bf16.mxu0 0
  %851 = vmatpush1.bf16.msra.mxu0 0
  %852 = vmatprep.subr.bf16.mxu0 0
  %853 = vmatpush1.bf16.msra.mxu0 0
  %854 = vmatprep.subr.bf16.mxu0 0
  %855 = vmatpush1.bf16.msra.mxu0 0
  %856 = vmatprep.subr.bf16.mxu0 0
  %857 = vmatpush1.bf16.msra.mxu0 0
  %858 = vmatprep.mubr.bf16.mxu0 0
  %859 = vmatmul.mubr.bf16.gmra.mrb[0].mxu0 %v220
  %v860 = vpop.f32.mrb[0].mxu0
  %v861 = vadd.f32 %v820, %v860
  %v862 = vpop.f32.mrb[0].mxu0
  %v863 = vpop.f32.mrb[0].mxu0
  %v864 = vadd.f32 %v823, %v863
  %v865 = vpop.f32.mrb[0].mxu0
  %866 = vdwg.mxu0
  %v867 = vld [vmem:[%s2] sm:$0x1]
  %v868 = vld [vmem:[%s3] sm:$0x1]
  %v869 = vadd.f32 %v861, %v864
  %v870 = vrot.slane %v869, 4
  %v871 = vadd.f32 %v869, %v870
  %v872 = vrot.slane %v871, 2
  %v873 = vadd.f32 %v871, %v872
  %v874 = vrot.slane %v873, 1
  %v875 = vadd.f32 %v873, %v874
  %v876 = vrcp.pop 8.0
  %v877 = vmul.f32 %v875, %v876
  %v878 = vmul.f32 %v861, %v861
  %v879 = vmul.f32 %v864, %v864
  %v880 = vadd.f32 %v878, %v879
  %v881 = vrot.slane %v880, 4
  %v882 = vadd.f32 %v880, %v881
  %v883 = vrot.slane %v882, 2
  %v884 = vadd.f32 %v882, %v883
  %v885 = vrot.slane %v884, 1
  %v886 = vadd.f32 %v884, %v885
  %v887 = vmul.f32 %v886, %v876
  %v888 = vmul.f32 %v877, %v877
  %v889 = vsub.f32 %v887, %v888
  %v890 = vmax.f32 %v889, 0.0
  %v891 = vsub.f32 %v861, %v877
  %v892 = vsub.f32 %v864, %v877
  %v893 = vadd.f32 %v890, 1e-05
  %v894 = vrsqrt.pop %v893
  %v895 = vmul.f32 %v891, %v894
  %v896 = vmul.f32 %v892, %v894
  %v898 = vlaneseq
  %v899 = vshrl.u32 %v898, 7
  %v900 = vsub.s32 0, %v899
  %v901 = vrot.slane %v867, %v900
  %v903 = vmul.f32 %v895, %v901
  %v904 = vmul.f32 %v896, %v901
  %v906 = vlaneseq
  %v907 = vshrl.u32 %v906, 7
  %v908 = vsub.s32 0, %v907
  %v909 = vrot.slane %v868, %v908
  %v911 = vadd.f32 %v903, %v909
  %v912 = vadd.f32 %v904, %v909
  %v913 = vld [vmem:[%s4] sm:$0xf]
  %v914 = vld [vmem:[%s4 + $0x4] sm:$0xf]
  %v915 = vld [vmem:[%s5] sm:$0xf]
  %v916 = vld [vmem:[%s5 + $0x4] sm:$0xf]
  %v917 = vld [vmem:[%s5 + $0x8] sm:$0xf]
  %v918 = vld [vmem:[%s5 + $0xc] sm:$0xf]
  %v919 = vld [vmem:[%s5 + $0x10] sm:$0xf]
  %v920 = vld [vmem:[%s5 + $0x14] sm:$0xf]
  %v921 = vld [vmem:[%s5 + $0x18] sm:$0xf]
  %v922 = vld [vmem:[%s5 + $0x1c] sm:$0xf]
  %v923 = vld [vmem:[%s5 + $0x20] sm:$0xf]
  %v924 = vld [vmem:[%s5 + $0x24] sm:$0xf]
  %v925 = vld [vmem:[%s5 + $0x28] sm:$0xf]
  %v926 = vld [vmem:[%s5 + $0x2c] sm:$0xf]
  %v927 = vld [vmem:[%s5 + $0x30] sm:$0xf]
  %v928 = vld [vmem:[%s5 + $0x34] sm:$0xf]
  %v929 = vld [vmem:[%s5 + $0x38] sm:$0xf]
  %v930 = vld [vmem:[%s5 + $0x3c] sm:$0xf]
  %v933 = vunpack.c.l.b16 %v913
  %v934 = vunpack.c.l.b16 %v914
  %v935 = vpack.c.b16 %v934, %v933
  %v953 = vunpack.c.l.b16 %v915
  %v954 = vunpack.c.l.b16 %v916
  %v955 = vunpack.c.l.b16 %v917
  %v956 = vunpack.c.l.b16 %v918
  %v957 = vunpack.c.l.b16 %v919
  %v958 = vunpack.c.l.b16 %v920
  %v959 = vunpack.c.l.b16 %v921
  %v960 = vunpack.c.l.b16 %v922
  %v961 = vunpack.c.l.b16 %v923
  %v962 = vunpack.c.l.b16 %v924
  %v963 = vunpack.c.l.b16 %v925
  %v964 = vunpack.c.l.b16 %v926
  %v965 = vunpack.c.l.b16 %v927
  %v966 = vunpack.c.l.b16 %v928
  %v967 = vunpack.c.l.b16 %v929
  %v968 = vunpack.c.l.b16 %v930
  %v969 = vpack.c.b16 %v954, %v953
  %v970 = vpack.c.b16 %v956, %v955
  %v971 = vpack.c.b16 %v958, %v957
  %v972 = vpack.c.b16 %v960, %v959
  %v973 = vpack.c.b16 %v962, %v961
  %v974 = vpack.c.b16 %v964, %v963
  %v975 = vpack.c.b16 %v966, %v965
  %v976 = vpack.c.b16 %v968, %v967
  %985 = vmatprep.subr.bf16.mxu0 0
  %986 = vmatpush1.bf16.msra.mxu0 %v969
  %987 = vmatprep.subr.bf16.mxu0 0
  %988 = vmatpush1.bf16.msra.mxu0 %v970
  %989 = vmatprep.subr.bf16.mxu0 0
  %990 = vmatpush1.bf16.msra.mxu0 %v971
  %991 = vmatprep.subr.bf16.mxu0 0
  %992 = vmatpush1.bf16.msra.mxu0 %v972
  %993 = vmatprep.subr.bf16.mxu0 0
  %994 = vmatpush1.bf16.msra.mxu0 %v973
  %995 = vmatprep.subr.bf16.mxu0 0
  %996 = vmatpush1.bf16.msra.mxu0 %v974
  %997 = vmatprep.subr.bf16.mxu0 0
  %998 = vmatpush1.bf16.msra.mxu0 %v975
  %999 = vmatprep.subr.bf16.mxu0 0
  %1000 = vmatpush1.bf16.msra.mxu0 %v976
  %1001 = vmatprep.subr.bf16.mxu0 0
  %1002 = vmatpush1.bf16.msra.mxu0 0
  %1003 = vmatprep.subr.bf16.mxu0 0
  %1004 = vmatpush1.bf16.msra.mxu0 0
  %1005 = vmatprep.subr.bf16.mxu0 0
  %1006 = vmatpush1.bf16.msra.mxu0 0
  %1007 = vmatprep.subr.bf16.mxu0 0
  %1008 = vmatpush1.bf16.msra.mxu0 0
  %1009 = vmatprep.subr.bf16.mxu0 0
  %1010 = vmatpush1.bf16.msra.mxu0 0
  %1011 = vmatprep.subr.bf16.mxu0 0
  %1012 = vmatpush1.bf16.msra.mxu0 0
  %1013 = vmatprep.subr.bf16.mxu0 0
  %1014 = vmatpush1.bf16.msra.mxu0 0
  %1015 = vmatprep.subr.bf16.mxu0 0
  %1016 = vmatpush1.bf16.msra.mxu0 0
  %1017 = vmatprep.mubr.bf16.mxu0 0
  %1018 = vmatmul.mubr.bf16.gmra.mrb[0].mxu0 %v935
  %v1019 = vpop.f32.mrb[0].mxu0
  %v1020 = vadd.f32 0.0, %v1019
  %v1021 = vpop.f32.mrb[0].mxu0
  %v1022 = vpop.f32.mrb[0].mxu0
  %v1023 = vadd.f32 0.0, %v1022
  %v1024 = vpop.f32.mrb[0].mxu0
  %1025 = vdwg.mxu0
  %v1026 = vld [vmem:[%s6] sm:$0x1]
  %v1027 = vld [vmem:[%s7] sm:$0x1]
  %v1028 = vadd.f32 %v1020, %v1023
  %v1029 = vrot.slane %v1028, 4
  %v1030 = vadd.f32 %v1028, %v1029
  %v1031 = vrot.slane %v1030, 2
  %v1032 = vadd.f32 %v1030, %v1031
  %v1033 = vrot.slane %v1032, 1
  %v1034 = vadd.f32 %v1032, %v1033
  %v1035 = vmul.f32 %v1034, %v876
  %v1036 = vmul.f32 %v1020, %v1020
  %v1037 = vmul.f32 %v1023, %v1023
  %v1038 = vadd.f32 %v1036, %v1037
  %v1039 = vrot.slane %v1038, 4
  %v1040 = vadd.f32 %v1038, %v1039
  %v1041 = vrot.slane %v1040, 2
  %v1042 = vadd.f32 %v1040, %v1041
  %v1043 = vrot.slane %v1042, 1
  %v1044 = vadd.f32 %v1042, %v1043
  %v1045 = vmul.f32 %v1044, %v876
  %v1046 = vmul.f32 %v1035, %v1035
  %v1047 = vsub.f32 %v1045, %v1046
  %v1048 = vmax.f32 %v1047, 0.0
  %v1049 = vsub.f32 %v1020, %v1035
  %v1050 = vsub.f32 %v1023, %v1035
  %v1051 = vadd.f32 %v1048, 1e-05
  %v1052 = vrsqrt.pop %v1051
  %v1053 = vmul.f32 %v1049, %v1052
  %v1054 = vmul.f32 %v1050, %v1052
  %v1056 = vlaneseq
  %v1057 = vshrl.u32 %v1056, 7
  %v1058 = vsub.s32 0, %v1057
  %v1059 = vrot.slane %v1026, %v1058
  %v1061 = vmul.f32 %v1053, %v1059
  %v1062 = vmul.f32 %v1054, %v1059
  %v1064 = vlaneseq
  %v1065 = vshrl.u32 %v1064, 7
  %v1066 = vsub.s32 0, %v1065
  %v1067 = vrot.slane %v1027, %v1066
  %v1069 = vadd.f32 %v1061, %v1067
  %v1070 = vadd.f32 %v1062, %v1067
  %v1071 = vadd.f32 %v911, %v1069
  %v1072 = vadd.f32 %v912, %v1070
  %v1073 = vmax.f32 %v1071, 0.0
  %v1074 = vmax.f32 %v1072, 0.0
  %v1075 = vpack.c.bf16 %v1074, %v1073
  %v1077 = vunpack.c.l.b16 %v1075
  %v1078 = vunpack.c.h.b16 %v1075
  %v1079 = vpack.c.b16 %v1077, %v1077
  %v1080 = vpack.c.b16 %v1078, %v1078
  %1083 = vst [vmem:[%s8] sm:$0xf] %v1079
  %1084 = vst [vmem:[%s8 + $0x4] sm:$0xf] %v1080
  // Predicated region
  $region34: #{resnet18_forward.24} parent=0 // pred_check
    _
  $region35: #{resnet18_forward.24} parent=0 // pred_check_branch
    %1086 = sbr.rel (0) target = $region37
  $region36: #{resnet18_forward.24} parent=0 // pred_region
    _
  $region37: #{resnet18_forward.24} parent=0 // pred_fallthru
    _
  // Predicated region
  $region38: #{resnet18_forward.24} parent=0 // pred_check
    _
  $region39: #{resnet18_forward.24} parent=0 // pred_check_branch
    %1088 = sbr.rel (0) target = $region41
  $region40: #{resnet18_forward.24} parent=0 // pred_region
    _
  $region41: #{resnet18_forward.24} parent=0 // pred_fallthru
    _

// kernel: resnet18_forward.28
$region0: #{resnet18_forward.28}
  #allocation0 [shape = 'u32[]', space=smem, size = 0x4, offset = 0x4, fixed_abs, tag = 'smem constant byte address 0x4 - core index']
  #allocation1 [shape = 'u32[144,128]{1,0:T(1,128)}', space=vmem, size = 0x12000, scoped, tag = 'internal scratch']
  %s0 = inlined_call_operand.vmem [shape: bf16[16,256], index: 0, kind: input, shape index: {}]
  %s1 = inlined_call_operand.vmem [shape: bf16[256,256], index: 1, kind: input, shape index: {}]
  %s2 = inlined_call_operand.vmem [shape: f32[1,256], index: 2, kind: input, shape index: {}]
  %s3 = inlined_call_operand.vmem [shape: f32[1,256], index: 3, kind: input, shape index: {}]
  %s4 = inlined_call_operand.vmem [shape: bf16[16,128], index: 4, kind: input, shape index: {}]
  %s5 = inlined_call_operand.vmem [shape: bf16[128,256], index: 5, kind: input, shape index: {}]
  %s6 = inlined_call_operand.vmem [shape: f32[1,256], index: 6, kind: input, shape index: {}]
  %s7 = inlined_call_operand.vmem [shape: f32[1,256], index: 7, kind: input, shape index: {}]
  %s8 = inlined_call_operand.vmem [shape: bf16[16,256], index: 8, kind: output, shape index: {}]
  %s9 = sld [smem:[#allocation0]]
  $region42: #{resnet18_forward.28} parent=0
    _
  %s11 = ssub.s32 1, %s9
  %s12 = scalar_select 0, %s11, %s9
  // Predicated region
  $region2: #{resnet18_forward.28} parent=0 // pred_check
    _
  $region3: #{resnet18_forward.28} parent=0 // pred_check_branch
    %14 = sbr.rel (0) target = $region5
  $region4: #{resnet18_forward.28} parent=0 // pred_region
    _
  $region5: #{resnet18_forward.28} parent=0 // pred_fallthru
    _
  // Predicated region
  $region6: #{resnet18_forward.28} parent=0 // pred_check
    _
  $region7: #{resnet18_forward.28} parent=0 // pred_check_branch
    %16 = sbr.rel (0) target = $region9
  $region8: #{resnet18_forward.28} parent=0 // pred_region
    _
  $region9: #{resnet18_forward.28} parent=0 // pred_fallthru
    _
  // Predicated region
  $region10: #{resnet18_forward.28} parent=0 // pred_check
    _
  $region11: #{resnet18_forward.28} parent=0 // pred_check_branch
    %18 = sbr.rel (0) target = $region13
  $region12: #{resnet18_forward.28} parent=0 // pred_region
    _
  $region13: #{resnet18_forward.28} parent=0 // pred_fallthru
    _
  // Predicated region
  $region14: #{resnet18_forward.28} parent=0 // pred_check
    _
  $region15: #{resnet18_forward.28} parent=0 // pred_check_branch
    %20 = sbr.rel (0) target = $region17
  $region16: #{resnet18_forward.28} parent=0 // pred_region
    _
  $region17: #{resnet18_forward.28} parent=0 // pred_fallthru
    _
  // Predicated region
  $region18: #{resnet18_forward.28} parent=0 // pred_check
    _
  $region19: #{resnet18_forward.28} parent=0 // pred_check_branch
    %22 = sbr.rel (0) target = $region21
  $region20: #{resnet18_forward.28} parent=0 // pred_region
    _
  $region21: #{resnet18_forward.28} parent=0 // pred_fallthru
    _
  // Predicated region
  $region22: #{resnet18_forward.28} parent=0 // pred_check
    _
  $region23: #{resnet18_forward.28} parent=0 // pred_check_branch
    %24 = sbr.rel (0) target = $region25
  $region24: #{resnet18_forward.28} parent=0 // pred_region
    _
  $region25: #{resnet18_forward.28} parent=0 // pred_fallthru
    _
  // Predicated region
  $region26: #{resnet18_forward.28} parent=0 // pred_check
    _
  $region27: #{resnet18_forward.28} parent=0 // pred_check_branch
    %26 = sbr.rel (0) target = $region29
  $region28: #{resnet18_forward.28} parent=0 // pred_region
    _
  $region29: #{resnet18_forward.28} parent=0 // pred_fallthru
    _
  // Predicated region
  $region30: #{resnet18_forward.28} parent=0 // pred_check
    _
  $region31: #{resnet18_forward.28} parent=0 // pred_check_branch
    %28 = sbr.rel (0) target = $region33
  $region32: #{resnet18_forward.28} parent=0 // pred_region
    _
  $region33: #{resnet18_forward.28} parent=0 // pred_fallthru
    _
  %v30 = vld [vmem:[%s0] sm:$0xff]
  %v31 = vld [vmem:[%s0 + $0x8] sm:$0xff]
  %v32 = vld [vmem:[%s1] sm:$0xff]
  %v33 = vld [vmem:[%s1 + $0x8] sm:$0xff]
  %v34 = vld [vmem:[%s1 + $0x10] sm:$0xff]
  %v35 = vld [vmem:[%s1 + $0x18] sm:$0xff]
  %v36 = vld [vmem:[%s1 + $0x20] sm:$0xff]
  %v37 = vld [vmem:[%s1 + $0x28] sm:$0xff]
  %v38 = vld [vmem:[%s1 + $0x30] sm:$0xff]
  %v39 = vld [vmem:[%s1 + $0x38] sm:$0xff]
  %v40 = vld [vmem:[%s1 + $0x40] sm:$0xff]
  %v41 = vld [vmem:[%s1 + $0x48] sm:$0xff]
  %v42 = vld [vmem:[%s1 + $0x50] sm:$0xff]
  %v43 = vld [vmem:[%s1 + $0x58] sm:$0xff]
  %v44 = vld [vmem:[%s1 + $0x60] sm:$0xff]
  %v45 = vld [vmem:[%s1 + $0x68] sm:$0xff]
  %v46 = vld [vmem:[%s1 + $0x70] sm:$0xff]
  %v47 = vld [vmem:[%s1 + $0x78] sm:$0xff]
  %v48 = vld [vmem:[%s1 + $0x80] sm:$0xff]
  %v49 = vld [vmem:[%s1 + $0x88] sm:$0xff]
  %v50 = vld [vmem:[%s1 + $0x90] sm:$0xff]
  %v51 = vld [vmem:[%s1 + $0x98] sm:$0xff]
  %v52 = vld [vmem:[%s1 + $0xa0] sm:$0xff]
  %v53 = vld [vmem:[%s1 + $0xa8] sm:$0xff]
  %v54 = vld [vmem:[%s1 + $0xb0] sm:$0xff]
  %v55 = vld [vmem:[%s1 + $0xb8] sm:$0xff]
  %v56 = vld [vmem:[%s1 + $0xc0] sm:$0xff]
  %v57 = vld [vmem:[%s1 + $0xc8] sm:$0xff]
  %v58 = vld [vmem:[%s1 + $0xd0] sm:$0xff]
  %v59 = vld [vmem:[%s1 + $0xd8] sm:$0xff]
  %v60 = vld [vmem:[%s1 + $0xe0] sm:$0xff]
  %v61 = vld [vmem:[%s1 + $0xe8] sm:$0xff]
  %v62 = vld [vmem:[%s1 + $0xf0] sm:$0xff]
  %v63 = vld [vmem:[%s1 + $0xf8] sm:$0xff]
  %v66 = vunpack.c.l.b16 %v30
  %v67 = vunpack.c.h.b16 %v30
  %v68 = vunpack.c.l.b16 %v31
  %v69 = vunpack.c.h.b16 %v31
  %v70 = vpack.c.b16 %v68, %v66
  %v71 = vpack.c.b16 %v69, %v67
  %v106 = vunpack.c.l.b16 %v32
  %v107 = vunpack.c.h.b16 %v32
  %v108 = vunpack.c.l.b16 %v33
  %v109 = vunpack.c.h.b16 %v33
  %v110 = vunpack.c.l.b16 %v34
  %v111 = vunpack.c.h.b16 %v34
  %v112 = vunpack.c.l.b16 %v35
  %v113 = vunpack.c.h.b16 %v35
  %v114 = vunpack.c.l.b16 %v36
  %v115 = vunpack.c.h.b16 %v36
  %v116 = vunpack.c.l.b16 %v37
  %v117 = vunpack.c.h.b16 %v37
  %v118 = vunpack.c.l.b16 %v38
  %v119 = vunpack.c.h.b16 %v38
  %v120 = vunpack.c.l.b16 %v39
  %v121 = vunpack.c.h.b16 %v39
  %v122 = vunpack.c.l.b16 %v40
  %v123 = vunpack.c.h.b16 %v40
  %v124 = vunpack.c.l.b16 %v41
  %v125 = vunpack.c.h.b16 %v41
  %v126 = vunpack.c.l.b16 %v42
  %v127 = vunpack.c.h.b16 %v42
  %v128 = vunpack.c.l.b16 %v43
  %v129 = vunpack.c.h.b16 %v43
  %v130 = vunpack.c.l.b16 %v44
  %v131 = vunpack.c.h.b16 %v44
  %v132 = vunpack.c.l.b16 %v45
  %v133 = vunpack.c.h.b16 %v45
  %v134 = vunpack.c.l.b16 %v46
  %v135 = vunpack.c.h.b16 %v46
  %v136 = vunpack.c.l.b16 %v47
  %v137 = vunpack.c.h.b16 %v47
  %v138 = vunpack.c.l.b16 %v48
  %v139 = vunpack.c.h.b16 %v48
  %v140 = vunpack.c.l.b16 %v49
  %v141 = vunpack.c.h.b16 %v49
  %v142 = vunpack.c.l.b16 %v50
  %v143 = vunpack.c.h.b16 %v50
  %v144 = vunpack.c.l.b16 %v51
  %v145 = vunpack.c.h.b16 %v51
  %v146 = vunpack.c.l.b16 %v52
  %v147 = vunpack.c.h.b16 %v52
  %v148 = vunpack.c.l.b16 %v53
  %v149 = vunpack.c.h.b16 %v53
  %v150 = vunpack.c.l.b16 %v54
  %v151 = vunpack.c.h.b16 %v54
  %v152 = vunpack.c.l.b16 %v55
  %v153 = vunpack.c.h.b16 %v55
  %v154 = vunpack.c.l.b16 %v56
  %v155 = vunpack.c.h.b16 %v56
  %v156 = vunpack.c.l.b16 %v57
  %v157 = vunpack.c.h.b16 %v57
  %v158 = vunpack.c.l.b16 %v58
  %v159 = vunpack.c.h.b16 %v58
  %v160 = vunpack.c.l.b16 %v59
  %v161 = vunpack.c.h.b16 %v59
  %v162 = vunpack.c.l.b16 %v60
  %v163 = vunpack.c.h.b16 %v60
  %v164 = vunpack.c.l.b16 %v61
  %v165 = vunpack.c.h.b16 %v61
  %v166 = vunpack.c.l.b16 %v62
  %v167 = vunpack.c.h.b16 %v62
  %v168 = vunpack.c.l.b16 %v63
  %v169 = vunpack.c.h.b16 %v63
  %v170 = vpack.c.b16 %v108, %v106
  %v171 = vpack.c.b16 %v109, %v107
  %v172 = vpack.c.b16 %v112, %v110
  %v173 = vpack.c.b16 %v113, %v111
  %v174 = vpack.c.b16 %v116, %v114
  %v175 = vpack.c.b16 %v117, %v115
  %v176 = vpack.c.b16 %v120, %v118
  %v177 = vpack.c.b16 %v121, %v119
  %v178 = vpack.c.b16 %v124, %v122
  %v179 = vpack.c.b16 %v125, %v123
  %v180 = vpack.c.b16 %v128, %v126
  %v181 = vpack.c.b16 %v129, %v127
  %v182 = vpack.c.b16 %v132, %v130
  %v183 = vpack.c.b16 %v133, %v131
  %v184 = vpack.c.b16 %v136, %v134
  %v185 = vpack.c.b16 %v137, %v135
  %v186 = vpack.c.b16 %v140, %v138
  %v187 = vpack.c.b16 %v141, %v139
  %v188 = vpack.c.b16 %v144, %v142
  %v189 = vpack.c.b16 %v145, %v143
  %v190 = vpack.c.b16 %v148, %v146
  %v191 = vpack.c.b16 %v149, %v147
  %v192 = vpack.c.b16 %v152, %v150
  %v193 = vpack.c.b16 %v153, %v151
  %v194 = vpack.c.b16 %v156, %v154
  %v195 = vpack.c.b16 %v157, %v155
  %v196 = vpack.c.b16 %v160, %v158
  %v197 = vpack.c.b16 %v161, %v159
  %v198 = vpack.c.b16 %v164, %v162
  %v199 = vpack.c.b16 %v165, %v163
  %v200 = vpack.c.b16 %v168, %v166
  %v201 = vpack.c.b16 %v169, %v167
  %234 = vmatprep.subr.bf16.mxu0 %v171
  %235 = vmatpush1.bf16.msra.mxu0 %v170
  %236 = vmatprep.subr.bf16.mxu0 %v173
  %237 = vmatpush1.bf16.msra.mxu0 %v172
  %238 = vmatprep.subr.bf16.mxu0 %v175
  %239 = vmatpush1.bf16.msra.mxu0 %v174
  %240 = vmatprep.subr.bf16.mxu0 %v177
  %241 = vmatpush1.bf16.msra.mxu0 %v176
  %242 = vmatprep.subr.bf16.mxu0 %v179
  %243 = vmatpush1.bf16.msra.mxu0 %v178
  %244 = vmatprep.subr.bf16.mxu0 %v181
  %245 = vmatpush1.bf16.msra.mxu0 %v180
  %246 = vmatprep.subr.bf16.mxu0 %v183
  %247 = vmatpush1.bf16.msra.mxu0 %v182
  %248 = vmatprep.subr.bf16.mxu0 %v185
  %249 = vmatpush1.bf16.msra.mxu0 %v184
  %250 = vmatprep.subr.bf16.mxu0 %v187
  %251 = vmatpush1.bf16.msra.mxu0 %v186
  %252 = vmatprep.subr.bf16.mxu0 %v189
  %253 = vmatpush1.bf16.msra.mxu0 %v188
  %254 = vmatprep.subr.bf16.mxu0 %v191
  %255 = vmatpush1.bf16.msra.mxu0 %v190
  %256 = vmatprep.subr.bf16.mxu0 %v193
  %257 = vmatpush1.bf16.msra.mxu0 %v192
  %258 = vmatprep.subr.bf16.mxu0 %v195
  %259 = vmatpush1.bf16.msra.mxu0 %v194
  %260 = vmatprep.subr.bf16.mxu0 %v197
  %261 = vmatpush1.bf16.msra.mxu0 %v196
  %262 = vmatprep.subr.bf16.mxu0 %v199
  %263 = vmatpush1.bf16.msra.mxu0 %v198
  %264 = vmatprep.subr.bf16.mxu0 %v201
  %265 = vmatpush1.bf16.msra.mxu0 %v200
  %266 = vmatprep.mubr.bf16.mxu0 %v71
  %267 = vmatmul.mubr.bf16.gmra.mrb[0].mxu0 %v70
  %v268 = vpop.f32.mrb[0].mxu0
  %v269 = vadd.f32 0.0, %v268
  %v270 = vpop.f32.mrb[0].mxu0
  %v271 = vadd.f32 0.0, %v270
  %v272 = vpop.f32.mrb[0].mxu0
  %v273 = vadd.f32 0.0, %v272
  %v274 = vpop.f32.mrb[0].mxu0
  %v275 = vadd.f32 0.0, %v274
  %276 = vdwg.mxu0
  %v277 = vld [vmem:[%s2] sm:$0x3]
  %v278 = vld [vmem:[%s3] sm:$0x3]
  %v279 = vadd.f32 %v269, %v273
  %v280 = vrot.slane %v279, 4
  %v281 = vadd.f32 %v279, %v280
  %v282 = vrot.slane %v281, 2
  %v283 = vadd.f32 %v281, %v282
  %v284 = vrot.slane %v283, 1
  %v285 = vadd.f32 %v283, %v284
  %v286 = vadd.f32 %v271, %v275
  %v287 = vrot.slane %v286, 4
  %v288 = vadd.f32 %v286, %v287
  %v289 = vrot.slane %v288, 2
  %v290 = vadd.f32 %v288, %v289
  %v291 = vrot.slane %v290, 1
  %v292 = vadd.f32 %v290, %v291
  %v293 = vrcp.pop 2.0
  %v294 = vmul.f32 %v285, %v293
  %v295 = vmul.f32 %v292, %v293
  %v296 = vmul.f32 %v269, %v269
  %v297 = vmul.f32 %v271, %v271
  %v298 = vmul.f32 %v273, %v273
  %v299 = vmul.f32 %v275, %v275
  %v300 = vadd.f32 %v296, %v298
  %v301 = vrot.slane %v300, 4
  %v302 = vadd.f32 %v300, %v301
  %v303 = vrot.slane %v302, 2
  %v304 = vadd.f32 %v302, %v303
  %v305 = vrot.slane %v304, 1
  %v306 = vadd.f32 %v304, %v305
  %v307 = vadd.f32 %v297, %v299
  %v308 = vrot.slane %v307, 4
  %v309 = vadd.f32 %v307, %v308
  %v310 = vrot.slane %v309, 2
  %v311 = vadd.f32 %v309, %v310
  %v312 = vrot.slane %v311, 1
  %v313 = vadd.f32 %v311, %v312
  %v314 = vmul.f32 %v306, %v293
  %v315 = vmul.f32 %v313, %v293
  %v316 = vmul.f32 %v294, %v294
  %v317 = vmul.f32 %v295, %v295
  %v318 = vsub.f32 %v314, %v316
  %v319 = vsub.f32 %v315, %v317
  %v320 = vmax.f32 %v318, 0.0
  %v321 = vmax.f32 %v319, 0.0
  %v322 = vsub.f32 %v269, %v294
  %v323 = vsub.f32 %v271, %v295
  %v324 = vsub.f32 %v273, %v294
  %v325 = vsub.f32 %v275, %v295
  %v326 = vadd.f32 %v320, 1e-05
  %v327 = vadd.f32 %v321, 1e-05
  %v328 = vrsqrt.pop %v326
  %v329 = vrsqrt.pop %v327
  %v330 = vmul.f32 %v322, %v328
  %v331 = vmul.f32 %v323, %v329
  %v332 = vmul.f32 %v324, %v328
  %v333 = vmul.f32 %v325, %v329
  %v335 = vlaneseq
  %v336 = vshrl.u32 %v335, 7
  %v337 = vsub.s32 0, %v336
  %v338 = vrot.slane %v277, %v337
  %v339 = vlaneseq
  %v340 = vshrl.u32 %v339, 7
  %v341 = vsub.s32 1, %v340
  %v342 = vrot.slane %v277, %v341
  %v345 = vmul.f32 %v330, %v338
  %v346 = vmul.f32 %v331, %v342
  %v347 = vmul.f32 %v332, %v338
  %v348 = vmul.f32 %v333, %v342
  %v350 = vlaneseq
  %v351 = vshrl.u32 %v350, 7
  %v352 = vsub.s32 0, %v351
  %v353 = vrot.slane %v278, %v352
  %v354 = vlaneseq
  %v355 = vshrl.u32 %v354, 7
  %v356 = vsub.s32 1, %v355
  %v357 = vrot.slane %v278, %v356
  %v360 = vadd.f32 %v345, %v353
  %v361 = vadd.f32 %v346, %v357
  %v362 = vadd.f32 %v347, %v353
  %v363 = vadd.f32 %v348, %v357
  %v364 = vld [vmem:[%s4] sm:$0xf]
  %v365 = vld [vmem:[%s4 + $0x4] sm:$0xf]
  %v366 = vld [vmem:[%s5] sm:$0xff]
  %v367 = vld [vmem:[%s5 + $0x8] sm:$0xff]
  %v368 = vld [vmem:[%s5 + $0x10] sm:$0xff]
  %v369 = vld [vmem:[%s5 + $0x18] sm:$0xff]
  %v370 = vld [vmem:[%s5 + $0x20] sm:$0xff]
  %v371 = vld [vmem:[%s5 + $0x28] sm:$0xff]
  %v372 = vld [vmem:[%s5 + $0x30] sm:$0xff]
  %v373 = vld [vmem:[%s5 + $0x38] sm:$0xff]
  %v374 = vld [vmem:[%s5 + $0x40] sm:$0xff]
  %v375 = vld [vmem:[%s5 + $0x48] sm:$0xff]
  %v376 = vld [vmem:[%s5 + $0x50] sm:$0xff]
  %v377 = vld [vmem:[%s5 + $0x58] sm:$0xff]
  %v378 = vld [vmem:[%s5 + $0x60] sm:$0xff]
  %v379 = vld [vmem:[%s5 + $0x68] sm:$0xff]
  %v380 = vld [vmem:[%s5 + $0x70] sm:$0xff]
  %v381 = vld [vmem:[%s5 + $0x78] sm:$0xff]
  %v384 = vunpack.c.l.b16 %v364
  %v385 = vunpack.c.l.b16 %v365
  %v386 = vpack.c.b16 %v385, %v384
  %v404 = vunpack.c.l.b16 %v366
  %v405 = vunpack.c.h.b16 %v366
  %v406 = vunpack.c.l.b16 %v367
  %v407 = vunpack.c.h.b16 %v367
  %v408 = vunpack.c.l.b16 %v368
  %v409 = vunpack.c.h.b16 %v368
  %v410 = vunpack.c.l.b16 %v369
  %v411 = vunpack.c.h.b16 %v369
  %v412 = vunpack.c.l.b16 %v370
  %v413 = vunpack.c.h.b16 %v370
  %v414 = vunpack.c.l.b16 %v371
  %v415 = vunpack.c.h.b16 %v371
  %v416 = vunpack.c.l.b16 %v372
  %v417 = vunpack.c.h.b16 %v372
  %v418 = vunpack.c.l.b16 %v373
  %v419 = vunpack.c.h.b16 %v373
  %v420 = vunpack.c.l.b16 %v374
  %v421 = vunpack.c.h.b16 %v374
  %v422 = vunpack.c.l.b16 %v375
  %v423 = vunpack.c.h.b16 %v375
  %v424 = vunpack.c.l.b16 %v376
  %v425 = vunpack.c.h.b16 %v376
  %v426 = vunpack.c.l.b16 %v377
  %v427 = vunpack.c.h.b16 %v377
  %v428 = vunpack.c.l.b16 %v378
  %v429 = vunpack.c.h.b16 %v378
  %v430 = vunpack.c.l.b16 %v379
  %v431 = vunpack.c.h.b16 %v379
  %v432 = vunpack.c.l.b16 %v380
  %v433 = vunpack.c.h.b16 %v380
  %v434 = vunpack.c.l.b16 %v381
  %v435 = vunpack.c.h.b16 %v381
  %v436 = vpack.c.b16 %v406, %v404
  %v437 = vpack.c.b16 %v407, %v405
  %v438 = vpack.c.b16 %v410, %v408
  %v439 = vpack.c.b16 %v411, %v409
  %v440 = vpack.c.b16 %v414, %v412
  %v441 = vpack.c.b16 %v415, %v413
  %v442 = vpack.c.b16 %v418, %v416
  %v443 = vpack.c.b16 %v419, %v417
  %v444 = vpack.c.b16 %v422, %v420
  %v445 = vpack.c.b16 %v423, %v421
  %v446 = vpack.c.b16 %v426, %v424
  %v447 = vpack.c.b16 %v427, %v425
  %v448 = vpack.c.b16 %v430, %v428
  %v449 = vpack.c.b16 %v431, %v429
  %v450 = vpack.c.b16 %v434, %v432
  %v451 = vpack.c.b16 %v435, %v433
  %468 = vmatprep.subr.bf16.mxu0 %v437
  %469 = vmatpush1.bf16.msra.mxu0 %v436
  %470 = vmatprep.subr.bf16.mxu0 %v439
  %471 = vmatpush1.bf16.msra.mxu0 %v438
  %472 = vmatprep.subr.bf16.mxu0 %v441
  %473 = vmatpush1.bf16.msra.mxu0 %v440
  %474 = vmatprep.subr.bf16.mxu0 %v443
  %475 = vmatpush1.bf16.msra.mxu0 %v442
  %476 = vmatprep.subr.bf16.mxu0 %v445
  %477 = vmatpush1.bf16.msra.mxu0 %v444
  %478 = vmatprep.subr.bf16.mxu0 %v447
  %479 = vmatpush1.bf16.msra.mxu0 %v446
  %480 = vmatprep.subr.bf16.mxu0 %v449
  %481 = vmatpush1.bf16.msra.mxu0 %v448
  %482 = vmatprep.subr.bf16.mxu0 %v451
  %483 = vmatpush1.bf16.msra.mxu0 %v450
  %484 = vmatprep.subr.bf16.mxu0 0
  %485 = vmatpush1.bf16.msra.mxu0 0
  %486 = vmatprep.subr.bf16.mxu0 0
  %487 = vmatpush1.bf16.msra.mxu0 0
  %488 = vmatprep.subr.bf16.mxu0 0
  %489 = vmatpush1.bf16.msra.mxu0 0
  %490 = vmatprep.subr.bf16.mxu0 0
  %491 = vmatpush1.bf16.msra.mxu0 0
  %492 = vmatprep.subr.bf16.mxu0 0
  %493 = vmatpush1.bf16.msra.mxu0 0
  %494 = vmatprep.subr.bf16.mxu0 0
  %495 = vmatpush1.bf16.msra.mxu0 0
  %496 = vmatprep.subr.bf16.mxu0 0
  %497 = vmatpush1.bf16.msra.mxu0 0
  %498 = vmatprep.subr.bf16.mxu0 0
  %499 = vmatpush1.bf16.msra.mxu0 0
  %500 = vmatprep.mubr.bf16.mxu0 0
  %501 = vmatmul.mubr.bf16.gmra.mrb[0].mxu0 %v386
  %v502 = vpop.f32.mrb[0].mxu0
  %v503 = vadd.f32 0.0, %v502
  %v504 = vpop.f32.mrb[0].mxu0
  %v505 = vadd.f32 0.0, %v504
  %v506 = vpop.f32.mrb[0].mxu0
  %v507 = vadd.f32 0.0, %v506
  %v508 = vpop.f32.mrb[0].mxu0
  %v509 = vadd.f32 0.0, %v508
  %510 = vdwg.mxu0
  %v511 = vld [vmem:[%s6] sm:$0x3]
  %v512 = vld [vmem:[%s7] sm:$0x3]
  %v513 = vadd.f32 %v503, %v507
  %v514 = vrot.slane %v513, 4
  %v515 = vadd.f32 %v513, %v514
  %v516 = vrot.slane %v515, 2
  %v517 = vadd.f32 %v515, %v516
  %v518 = vrot.slane %v517, 1
  %v519 = vadd.f32 %v517, %v518
  %v520 = vadd.f32 %v505, %v509
  %v521 = vrot.slane %v520, 4
  %v522 = vadd.f32 %v520, %v521
  %v523 = vrot.slane %v522, 2
  %v524 = vadd.f32 %v522, %v523
  %v525 = vrot.slane %v524, 1
  %v526 = vadd.f32 %v524, %v525
  %v527 = vmul.f32 %v519, %v293
  %v528 = vmul.f32 %v526, %v293
  %v529 = vmul.f32 %v503, %v503
  %v530 = vmul.f32 %v505, %v505
  %v531 = vmul.f32 %v507, %v507
  %v532 = vmul.f32 %v509, %v509
  %v533 = vadd.f32 %v529, %v531
  %v534 = vrot.slane %v533, 4
  %v535 = vadd.f32 %v533, %v534
  %v536 = vrot.slane %v535, 2
  %v537 = vadd.f32 %v535, %v536
  %v538 = vrot.slane %v537, 1
  %v539 = vadd.f32 %v537, %v538
  %v540 = vadd.f32 %v530, %v532
  %v541 = vrot.slane %v540, 4
  %v542 = vadd.f32 %v540, %v541
  %v543 = vrot.slane %v542, 2
  %v544 = vadd.f32 %v542, %v543
  %v545 = vrot.slane %v544, 1
  %v546 = vadd.f32 %v544, %v545
  %v547 = vmul.f32 %v539, %v293
  %v548 = vmul.f32 %v546, %v293
  %v549 = vmul.f32 %v527, %v527
  %v550 = vmul.f32 %v528, %v528
  %v551 = vsub.f32 %v547, %v549
  %v552 = vsub.f32 %v548, %v550
  %v553 = vmax.f32 %v551, 0.0
  %v554 = vmax.f32 %v552, 0.0
  %v555 = vsub.f32 %v503, %v527
  %v556 = vsub.f32 %v505, %v528
  %v557 = vsub.f32 %v507, %v527
  %v558 = vsub.f32 %v509, %v528
  %v559 = vadd.f32 %v553, 1e-05
  %v560 = vadd.f32 %v554, 1e-05
  %v561 = vrsqrt.pop %v559
  %v562 = vrsqrt.pop %v560
  %v563 = vmul.f32 %v555, %v561
  %v564 = vmul.f32 %v556, %v562
  %v565 = vmul.f32 %v557, %v561
  %v566 = vmul.f32 %v558, %v562
  %v568 = vlaneseq
  %v569 = vshrl.u32 %v568, 7
  %v570 = vsub.s32 0, %v569
  %v571 = vrot.slane %v511, %v570
  %v572 = vlaneseq
  %v573 = vshrl.u32 %v572, 7
  %v574 = vsub.s32 1, %v573
  %v575 = vrot.slane %v511, %v574
  %v578 = vmul.f32 %v563, %v571
  %v579 = vmul.f32 %v564, %v575
  %v580 = vmul.f32 %v565, %v571
  %v581 = vmul.f32 %v566, %v575
  %v583 = vlaneseq
  %v584 = vshrl.u32 %v583, 7
  %v585 = vsub.s32 0, %v584
  %v586 = vrot.slane %v512, %v585
  %v587 = vlaneseq
  %v588 = vshrl.u32 %v587, 7
  %v589 = vsub.s32 1, %v588
  %v590 = vrot.slane %v512, %v589
  %v593 = vadd.f32 %v578, %v586
  %v594 = vadd.f32 %v579, %v590
  %v595 = vadd.f32 %v580, %v586
  %v596 = vadd.f32 %v581, %v590
  %v597 = vadd.f32 %v360, %v593
  %v598 = vadd.f32 %v361, %v594
  %v599 = vadd.f32 %v362, %v595
  %v600 = vadd.f32 %v363, %v596
  %v601 = vmax.f32 %v597, 0.0
  %v602 = vmax.f32 %v598, 0.0
  %v603 = vmax.f32 %v599, 0.0
  %v604 = vmax.f32 %v600, 0.0
  %v605 = vpack.c.bf16 %v603, %v601
  %v606 = vpack.c.bf16 %v604, %v602
  %v609 = vunpack.c.l.b16 %v605
  %v610 = vunpack.c.l.b16 %v606
  %v611 = vunpack.c.h.b16 %v605
  %v612 = vunpack.c.h.b16 %v606
  %v613 = vpack.c.b16 %v610, %v609
  %v614 = vpack.c.b16 %v612, %v611
  %617 = vst [vmem:[%s8] sm:$0xff] %v613
  %618 = vst [vmem:[%s8 + $0x8] sm:$0xff] %v614
  // Predicated region
  $region34: #{resnet18_forward.28} parent=0 // pred_check
    _
  $region35: #{resnet18_forward.28} parent=0 // pred_check_branch
    %620 = sbr.rel (0) target = $region37
  $region36: #{resnet18_forward.28} parent=0 // pred_region
    _
  $region37: #{resnet18_forward.28} parent=0 // pred_fallthru
    _
  // Predicated region
  $region38: #{resnet18_forward.28} parent=0 // pred_check
    _
  $region39: #{resnet18_forward.28} parent=0 // pred_check_branch
    %622 = sbr.rel (0) target = $region41
  $region40: #{resnet18_forward.28} parent=0 // pred_region
    _
  $region41: #{resnet18_forward.28} parent=0 // pred_fallthru
    _

// kernel: resnet18_forward.29
$region0: #{resnet18_forward.29}
  #allocation0 [shape = 'u32[]', space=smem, size = 0x4, offset = 0x4, fixed_abs, tag = 'smem constant byte address 0x4 - core index']
  #allocation1 [shape = 'u32[144,128]{1,0:T(1,128)}', space=vmem, size = 0x12000, scoped, tag = 'internal scratch']
  %s0 = inlined_call_operand.vmem [shape: bf16[16,256], index: 0, kind: input, shape index: {}]
  %s1 = inlined_call_operand.vmem [shape: bf16[256,256], index: 1, kind: input, shape index: {}]
  %s2 = inlined_call_operand.vmem [shape: f32[1,256], index: 2, kind: input, shape index: {}]
  %s3 = inlined_call_operand.vmem [shape: f32[1,256], index: 3, kind: input, shape index: {}]
  %s4 = inlined_call_operand.vmem [shape: bf16[16,256], index: 4, kind: output, shape index: {}]
  %s5 = sld [smem:[#allocation0]]
  $region26: #{resnet18_forward.29} parent=0
    _
  %s7 = ssub.s32 1, %s5
  %s8 = scalar_select 0, %s7, %s5
  // Predicated region
  $region2: #{resnet18_forward.29} parent=0 // pred_check
    _
  $region3: #{resnet18_forward.29} parent=0 // pred_check_branch
    %10 = sbr.rel (0) target = $region5
  $region4: #{resnet18_forward.29} parent=0 // pred_region
    _
  $region5: #{resnet18_forward.29} parent=0 // pred_fallthru
    _
  // Predicated region
  $region6: #{resnet18_forward.29} parent=0 // pred_check
    _
  $region7: #{resnet18_forward.29} parent=0 // pred_check_branch
    %12 = sbr.rel (0) target = $region9
  $region8: #{resnet18_forward.29} parent=0 // pred_region
    _
  $region9: #{resnet18_forward.29} parent=0 // pred_fallthru
    _
  // Predicated region
  $region10: #{resnet18_forward.29} parent=0 // pred_check
    _
  $region11: #{resnet18_forward.29} parent=0 // pred_check_branch
    %14 = sbr.rel (0) target = $region13
  $region12: #{resnet18_forward.29} parent=0 // pred_region
    _
  $region13: #{resnet18_forward.29} parent=0 // pred_fallthru
    _
  // Predicated region
  $region14: #{resnet18_forward.29} parent=0 // pred_check
    _
  $region15: #{resnet18_forward.29} parent=0 // pred_check_branch
    %16 = sbr.rel (0) target = $region17
  $region16: #{resnet18_forward.29} parent=0 // pred_region
    _
  $region17: #{resnet18_forward.29} parent=0 // pred_fallthru
    _
  %v17 = vld [vmem:[%s0] sm:$0xff]
  %v18 = vld [vmem:[%s0 + $0x8] sm:$0xff]
  %v19 = vld [vmem:[%s1] sm:$0xff]
  %v20 = vld [vmem:[%s1 + $0x8] sm:$0xff]
  %v21 = vld [vmem:[%s1 + $0x10] sm:$0xff]
  %v22 = vld [vmem:[%s1 + $0x18] sm:$0xff]
  %v23 = vld [vmem:[%s1 + $0x20] sm:$0xff]
  %v24 = vld [vmem:[%s1 + $0x28] sm:$0xff]
  %v25 = vld [vmem:[%s1 + $0x30] sm:$0xff]
  %v26 = vld [vmem:[%s1 + $0x38] sm:$0xff]
  %v27 = vld [vmem:[%s1 + $0x40] sm:$0xff]
  %v28 = vld [vmem:[%s1 + $0x48] sm:$0xff]
  %v29 = vld [vmem:[%s1 + $0x50] sm:$0xff]
  %v30 = vld [vmem:[%s1 + $0x58] sm:$0xff]
  %v31 = vld [vmem:[%s1 + $0x60] sm:$0xff]
  %v32 = vld [vmem:[%s1 + $0x68] sm:$0xff]
  %v33 = vld [vmem:[%s1 + $0x70] sm:$0xff]
  %v34 = vld [vmem:[%s1 + $0x78] sm:$0xff]
  %v35 = vld [vmem:[%s1 + $0x80] sm:$0xff]
  %v36 = vld [vmem:[%s1 + $0x88] sm:$0xff]
  %v37 = vld [vmem:[%s1 + $0x90] sm:$0xff]
  %v38 = vld [vmem:[%s1 + $0x98] sm:$0xff]
  %v39 = vld [vmem:[%s1 + $0xa0] sm:$0xff]
  %v40 = vld [vmem:[%s1 + $0xa8] sm:$0xff]
  %v41 = vld [vmem:[%s1 + $0xb0] sm:$0xff]
  %v42 = vld [vmem:[%s1 + $0xb8] sm:$0xff]
  %v43 = vld [vmem:[%s1 + $0xc0] sm:$0xff]
  %v44 = vld [vmem:[%s1 + $0xc8] sm:$0xff]
  %v45 = vld [vmem:[%s1 + $0xd0] sm:$0xff]
  %v46 = vld [vmem:[%s1 + $0xd8] sm:$0xff]
  %v47 = vld [vmem:[%s1 + $0xe0] sm:$0xff]
  %v48 = vld [vmem:[%s1 + $0xe8] sm:$0xff]
  %v49 = vld [vmem:[%s1 + $0xf0] sm:$0xff]
  %v50 = vld [vmem:[%s1 + $0xf8] sm:$0xff]
  %v53 = vunpack.c.l.b16 %v17
  %v54 = vunpack.c.h.b16 %v17
  %v55 = vunpack.c.l.b16 %v18
  %v56 = vunpack.c.h.b16 %v18
  %v57 = vpack.c.b16 %v55, %v53
  %v58 = vpack.c.b16 %v56, %v54
  %v93 = vunpack.c.l.b16 %v19
  %v94 = vunpack.c.h.b16 %v19
  %v95 = vunpack.c.l.b16 %v20
  %v96 = vunpack.c.h.b16 %v20
  %v97 = vunpack.c.l.b16 %v21
  %v98 = vunpack.c.h.b16 %v21
  %v99 = vunpack.c.l.b16 %v22
  %v100 = vunpack.c.h.b16 %v22
  %v101 = vunpack.c.l.b16 %v23
  %v102 = vunpack.c.h.b16 %v23
  %v103 = vunpack.c.l.b16 %v24
  %v104 = vunpack.c.h.b16 %v24
  %v105 = vunpack.c.l.b16 %v25
  %v106 = vunpack.c.h.b16 %v25
  %v107 = vunpack.c.l.b16 %v26
  %v108 = vunpack.c.h.b16 %v26
  %v109 = vunpack.c.l.b16 %v27
  %v110 = vunpack.c.h.b16 %v27
  %v111 = vunpack.c.l.b16 %v28
  %v112 = vunpack.c.h.b16 %v28
  %v113 = vunpack.c.l.b16 %v29
  %v114 = vunpack.c.h.b16 %v29
  %v115 = vunpack.c.l.b16 %v30
  %v116 = vunpack.c.h.b16 %v30
  %v117 = vunpack.c.l.b16 %v31
  %v118 = vunpack.c.h.b16 %v31
  %v119 = vunpack.c.l.b16 %v32
  %v120 = vunpack.c.h.b16 %v32
  %v121 = vunpack.c.l.b16 %v33
  %v122 = vunpack.c.h.b16 %v33
  %v123 = vunpack.c.l.b16 %v34
  %v124 = vunpack.c.h.b16 %v34
  %v125 = vunpack.c.l.b16 %v35
  %v126 = vunpack.c.h.b16 %v35
  %v127 = vunpack.c.l.b16 %v36
  %v128 = vunpack.c.h.b16 %v36
  %v129 = vunpack.c.l.b16 %v37
  %v130 = vunpack.c.h.b16 %v37
  %v131 = vunpack.c.l.b16 %v38
  %v132 = vunpack.c.h.b16 %v38
  %v133 = vunpack.c.l.b16 %v39
  %v134 = vunpack.c.h.b16 %v39
  %v135 = vunpack.c.l.b16 %v40
  %v136 = vunpack.c.h.b16 %v40
  %v137 = vunpack.c.l.b16 %v41
  %v138 = vunpack.c.h.b16 %v41
  %v139 = vunpack.c.l.b16 %v42
  %v140 = vunpack.c.h.b16 %v42
  %v141 = vunpack.c.l.b16 %v43
  %v142 = vunpack.c.h.b16 %v43
  %v143 = vunpack.c.l.b16 %v44
  %v144 = vunpack.c.h.b16 %v44
  %v145 = vunpack.c.l.b16 %v45
  %v146 = vunpack.c.h.b16 %v45
  %v147 = vunpack.c.l.b16 %v46
  %v148 = vunpack.c.h.b16 %v46
  %v149 = vunpack.c.l.b16 %v47
  %v150 = vunpack.c.h.b16 %v47
  %v151 = vunpack.c.l.b16 %v48
  %v152 = vunpack.c.h.b16 %v48
  %v153 = vunpack.c.l.b16 %v49
  %v154 = vunpack.c.h.b16 %v49
  %v155 = vunpack.c.l.b16 %v50
  %v156 = vunpack.c.h.b16 %v50
  %v157 = vpack.c.b16 %v95, %v93
  %v158 = vpack.c.b16 %v96, %v94
  %v159 = vpack.c.b16 %v99, %v97
  %v160 = vpack.c.b16 %v100, %v98
  %v161 = vpack.c.b16 %v103, %v101
  %v162 = vpack.c.b16 %v104, %v102
  %v163 = vpack.c.b16 %v107, %v105
  %v164 = vpack.c.b16 %v108, %v106
  %v165 = vpack.c.b16 %v111, %v109
  %v166 = vpack.c.b16 %v112, %v110
  %v167 = vpack.c.b16 %v115, %v113
  %v168 = vpack.c.b16 %v116, %v114
  %v169 = vpack.c.b16 %v119, %v117
  %v170 = vpack.c.b16 %v120, %v118
  %v171 = vpack.c.b16 %v123, %v121
  %v172 = vpack.c.b16 %v124, %v122
  %v173 = vpack.c.b16 %v127, %v125
  %v174 = vpack.c.b16 %v128, %v126
  %v175 = vpack.c.b16 %v131, %v129
  %v176 = vpack.c.b16 %v132, %v130
  %v177 = vpack.c.b16 %v135, %v133
  %v178 = vpack.c.b16 %v136, %v134
  %v179 = vpack.c.b16 %v139, %v137
  %v180 = vpack.c.b16 %v140, %v138
  %v181 = vpack.c.b16 %v143, %v141
  %v182 = vpack.c.b16 %v144, %v142
  %v183 = vpack.c.b16 %v147, %v145
  %v184 = vpack.c.b16 %v148, %v146
  %v185 = vpack.c.b16 %v151, %v149
  %v186 = vpack.c.b16 %v152, %v150
  %v187 = vpack.c.b16 %v155, %v153
  %v188 = vpack.c.b16 %v156, %v154
  %221 = vmatprep.subr.bf16.mxu0 %v158
  %222 = vmatpush1.bf16.msra.mxu0 %v157
  %223 = vmatprep.subr.bf16.mxu0 %v160
  %224 = vmatpush1.bf16.msra.mxu0 %v159
  %225 = vmatprep.subr.bf16.mxu0 %v162
  %226 = vmatpush1.bf16.msra.mxu0 %v161
  %227 = vmatprep.subr.bf16.mxu0 %v164
  %228 = vmatpush1.bf16.msra.mxu0 %v163
  %229 = vmatprep.subr.bf16.mxu0 %v166
  %230 = vmatpush1.bf16.msra.mxu0 %v165
  %231 = vmatprep.subr.bf16.mxu0 %v168
  %232 = vmatpush1.bf16.msra.mxu0 %v167
  %233 = vmatprep.subr.bf16.mxu0 %v170
  %234 = vmatpush1.bf16.msra.mxu0 %v169
  %235 = vmatprep.subr.bf16.mxu0 %v172
  %236 = vmatpush1.bf16.msra.mxu0 %v171
  %237 = vmatprep.subr.bf16.mxu0 %v174
  %238 = vmatpush1.bf16.msra.mxu0 %v173
  %239 = vmatprep.subr.bf16.mxu0 %v176
  %240 = vmatpush1.bf16.msra.mxu0 %v175
  %241 = vmatprep.subr.bf16.mxu0 %v178
  %242 = vmatpush1.bf16.msra.mxu0 %v177
  %243 = vmatprep.subr.bf16.mxu0 %v180
  %244 = vmatpush1.bf16.msra.mxu0 %v179
  %245 = vmatprep.subr.bf16.mxu0 %v182
  %246 = vmatpush1.bf16.msra.mxu0 %v181
  %247 = vmatprep.subr.bf16.mxu0 %v184
  %248 = vmatpush1.bf16.msra.mxu0 %v183
  %249 = vmatprep.subr.bf16.mxu0 %v186
  %250 = vmatpush1.bf16.msra.mxu0 %v185
  %251 = vmatprep.subr.bf16.mxu0 %v188
  %252 = vmatpush1.bf16.msra.mxu0 %v187
  %253 = vmatprep.mubr.bf16.mxu0 %v58
  %254 = vmatmul.mubr.bf16.gmra.mrb[0].mxu0 %v57
  %v255 = vpop.f32.mrb[0].mxu0
  %v256 = vadd.f32 0.0, %v255
  %v257 = vpop.f32.mrb[0].mxu0
  %v258 = vadd.f32 0.0, %v257
  %v259 = vpop.f32.mrb[0].mxu0
  %v260 = vadd.f32 0.0, %v259
  %v261 = vpop.f32.mrb[0].mxu0
  %v262 = vadd.f32 0.0, %v261
  %263 = vdwg.mxu0
  %v264 = vld [vmem:[%s2] sm:$0x3]
  %v265 = vld [vmem:[%s3] sm:$0x3]
  %v266 = vadd.f32 %v256, %v260
  %v267 = vrot.slane %v266, 4
  %v268 = vadd.f32 %v266, %v267
  %v269 = vrot.slane %v268, 2
  %v270 = vadd.f32 %v268, %v269
  %v271 = vrot.slane %v270, 1
  %v272 = vadd.f32 %v270, %v271
  %v273 = vadd.f32 %v258, %v262
  %v274 = vrot.slane %v273, 4
  %v275 = vadd.f32 %v273, %v274
  %v276 = vrot.slane %v275, 2
  %v277 = vadd.f32 %v275, %v276
  %v278 = vrot.slane %v277, 1
  %v279 = vadd.f32 %v277, %v278
  %v280 = vrcp.pop 2.0
  %v281 = vmul.f32 %v272, %v280
  %v282 = vmul.f32 %v279, %v280
  %v283 = vmul.f32 %v256, %v256
  %v284 = vmul.f32 %v258, %v258
  %v285 = vmul.f32 %v260, %v260
  %v286 = vmul.f32 %v262, %v262
  %v287 = vadd.f32 %v283, %v285
  %v288 = vrot.slane %v287, 4
  %v289 = vadd.f32 %v287, %v288
  %v290 = vrot.slane %v289, 2
  %v291 = vadd.f32 %v289, %v290
  %v292 = vrot.slane %v291, 1
  %v293 = vadd.f32 %v291, %v292
  %v294 = vadd.f32 %v284, %v286
  %v295 = vrot.slane %v294, 4
  %v296 = vadd.f32 %v294, %v295
  %v297 = vrot.slane %v296, 2
  %v298 = vadd.f32 %v296, %v297
  %v299 = vrot.slane %v298, 1
  %v300 = vadd.f32 %v298, %v299
  %v301 = vmul.f32 %v293, %v280
  %v302 = vmul.f32 %v300, %v280
  %v303 = vmul.f32 %v281, %v281
  %v304 = vmul.f32 %v282, %v282
  %v305 = vsub.f32 %v301, %v303
  %v306 = vsub.f32 %v302, %v304
  %v307 = vmax.f32 %v305, 0.0
  %v308 = vmax.f32 %v306, 0.0
  %v309 = vsub.f32 %v256, %v281
  %v310 = vsub.f32 %v258, %v282
  %v311 = vsub.f32 %v260, %v281
  %v312 = vsub.f32 %v262, %v282
  %v313 = vadd.f32 %v307, 1e-05
  %v314 = vadd.f32 %v308, 1e-05
  %v315 = vrsqrt.pop %v313
  %v316 = vrsqrt.pop %v314
  %v317 = vmul.f32 %v309, %v315
  %v318 = vmul.f32 %v310, %v316
  %v319 = vmul.f32 %v311, %v315
  %v320 = vmul.f32 %v312, %v316
  %v322 = vlaneseq
  %v323 = vshrl.u32 %v322, 7
  %v324 = vsub.s32 0, %v323
  %v325 = vrot.slane %v264, %v324
  %v326 = vlaneseq
  %v327 = vshrl.u32 %v326, 7
  %v328 = vsub.s32 1, %v327
  %v329 = vrot.slane %v264, %v328
  %v332 = vmul.f32 %v317, %v325
  %v333 = vmul.f32 %v318, %v329
  %v334 = vmul.f32 %v319, %v325
  %v335 = vmul.f32 %v320, %v329
  %v337 = vlaneseq
  %v338 = vshrl.u32 %v337, 7
  %v339 = vsub.s32 0, %v338
  %v340 = vrot.slane %v265, %v339
  %v341 = vlaneseq
  %v342 = vshrl.u32 %v341, 7
  %v343 = vsub.s32 1, %v342
  %v344 = vrot.slane %v265, %v343
  %v347 = vadd.f32 %v332, %v340
  %v348 = vadd.f32 %v333, %v344
  %v349 = vadd.f32 %v334, %v340
  %v350 = vadd.f32 %v335, %v344
  %v351 = vmax.f32 %v347, 0.0
  %v352 = vmax.f32 %v348, 0.0
  %v353 = vmax.f32 %v349, 0.0
  %v354 = vmax.f32 %v350, 0.0
  %v355 = vpack.c.bf16 %v353, %v351
  %v356 = vpack.c.bf16 %v354, %v352
  %v359 = vunpack.c.l.b16 %v355
  %v360 = vunpack.c.l.b16 %v356
  %v361 = vunpack.c.h.b16 %v355
  %v362 = vunpack.c.h.b16 %v356
  %v363 = vpack.c.b16 %v360, %v359
  %v364 = vpack.c.b16 %v362, %v361
  %367 = vst [vmem:[%s4] sm:$0xff] %v363
  %368 = vst [vmem:[%s4 + $0x8] sm:$0xff] %v364
  // Predicated region
  $region18: #{resnet18_forward.29} parent=0 // pred_check
    _
  $region19: #{resnet18_forward.29} parent=0 // pred_check_branch
    %370 = sbr.rel (0) target = $region21
  $region20: #{resnet18_forward.29} parent=0 // pred_region
    _
  $region21: #{resnet18_forward.29} parent=0 // pred_fallthru
    _
  // Predicated region
  $region22: #{resnet18_forward.29} parent=0 // pred_check
    _
  $region23: #{resnet18_forward.29} parent=0 // pred_check_branch
    %372 = sbr.rel (0) target = $region25
  $region24: #{resnet18_forward.29} parent=0 // pred_region
    _
  $region25: #{resnet18_forward.29} parent=0 // pred_fallthru
    _

// kernel: resnet18_forward.30
$region0: #{resnet18_forward.30}
  #allocation0 [shape = 'u32[]', space=smem, size = 0x4, offset = 0x4, fixed_abs, tag = 'smem constant byte address 0x4 - core index']
  #allocation1 [shape = 'u32[144,128]{1,0:T(1,128)}', space=vmem, size = 0x12000, scoped, tag = 'internal scratch']
  %s0 = inlined_call_operand.vmem [shape: bf16[16,256], index: 0, kind: input, shape index: {}]
  %s1 = inlined_call_operand.vmem [shape: bf16[256,256], index: 1, kind: input, shape index: {}]
  %s2 = inlined_call_operand.vmem [shape: f32[1,256], index: 2, kind: input, shape index: {}]
  %s3 = inlined_call_operand.vmem [shape: f32[1,256], index: 3, kind: input, shape index: {}]
  %s4 = inlined_call_operand.vmem [shape: bf16[16,256], index: 4, kind: input, shape index: {}]
  %s5 = inlined_call_operand.vmem [shape: bf16[16,256], index: 5, kind: output, shape index: {}]
  %s6 = sld [smem:[#allocation0]]
  $region30: #{resnet18_forward.30} parent=0
    _
  %s8 = ssub.s32 1, %s6
  %s9 = scalar_select 0, %s8, %s6
  // Predicated region
  $region2: #{resnet18_forward.30} parent=0 // pred_check
    _
  $region3: #{resnet18_forward.30} parent=0 // pred_check_branch
    %11 = sbr.rel (0) target = $region5
  $region4: #{resnet18_forward.30} parent=0 // pred_region
    _
  $region5: #{resnet18_forward.30} parent=0 // pred_fallthru
    _
  // Predicated region
  $region6: #{resnet18_forward.30} parent=0 // pred_check
    _
  $region7: #{resnet18_forward.30} parent=0 // pred_check_branch
    %13 = sbr.rel (0) target = $region9
  $region8: #{resnet18_forward.30} parent=0 // pred_region
    _
  $region9: #{resnet18_forward.30} parent=0 // pred_fallthru
    _
  // Predicated region
  $region10: #{resnet18_forward.30} parent=0 // pred_check
    _
  $region11: #{resnet18_forward.30} parent=0 // pred_check_branch
    %15 = sbr.rel (0) target = $region13
  $region12: #{resnet18_forward.30} parent=0 // pred_region
    _
  $region13: #{resnet18_forward.30} parent=0 // pred_fallthru
    _
  // Predicated region
  $region14: #{resnet18_forward.30} parent=0 // pred_check
    _
  $region15: #{resnet18_forward.30} parent=0 // pred_check_branch
    %17 = sbr.rel (0) target = $region17
  $region16: #{resnet18_forward.30} parent=0 // pred_region
    _
  $region17: #{resnet18_forward.30} parent=0 // pred_fallthru
    _
  // Predicated region
  $region18: #{resnet18_forward.30} parent=0 // pred_check
    _
  $region19: #{resnet18_forward.30} parent=0 // pred_check_branch
    %19 = sbr.rel (0) target = $region21
  $region20: #{resnet18_forward.30} parent=0 // pred_region
    _
  $region21: #{resnet18_forward.30} parent=0 // pred_fallthru
    _
  %v20 = vld [vmem:[%s0] sm:$0xff]
  %v21 = vld [vmem:[%s0 + $0x8] sm:$0xff]
  %v22 = vld [vmem:[%s1] sm:$0xff]
  %v23 = vld [vmem:[%s1 + $0x8] sm:$0xff]
  %v24 = vld [vmem:[%s1 + $0x10] sm:$0xff]
  %v25 = vld [vmem:[%s1 + $0x18] sm:$0xff]
  %v26 = vld [vmem:[%s1 + $0x20] sm:$0xff]
  %v27 = vld [vmem:[%s1 + $0x28] sm:$0xff]
  %v28 = vld [vmem:[%s1 + $0x30] sm:$0xff]
  %v29 = vld [vmem:[%s1 + $0x38] sm:$0xff]
  %v30 = vld [vmem:[%s1 + $0x40] sm:$0xff]
  %v31 = vld [vmem:[%s1 + $0x48] sm:$0xff]
  %v32 = vld [vmem:[%s1 + $0x50] sm:$0xff]
  %v33 = vld [vmem:[%s1 + $0x58] sm:$0xff]
  %v34 = vld [vmem:[%s1 + $0x60] sm:$0xff]
  %v35 = vld [vmem:[%s1 + $0x68] sm:$0xff]
  %v36 = vld [vmem:[%s1 + $0x70] sm:$0xff]
  %v37 = vld [vmem:[%s1 + $0x78] sm:$0xff]
  %v38 = vld [vmem:[%s1 + $0x80] sm:$0xff]
  %v39 = vld [vmem:[%s1 + $0x88] sm:$0xff]
  %v40 = vld [vmem:[%s1 + $0x90] sm:$0xff]
  %v41 = vld [vmem:[%s1 + $0x98] sm:$0xff]
  %v42 = vld [vmem:[%s1 + $0xa0] sm:$0xff]
  %v43 = vld [vmem:[%s1 + $0xa8] sm:$0xff]
  %v44 = vld [vmem:[%s1 + $0xb0] sm:$0xff]
  %v45 = vld [vmem:[%s1 + $0xb8] sm:$0xff]
  %v46 = vld [vmem:[%s1 + $0xc0] sm:$0xff]
  %v47 = vld [vmem:[%s1 + $0xc8] sm:$0xff]
  %v48 = vld [vmem:[%s1 + $0xd0] sm:$0xff]
  %v49 = vld [vmem:[%s1 + $0xd8] sm:$0xff]
  %v50 = vld [vmem:[%s1 + $0xe0] sm:$0xff]
  %v51 = vld [vmem:[%s1 + $0xe8] sm:$0xff]
  %v52 = vld [vmem:[%s1 + $0xf0] sm:$0xff]
  %v53 = vld [vmem:[%s1 + $0xf8] sm:$0xff]
  %v56 = vunpack.c.l.b16 %v20
  %v57 = vunpack.c.h.b16 %v20
  %v58 = vunpack.c.l.b16 %v21
  %v59 = vunpack.c.h.b16 %v21
  %v60 = vpack.c.b16 %v58, %v56
  %v61 = vpack.c.b16 %v59, %v57
  %v96 = vunpack.c.l.b16 %v22
  %v97 = vunpack.c.h.b16 %v22
  %v98 = vunpack.c.l.b16 %v23
  %v99 = vunpack.c.h.b16 %v23
  %v100 = vunpack.c.l.b16 %v24
  %v101 = vunpack.c.h.b16 %v24
  %v102 = vunpack.c.l.b16 %v25
  %v103 = vunpack.c.h.b16 %v25
  %v104 = vunpack.c.l.b16 %v26
  %v105 = vunpack.c.h.b16 %v26
  %v106 = vunpack.c.l.b16 %v27
  %v107 = vunpack.c.h.b16 %v27
  %v108 = vunpack.c.l.b16 %v28
  %v109 = vunpack.c.h.b16 %v28
  %v110 = vunpack.c.l.b16 %v29
  %v111 = vunpack.c.h.b16 %v29
  %v112 = vunpack.c.l.b16 %v30
  %v113 = vunpack.c.h.b16 %v30
  %v114 = vunpack.c.l.b16 %v31
  %v115 = vunpack.c.h.b16 %v31
  %v116 = vunpack.c.l.b16 %v32
  %v117 = vunpack.c.h.b16 %v32
  %v118 = vunpack.c.l.b16 %v33
  %v119 = vunpack.c.h.b16 %v33
  %v120 = vunpack.c.l.b16 %v34
  %v121 = vunpack.c.h.b16 %v34
  %v122 = vunpack.c.l.b16 %v35
  %v123 = vunpack.c.h.b16 %v35
  %v124 = vunpack.c.l.b16 %v36
  %v125 = vunpack.c.h.b16 %v36
  %v126 = vunpack.c.l.b16 %v37
  %v127 = vunpack.c.h.b16 %v37
  %v128 = vunpack.c.l.b16 %v38
  %v129 = vunpack.c.h.b16 %v38
  %v130 = vunpack.c.l.b16 %v39
  %v131 = vunpack.c.h.b16 %v39
  %v132 = vunpack.c.l.b16 %v40
  %v133 = vunpack.c.h.b16 %v40
  %v134 = vunpack.c.l.b16 %v41
  %v135 = vunpack.c.h.b16 %v41
  %v136 = vunpack.c.l.b16 %v42
  %v137 = vunpack.c.h.b16 %v42
  %v138 = vunpack.c.l.b16 %v43
  %v139 = vunpack.c.h.b16 %v43
  %v140 = vunpack.c.l.b16 %v44
  %v141 = vunpack.c.h.b16 %v44
  %v142 = vunpack.c.l.b16 %v45
  %v143 = vunpack.c.h.b16 %v45
  %v144 = vunpack.c.l.b16 %v46
  %v145 = vunpack.c.h.b16 %v46
  %v146 = vunpack.c.l.b16 %v47
  %v147 = vunpack.c.h.b16 %v47
  %v148 = vunpack.c.l.b16 %v48
  %v149 = vunpack.c.h.b16 %v48
  %v150 = vunpack.c.l.b16 %v49
  %v151 = vunpack.c.h.b16 %v49
  %v152 = vunpack.c.l.b16 %v50
  %v153 = vunpack.c.h.b16 %v50
  %v154 = vunpack.c.l.b16 %v51
  %v155 = vunpack.c.h.b16 %v51
  %v156 = vunpack.c.l.b16 %v52
  %v157 = vunpack.c.h.b16 %v52
  %v158 = vunpack.c.l.b16 %v53
  %v159 = vunpack.c.h.b16 %v53
  %v160 = vpack.c.b16 %v98, %v96
  %v161 = vpack.c.b16 %v99, %v97
  %v162 = vpack.c.b16 %v102, %v100
  %v163 = vpack.c.b16 %v103, %v101
  %v164 = vpack.c.b16 %v106, %v104
  %v165 = vpack.c.b16 %v107, %v105
  %v166 = vpack.c.b16 %v110, %v108
  %v167 = vpack.c.b16 %v111, %v109
  %v168 = vpack.c.b16 %v114, %v112
  %v169 = vpack.c.b16 %v115, %v113
  %v170 = vpack.c.b16 %v118, %v116
  %v171 = vpack.c.b16 %v119, %v117
  %v172 = vpack.c.b16 %v122, %v120
  %v173 = vpack.c.b16 %v123, %v121
  %v174 = vpack.c.b16 %v126, %v124
  %v175 = vpack.c.b16 %v127, %v125
  %v176 = vpack.c.b16 %v130, %v128
  %v177 = vpack.c.b16 %v131, %v129
  %v178 = vpack.c.b16 %v134, %v132
  %v179 = vpack.c.b16 %v135, %v133
  %v180 = vpack.c.b16 %v138, %v136
  %v181 = vpack.c.b16 %v139, %v137
  %v182 = vpack.c.b16 %v142, %v140
  %v183 = vpack.c.b16 %v143, %v141
  %v184 = vpack.c.b16 %v146, %v144
  %v185 = vpack.c.b16 %v147, %v145
  %v186 = vpack.c.b16 %v150, %v148
  %v187 = vpack.c.b16 %v151, %v149
  %v188 = vpack.c.b16 %v154, %v152
  %v189 = vpack.c.b16 %v155, %v153
  %v190 = vpack.c.b16 %v158, %v156
  %v191 = vpack.c.b16 %v159, %v157
  %224 = vmatprep.subr.bf16.mxu0 %v161
  %225 = vmatpush1.bf16.msra.mxu0 %v160
  %226 = vmatprep.subr.bf16.mxu0 %v163
  %227 = vmatpush1.bf16.msra.mxu0 %v162
  %228 = vmatprep.subr.bf16.mxu0 %v165
  %229 = vmatpush1.bf16.msra.mxu0 %v164
  %230 = vmatprep.subr.bf16.mxu0 %v167
  %231 = vmatpush1.bf16.msra.mxu0 %v166
  %232 = vmatprep.subr.bf16.mxu0 %v169
  %233 = vmatpush1.bf16.msra.mxu0 %v168
  %234 = vmatprep.subr.bf16.mxu0 %v171
  %235 = vmatpush1.bf16.msra.mxu0 %v170
  %236 = vmatprep.subr.bf16.mxu0 %v173
  %237 = vmatpush1.bf16.msra.mxu0 %v172
  %238 = vmatprep.subr.bf16.mxu0 %v175
  %239 = vmatpush1.bf16.msra.mxu0 %v174
  %240 = vmatprep.subr.bf16.mxu0 %v177
  %241 = vmatpush1.bf16.msra.mxu0 %v176
  %242 = vmatprep.subr.bf16.mxu0 %v179
  %243 = vmatpush1.bf16.msra.mxu0 %v178
  %244 = vmatprep.subr.bf16.mxu0 %v181
  %245 = vmatpush1.bf16.msra.mxu0 %v180
  %246 = vmatprep.subr.bf16.mxu0 %v183
  %247 = vmatpush1.bf16.msra.mxu0 %v182
  %248 = vmatprep.subr.bf16.mxu0 %v185
  %249 = vmatpush1.bf16.msra.mxu0 %v184
  %250 = vmatprep.subr.bf16.mxu0 %v187
  %251 = vmatpush1.bf16.msra.mxu0 %v186
  %252 = vmatprep.subr.bf16.mxu0 %v189
  %253 = vmatpush1.bf16.msra.mxu0 %v188
  %254 = vmatprep.subr.bf16.mxu0 %v191
  %255 = vmatpush1.bf16.msra.mxu0 %v190
  %256 = vmatprep.mubr.bf16.mxu0 %v61
  %257 = vmatmul.mubr.bf16.gmra.mrb[0].mxu0 %v60
  %v258 = vpop.f32.mrb[0].mxu0
  %v259 = vadd.f32 0.0, %v258
  %v260 = vpop.f32.mrb[0].mxu0
  %v261 = vadd.f32 0.0, %v260
  %v262 = vpop.f32.mrb[0].mxu0
  %v263 = vadd.f32 0.0, %v262
  %v264 = vpop.f32.mrb[0].mxu0
  %v265 = vadd.f32 0.0, %v264
  %266 = vdwg.mxu0
  %v267 = vld [vmem:[%s2] sm:$0x3]
  %v268 = vld [vmem:[%s3] sm:$0x3]
  %v269 = vadd.f32 %v259, %v263
  %v270 = vrot.slane %v269, 4
  %v271 = vadd.f32 %v269, %v270
  %v272 = vrot.slane %v271, 2
  %v273 = vadd.f32 %v271, %v272
  %v274 = vrot.slane %v273, 1
  %v275 = vadd.f32 %v273, %v274
  %v276 = vadd.f32 %v261, %v265
  %v277 = vrot.slane %v276, 4
  %v278 = vadd.f32 %v276, %v277
  %v279 = vrot.slane %v278, 2
  %v280 = vadd.f32 %v278, %v279
  %v281 = vrot.slane %v280, 1
  %v282 = vadd.f32 %v280, %v281
  %v283 = vrcp.pop 2.0
  %v284 = vmul.f32 %v275, %v283
  %v285 = vmul.f32 %v282, %v283
  %v286 = vmul.f32 %v259, %v259
  %v287 = vmul.f32 %v261, %v261
  %v288 = vmul.f32 %v263, %v263
  %v289 = vmul.f32 %v265, %v265
  %v290 = vadd.f32 %v286, %v288
  %v291 = vrot.slane %v290, 4
  %v292 = vadd.f32 %v290, %v291
  %v293 = vrot.slane %v292, 2
  %v294 = vadd.f32 %v292, %v293
  %v295 = vrot.slane %v294, 1
  %v296 = vadd.f32 %v294, %v295
  %v297 = vadd.f32 %v287, %v289
  %v298 = vrot.slane %v297, 4
  %v299 = vadd.f32 %v297, %v298
  %v300 = vrot.slane %v299, 2
  %v301 = vadd.f32 %v299, %v300
  %v302 = vrot.slane %v301, 1
  %v303 = vadd.f32 %v301, %v302
  %v304 = vmul.f32 %v296, %v283
  %v305 = vmul.f32 %v303, %v283
  %v306 = vmul.f32 %v284, %v284
  %v307 = vmul.f32 %v285, %v285
  %v308 = vsub.f32 %v304, %v306
  %v309 = vsub.f32 %v305, %v307
  %v310 = vmax.f32 %v308, 0.0
  %v311 = vmax.f32 %v309, 0.0
  %v312 = vsub.f32 %v259, %v284
  %v313 = vsub.f32 %v261, %v285
  %v314 = vsub.f32 %v263, %v284
  %v315 = vsub.f32 %v265, %v285
  %v316 = vadd.f32 %v310, 1e-05
  %v317 = vadd.f32 %v311, 1e-05
  %v318 = vrsqrt.pop %v316
  %v319 = vrsqrt.pop %v317
  %v320 = vmul.f32 %v312, %v318
  %v321 = vmul.f32 %v313, %v319
  %v322 = vmul.f32 %v314, %v318
  %v323 = vmul.f32 %v315, %v319
  %v325 = vlaneseq
  %v326 = vshrl.u32 %v325, 7
  %v327 = vsub.s32 0, %v326
  %v328 = vrot.slane %v267, %v327
  %v329 = vlaneseq
  %v330 = vshrl.u32 %v329, 7
  %v331 = vsub.s32 1, %v330
  %v332 = vrot.slane %v267, %v331
  %v335 = vmul.f32 %v320, %v328
  %v336 = vmul.f32 %v321, %v332
  %v337 = vmul.f32 %v322, %v328
  %v338 = vmul.f32 %v323, %v332
  %v340 = vlaneseq
  %v341 = vshrl.u32 %v340, 7
  %v342 = vsub.s32 0, %v341
  %v343 = vrot.slane %v268, %v342
  %v344 = vlaneseq
  %v345 = vshrl.u32 %v344, 7
  %v346 = vsub.s32 1, %v345
  %v347 = vrot.slane %v268, %v346
  %v350 = vadd.f32 %v335, %v343
  %v351 = vadd.f32 %v336, %v347
  %v352 = vadd.f32 %v337, %v343
  %v353 = vadd.f32 %v338, %v347
  %v354 = vld [vmem:[%s4] sm:$0xff]
  %v355 = vld [vmem:[%s4 + $0x8] sm:$0xff]
  %v356 = vunpack.c.l.bf16 %v354
  %v357 = vunpack.c.h.bf16 %v354
  %v358 = vunpack.c.l.bf16 %v355
  %v359 = vunpack.c.h.bf16 %v355
  %v360 = vadd.f32 %v350, %v356
  %v361 = vadd.f32 %v351, %v357
  %v362 = vadd.f32 %v352, %v358
  %v363 = vadd.f32 %v353, %v359
  %v364 = vmax.f32 %v360, 0.0
  %v365 = vmax.f32 %v361, 0.0
  %v366 = vmax.f32 %v362, 0.0
  %v367 = vmax.f32 %v363, 0.0
  %v368 = vpack.c.bf16 %v366, %v364
  %v369 = vpack.c.bf16 %v367, %v365
  %v372 = vunpack.c.l.b16 %v368
  %v373 = vunpack.c.l.b16 %v369
  %v374 = vunpack.c.h.b16 %v368
  %v375 = vunpack.c.h.b16 %v369
  %v376 = vpack.c.b16 %v373, %v372
  %v377 = vpack.c.b16 %v375, %v374
  %380 = vst [vmem:[%s5] sm:$0xff] %v376
  %381 = vst [vmem:[%s5 + $0x8] sm:$0xff] %v377
  // Predicated region
  $region22: #{resnet18_forward.30} parent=0 // pred_check
    _
  $region23: #{resnet18_forward.30} parent=0 // pred_check_branch
    %383 = sbr.rel (0) target = $region25
  $region24: #{resnet18_forward.30} parent=0 // pred_region
    _
  $region25: #{resnet18_forward.30} parent=0 // pred_fallthru
    _
  // Predicated region
  $region26: #{resnet18_forward.30} parent=0 // pred_check
    _
  $region27: #{resnet18_forward.30} parent=0 // pred_check_branch
    %385 = sbr.rel (0) target = $region29
  $region28: #{resnet18_forward.30} parent=0 // pred_region
    _
  $region29: #{resnet18_forward.30} parent=0 // pred_fallthru
    _

// kernel: resnet18_forward.27
$region0: #{resnet18_forward.27}
  #allocation0 [shape = 'u32[]', space=smem, size = 0x4, offset = 0x4, fixed_abs, tag = 'smem constant byte address 0x4 - core index']
  #allocation1 [shape = 'u32[144,128]{1,0:T(1,128)}', space=vmem, size = 0x12000, scoped, tag = 'internal scratch']
  %s0 = inlined_call_operand.vmem [shape: bf16[16,1152], index: 0, kind: input, shape index: {}]
  %s1 = inlined_call_operand.vmem [shape: bf16[1152,256], index: 1, kind: input, shape index: {}]
  %s2 = inlined_call_operand.vmem [shape: f32[1,256], index: 2, kind: input, shape index: {}]
  %s3 = inlined_call_operand.vmem [shape: f32[1,256], index: 3, kind: input, shape index: {}]
  %s4 = inlined_call_operand.vmem [shape: bf16[16,256], index: 4, kind: output, shape index: {}]
  %s5 = sld [smem:[#allocation0]]
  $region26: #{resnet18_forward.27} parent=0
    _
  %s7 = ssub.s32 1, %s5
  %s8 = scalar_select 0, %s7, %s5
  // Predicated region
  $region2: #{resnet18_forward.27} parent=0 // pred_check
    _
  $region3: #{resnet18_forward.27} parent=0 // pred_check_branch
    %10 = sbr.rel (0) target = $region5
  $region4: #{resnet18_forward.27} parent=0 // pred_region
    _
  $region5: #{resnet18_forward.27} parent=0 // pred_fallthru
    _
  // Predicated region
  $region6: #{resnet18_forward.27} parent=0 // pred_check
    _
  $region7: #{resnet18_forward.27} parent=0 // pred_check_branch
    %12 = sbr.rel (0) target = $region9
  $region8: #{resnet18_forward.27} parent=0 // pred_region
    _
  $region9: #{resnet18_forward.27} parent=0 // pred_fallthru
    _
  // Predicated region
  $region10: #{resnet18_forward.27} parent=0 // pred_check
    _
  $region11: #{resnet18_forward.27} parent=0 // pred_check_branch
    %14 = sbr.rel (0) target = $region13
  $region12: #{resnet18_forward.27} parent=0 // pred_region
    _
  $region13: #{resnet18_forward.27} parent=0 // pred_fallthru
    _
  // Predicated region
  $region14: #{resnet18_forward.27} parent=0 // pred_check
    _
  $region15: #{resnet18_forward.27} parent=0 // pred_check_branch
    %16 = sbr.rel (0) target = $region17
  $region16: #{resnet18_forward.27} parent=0 // pred_region
    _
  $region17: #{resnet18_forward.27} parent=0 // pred_fallthru
    _
  %v18 = vld [vmem:[%s0] sm:$0xff]
  %v19 = vld [vmem:[%s0 + $0x8] sm:$0xff]
  %v20 = vld [vmem:[%s0 + $0x10] sm:$0xff]
  %v21 = vld [vmem:[%s0 + $0x18] sm:$0xff]
  %v22 = vld [vmem:[%s0 + $0x20] sm:$0xf]
  %v23 = vld [vmem:[%s0 + $0x24] sm:$0xff]
  %v24 = vld [vmem:[%s0 + $0x2c] sm:$0xff]
  %v25 = vld [vmem:[%s0 + $0x34] sm:$0xff]
  %v26 = vld [vmem:[%s0 + $0x3c] sm:$0xff]
  %v27 = vld [vmem:[%s0 + $0x44] sm:$0xf]
  %v28 = vld [vmem:[%s1] sm:$0xff]
  %v29 = vld [vmem:[%s1 + $0x8] sm:$0xff]
  %v30 = vld [vmem:[%s1 + $0x10] sm:$0xff]
  %v31 = vld [vmem:[%s1 + $0x18] sm:$0xff]
  %v32 = vld [vmem:[%s1 + $0x20] sm:$0xff]
  %v33 = vld [vmem:[%s1 + $0x28] sm:$0xff]
  %v34 = vld [vmem:[%s1 + $0x30] sm:$0xff]
  %v35 = vld [vmem:[%s1 + $0x38] sm:$0xff]
  %v36 = vld [vmem:[%s1 + $0x40] sm:$0xff]
  %v37 = vld [vmem:[%s1 + $0x48] sm:$0xff]
  %v38 = vld [vmem:[%s1 + $0x50] sm:$0xff]
  %v39 = vld [vmem:[%s1 + $0x58] sm:$0xff]
  %v40 = vld [vmem:[%s1 + $0x60] sm:$0xff]
  %v41 = vld [vmem:[%s1 + $0x68] sm:$0xff]
  %v42 = vld [vmem:[%s1 + $0x70] sm:$0xff]
  %v43 = vld [vmem:[%s1 + $0x78] sm:$0xff]
  %v44 = vld [vmem:[%s1 + $0x80] sm:$0xff]
  %v45 = vld [vmem:[%s1 + $0x88] sm:$0xff]
  %v46 = vld [vmem:[%s1 + $0x90] sm:$0xff]
  %v47 = vld [vmem:[%s1 + $0x98] sm:$0xff]
  %v48 = vld [vmem:[%s1 + $0xa0] sm:$0xff]
  %v49 = vld [vmem:[%s1 + $0xa8] sm:$0xff]
  %v50 = vld [vmem:[%s1 + $0xb0] sm:$0xff]
  %v51 = vld [vmem:[%s1 + $0xb8] sm:$0xff]
  %v52 = vld [vmem:[%s1 + $0xc0] sm:$0xff]
  %v53 = vld [vmem:[%s1 + $0xc8] sm:$0xff]
  %v54 = vld [vmem:[%s1 + $0xd0] sm:$0xff]
  %v55 = vld [vmem:[%s1 + $0xd8] sm:$0xff]
  %v56 = vld [vmem:[%s1 + $0xe0] sm:$0xff]
  %v57 = vld [vmem:[%s1 + $0xe8] sm:$0xff]
  %v58 = vld [vmem:[%s1 + $0xf0] sm:$0xff]
  %v59 = vld [vmem:[%s1 + $0xf8] sm:$0xff]
  %v60 = vld [vmem:[%s1 + $0x100] sm:$0xff]
  %v61 = vld [vmem:[%s1 + $0x108] sm:$0xff]
  %v62 = vld [vmem:[%s1 + $0x110] sm:$0xff]
  %v63 = vld [vmem:[%s1 + $0x118] sm:$0xff]
  %v64 = vld [vmem:[%s1 + $0x120] sm:$0xff]
  %v65 = vld [vmem:[%s1 + $0x128] sm:$0xff]
  %v66 = vld [vmem:[%s1 + $0x130] sm:$0xff]
  %v67 = vld [vmem:[%s1 + $0x138] sm:$0xff]
  %v68 = vld [vmem:[%s1 + $0x140] sm:$0xff]
  %v69 = vld [vmem:[%s1 + $0x148] sm:$0xff]
  %v70 = vld [vmem:[%s1 + $0x150] sm:$0xff]
  %v71 = vld [vmem:[%s1 + $0x158] sm:$0xff]
  %v72 = vld [vmem:[%s1 + $0x160] sm:$0xff]
  %v73 = vld [vmem:[%s1 + $0x168] sm:$0xff]
  %v74 = vld [vmem:[%s1 + $0x170] sm:$0xff]
  %v75 = vld [vmem:[%s1 + $0x178] sm:$0xff]
  %v76 = vld [vmem:[%s1 + $0x180] sm:$0xff]
  %v77 = vld [vmem:[%s1 + $0x188] sm:$0xff]
  %v78 = vld [vmem:[%s1 + $0x190] sm:$0xff]
  %v79 = vld [vmem:[%s1 + $0x198] sm:$0xff]
  %v80 = vld [vmem:[%s1 + $0x1a0] sm:$0xff]
  %v81 = vld [vmem:[%s1 + $0x1a8] sm:$0xff]
  %v82 = vld [vmem:[%s1 + $0x1b0] sm:$0xff]
  %v83 = vld [vmem:[%s1 + $0x1b8] sm:$0xff]
  %v84 = vld [vmem:[%s1 + $0x1c0] sm:$0xff]
  %v85 = vld [vmem:[%s1 + $0x1c8] sm:$0xff]
  %v86 = vld [vmem:[%s1 + $0x1d0] sm:$0xff]
  %v87 = vld [vmem:[%s1 + $0x1d8] sm:$0xff]
  %v88 = vld [vmem:[%s1 + $0x1e0] sm:$0xff]
  %v89 = vld [vmem:[%s1 + $0x1e8] sm:$0xff]
  %v90 = vld [vmem:[%s1 + $0x1f0] sm:$0xff]
  %v91 = vld [vmem:[%s1 + $0x1f8] sm:$0xff]
  %v92 = vld [vmem:[%s1 + $0x200] sm:$0xff]
  %v93 = vld [vmem:[%s1 + $0x208] sm:$0xff]
  %v94 = vld [vmem:[%s1 + $0x210] sm:$0xff]
  %v95 = vld [vmem:[%s1 + $0x218] sm:$0xff]
  %v96 = vld [vmem:[%s1 + $0x220] sm:$0xff]
  %v97 = vld [vmem:[%s1 + $0x228] sm:$0xff]
  %v98 = vld [vmem:[%s1 + $0x230] sm:$0xff]
  %v99 = vld [vmem:[%s1 + $0x238] sm:$0xff]
  %v100 = vld [vmem:[%s1 + $0x240] sm:$0xff]
  %v101 = vld [vmem:[%s1 + $0x248] sm:$0xff]
  %v102 = vld [vmem:[%s1 + $0x250] sm:$0xff]
  %v103 = vld [vmem:[%s1 + $0x258] sm:$0xff]
  %v104 = vld [vmem:[%s1 + $0x260] sm:$0xff]
  %v105 = vld [vmem:[%s1 + $0x268] sm:$0xff]
  %v106 = vld [vmem:[%s1 + $0x270] sm:$0xff]
  %v107 = vld [vmem:[%s1 + $0x278] sm:$0xff]
  %v108 = vld [vmem:[%s1 + $0x280] sm:$0xff]
  %v109 = vld [vmem:[%s1 + $0x288] sm:$0xff]
  %v110 = vld [vmem:[%s1 + $0x290] sm:$0xff]
  %v111 = vld [vmem:[%s1 + $0x298] sm:$0xff]
  %v112 = vld [vmem:[%s1 + $0x2a0] sm:$0xff]
  %v113 = vld [vmem:[%s1 + $0x2a8] sm:$0xff]
  %v114 = vld [vmem:[%s1 + $0x2b0] sm:$0xff]
  %v115 = vld [vmem:[%s1 + $0x2b8] sm:$0xff]
  %v116 = vld [vmem:[%s1 + $0x2c0] sm:$0xff]
  %v117 = vld [vmem:[%s1 + $0x2c8] sm:$0xff]
  %v118 = vld [vmem:[%s1 + $0x2d0] sm:$0xff]
  %v119 = vld [vmem:[%s1 + $0x2d8] sm:$0xff]
  %v120 = vld [vmem:[%s1 + $0x2e0] sm:$0xff]
  %v121 = vld [vmem:[%s1 + $0x2e8] sm:$0xff]
  %v122 = vld [vmem:[%s1 + $0x2f0] sm:$0xff]
  %v123 = vld [vmem:[%s1 + $0x2f8] sm:$0xff]
  %v124 = vld [vmem:[%s1 + $0x300] sm:$0xff]
  %v125 = vld [vmem:[%s1 + $0x308] sm:$0xff]
  %v126 = vld [vmem:[%s1 + $0x310] sm:$0xff]
  %v127 = vld [vmem:[%s1 + $0x318] sm:$0xff]
  %v128 = vld [vmem:[%s1 + $0x320] sm:$0xff]
  %v129 = vld [vmem:[%s1 + $0x328] sm:$0xff]
  %v130 = vld [vmem:[%s1 + $0x330] sm:$0xff]
  %v131 = vld [vmem:[%s1 + $0x338] sm:$0xff]
  %v132 = vld [vmem:[%s1 + $0x340] sm:$0xff]
  %v133 = vld [vmem:[%s1 + $0x348] sm:$0xff]
  %v134 = vld [vmem:[%s1 + $0x350] sm:$0xff]
  %v135 = vld [vmem:[%s1 + $0x358] sm:$0xff]
  %v136 = vld [vmem:[%s1 + $0x360] sm:$0xff]
  %v137 = vld [vmem:[%s1 + $0x368] sm:$0xff]
  %v138 = vld [vmem:[%s1 + $0x370] sm:$0xff]
  %v139 = vld [vmem:[%s1 + $0x378] sm:$0xff]
  %v140 = vld [vmem:[%s1 + $0x380] sm:$0xff]
  %v141 = vld [vmem:[%s1 + $0x388] sm:$0xff]
  %v142 = vld [vmem:[%s1 + $0x390] sm:$0xff]
  %v143 = vld [vmem:[%s1 + $0x398] sm:$0xff]
  %v144 = vld [vmem:[%s1 + $0x3a0] sm:$0xff]
  %v145 = vld [vmem:[%s1 + $0x3a8] sm:$0xff]
  %v146 = vld [vmem:[%s1 + $0x3b0] sm:$0xff]
  %v147 = vld [vmem:[%s1 + $0x3b8] sm:$0xff]
  %v148 = vld [vmem:[%s1 + $0x3c0] sm:$0xff]
  %v149 = vld [vmem:[%s1 + $0x3c8] sm:$0xff]
  %v150 = vld [vmem:[%s1 + $0x3d0] sm:$0xff]
  %v151 = vld [vmem:[%s1 + $0x3d8] sm:$0xff]
  %v152 = vld [vmem:[%s1 + $0x3e0] sm:$0xff]
  %v153 = vld [vmem:[%s1 + $0x3e8] sm:$0xff]
  %v154 = vld [vmem:[%s1 + $0x3f0] sm:$0xff]
  %v155 = vld [vmem:[%s1 + $0x3f8] sm:$0xff]
  %v156 = vld [vmem:[%s1 + $0x400] sm:$0xff]
  %v157 = vld [vmem:[%s1 + $0x408] sm:$0xff]
  %v158 = vld [vmem:[%s1 + $0x410] sm:$0xff]
  %v159 = vld [vmem:[%s1 + $0x418] sm:$0xff]
  %v160 = vld [vmem:[%s1 + $0x420] sm:$0xff]
  %v161 = vld [vmem:[%s1 + $0x428] sm:$0xff]
  %v162 = vld [vmem:[%s1 + $0x430] sm:$0xff]
  %v163 = vld [vmem:[%s1 + $0x438] sm:$0xff]
  %v164 = vld [vmem:[%s1 + $0x440] sm:$0xff]
  %v165 = vld [vmem:[%s1 + $0x448] sm:$0xff]
  %v166 = vld [vmem:[%s1 + $0x450] sm:$0xff]
  %v167 = vld [vmem:[%s1 + $0x458] sm:$0xff]
  %v168 = vld [vmem:[%s1 + $0x460] sm:$0xff]
  %v169 = vld [vmem:[%s1 + $0x468] sm:$0xff]
  %v170 = vld [vmem:[%s1 + $0x470] sm:$0xff]
  %v171 = vld [vmem:[%s1 + $0x478] sm:$0xff]
  %v182 = vunpack.c.l.b16 %v18
  %v183 = vunpack.c.h.b16 %v18
  %v184 = vunpack.c.l.b16 %v19
  %v185 = vunpack.c.h.b16 %v19
  %v186 = vunpack.c.l.b16 %v20
  %v187 = vunpack.c.h.b16 %v20
  %v188 = vunpack.c.l.b16 %v21
  %v189 = vunpack.c.h.b16 %v21
  %v190 = vunpack.c.l.b16 %v22
  %v191 = vunpack.c.l.b16 %v23
  %v192 = vunpack.c.h.b16 %v23
  %v193 = vunpack.c.l.b16 %v24
  %v194 = vunpack.c.h.b16 %v24
  %v195 = vunpack.c.l.b16 %v25
  %v196 = vunpack.c.h.b16 %v25
  %v197 = vunpack.c.l.b16 %v26
  %v198 = vunpack.c.h.b16 %v26
  %v199 = vunpack.c.l.b16 %v27
  %v200 = vpack.c.b16 %v191, %v182
  %v201 = vpack.c.b16 %v192, %v183
  %v202 = vpack.c.b16 %v193, %v184
  %v203 = vpack.c.b16 %v194, %v185
  %v204 = vpack.c.b16 %v195, %v186
  %v205 = vpack.c.b16 %v196, %v187
  %v206 = vpack.c.b16 %v197, %v188
  %v207 = vpack.c.b16 %v198, %v189
  %v208 = vpack.c.b16 %v199, %v190
  %v362 = vunpack.c.l.b16 %v28
  %v363 = vunpack.c.h.b16 %v28
  %v364 = vunpack.c.l.b16 %v29
  %v365 = vunpack.c.h.b16 %v29
  %v366 = vunpack.c.l.b16 %v30
  %v367 = vunpack.c.h.b16 %v30
  %v368 = vunpack.c.l.b16 %v31
  %v369 = vunpack.c.h.b16 %v31
  %v370 = vunpack.c.l.b16 %v32
  %v371 = vunpack.c.h.b16 %v32
  %v372 = vunpack.c.l.b16 %v33
  %v373 = vunpack.c.h.b16 %v33
  %v374 = vunpack.c.l.b16 %v34
  %v375 = vunpack.c.h.b16 %v34
  %v376 = vunpack.c.l.b16 %v35
  %v377 = vunpack.c.h.b16 %v35
  %v378 = vunpack.c.l.b16 %v36
  %v379 = vunpack.c.h.b16 %v36
  %v380 = vunpack.c.l.b16 %v37
  %v381 = vunpack.c.h.b16 %v37
  %v382 = vunpack.c.l.b16 %v38
  %v383 = vunpack.c.h.b16 %v38
  %v384 = vunpack.c.l.b16 %v39
  %v385 = vunpack.c.h.b16 %v39
  %v386 = vunpack.c.l.b16 %v40
  %v387 = vunpack.c.h.b16 %v40
  %v388 = vunpack.c.l.b16 %v41
  %v389 = vunpack.c.h.b16 %v41
  %v390 = vunpack.c.l.b16 %v42
  %v391 = vunpack.c.h.b16 %v42
  %v392 = vunpack.c.l.b16 %v43
  %v393 = vunpack.c.h.b16 %v43
  %v394 = vunpack.c.l.b16 %v44
  %v395 = vunpack.c.h.b16 %v44
  %v396 = vunpack.c.l.b16 %v45
  %v397 = vunpack.c.h.b16 %v45
  %v398 = vunpack.c.l.b16 %v46
  %v399 = vunpack.c.h.b16 %v46
  %v400 = vunpack.c.l.b16 %v47
  %v401 = vunpack.c.h.b16 %v47
  %v402 = vunpack.c.l.b16 %v48
  %v403 = vunpack.c.h.b16 %v48
  %v404 = vunpack.c.l.b16 %v49
  %v405 = vunpack.c.h.b16 %v49
  %v406 = vunpack.c.l.b16 %v50
  %v407 = vunpack.c.h.b16 %v50
  %v408 = vunpack.c.l.b16 %v51
  %v409 = vunpack.c.h.b16 %v51
  %v410 = vunpack.c.l.b16 %v52
  %v411 = vunpack.c.h.b16 %v52
  %v412 = vunpack.c.l.b16 %v53
  %v413 = vunpack.c.h.b16 %v53
  %v414 = vunpack.c.l.b16 %v54
  %v415 = vunpack.c.h.b16 %v54
  %v416 = vunpack.c.l.b16 %v55
  %v417 = vunpack.c.h.b16 %v55
  %v418 = vunpack.c.l.b16 %v56
  %v419 = vunpack.c.h.b16 %v56
  %v420 = vunpack.c.l.b16 %v57
  %v421 = vunpack.c.h.b16 %v57
  %v422 = vunpack.c.l.b16 %v58
  %v423 = vunpack.c.h.b16 %v58
  %v424 = vunpack.c.l.b16 %v59
  %v425 = vunpack.c.h.b16 %v59
  %v426 = vunpack.c.l.b16 %v60
  %v427 = vunpack.c.h.b16 %v60
  %v428 = vunpack.c.l.b16 %v61
  %v429 = vunpack.c.h.b16 %v61
  %v430 = vunpack.c.l.b16 %v62
  %v431 = vunpack.c.h.b16 %v62
  %v432 = vunpack.c.l.b16 %v63
  %v433 = vunpack.c.h.b16 %v63
  %v434 = vunpack.c.l.b16 %v64
  %v435 = vunpack.c.h.b16 %v64
  %v436 = vunpack.c.l.b16 %v65
  %v437 = vunpack.c.h.b16 %v65
  %v438 = vunpack.c.l.b16 %v66
  %v439 = vunpack.c.h.b16 %v66
  %v440 = vunpack.c.l.b16 %v67
  %v441 = vunpack.c.h.b16 %v67
  %v442 = vunpack.c.l.b16 %v68
  %v443 = vunpack.c.h.b16 %v68
  %v444 = vunpack.c.l.b16 %v69
  %v445 = vunpack.c.h.b16 %v69
  %v446 = vunpack.c.l.b16 %v70
  %v447 = vunpack.c.h.b16 %v70
  %v448 = vunpack.c.l.b16 %v71
  %v449 = vunpack.c.h.b16 %v71
  %v450 = vunpack.c.l.b16 %v72
  %v451 = vunpack.c.h.b16 %v72
  %v452 = vunpack.c.l.b16 %v73
  %v453 = vunpack.c.h.b16 %v73
  %v454 = vunpack.c.l.b16 %v74
  %v455 = vunpack.c.h.b16 %v74
  %v456 = vunpack.c.l.b16 %v75
  %v457 = vunpack.c.h.b16 %v75
  %v458 = vunpack.c.l.b16 %v76
  %v459 = vunpack.c.h.b16 %v76
  %v460 = vunpack.c.l.b16 %v77
  %v461 = vunpack.c.h.b16 %v77
  %v462 = vunpack.c.l.b16 %v78
  %v463 = vunpack.c.h.b16 %v78
  %v464 = vunpack.c.l.b16 %v79
  %v465 = vunpack.c.h.b16 %v79
  %v466 = vunpack.c.l.b16 %v80
  %v467 = vunpack.c.h.b16 %v80
  %v468 = vunpack.c.l.b16 %v81
  %v469 = vunpack.c.h.b16 %v81
  %v470 = vunpack.c.l.b16 %v82
  %v471 = vunpack.c.h.b16 %v82
  %v472 = vunpack.c.l.b16 %v83
  %v473 = vunpack.c.h.b16 %v83
  %v474 = vunpack.c.l.b16 %v84
  %v475 = vunpack.c.h.b16 %v84
  %v476 = vunpack.c.l.b16 %v85
  %v477 = vunpack.c.h.b16 %v85
  %v478 = vunpack.c.l.b16 %v86
  %v479 = vunpack.c.h.b16 %v86
  %v480 = vunpack.c.l.b16 %v87
  %v481 = vunpack.c.h.b16 %v87
  %v482 = vunpack.c.l.b16 %v88
  %v483 = vunpack.c.h.b16 %v88
  %v484 = vunpack.c.l.b16 %v89
  %v485 = vunpack.c.h.b16 %v89
  %v486 = vunpack.c.l.b16 %v90
  %v487 = vunpack.c.h.b16 %v90
  %v488 = vunpack.c.l.b16 %v91
  %v489 = vunpack.c.h.b16 %v91
  %v490 = vunpack.c.l.b16 %v92
  %v491 = vunpack.c.h.b16 %v92
  %v492 = vunpack.c.l.b16 %v93
  %v493 = vunpack.c.h.b16 %v93
  %v494 = vunpack.c.l.b16 %v94
  %v495 = vunpack.c.h.b16 %v94
  %v496 = vunpack.c.l.b16 %v95
  %v497 = vunpack.c.h.b16 %v95
  %v498 = vunpack.c.l.b16 %v96
  %v499 = vunpack.c.h.b16 %v96
  %v500 = vunpack.c.l.b16 %v97
  %v501 = vunpack.c.h.b16 %v97
  %v502 = vunpack.c.l.b16 %v98
  %v503 = vunpack.c.h.b16 %v98
  %v504 = vunpack.c.l.b16 %v99
  %v505 = vunpack.c.h.b16 %v99
  %v506 = vunpack.c.l.b16 %v100
  %v507 = vunpack.c.h.b16 %v100
  %v508 = vunpack.c.l.b16 %v101
  %v509 = vunpack.c.h.b16 %v101
  %v510 = vunpack.c.l.b16 %v102
  %v511 = vunpack.c.h.b16 %v102
  %v512 = vunpack.c.l.b16 %v103
  %v513 = vunpack.c.h.b16 %v103
  %v514 = vunpack.c.l.b16 %v104
  %v515 = vunpack.c.h.b16 %v104
  %v516 = vunpack.c.l.b16 %v105
  %v517 = vunpack.c.h.b16 %v105
  %v518 = vunpack.c.l.b16 %v106
  %v519 = vunpack.c.h.b16 %v106
  %v520 = vunpack.c.l.b16 %v107
  %v521 = vunpack.c.h.b16 %v107
  %v522 = vunpack.c.l.b16 %v108
  %v523 = vunpack.c.h.b16 %v108
  %v524 = vunpack.c.l.b16 %v109
  %v525 = vunpack.c.h.b16 %v109
  %v526 = vunpack.c.l.b16 %v110
  %v527 = vunpack.c.h.b16 %v110
  %v528 = vunpack.c.l.b16 %v111
  %v529 = vunpack.c.h.b16 %v111
  %v530 = vunpack.c.l.b16 %v112
  %v531 = vunpack.c.h.b16 %v112
  %v532 = vunpack.c.l.b16 %v113
  %v533 = vunpack.c.h.b16 %v113
  %v534 = vunpack.c.l.b16 %v114
  %v535 = vunpack.c.h.b16 %v114
  %v536 = vunpack.c.l.b16 %v115
  %v537 = vunpack.c.h.b16 %v115
  %v538 = vunpack.c.l.b16 %v116
  %v539 = vunpack.c.h.b16 %v116
  %v540 = vunpack.c.l.b16 %v117
  %v541 = vunpack.c.h.b16 %v117
  %v542 = vunpack.c.l.b16 %v118
  %v543 = vunpack.c.h.b16 %v118
  %v544 = vunpack.c.l.b16 %v119
  %v545 = vunpack.c.h.b16 %v119
  %v546 = vunpack.c.l.b16 %v120
  %v547 = vunpack.c.h.b16 %v120
  %v548 = vunpack.c.l.b16 %v121
  %v549 = vunpack.c.h.b16 %v121
  %v550 = vunpack.c.l.b16 %v122
  %v551 = vunpack.c.h.b16 %v122
  %v552 = vunpack.c.l.b16 %v123
  %v553 = vunpack.c.h.b16 %v123
  %v554 = vunpack.c.l.b16 %v124
  %v555 = vunpack.c.h.b16 %v124
  %v556 = vunpack.c.l.b16 %v125
  %v557 = vunpack.c.h.b16 %v125
  %v558 = vunpack.c.l.b16 %v126
  %v559 = vunpack.c.h.b16 %v126
  %v560 = vunpack.c.l.b16 %v127
  %v561 = vunpack.c.h.b16 %v127
  %v562 = vunpack.c.l.b16 %v128
  %v563 = vunpack.c.h.b16 %v128
  %v564 = vunpack.c.l.b16 %v129
  %v565 = vunpack.c.h.b16 %v129
  %v566 = vunpack.c.l.b16 %v130
  %v567 = vunpack.c.h.b16 %v130
  %v568 = vunpack.c.l.b16 %v131
  %v569 = vunpack.c.h.b16 %v131
  %v570 = vunpack.c.l.b16 %v132
  %v571 = vunpack.c.h.b16 %v132
  %v572 = vunpack.c.l.b16 %v133
  %v573 = vunpack.c.h.b16 %v133
  %v574 = vunpack.c.l.b16 %v134
  %v575 = vunpack.c.h.b16 %v134
  %v576 = vunpack.c.l.b16 %v135
  %v577 = vunpack.c.h.b16 %v135
  %v578 = vunpack.c.l.b16 %v136
  %v579 = vunpack.c.h.b16 %v136
  %v580 = vunpack.c.l.b16 %v137
  %v581 = vunpack.c.h.b16 %v137
  %v582 = vunpack.c.l.b16 %v138
  %v583 = vunpack.c.h.b16 %v138
  %v584 = vunpack.c.l.b16 %v139
  %v585 = vunpack.c.h.b16 %v139
  %v586 = vunpack.c.l.b16 %v140
  %v587 = vunpack.c.h.b16 %v140
  %v588 = vunpack.c.l.b16 %v141
  %v589 = vunpack.c.h.b16 %v141
  %v590 = vunpack.c.l.b16 %v142
  %v591 = vunpack.c.h.b16 %v142
  %v592 = vunpack.c.l.b16 %v143
  %v593 = vunpack.c.h.b16 %v143
  %v594 = vunpack.c.l.b16 %v144
  %v595 = vunpack.c.h.b16 %v144
  %v596 = vunpack.c.l.b16 %v145
  %v597 = vunpack.c.h.b16 %v145
  %v598 = vunpack.c.l.b16 %v146
  %v599 = vunpack.c.h.b16 %v146
  %v600 = vunpack.c.l.b16 %v147
  %v601 = vunpack.c.h.b16 %v147
  %v602 = vunpack.c.l.b16 %v148
  %v603 = vunpack.c.h.b16 %v148
  %v604 = vunpack.c.l.b16 %v149
  %v605 = vunpack.c.h.b16 %v149
  %v606 = vunpack.c.l.b16 %v150
  %v607 = vunpack.c.h.b16 %v150
  %v608 = vunpack.c.l.b16 %v151
  %v609 = vunpack.c.h.b16 %v151
  %v610 = vunpack.c.l.b16 %v152
  %v611 = vunpack.c.h.b16 %v152
  %v612 = vunpack.c.l.b16 %v153
  %v613 = vunpack.c.h.b16 %v153
  %v614 = vunpack.c.l.b16 %v154
  %v615 = vunpack.c.h.b16 %v154
  %v616 = vunpack.c.l.b16 %v155
  %v617 = vunpack.c.h.b16 %v155
  %v618 = vunpack.c.l.b16 %v156
  %v619 = vunpack.c.h.b16 %v156
  %v620 = vunpack.c.l.b16 %v157
  %v621 = vunpack.c.h.b16 %v157
  %v622 = vunpack.c.l.b16 %v158
  %v623 = vunpack.c.h.b16 %v158
  %v624 = vunpack.c.l.b16 %v159
  %v625 = vunpack.c.h.b16 %v159
  %v626 = vunpack.c.l.b16 %v160
  %v627 = vunpack.c.h.b16 %v160
  %v628 = vunpack.c.l.b16 %v161
  %v629 = vunpack.c.h.b16 %v161
  %v630 = vunpack.c.l.b16 %v162
  %v631 = vunpack.c.h.b16 %v162
  %v632 = vunpack.c.l.b16 %v163
  %v633 = vunpack.c.h.b16 %v163
  %v634 = vunpack.c.l.b16 %v164
  %v635 = vunpack.c.h.b16 %v164
  %v636 = vunpack.c.l.b16 %v165
  %v637 = vunpack.c.h.b16 %v165
  %v638 = vunpack.c.l.b16 %v166
  %v639 = vunpack.c.h.b16 %v166
  %v640 = vunpack.c.l.b16 %v167
  %v641 = vunpack.c.h.b16 %v167
  %v642 = vunpack.c.l.b16 %v168
  %v643 = vunpack.c.h.b16 %v168
  %v644 = vunpack.c.l.b16 %v169
  %v645 = vunpack.c.h.b16 %v169
  %v646 = vunpack.c.l.b16 %v170
  %v647 = vunpack.c.h.b16 %v170
  %v648 = vunpack.c.l.b16 %v171
  %v649 = vunpack.c.h.b16 %v171
  %v650 = vpack.c.b16 %v364, %v362
  %v651 = vpack.c.b16 %v365, %v363
  %v652 = vpack.c.b16 %v368, %v366
  %v653 = vpack.c.b16 %v369, %v367
  %v654 = vpack.c.b16 %v372, %v370
  %v655 = vpack.c.b16 %v373, %v371
  %v656 = vpack.c.b16 %v376, %v374
  %v657 = vpack.c.b16 %v377, %v375
  %v658 = vpack.c.b16 %v380, %v378
  %v659 = vpack.c.b16 %v381, %v379
  %v660 = vpack.c.b16 %v384, %v382
  %v661 = vpack.c.b16 %v385, %v383
  %v662 = vpack.c.b16 %v388, %v386
  %v663 = vpack.c.b16 %v389, %v387
  %v664 = vpack.c.b16 %v392, %v390
  %v665 = vpack.c.b16 %v393, %v391
  %v666 = vpack.c.b16 %v396, %v394
  %v667 = vpack.c.b16 %v397, %v395
  %v668 = vpack.c.b16 %v400, %v398
  %v669 = vpack.c.b16 %v401, %v399
  %v670 = vpack.c.b16 %v404, %v402
  %v671 = vpack.c.b16 %v405, %v403
  %v672 = vpack.c.b16 %v408, %v406
  %v673 = vpack.c.b16 %v409, %v407
  %v674 = vpack.c.b16 %v412, %v410
  %v675 = vpack.c.b16 %v413, %v411
  %v676 = vpack.c.b16 %v416, %v414
  %v677 = vpack.c.b16 %v417, %v415
  %v678 = vpack.c.b16 %v420, %v418
  %v679 = vpack.c.b16 %v421, %v419
  %v680 = vpack.c.b16 %v424, %v422
  %v681 = vpack.c.b16 %v425, %v423
  %v682 = vpack.c.b16 %v428, %v426
  %v683 = vpack.c.b16 %v429, %v427
  %v684 = vpack.c.b16 %v432, %v430
  %v685 = vpack.c.b16 %v433, %v431
  %v686 = vpack.c.b16 %v436, %v434
  %v687 = vpack.c.b16 %v437, %v435
  %v688 = vpack.c.b16 %v440, %v438
  %v689 = vpack.c.b16 %v441, %v439
  %v690 = vpack.c.b16 %v444, %v442
  %v691 = vpack.c.b16 %v445, %v443
  %v692 = vpack.c.b16 %v448, %v446
  %v693 = vpack.c.b16 %v449, %v447
  %v694 = vpack.c.b16 %v452, %v450
  %v695 = vpack.c.b16 %v453, %v451
  %v696 = vpack.c.b16 %v456, %v454
  %v697 = vpack.c.b16 %v457, %v455
  %v698 = vpack.c.b16 %v460, %v458
  %v699 = vpack.c.b16 %v461, %v459
  %v700 = vpack.c.b16 %v464, %v462
  %v701 = vpack.c.b16 %v465, %v463
  %v702 = vpack.c.b16 %v468, %v466
  %v703 = vpack.c.b16 %v469, %v467
  %v704 = vpack.c.b16 %v472, %v470
  %v705 = vpack.c.b16 %v473, %v471
  %v706 = vpack.c.b16 %v476, %v474
  %v707 = vpack.c.b16 %v477, %v475
  %v708 = vpack.c.b16 %v480, %v478
  %v709 = vpack.c.b16 %v481, %v479
  %v710 = vpack.c.b16 %v484, %v482
  %v711 = vpack.c.b16 %v485, %v483
  %v712 = vpack.c.b16 %v488, %v486
  %v713 = vpack.c.b16 %v489, %v487
  %v714 = vpack.c.b16 %v492, %v490
  %v715 = vpack.c.b16 %v493, %v491
  %v716 = vpack.c.b16 %v496, %v494
  %v717 = vpack.c.b16 %v497, %v495
  %v718 = vpack.c.b16 %v500, %v498
  %v719 = vpack.c.b16 %v501, %v499
  %v720 = vpack.c.b16 %v504, %v502
  %v721 = vpack.c.b16 %v505, %v503
  %v722 = vpack.c.b16 %v508, %v506
  %v723 = vpack.c.b16 %v509, %v507
  %v724 = vpack.c.b16 %v512, %v510
  %v725 = vpack.c.b16 %v513, %v511
  %v726 = vpack.c.b16 %v516, %v514
  %v727 = vpack.c.b16 %v517, %v515
  %v728 = vpack.c.b16 %v520, %v518
  %v729 = vpack.c.b16 %v521, %v519
  %v730 = vpack.c.b16 %v524, %v522
  %v731 = vpack.c.b16 %v525, %v523
  %v732 = vpack.c.b16 %v528, %v526
  %v733 = vpack.c.b16 %v529, %v527
  %v734 = vpack.c.b16 %v532, %v530
  %v735 = vpack.c.b16 %v533, %v531
  %v736 = vpack.c.b16 %v536, %v534
  %v737 = vpack.c.b16 %v537, %v535
  %v738 = vpack.c.b16 %v540, %v538
  %v739 = vpack.c.b16 %v541, %v539
  %v740 = vpack.c.b16 %v544, %v542
  %v741 = vpack.c.b16 %v545, %v543
  %v742 = vpack.c.b16 %v548, %v546
  %v743 = vpack.c.b16 %v549, %v547
  %v744 = vpack.c.b16 %v552, %v550
  %v745 = vpack.c.b16 %v553, %v551
  %v746 = vpack.c.b16 %v556, %v554
  %v747 = vpack.c.b16 %v557, %v555
  %v748 = vpack.c.b16 %v560, %v558
  %v749 = vpack.c.b16 %v561, %v559
  %v750 = vpack.c.b16 %v564, %v562
  %v751 = vpack.c.b16 %v565, %v563
  %v752 = vpack.c.b16 %v568, %v566
  %v753 = vpack.c.b16 %v569, %v567
  %v754 = vpack.c.b16 %v572, %v570
  %v755 = vpack.c.b16 %v573, %v571
  %v756 = vpack.c.b16 %v576, %v574
  %v757 = vpack.c.b16 %v577, %v575
  %v758 = vpack.c.b16 %v580, %v578
  %v759 = vpack.c.b16 %v581, %v579
  %v760 = vpack.c.b16 %v584, %v582
  %v761 = vpack.c.b16 %v585, %v583
  %v762 = vpack.c.b16 %v588, %v586
  %v763 = vpack.c.b16 %v589, %v587
  %v764 = vpack.c.b16 %v592, %v590
  %v765 = vpack.c.b16 %v593, %v591
  %v766 = vpack.c.b16 %v596, %v594
  %v767 = vpack.c.b16 %v597, %v595
  %v768 = vpack.c.b16 %v600, %v598
  %v769 = vpack.c.b16 %v601, %v599
  %v770 = vpack.c.b16 %v604, %v602
  %v771 = vpack.c.b16 %v605, %v603
  %v772 = vpack.c.b16 %v608, %v606
  %v773 = vpack.c.b16 %v609, %v607
  %v774 = vpack.c.b16 %v612, %v610
  %v775 = vpack.c.b16 %v613, %v611
  %v776 = vpack.c.b16 %v616, %v614
  %v777 = vpack.c.b16 %v617, %v615
  %v778 = vpack.c.b16 %v620, %v618
  %v779 = vpack.c.b16 %v621, %v619
  %v780 = vpack.c.b16 %v624, %v622
  %v781 = vpack.c.b16 %v625, %v623
  %v782 = vpack.c.b16 %v628, %v626
  %v783 = vpack.c.b16 %v629, %v627
  %v784 = vpack.c.b16 %v632, %v630
  %v785 = vpack.c.b16 %v633, %v631
  %v786 = vpack.c.b16 %v636, %v634
  %v787 = vpack.c.b16 %v637, %v635
  %v788 = vpack.c.b16 %v640, %v638
  %v789 = vpack.c.b16 %v641, %v639
  %v790 = vpack.c.b16 %v644, %v642
  %v791 = vpack.c.b16 %v645, %v643
  %v792 = vpack.c.b16 %v648, %v646
  %v793 = vpack.c.b16 %v649, %v647
  %938 = vmatprep.subr.bf16.mxu0 %v651
  %939 = vmatpush1.bf16.msra.mxu0 %v650
  %940 = vmatprep.subr.bf16.mxu0 %v653
  %941 = vmatpush1.bf16.msra.mxu0 %v652
  %942 = vmatprep.subr.bf16.mxu0 %v655
  %943 = vmatpush1.bf16.msra.mxu0 %v654
  %944 = vmatprep.subr.bf16.mxu0 %v657
  %945 = vmatpush1.bf16.msra.mxu0 %v656
  %946 = vmatprep.subr.bf16.mxu0 %v659
  %947 = vmatpush1.bf16.msra.mxu0 %v658
  %948 = vmatprep.subr.bf16.mxu0 %v661
  %949 = vmatpush1.bf16.msra.mxu0 %v660
  %950 = vmatprep.subr.bf16.mxu0 %v663
  %951 = vmatpush1.bf16.msra.mxu0 %v662
  %952 = vmatprep.subr.bf16.mxu0 %v665
  %953 = vmatpush1.bf16.msra.mxu0 %v664
  %954 = vmatprep.subr.bf16.mxu0 %v667
  %955 = vmatpush1.bf16.msra.mxu0 %v666
  %956 = vmatprep.subr.bf16.mxu0 %v669
  %957 = vmatpush1.bf16.msra.mxu0 %v668
  %958 = vmatprep.subr.bf16.mxu0 %v671
  %959 = vmatpush1.bf16.msra.mxu0 %v670
  %960 = vmatprep.subr.bf16.mxu0 %v673
  %961 = vmatpush1.bf16.msra.mxu0 %v672
  %962 = vmatprep.subr.bf16.mxu0 %v675
  %963 = vmatpush1.bf16.msra.mxu0 %v674
  %964 = vmatprep.subr.bf16.mxu0 %v677
  %965 = vmatpush1.bf16.msra.mxu0 %v676
  %966 = vmatprep.subr.bf16.mxu0 %v679
  %967 = vmatpush1.bf16.msra.mxu0 %v678
  %968 = vmatprep.subr.bf16.mxu0 %v681
  %969 = vmatpush1.bf16.msra.mxu0 %v680
  %970 = vmatprep.mubr.bf16.mxu0 %v201
  %971 = vmatmul.mubr.bf16.gmra.mrb[0].mxu0 %v200
  %v972 = vpop.f32.mrb[0].mxu0
  %v973 = vadd.f32 0.0, %v972
  %v974 = vpop.f32.mrb[0].mxu0
  %v975 = vadd.f32 0.0, %v974
  %v976 = vpop.f32.mrb[0].mxu0
  %v977 = vadd.f32 0.0, %v976
  %v978 = vpop.f32.mrb[0].mxu0
  %v979 = vadd.f32 0.0, %v978
  %980 = vdwg.mxu0
  %981 = vmatprep.subr.bf16.mxu0 %v683
  %982 = vmatpush1.bf16.msra.mxu0 %v682
  %983 = vmatprep.subr.bf16.mxu0 %v685
  %984 = vmatpush1.bf16.msra.mxu0 %v684
  %985 = vmatprep.subr.bf16.mxu0 %v687
  %986 = vmatpush1.bf16.msra.mxu0 %v686
  %987 = vmatprep.subr.bf16.mxu0 %v689
  %988 = vmatpush1.bf16.msra.mxu0 %v688
  %989 = vmatprep.subr.bf16.mxu0 %v691
  %990 = vmatpush1.bf16.msra.mxu0 %v690
  %991 = vmatprep.subr.bf16.mxu0 %v693
  %992 = vmatpush1.bf16.msra.mxu0 %v692
  %993 = vmatprep.subr.bf16.mxu0 %v695
  %994 = vmatpush1.bf16.msra.mxu0 %v694
  %995 = vmatprep.subr.bf16.mxu0 %v697
  %996 = vmatpush1.bf16.msra.mxu0 %v696
  %997 = vmatprep.subr.bf16.mxu0 %v699
  %998 = vmatpush1.bf16.msra.mxu0 %v698
  %999 = vmatprep.subr.bf16.mxu0 %v701
  %1000 = vmatpush1.bf16.msra.mxu0 %v700
  %1001 = vmatprep.subr.bf16.mxu0 %v703
  %1002 = vmatpush1.bf16.msra.mxu0 %v702
  %1003 = vmatprep.subr.bf16.mxu0 %v705
  %1004 = vmatpush1.bf16.msra.mxu0 %v704
  %1005 = vmatprep.subr.bf16.mxu0 %v707
  %1006 = vmatpush1.bf16.msra.mxu0 %v706
  %1007 = vmatprep.subr.bf16.mxu0 %v709
  %1008 = vmatpush1.bf16.msra.mxu0 %v708
  %1009 = vmatprep.subr.bf16.mxu0 %v711
  %1010 = vmatpush1.bf16.msra.mxu0 %v710
  %1011 = vmatprep.subr.bf16.mxu0 %v713
  %1012 = vmatpush1.bf16.msra.mxu0 %v712
  %1013 = vmatprep.mubr.bf16.mxu0 %v203
  %1014 = vmatmul.mubr.bf16.gmra.mrb[0].mxu0 %v202
  %v1015 = vpop.f32.mrb[0].mxu0
  %v1016 = vadd.f32 %v973, %v1015
  %v1017 = vpop.f32.mrb[0].mxu0
  %v1018 = vadd.f32 %v975, %v1017
  %v1019 = vpop.f32.mrb[0].mxu0
  %v1020 = vadd.f32 %v977, %v1019
  %v1021 = vpop.f32.mrb[0].mxu0
  %v1022 = vadd.f32 %v979, %v1021
  %1023 = vdwg.mxu0
  %1024 = vmatprep.subr.bf16.mxu0 %v715
  %1025 = vmatpush1.bf16.msra.mxu0 %v714
  %1026 = vmatprep.subr.bf16.mxu0 %v717
  %1027 = vmatpush1.bf16.msra.mxu0 %v716
  %1028 = vmatprep.subr.bf16.mxu0 %v719
  %1029 = vmatpush1.bf16.msra.mxu0 %v718
  %1030 = vmatprep.subr.bf16.mxu0 %v721
  %1031 = vmatpush1.bf16.msra.mxu0 %v720
  %1032 = vmatprep.subr.bf16.mxu0 %v723
  %1033 = vmatpush1.bf16.msra.mxu0 %v722
  %1034 = vmatprep.subr.bf16.mxu0 %v725
  %1035 = vmatpush1.bf16.msra.mxu0 %v724
  %1036 = vmatprep.subr.bf16.mxu0 %v727
  %1037 = vmatpush1.bf16.msra.mxu0 %v726
  %1038 = vmatprep.subr.bf16.mxu0 %v729
  %1039 = vmatpush1.bf16.msra.mxu0 %v728
  %1040 = vmatprep.subr.bf16.mxu0 %v731
  %1041 = vmatpush1.bf16.msra.mxu0 %v730
  %1042 = vmatprep.subr.bf16.mxu0 %v733
  %1043 = vmatpush1.bf16.msra.mxu0 %v732
  %1044 = vmatprep.subr.bf16.mxu0 %v735
  %1045 = vmatpush1.bf16.msra.mxu0 %v734
  %1046 = vmatprep.subr.bf16.mxu0 %v737
  %1047 = vmatpush1.bf16.msra.mxu0 %v736
  %1048 = vmatprep.subr.bf16.mxu0 %v739
  %1049 = vmatpush1.bf16.msra.mxu0 %v738
  %1050 = vmatprep.subr.bf16.mxu0 %v741
  %1051 = vmatpush1.bf16.msra.mxu0 %v740
  %1052 = vmatprep.subr.bf16.mxu0 %v743
  %1053 = vmatpush1.bf16.msra.mxu0 %v742
  %1054 = vmatprep.subr.bf16.mxu0 %v745
  %1055 = vmatpush1.bf16.msra.mxu0 %v744
  %1056 = vmatprep.mubr.bf16.mxu0 %v205
  %1057 = vmatmul.mubr.bf16.gmra.mrb[0].mxu0 %v204
  %v1058 = vpop.f32.mrb[0].mxu0
  %v1059 = vadd.f32 %v1016, %v1058
  %v1060 = vpop.f32.mrb[0].mxu0
  %v1061 = vadd.f32 %v1018, %v1060
  %v1062 = vpop.f32.mrb[0].mxu0
  %v1063 = vadd.f32 %v1020, %v1062
  %v1064 = vpop.f32.mrb[0].mxu0
  %v1065 = vadd.f32 %v1022, %v1064
  %1066 = vdwg.mxu0
  %1067 = vmatprep.subr.bf16.mxu0 %v747
  %1068 = vmatpush1.bf16.msra.mxu0 %v746
  %1069 = vmatprep.subr.bf16.mxu0 %v749
  %1070 = vmatpush1.bf16.msra.mxu0 %v748
  %1071 = vmatprep.subr.bf16.mxu0 %v751
  %1072 = vmatpush1.bf16.msra.mxu0 %v750
  %1073 = vmatprep.subr.bf16.mxu0 %v753
  %1074 = vmatpush1.bf16.msra.mxu0 %v752
  %1075 = vmatprep.subr.bf16.mxu0 %v755
  %1076 = vmatpush1.bf16.msra.mxu0 %v754
  %1077 = vmatprep.subr.bf16.mxu0 %v757
  %1078 = vmatpush1.bf16.msra.mxu0 %v756
  %1079 = vmatprep.subr.bf16.mxu0 %v759
  %1080 = vmatpush1.bf16.msra.mxu0 %v758
  %1081 = vmatprep.subr.bf16.mxu0 %v761
  %1082 = vmatpush1.bf16.msra.mxu0 %v760
  %1083 = vmatprep.subr.bf16.mxu0 %v763
  %1084 = vmatpush1.bf16.msra.mxu0 %v762
  %1085 = vmatprep.subr.bf16.mxu0 %v765
  %1086 = vmatpush1.bf16.msra.mxu0 %v764
  %1087 = vmatprep.subr.bf16.mxu0 %v767
  %1088 = vmatpush1.bf16.msra.mxu0 %v766
  %1089 = vmatprep.subr.bf16.mxu0 %v769
  %1090 = vmatpush1.bf16.msra.mxu0 %v768
  %1091 = vmatprep.subr.bf16.mxu0 %v771
  %1092 = vmatpush1.bf16.msra.mxu0 %v770
  %1093 = vmatprep.subr.bf16.mxu0 %v773
  %1094 = vmatpush1.bf16.msra.mxu0 %v772
  %1095 = vmatprep.subr.bf16.mxu0 %v775
  %1096 = vmatpush1.bf16.msra.mxu0 %v774
  %1097 = vmatprep.subr.bf16.mxu0 %v777
  %1098 = vmatpush1.bf16.msra.mxu0 %v776
  %1099 = vmatprep.mubr.bf16.mxu0 %v207
  %1100 = vmatmul.mubr.bf16.gmra.mrb[0].mxu0 %v206
  %v1101 = vpop.f32.mrb[0].mxu0
  %v1102 = vadd.f32 %v1059, %v1101
  %v1103 = vpop.f32.mrb[0].mxu0
  %v1104 = vadd.f32 %v1061, %v1103
  %v1105 = vpop.f32.mrb[0].mxu0
  %v1106 = vadd.f32 %v1063, %v1105
  %v1107 = vpop.f32.mrb[0].mxu0
  %v1108 = vadd.f32 %v1065, %v1107
  %1109 = vdwg.mxu0
  %1110 = vmatprep.subr.bf16.mxu0 %v779
  %1111 = vmatpush1.bf16.msra.mxu0 %v778
  %1112 = vmatprep.subr.bf16.mxu0 %v781
  %1113 = vmatpush1.bf16.msra.mxu0 %v780
  %1114 = vmatprep.subr.bf16.mxu0 %v783
  %1115 = vmatpush1.bf16.msra.mxu0 %v782
  %1116 = vmatprep.subr.bf16.mxu0 %v785
  %1117 = vmatpush1.bf16.msra.mxu0 %v784
  %1118 = vmatprep.subr.bf16.mxu0 %v787
  %1119 = vmatpush1.bf16.msra.mxu0 %v786
  %1120 = vmatprep.subr.bf16.mxu0 %v789
  %1121 = vmatpush1.bf16.msra.mxu0 %v788
  %1122 = vmatprep.subr.bf16.mxu0 %v791
  %1123 = vmatpush1.bf16.msra.mxu0 %v790
  %1124 = vmatprep.subr.bf16.mxu0 %v793
  %1125 = vmatpush1.bf16.msra.mxu0 %v792
  %1126 = vmatprep.subr.bf16.mxu0 0
  %1127 = vmatpush1.bf16.msra.mxu0 0
  %1128 = vmatprep.subr.bf16.mxu0 0
  %1129 = vmatpush1.bf16.msra.mxu0 0
  %1130 = vmatprep.subr.bf16.mxu0 0
  %1131 = vmatpush1.bf16.msra.mxu0 0
  %1132 = vmatprep.subr.bf16.mxu0 0
  %1133 = vmatpush1.bf16.msra.mxu0 0
  %1134 = vmatprep.subr.bf16.mxu0 0
  %1135 = vmatpush1.bf16.msra.mxu0 0
  %1136 = vmatprep.subr.bf16.mxu0 0
  %1137 = vmatpush1.bf16.msra.mxu0 0
  %1138 = vmatprep.subr.bf16.mxu0 0
  %1139 = vmatpush1.bf16.msra.mxu0 0
  %1140 = vmatprep.subr.bf16.mxu0 0
  %1141 = vmatpush1.bf16.msra.mxu0 0
  %1142 = vmatprep.mubr.bf16.mxu0 0
  %1143 = vmatmul.mubr.bf16.gmra.mrb[0].mxu0 %v208
  %v1144 = vpop.f32.mrb[0].mxu0
  %v1145 = vadd.f32 %v1102, %v1144
  %v1146 = vpop.f32.mrb[0].mxu0
  %v1147 = vadd.f32 %v1104, %v1146
  %v1148 = vpop.f32.mrb[0].mxu0
  %v1149 = vadd.f32 %v1106, %v1148
  %v1150 = vpop.f32.mrb[0].mxu0
  %v1151 = vadd.f32 %v1108, %v1150
  %1152 = vdwg.mxu0
  %v1153 = vld [vmem:[%s2] sm:$0x3]
  %v1154 = vld [vmem:[%s3] sm:$0x3]
  %v1155 = vadd.f32 %v1145, %v1149
  %v1156 = vrot.slane %v1155, 4
  %v1157 = vadd.f32 %v1155, %v1156
  %v1158 = vrot.slane %v1157, 2
  %v1159 = vadd.f32 %v1157, %v1158
  %v1160 = vrot.slane %v1159, 1
  %v1161 = vadd.f32 %v1159, %v1160
  %v1162 = vadd.f32 %v1147, %v1151
  %v1163 = vrot.slane %v1162, 4
  %v1164 = vadd.f32 %v1162, %v1163
  %v1165 = vrot.slane %v1164, 2
  %v1166 = vadd.f32 %v1164, %v1165
  %v1167 = vrot.slane %v1166, 1
  %v1168 = vadd.f32 %v1166, %v1167
  %v1169 = vrcp.pop 2.0
  %v1170 = vmul.f32 %v1161, %v1169
  %v1171 = vmul.f32 %v1168, %v1169
  %v1172 = vmul.f32 %v1145, %v1145
  %v1173 = vmul.f32 %v1147, %v1147
  %v1174 = vmul.f32 %v1149, %v1149
  %v1175 = vmul.f32 %v1151, %v1151
  %v1176 = vadd.f32 %v1172, %v1174
  %v1177 = vrot.slane %v1176, 4
  %v1178 = vadd.f32 %v1176, %v1177
  %v1179 = vrot.slane %v1178, 2
  %v1180 = vadd.f32 %v1178, %v1179
  %v1181 = vrot.slane %v1180, 1
  %v1182 = vadd.f32 %v1180, %v1181
  %v1183 = vadd.f32 %v1173, %v1175
  %v1184 = vrot.slane %v1183, 4
  %v1185 = vadd.f32 %v1183, %v1184
  %v1186 = vrot.slane %v1185, 2
  %v1187 = vadd.f32 %v1185, %v1186
  %v1188 = vrot.slane %v1187, 1
  %v1189 = vadd.f32 %v1187, %v1188
  %v1190 = vmul.f32 %v1182, %v1169
  %v1191 = vmul.f32 %v1189, %v1169
  %v1192 = vmul.f32 %v1170, %v1170
  %v1193 = vmul.f32 %v1171, %v1171
  %v1194 = vsub.f32 %v1190, %v1192
  %v1195 = vsub.f32 %v1191, %v1193
  %v1196 = vmax.f32 %v1194, 0.0
  %v1197 = vmax.f32 %v1195, 0.0
  %v1198 = vsub.f32 %v1145, %v1170
  %v1199 = vsub.f32 %v1147, %v1171
  %v1200 = vsub.f32 %v1149, %v1170
  %v1201 = vsub.f32 %v1151, %v1171
  %v1202 = vadd.f32 %v1196, 1e-05
  %v1203 = vadd.f32 %v1197, 1e-05
  %v1204 = vrsqrt.pop %v1202
  %v1205 = vrsqrt.pop %v1203
  %v1206 = vmul.f32 %v1198, %v1204
  %v1207 = vmul.f32 %v1199, %v1205
  %v1208 = vmul.f32 %v1200, %v1204
  %v1209 = vmul.f32 %v1201, %v1205
  %v1211 = vlaneseq
  %v1212 = vshrl.u32 %v1211, 7
  %v1213 = vsub.s32 0, %v1212
  %v1214 = vrot.slane %v1153, %v1213
  %v1215 = vlaneseq
  %v1216 = vshrl.u32 %v1215, 7
  %v1217 = vsub.s32 1, %v1216
  %v1218 = vrot.slane %v1153, %v1217
  %v1221 = vmul.f32 %v1206, %v1214
  %v1222 = vmul.f32 %v1207, %v1218
  %v1223 = vmul.f32 %v1208, %v1214
  %v1224 = vmul.f32 %v1209, %v1218
  %v1226 = vlaneseq
  %v1227 = vshrl.u32 %v1226, 7
  %v1228 = vsub.s32 0, %v1227
  %v1229 = vrot.slane %v1154, %v1228
  %v1230 = vlaneseq
  %v1231 = vshrl.u32 %v1230, 7
  %v1232 = vsub.s32 1, %v1231
  %v1233 = vrot.slane %v1154, %v1232
  %v1236 = vadd.f32 %v1221, %v1229
  %v1237 = vadd.f32 %v1222, %v1233
  %v1238 = vadd.f32 %v1223, %v1229
  %v1239 = vadd.f32 %v1224, %v1233
  %v1240 = vmax.f32 %v1236, 0.0
  %v1241 = vmax.f32 %v1237, 0.0
  %v1242 = vmax.f32 %v1238, 0.0
  %v1243 = vmax.f32 %v1239, 0.0
  %v1244 = vpack.c.bf16 %v1242, %v1240
  %v1245 = vpack.c.bf16 %v1243, %v1241
  %v1248 = vunpack.c.l.b16 %v1244
  %v1249 = vunpack.c.l.b16 %v1245
  %v1250 = vunpack.c.h.b16 %v1244
  %v1251 = vunpack.c.h.b16 %v1245
  %v1252 = vpack.c.b16 %v1249, %v1248
  %v1253 = vpack.c.b16 %v1251, %v1250
  %1256 = vst [vmem:[%s4] sm:$0xff] %v1252
  %1257 = vst [vmem:[%s4 + $0x8] sm:$0xff] %v1253
  // Predicated region
  $region18: #{resnet18_forward.27} parent=0 // pred_check
    _
  $region19: #{resnet18_forward.27} parent=0 // pred_check_branch
    %1259 = sbr.rel (0) target = $region21
  $region20: #{resnet18_forward.27} parent=0 // pred_region
    _
  $region21: #{resnet18_forward.27} parent=0 // pred_fallthru
    _
  // Predicated region
  $region22: #{resnet18_forward.27} parent=0 // pred_check
    _
  $region23: #{resnet18_forward.27} parent=0 // pred_check_branch
    %1261 = sbr.rel (0) target = $region25
  $region24: #{resnet18_forward.27} parent=0 // pred_region
    _
  $region25: #{resnet18_forward.27} parent=0 // pred_fallthru
    _

// kernel: resnet18_forward.31
$region0: #{resnet18_forward.31}
  #allocation0 [shape = 'u32[]', space=smem, size = 0x4, offset = 0x4, fixed_abs, tag = 'smem constant byte address 0x4 - core index']
  #allocation1 [shape = 'u32[144,128]{1,0:T(1,128)}', space=vmem, size = 0x12000, scoped, tag = 'internal scratch']
  %s0 = inlined_call_operand.vmem [shape: bf16[16,256], index: 0, kind: input, shape index: {}]
  %s1 = inlined_call_operand.vmem [shape: bf16[256,512], index: 1, kind: input, shape index: {}]
  %s2 = inlined_call_operand.vmem [shape: f32[1,512], index: 2, kind: input, shape index: {}]
  %s3 = inlined_call_operand.vmem [shape: f32[1,512], index: 3, kind: input, shape index: {}]
  %s4 = inlined_call_operand.vmem [shape: bf16[16,512], index: 4, kind: output, shape index: {}]
  %s5 = sld [smem:[#allocation0]]
  $region26: #{resnet18_forward.31} parent=0
    _
  %s7 = ssub.s32 1, %s5
  %s8 = scalar_select 0, %s7, %s5
  // Predicated region
  $region2: #{resnet18_forward.31} parent=0 // pred_check
    _
  $region3: #{resnet18_forward.31} parent=0 // pred_check_branch
    %10 = sbr.rel (0) target = $region5
  $region4: #{resnet18_forward.31} parent=0 // pred_region
    _
  $region5: #{resnet18_forward.31} parent=0 // pred_fallthru
    _
  // Predicated region
  $region6: #{resnet18_forward.31} parent=0 // pred_check
    _
  $region7: #{resnet18_forward.31} parent=0 // pred_check_branch
    %12 = sbr.rel (0) target = $region9
  $region8: #{resnet18_forward.31} parent=0 // pred_region
    _
  $region9: #{resnet18_forward.31} parent=0 // pred_fallthru
    _
  // Predicated region
  $region10: #{resnet18_forward.31} parent=0 // pred_check
    _
  $region11: #{resnet18_forward.31} parent=0 // pred_check_branch
    %14 = sbr.rel (0) target = $region13
  $region12: #{resnet18_forward.31} parent=0 // pred_region
    _
  $region13: #{resnet18_forward.31} parent=0 // pred_fallthru
    _
  // Predicated region
  $region14: #{resnet18_forward.31} parent=0 // pred_check
    _
  $region15: #{resnet18_forward.31} parent=0 // pred_check_branch
    %16 = sbr.rel (0) target = $region17
  $region16: #{resnet18_forward.31} parent=0 // pred_region
    _
  $region17: #{resnet18_forward.31} parent=0 // pred_fallthru
    _
  %v17 = vld [vmem:[%s0] sm:$0xff]
  %v18 = vld [vmem:[%s0 + $0x8] sm:$0xff]
  %v19 = vld [vmem:[%s1] sm:$0xff]
  %v20 = vld [vmem:[%s1 + $0x8] sm:$0xff]
  %v21 = vld [vmem:[%s1 + $0x10] sm:$0xff]
  %v22 = vld [vmem:[%s1 + $0x18] sm:$0xff]
  %v23 = vld [vmem:[%s1 + $0x20] sm:$0xff]
  %v24 = vld [vmem:[%s1 + $0x28] sm:$0xff]
  %v25 = vld [vmem:[%s1 + $0x30] sm:$0xff]
  %v26 = vld [vmem:[%s1 + $0x38] sm:$0xff]
  %v27 = vld [vmem:[%s1 + $0x40] sm:$0xff]
  %v28 = vld [vmem:[%s1 + $0x48] sm:$0xff]
  %v29 = vld [vmem:[%s1 + $0x50] sm:$0xff]
  %v30 = vld [vmem:[%s1 + $0x58] sm:$0xff]
  %v31 = vld [vmem:[%s1 + $0x60] sm:$0xff]
  %v32 = vld [vmem:[%s1 + $0x68] sm:$0xff]
  %v33 = vld [vmem:[%s1 + $0x70] sm:$0xff]
  %v34 = vld [vmem:[%s1 + $0x78] sm:$0xff]
  %v35 = vld [vmem:[%s1 + $0x80] sm:$0xff]
  %v36 = vld [vmem:[%s1 + $0x88] sm:$0xff]
  %v37 = vld [vmem:[%s1 + $0x90] sm:$0xff]
  %v38 = vld [vmem:[%s1 + $0x98] sm:$0xff]
  %v39 = vld [vmem:[%s1 + $0xa0] sm:$0xff]
  %v40 = vld [vmem:[%s1 + $0xa8] sm:$0xff]
  %v41 = vld [vmem:[%s1 + $0xb0] sm:$0xff]
  %v42 = vld [vmem:[%s1 + $0xb8] sm:$0xff]
  %v43 = vld [vmem:[%s1 + $0xc0] sm:$0xff]
  %v44 = vld [vmem:[%s1 + $0xc8] sm:$0xff]
  %v45 = vld [vmem:[%s1 + $0xd0] sm:$0xff]
  %v46 = vld [vmem:[%s1 + $0xd8] sm:$0xff]
  %v47 = vld [vmem:[%s1 + $0xe0] sm:$0xff]
  %v48 = vld [vmem:[%s1 + $0xe8] sm:$0xff]
  %v49 = vld [vmem:[%s1 + $0xf0] sm:$0xff]
  %v50 = vld [vmem:[%s1 + $0xf8] sm:$0xff]
  %v51 = vld [vmem:[%s1 + $0x100] sm:$0xff]
  %v52 = vld [vmem:[%s1 + $0x108] sm:$0xff]
  %v53 = vld [vmem:[%s1 + $0x110] sm:$0xff]
  %v54 = vld [vmem:[%s1 + $0x118] sm:$0xff]
  %v55 = vld [vmem:[%s1 + $0x120] sm:$0xff]
  %v56 = vld [vmem:[%s1 + $0x128] sm:$0xff]
  %v57 = vld [vmem:[%s1 + $0x130] sm:$0xff]
  %v58 = vld [vmem:[%s1 + $0x138] sm:$0xff]
  %v59 = vld [vmem:[%s1 + $0x140] sm:$0xff]
  %v60 = vld [vmem:[%s1 + $0x148] sm:$0xff]
  %v61 = vld [vmem:[%s1 + $0x150] sm:$0xff]
  %v62 = vld [vmem:[%s1 + $0x158] sm:$0xff]
  %v63 = vld [vmem:[%s1 + $0x160] sm:$0xff]
  %v64 = vld [vmem:[%s1 + $0x168] sm:$0xff]
  %v65 = vld [vmem:[%s1 + $0x170] sm:$0xff]
  %v66 = vld [vmem:[%s1 + $0x178] sm:$0xff]
  %v67 = vld [vmem:[%s1 + $0x180] sm:$0xff]
  %v68 = vld [vmem:[%s1 + $0x188] sm:$0xff]
  %v69 = vld [vmem:[%s1 + $0x190] sm:$0xff]
  %v70 = vld [vmem:[%s1 + $0x198] sm:$0xff]
  %v71 = vld [vmem:[%s1 + $0x1a0] sm:$0xff]
  %v72 = vld [vmem:[%s1 + $0x1a8] sm:$0xff]
  %v73 = vld [vmem:[%s1 + $0x1b0] sm:$0xff]
  %v74 = vld [vmem:[%s1 + $0x1b8] sm:$0xff]
  %v75 = vld [vmem:[%s1 + $0x1c0] sm:$0xff]
  %v76 = vld [vmem:[%s1 + $0x1c8] sm:$0xff]
  %v77 = vld [vmem:[%s1 + $0x1d0] sm:$0xff]
  %v78 = vld [vmem:[%s1 + $0x1d8] sm:$0xff]
  %v79 = vld [vmem:[%s1 + $0x1e0] sm:$0xff]
  %v80 = vld [vmem:[%s1 + $0x1e8] sm:$0xff]
  %v81 = vld [vmem:[%s1 + $0x1f0] sm:$0xff]
  %v82 = vld [vmem:[%s1 + $0x1f8] sm:$0xff]
  %v85 = vunpack.c.l.b16 %v17
  %v86 = vunpack.c.h.b16 %v17
  %v87 = vunpack.c.l.b16 %v18
  %v88 = vunpack.c.h.b16 %v18
  %v89 = vpack.c.b16 %v87, %v85
  %v90 = vpack.c.b16 %v88, %v86
  %v157 = vunpack.c.l.b16 %v19
  %v158 = vunpack.c.h.b16 %v19
  %v159 = vunpack.c.l.b16 %v20
  %v160 = vunpack.c.h.b16 %v20
  %v161 = vunpack.c.l.b16 %v21
  %v162 = vunpack.c.h.b16 %v21
  %v163 = vunpack.c.l.b16 %v22
  %v164 = vunpack.c.h.b16 %v22
  %v165 = vunpack.c.l.b16 %v23
  %v166 = vunpack.c.h.b16 %v23
  %v167 = vunpack.c.l.b16 %v24
  %v168 = vunpack.c.h.b16 %v24
  %v169 = vunpack.c.l.b16 %v25
  %v170 = vunpack.c.h.b16 %v25
  %v171 = vunpack.c.l.b16 %v26
  %v172 = vunpack.c.h.b16 %v26
  %v173 = vunpack.c.l.b16 %v27
  %v174 = vunpack.c.h.b16 %v27
  %v175 = vunpack.c.l.b16 %v28
  %v176 = vunpack.c.h.b16 %v28
  %v177 = vunpack.c.l.b16 %v29
  %v178 = vunpack.c.h.b16 %v29
  %v179 = vunpack.c.l.b16 %v30
  %v180 = vunpack.c.h.b16 %v30
  %v181 = vunpack.c.l.b16 %v31
  %v182 = vunpack.c.h.b16 %v31
  %v183 = vunpack.c.l.b16 %v32
  %v184 = vunpack.c.h.b16 %v32
  %v185 = vunpack.c.l.b16 %v33
  %v186 = vunpack.c.h.b16 %v33
  %v187 = vunpack.c.l.b16 %v34
  %v188 = vunpack.c.h.b16 %v34
  %v189 = vunpack.c.l.b16 %v35
  %v190 = vunpack.c.h.b16 %v35
  %v191 = vunpack.c.l.b16 %v36
  %v192 = vunpack.c.h.b16 %v36
  %v193 = vunpack.c.l.b16 %v37
  %v194 = vunpack.c.h.b16 %v37
  %v195 = vunpack.c.l.b16 %v38
  %v196 = vunpack.c.h.b16 %v38
  %v197 = vunpack.c.l.b16 %v39
  %v198 = vunpack.c.h.b16 %v39
  %v199 = vunpack.c.l.b16 %v40
  %v200 = vunpack.c.h.b16 %v40
  %v201 = vunpack.c.l.b16 %v41
  %v202 = vunpack.c.h.b16 %v41
  %v203 = vunpack.c.l.b16 %v42
  %v204 = vunpack.c.h.b16 %v42
  %v205 = vunpack.c.l.b16 %v43
  %v206 = vunpack.c.h.b16 %v43
  %v207 = vunpack.c.l.b16 %v44
  %v208 = vunpack.c.h.b16 %v44
  %v209 = vunpack.c.l.b16 %v45
  %v210 = vunpack.c.h.b16 %v45
  %v211 = vunpack.c.l.b16 %v46
  %v212 = vunpack.c.h.b16 %v46
  %v213 = vunpack.c.l.b16 %v47
  %v214 = vunpack.c.h.b16 %v47
  %v215 = vunpack.c.l.b16 %v48
  %v216 = vunpack.c.h.b16 %v48
  %v217 = vunpack.c.l.b16 %v49
  %v218 = vunpack.c.h.b16 %v49
  %v219 = vunpack.c.l.b16 %v50
  %v220 = vunpack.c.h.b16 %v50
  %v221 = vunpack.c.l.b16 %v51
  %v222 = vunpack.c.h.b16 %v51
  %v223 = vunpack.c.l.b16 %v52
  %v224 = vunpack.c.h.b16 %v52
  %v225 = vunpack.c.l.b16 %v53
  %v226 = vunpack.c.h.b16 %v53
  %v227 = vunpack.c.l.b16 %v54
  %v228 = vunpack.c.h.b16 %v54
  %v229 = vunpack.c.l.b16 %v55
  %v230 = vunpack.c.h.b16 %v55
  %v231 = vunpack.c.l.b16 %v56
  %v232 = vunpack.c.h.b16 %v56
  %v233 = vunpack.c.l.b16 %v57
  %v234 = vunpack.c.h.b16 %v57
  %v235 = vunpack.c.l.b16 %v58
  %v236 = vunpack.c.h.b16 %v58
  %v237 = vunpack.c.l.b16 %v59
  %v238 = vunpack.c.h.b16 %v59
  %v239 = vunpack.c.l.b16 %v60
  %v240 = vunpack.c.h.b16 %v60
  %v241 = vunpack.c.l.b16 %v61
  %v242 = vunpack.c.h.b16 %v61
  %v243 = vunpack.c.l.b16 %v62
  %v244 = vunpack.c.h.b16 %v62
  %v245 = vunpack.c.l.b16 %v63
  %v246 = vunpack.c.h.b16 %v63
  %v247 = vunpack.c.l.b16 %v64
  %v248 = vunpack.c.h.b16 %v64
  %v249 = vunpack.c.l.b16 %v65
  %v250 = vunpack.c.h.b16 %v65
  %v251 = vunpack.c.l.b16 %v66
  %v252 = vunpack.c.h.b16 %v66
  %v253 = vunpack.c.l.b16 %v67
  %v254 = vunpack.c.h.b16 %v67
  %v255 = vunpack.c.l.b16 %v68
  %v256 = vunpack.c.h.b16 %v68
  %v257 = vunpack.c.l.b16 %v69
  %v258 = vunpack.c.h.b16 %v69
  %v259 = vunpack.c.l.b16 %v70
  %v260 = vunpack.c.h.b16 %v70
  %v261 = vunpack.c.l.b16 %v71
  %v262 = vunpack.c.h.b16 %v71
  %v263 = vunpack.c.l.b16 %v72
  %v264 = vunpack.c.h.b16 %v72
  %v265 = vunpack.c.l.b16 %v73
  %v266 = vunpack.c.h.b16 %v73
  %v267 = vunpack.c.l.b16 %v74
  %v268 = vunpack.c.h.b16 %v74
  %v269 = vunpack.c.l.b16 %v75
  %v270 = vunpack.c.h.b16 %v75
  %v271 = vunpack.c.l.b16 %v76
  %v272 = vunpack.c.h.b16 %v76
  %v273 = vunpack.c.l.b16 %v77
  %v274 = vunpack.c.h.b16 %v77
  %v275 = vunpack.c.l.b16 %v78
  %v276 = vunpack.c.h.b16 %v78
  %v277 = vunpack.c.l.b16 %v79
  %v278 = vunpack.c.h.b16 %v79
  %v279 = vunpack.c.l.b16 %v80
  %v280 = vunpack.c.h.b16 %v80
  %v281 = vunpack.c.l.b16 %v81
  %v282 = vunpack.c.h.b16 %v81
  %v283 = vunpack.c.l.b16 %v82
  %v284 = vunpack.c.h.b16 %v82
  %v285 = vpack.c.b16 %v161, %v157
  %v286 = vpack.c.b16 %v162, %v158
  %v287 = vpack.c.b16 %v163, %v159
  %v288 = vpack.c.b16 %v164, %v160
  %v289 = vpack.c.b16 %v169, %v165
  %v290 = vpack.c.b16 %v170, %v166
  %v291 = vpack.c.b16 %v171, %v167
  %v292 = vpack.c.b16 %v172, %v168
  %v293 = vpack.c.b16 %v177, %v173
  %v294 = vpack.c.b16 %v178, %v174
  %v295 = vpack.c.b16 %v179, %v175
  %v296 = vpack.c.b16 %v180, %v176
  %v297 = vpack.c.b16 %v185, %v181
  %v298 = vpack.c.b16 %v186, %v182
  %v299 = vpack.c.b16 %v187, %v183
  %v300 = vpack.c.b16 %v188, %v184
  %v301 = vpack.c.b16 %v193, %v189
  %v302 = vpack.c.b16 %v194, %v190
  %v303 = vpack.c.b16 %v195, %v191
  %v304 = vpack.c.b16 %v196, %v192
  %v305 = vpack.c.b16 %v201, %v197
  %v306 = vpack.c.b16 %v202, %v198
  %v307 = vpack.c.b16 %v203, %v199
  %v308 = vpack.c.b16 %v204, %v200
  %v309 = vpack.c.b16 %v209, %v205
  %v310 = vpack.c.b16 %v210, %v206
  %v311 = vpack.c.b16 %v211, %v207
  %v312 = vpack.c.b16 %v212, %v208
  %v313 = vpack.c.b16 %v217, %v213
  %v314 = vpack.c.b16 %v218, %v214
  %v315 = vpack.c.b16 %v219, %v215
  %v316 = vpack.c.b16 %v220, %v216
  %v317 = vpack.c.b16 %v225, %v221
  %v318 = vpack.c.b16 %v226, %v222
  %v319 = vpack.c.b16 %v227, %v223
  %v320 = vpack.c.b16 %v228, %v224
  %v321 = vpack.c.b16 %v233, %v229
  %v322 = vpack.c.b16 %v234, %v230
  %v323 = vpack.c.b16 %v235, %v231
  %v324 = vpack.c.b16 %v236, %v232
  %v325 = vpack.c.b16 %v241, %v237
  %v326 = vpack.c.b16 %v242, %v238
  %v327 = vpack.c.b16 %v243, %v239
  %v328 = vpack.c.b16 %v244, %v240
  %v329 = vpack.c.b16 %v249, %v245
  %v330 = vpack.c.b16 %v250, %v246
  %v331 = vpack.c.b16 %v251, %v247
  %v332 = vpack.c.b16 %v252, %v248
  %v333 = vpack.c.b16 %v257, %v253
  %v334 = vpack.c.b16 %v258, %v254
  %v335 = vpack.c.b16 %v259, %v255
  %v336 = vpack.c.b16 %v260, %v256
  %v337 = vpack.c.b16 %v265, %v261
  %v338 = vpack.c.b16 %v266, %v262
  %v339 = vpack.c.b16 %v267, %v263
  %v340 = vpack.c.b16 %v268, %v264
  %v341 = vpack.c.b16 %v273, %v269
  %v342 = vpack.c.b16 %v274, %v270
  %v343 = vpack.c.b16 %v275, %v271
  %v344 = vpack.c.b16 %v276, %v272
  %v345 = vpack.c.b16 %v281, %v277
  %v346 = vpack.c.b16 %v282, %v278
  %v347 = vpack.c.b16 %v283, %v279
  %v348 = vpack.c.b16 %v284, %v280
  %413 = vmatprep.subr.bf16.mxu0 %v286
  %414 = vmatpush1.bf16.msra.mxu0 %v285
  %415 = vmatprep.subr.bf16.mxu0 %v290
  %416 = vmatpush1.bf16.msra.mxu0 %v289
  %417 = vmatprep.subr.bf16.mxu0 %v294
  %418 = vmatpush1.bf16.msra.mxu0 %v293
  %419 = vmatprep.subr.bf16.mxu0 %v298
  %420 = vmatpush1.bf16.msra.mxu0 %v297
  %421 = vmatprep.subr.bf16.mxu0 %v302
  %422 = vmatpush1.bf16.msra.mxu0 %v301
  %423 = vmatprep.subr.bf16.mxu0 %v306
  %424 = vmatpush1.bf16.msra.mxu0 %v305
  %425 = vmatprep.subr.bf16.mxu0 %v310
  %426 = vmatpush1.bf16.msra.mxu0 %v309
  %427 = vmatprep.subr.bf16.mxu0 %v314
  %428 = vmatpush1.bf16.msra.mxu0 %v313
  %429 = vmatprep.subr.bf16.mxu0 %v318
  %430 = vmatpush1.bf16.msra.mxu0 %v317
  %431 = vmatprep.subr.bf16.mxu0 %v322
  %432 = vmatpush1.bf16.msra.mxu0 %v321
  %433 = vmatprep.subr.bf16.mxu0 %v326
  %434 = vmatpush1.bf16.msra.mxu0 %v325
  %435 = vmatprep.subr.bf16.mxu0 %v330
  %436 = vmatpush1.bf16.msra.mxu0 %v329
  %437 = vmatprep.subr.bf16.mxu0 %v334
  %438 = vmatpush1.bf16.msra.mxu0 %v333
  %439 = vmatprep.subr.bf16.mxu0 %v338
  %440 = vmatpush1.bf16.msra.mxu0 %v337
  %441 = vmatprep.subr.bf16.mxu0 %v342
  %442 = vmatpush1.bf16.msra.mxu0 %v341
  %443 = vmatprep.subr.bf16.mxu0 %v346
  %444 = vmatpush1.bf16.msra.mxu0 %v345
  %445 = vmatprep.mubr.bf16.mxu0 %v90
  %446 = vmatmul.mubr.bf16.gmra.mrb[0].mxu0 %v89
  %v447 = vpop.f32.mrb[0].mxu0
  %v448 = vadd.f32 0.0, %v447
  %v449 = vpop.f32.mrb[0].mxu0
  %v450 = vadd.f32 0.0, %v449
  %v451 = vpop.f32.mrb[0].mxu0
  %v452 = vadd.f32 0.0, %v451
  %v453 = vpop.f32.mrb[0].mxu0
  %v454 = vadd.f32 0.0, %v453
  %455 = vdwg.mxu0
  %456 = vmatprep.subr.bf16.mxu0 %v288
  %457 = vmatpush1.bf16.msra.mxu0 %v287
  %458 = vmatprep.subr.bf16.mxu0 %v292
  %459 = vmatpush1.bf16.msra.mxu0 %v291
  %460 = vmatprep.subr.bf16.mxu0 %v296
  %461 = vmatpush1.bf16.msra.mxu0 %v295
  %462 = vmatprep.subr.bf16.mxu0 %v300
  %463 = vmatpush1.bf16.msra.mxu0 %v299
  %464 = vmatprep.subr.bf16.mxu0 %v304
  %465 = vmatpush1.bf16.msra.mxu0 %v303
  %466 = vmatprep.subr.bf16.mxu0 %v308
  %467 = vmatpush1.bf16.msra.mxu0 %v307
  %468 = vmatprep.subr.bf16.mxu0 %v312
  %469 = vmatpush1.bf16.msra.mxu0 %v311
  %470 = vmatprep.subr.bf16.mxu0 %v316
  %471 = vmatpush1.bf16.msra.mxu0 %v315
  %472 = vmatprep.subr.bf16.mxu0 %v320
  %473 = vmatpush1.bf16.msra.mxu0 %v319
  %474 = vmatprep.subr.bf16.mxu0 %v324
  %475 = vmatpush1.bf16.msra.mxu0 %v323
  %476 = vmatprep.subr.bf16.mxu0 %v328
  %477 = vmatpush1.bf16.msra.mxu0 %v327
  %478 = vmatprep.subr.bf16.mxu0 %v332
  %479 = vmatpush1.bf16.msra.mxu0 %v331
  %480 = vmatprep.subr.bf16.mxu0 %v336
  %481 = vmatpush1.bf16.msra.mxu0 %v335
  %482 = vmatprep.subr.bf16.mxu0 %v340
  %483 = vmatpush1.bf16.msra.mxu0 %v339
  %484 = vmatprep.subr.bf16.mxu0 %v344
  %485 = vmatpush1.bf16.msra.mxu0 %v343
  %486 = vmatprep.subr.bf16.mxu0 %v348
  %487 = vmatpush1.bf16.msra.mxu0 %v347
  %488 = vmatprep.mubr.bf16.mxu0 %v90
  %489 = vmatmul.mubr.bf16.gmra.mrb[0].mxu0 %v89
  %v490 = vpop.f32.mrb[0].mxu0
  %v491 = vadd.f32 0.0, %v490
  %v492 = vpop.f32.mrb[0].mxu0
  %v493 = vadd.f32 0.0, %v492
  %v494 = vpop.f32.mrb[0].mxu0
  %v495 = vadd.f32 0.0, %v494
  %v496 = vpop.f32.mrb[0].mxu0
  %v497 = vadd.f32 0.0, %v496
  %498 = vdwg.mxu0
  %v499 = vld [vmem:[%s2] sm:$0xf]
  %v500 = vld [vmem:[%s3] sm:$0xf]
  %v501 = vadd.f32 %v448, %v452
  %v502 = vrot.slane %v501, 4
  %v503 = vadd.f32 %v501, %v502
  %v504 = vrot.slane %v503, 2
  %v505 = vadd.f32 %v503, %v504
  %v506 = vrot.slane %v505, 1
  %v507 = vadd.f32 %v505, %v506
  %v508 = vadd.f32 %v450, %v454
  %v509 = vrot.slane %v508, 4
  %v510 = vadd.f32 %v508, %v509
  %v511 = vrot.slane %v510, 2
  %v512 = vadd.f32 %v510, %v511
  %v513 = vrot.slane %v512, 1
  %v514 = vadd.f32 %v512, %v513
  %v515 = vadd.f32 %v491, %v495
  %v516 = vrot.slane %v515, 4
  %v517 = vadd.f32 %v515, %v516
  %v518 = vrot.slane %v517, 2
  %v519 = vadd.f32 %v517, %v518
  %v520 = vrot.slane %v519, 1
  %v521 = vadd.f32 %v519, %v520
  %v522 = vadd.f32 %v493, %v497
  %v523 = vrot.slane %v522, 4
  %v524 = vadd.f32 %v522, %v523
  %v525 = vrot.slane %v524, 2
  %v526 = vadd.f32 %v524, %v525
  %v527 = vrot.slane %v526, 1
  %v528 = vadd.f32 %v526, %v527
  %v529 = vrcp.pop 2.0
  %v530 = vmul.f32 %v507, %v529
  %v531 = vmul.f32 %v514, %v529
  %v532 = vmul.f32 %v521, %v529
  %v533 = vmul.f32 %v528, %v529
  %v534 = vmul.f32 %v448, %v448
  %v535 = vmul.f32 %v450, %v450
  %v536 = vmul.f32 %v491, %v491
  %v537 = vmul.f32 %v493, %v493
  %v538 = vmul.f32 %v452, %v452
  %v539 = vmul.f32 %v454, %v454
  %v540 = vmul.f32 %v495, %v495
  %v541 = vmul.f32 %v497, %v497
  %v542 = vadd.f32 %v534, %v538
  %v543 = vrot.slane %v542, 4
  %v544 = vadd.f32 %v542, %v543
  %v545 = vrot.slane %v544, 2
  %v546 = vadd.f32 %v544, %v545
  %v547 = vrot.slane %v546, 1
  %v548 = vadd.f32 %v546, %v547
  %v549 = vadd.f32 %v535, %v539
  %v550 = vrot.slane %v549, 4
  %v551 = vadd.f32 %v549, %v550
  %v552 = vrot.slane %v551, 2
  %v553 = vadd.f32 %v551, %v552
  %v554 = vrot.slane %v553, 1
  %v555 = vadd.f32 %v553, %v554
  %v556 = vadd.f32 %v536, %v540
  %v557 = vrot.slane %v556, 4
  %v558 = vadd.f32 %v556, %v557
  %v559 = vrot.slane %v558, 2
  %v560 = vadd.f32 %v558, %v559
  %v561 = vrot.slane %v560, 1
  %v562 = vadd.f32 %v560, %v561
  %v563 = vadd.f32 %v537, %v541
  %v564 = vrot.slane %v563, 4
  %v565 = vadd.f32 %v563, %v564
  %v566 = vrot.slane %v565, 2
  %v567 = vadd.f32 %v565, %v566
  %v568 = vrot.slane %v567, 1
  %v569 = vadd.f32 %v567, %v568
  %v570 = vmul.f32 %v548, %v529
  %v571 = vmul.f32 %v555, %v529
  %v572 = vmul.f32 %v562, %v529
  %v573 = vmul.f32 %v569, %v529
  %v574 = vmul.f32 %v530, %v530
  %v575 = vmul.f32 %v531, %v531
  %v576 = vmul.f32 %v532, %v532
  %v577 = vmul.f32 %v533, %v533
  %v578 = vsub.f32 %v570, %v574
  %v579 = vsub.f32 %v571, %v575
  %v580 = vsub.f32 %v572, %v576
  %v581 = vsub.f32 %v573, %v577
  %v582 = vmax.f32 %v578, 0.0
  %v583 = vmax.f32 %v579, 0.0
  %v584 = vmax.f32 %v580, 0.0
  %v585 = vmax.f32 %v581, 0.0
  %v586 = vsub.f32 %v448, %v530
  %v587 = vsub.f32 %v450, %v531
  %v588 = vsub.f32 %v491, %v532
  %v589 = vsub.f32 %v493, %v533
  %v590 = vsub.f32 %v452, %v530
  %v591 = vsub.f32 %v454, %v531
  %v592 = vsub.f32 %v495, %v532
  %v593 = vsub.f32 %v497, %v533
  %v594 = vadd.f32 %v582, 1e-05
  %v595 = vadd.f32 %v583, 1e-05
  %v596 = vadd.f32 %v584, 1e-05
  %v597 = vadd.f32 %v585, 1e-05
  %v598 = vrsqrt.pop %v594
  %v599 = vrsqrt.pop %v595
  %v600 = vrsqrt.pop %v596
  %v601 = vrsqrt.pop %v597
  %v602 = vmul.f32 %v586, %v598
  %v603 = vmul.f32 %v587, %v599
  %v604 = vmul.f32 %v588, %v600
  %v605 = vmul.f32 %v589, %v601
  %v606 = vmul.f32 %v590, %v598
  %v607 = vmul.f32 %v591, %v599
  %v608 = vmul.f32 %v592, %v600
  %v609 = vmul.f32 %v593, %v601
  %v611 = vlaneseq
  %v612 = vshrl.u32 %v611, 7
  %v613 = vsub.s32 0, %v612
  %v614 = vrot.slane %v499, %v613
  %v615 = vlaneseq
  %v616 = vshrl.u32 %v615, 7
  %v617 = vsub.s32 1, %v616
  %v618 = vrot.slane %v499, %v617
  %v619 = vlaneseq
  %v620 = vshrl.u32 %v619, 7
  %v621 = vsub.s32 2, %v620
  %v622 = vrot.slane %v499, %v621
  %v623 = vlaneseq
  %v624 = vshrl.u32 %v623, 7
  %v625 = vsub.s32 3, %v624
  %v626 = vrot.slane %v499, %v625
  %v631 = vmul.f32 %v602, %v614
  %v632 = vmul.f32 %v603, %v618
  %v633 = vmul.f32 %v604, %v622
  %v634 = vmul.f32 %v605, %v626
  %v635 = vmul.f32 %v606, %v614
  %v636 = vmul.f32 %v607, %v618
  %v637 = vmul.f32 %v608, %v622
  %v638 = vmul.f32 %v609, %v626
  %v640 = vlaneseq
  %v641 = vshrl.u32 %v640, 7
  %v642 = vsub.s32 0, %v641
  %v643 = vrot.slane %v500, %v642
  %v644 = vlaneseq
  %v645 = vshrl.u32 %v644, 7
  %v646 = vsub.s32 1, %v645
  %v647 = vrot.slane %v500, %v646
  %v648 = vlaneseq
  %v649 = vshrl.u32 %v648, 7
  %v650 = vsub.s32 2, %v649
  %v651 = vrot.slane %v500, %v650
  %v652 = vlaneseq
  %v653 = vshrl.u32 %v652, 7
  %v654 = vsub.s32 3, %v653
  %v655 = vrot.slane %v500, %v654
  %v660 = vadd.f32 %v631, %v643
  %v661 = vadd.f32 %v632, %v647
  %v662 = vadd.f32 %v633, %v651
  %v663 = vadd.f32 %v634, %v655
  %v664 = vadd.f32 %v635, %v643
  %v665 = vadd.f32 %v636, %v647
  %v666 = vadd.f32 %v637, %v651
  %v667 = vadd.f32 %v638, %v655
  %v668 = vmax.f32 %v660, 0.0
  %v669 = vmax.f32 %v661, 0.0
  %v670 = vmax.f32 %v662, 0.0
  %v671 = vmax.f32 %v663, 0.0
  %v672 = vmax.f32 %v664, 0.0
  %v673 = vmax.f32 %v665, 0.0
  %v674 = vmax.f32 %v666, 0.0
  %v675 = vmax.f32 %v667, 0.0
  %v676 = vpack.c.bf16 %v672, %v668
  %v677 = vpack.c.bf16 %v673, %v669
  %v678 = vpack.c.bf16 %v674, %v670
  %v679 = vpack.c.bf16 %v675, %v671
  %v684 = vunpack.c.l.b16 %v676
  %v685 = vunpack.c.l.b16 %v677
  %v686 = vunpack.c.l.b16 %v678
  %v687 = vunpack.c.l.b16 %v679
  %v688 = vunpack.c.h.b16 %v676
  %v689 = vunpack.c.h.b16 %v677
  %v690 = vunpack.c.h.b16 %v678
  %v691 = vunpack.c.h.b16 %v679
  %v692 = vpack.c.b16 %v685, %v684
  %v693 = vpack.c.b16 %v687, %v686
  %v694 = vpack.c.b16 %v689, %v688
  %v695 = vpack.c.b16 %v691, %v690
  %700 = vst [vmem:[%s4] sm:$0xff] %v692
  %701 = vst [vmem:[%s4 + $0x8] sm:$0xff] %v693
  %702 = vst [vmem:[%s4 + $0x10] sm:$0xff] %v694
  %703 = vst [vmem:[%s4 + $0x18] sm:$0xff] %v695
  // Predicated region
  $region18: #{resnet18_forward.31} parent=0 // pred_check
    _
  $region19: #{resnet18_forward.31} parent=0 // pred_check_branch
    %705 = sbr.rel (0) target = $region21
  $region20: #{resnet18_forward.31} parent=0 // pred_region
    _
  $region21: #{resnet18_forward.31} parent=0 // pred_fallthru
    _
  // Predicated region
  $region22: #{resnet18_forward.31} parent=0 // pred_check
    _
  $region23: #{resnet18_forward.31} parent=0 // pred_check_branch
    %707 = sbr.rel (0) target = $region25
  $region24: #{resnet18_forward.31} parent=0 // pred_region
    _
  $region25: #{resnet18_forward.31} parent=0 // pred_fallthru
    _

// kernel: resnet18_forward.33
$region0: #{resnet18_forward.33}
  #allocation0 [shape = 'u32[]', space=smem, size = 0x4, offset = 0x4, fixed_abs, tag = 'smem constant byte address 0x4 - core index']
  #allocation1 [shape = 'u32[144,128]{1,0:T(1,128)}', space=vmem, size = 0x12000, scoped, tag = 'internal scratch']
  %s0 = inlined_call_operand.vmem [shape: bf16[16,512], index: 0, kind: input, shape index: {}]
  %s1 = inlined_call_operand.vmem [shape: bf16[512,512], index: 1, kind: input, shape index: {}]
  %s2 = inlined_call_operand.vmem [shape: f32[1,512], index: 2, kind: input, shape index: {}]
  %s3 = inlined_call_operand.vmem [shape: f32[1,512], index: 3, kind: input, shape index: {}]
  %s4 = inlined_call_operand.vmem [shape: bf16[16,512], index: 4, kind: output, shape index: {}]
  %s5 = sld [smem:[#allocation0]]
  $region26: #{resnet18_forward.33} parent=0
    _
  %s7 = ssub.s32 1, %s5
  %s8 = scalar_select 0, %s7, %s5
  // Predicated region
  $region2: #{resnet18_forward.33} parent=0 // pred_check
    _
  $region3: #{resnet18_forward.33} parent=0 // pred_check_branch
    %10 = sbr.rel (0) target = $region5
  $region4: #{resnet18_forward.33} parent=0 // pred_region
    _
  $region5: #{resnet18_forward.33} parent=0 // pred_fallthru
    _
  // Predicated region
  $region6: #{resnet18_forward.33} parent=0 // pred_check
    _
  $region7: #{resnet18_forward.33} parent=0 // pred_check_branch
    %12 = sbr.rel (0) target = $region9
  $region8: #{resnet18_forward.33} parent=0 // pred_region
    _
  $region9: #{resnet18_forward.33} parent=0 // pred_fallthru
    _
  // Predicated region
  $region10: #{resnet18_forward.33} parent=0 // pred_check
    _
  $region11: #{resnet18_forward.33} parent=0 // pred_check_branch
    %14 = sbr.rel (0) target = $region13
  $region12: #{resnet18_forward.33} parent=0 // pred_region
    _
  $region13: #{resnet18_forward.33} parent=0 // pred_fallthru
    _
  // Predicated region
  $region14: #{resnet18_forward.33} parent=0 // pred_check
    _
  $region15: #{resnet18_forward.33} parent=0 // pred_check_branch
    %16 = sbr.rel (0) target = $region17
  $region16: #{resnet18_forward.33} parent=0 // pred_region
    _
  $region17: #{resnet18_forward.33} parent=0 // pred_fallthru
    _
  %v17 = vld [vmem:[%s0] sm:$0xff]
  %v18 = vld [vmem:[%s0 + $0x8] sm:$0xff]
  %v19 = vld [vmem:[%s0 + $0x10] sm:$0xff]
  %v20 = vld [vmem:[%s0 + $0x18] sm:$0xff]
  %v21 = vld [vmem:[%s1] sm:$0xff]
  %v22 = vld [vmem:[%s1 + $0x8] sm:$0xff]
  %v23 = vld [vmem:[%s1 + $0x10] sm:$0xff]
  %v24 = vld [vmem:[%s1 + $0x18] sm:$0xff]
  %v25 = vld [vmem:[%s1 + $0x20] sm:$0xff]
  %v26 = vld [vmem:[%s1 + $0x28] sm:$0xff]
  %v27 = vld [vmem:[%s1 + $0x30] sm:$0xff]
  %v28 = vld [vmem:[%s1 + $0x38] sm:$0xff]
  %v29 = vld [vmem:[%s1 + $0x40] sm:$0xff]
  %v30 = vld [vmem:[%s1 + $0x48] sm:$0xff]
  %v31 = vld [vmem:[%s1 + $0x50] sm:$0xff]
  %v32 = vld [vmem:[%s1 + $0x58] sm:$0xff]
  %v33 = vld [vmem:[%s1 + $0x60] sm:$0xff]
  %v34 = vld [vmem:[%s1 + $0x68] sm:$0xff]
  %v35 = vld [vmem:[%s1 + $0x70] sm:$0xff]
  %v36 = vld [vmem:[%s1 + $0x78] sm:$0xff]
  %v37 = vld [vmem:[%s1 + $0x80] sm:$0xff]
  %v38 = vld [vmem:[%s1 + $0x88] sm:$0xff]
  %v39 = vld [vmem:[%s1 + $0x90] sm:$0xff]
  %v40 = vld [vmem:[%s1 + $0x98] sm:$0xff]
  %v41 = vld [vmem:[%s1 + $0xa0] sm:$0xff]
  %v42 = vld [vmem:[%s1 + $0xa8] sm:$0xff]
  %v43 = vld [vmem:[%s1 + $0xb0] sm:$0xff]
  %v44 = vld [vmem:[%s1 + $0xb8] sm:$0xff]
  %v45 = vld [vmem:[%s1 + $0xc0] sm:$0xff]
  %v46 = vld [vmem:[%s1 + $0xc8] sm:$0xff]
  %v47 = vld [vmem:[%s1 + $0xd0] sm:$0xff]
  %v48 = vld [vmem:[%s1 + $0xd8] sm:$0xff]
  %v49 = vld [vmem:[%s1 + $0xe0] sm:$0xff]
  %v50 = vld [vmem:[%s1 + $0xe8] sm:$0xff]
  %v51 = vld [vmem:[%s1 + $0xf0] sm:$0xff]
  %v52 = vld [vmem:[%s1 + $0xf8] sm:$0xff]
  %v53 = vld [vmem:[%s1 + $0x100] sm:$0xff]
  %v54 = vld [vmem:[%s1 + $0x108] sm:$0xff]
  %v55 = vld [vmem:[%s1 + $0x110] sm:$0xff]
  %v56 = vld [vmem:[%s1 + $0x118] sm:$0xff]
  %v57 = vld [vmem:[%s1 + $0x120] sm:$0xff]
  %v58 = vld [vmem:[%s1 + $0x128] sm:$0xff]
  %v59 = vld [vmem:[%s1 + $0x130] sm:$0xff]
  %v60 = vld [vmem:[%s1 + $0x138] sm:$0xff]
  %v61 = vld [vmem:[%s1 + $0x140] sm:$0xff]
  %v62 = vld [vmem:[%s1 + $0x148] sm:$0xff]
  %v63 = vld [vmem:[%s1 + $0x150] sm:$0xff]
  %v64 = vld [vmem:[%s1 + $0x158] sm:$0xff]
  %v65 = vld [vmem:[%s1 + $0x160] sm:$0xff]
  %v66 = vld [vmem:[%s1 + $0x168] sm:$0xff]
  %v67 = vld [vmem:[%s1 + $0x170] sm:$0xff]
  %v68 = vld [vmem:[%s1 + $0x178] sm:$0xff]
  %v69 = vld [vmem:[%s1 + $0x180] sm:$0xff]
  %v70 = vld [vmem:[%s1 + $0x188] sm:$0xff]
  %v71 = vld [vmem:[%s1 + $0x190] sm:$0xff]
  %v72 = vld [vmem:[%s1 + $0x198] sm:$0xff]
  %v73 = vld [vmem:[%s1 + $0x1a0] sm:$0xff]
  %v74 = vld [vmem:[%s1 + $0x1a8] sm:$0xff]
  %v75 = vld [vmem:[%s1 + $0x1b0] sm:$0xff]
  %v76 = vld [vmem:[%s1 + $0x1b8] sm:$0xff]
  %v77 = vld [vmem:[%s1 + $0x1c0] sm:$0xff]
  %v78 = vld [vmem:[%s1 + $0x1c8] sm:$0xff]
  %v79 = vld [vmem:[%s1 + $0x1d0] sm:$0xff]
  %v80 = vld [vmem:[%s1 + $0x1d8] sm:$0xff]
  %v81 = vld [vmem:[%s1 + $0x1e0] sm:$0xff]
  %v82 = vld [vmem:[%s1 + $0x1e8] sm:$0xff]
  %v83 = vld [vmem:[%s1 + $0x1f0] sm:$0xff]
  %v84 = vld [vmem:[%s1 + $0x1f8] sm:$0xff]
  %v85 = vld [vmem:[%s1 + $0x200] sm:$0xff]
  %v86 = vld [vmem:[%s1 + $0x208] sm:$0xff]
  %v87 = vld [vmem:[%s1 + $0x210] sm:$0xff]
  %v88 = vld [vmem:[%s1 + $0x218] sm:$0xff]
  %v89 = vld [vmem:[%s1 + $0x220] sm:$0xff]
  %v90 = vld [vmem:[%s1 + $0x228] sm:$0xff]
  %v91 = vld [vmem:[%s1 + $0x230] sm:$0xff]
  %v92 = vld [vmem:[%s1 + $0x238] sm:$0xff]
  %v93 = vld [vmem:[%s1 + $0x240] sm:$0xff]
  %v94 = vld [vmem:[%s1 + $0x248] sm:$0xff]
  %v95 = vld [vmem:[%s1 + $0x250] sm:$0xff]
  %v96 = vld [vmem:[%s1 + $0x258] sm:$0xff]
  %v97 = vld [vmem:[%s1 + $0x260] sm:$0xff]
  %v98 = vld [vmem:[%s1 + $0x268] sm:$0xff]
  %v99 = vld [vmem:[%s1 + $0x270] sm:$0xff]
  %v100 = vld [vmem:[%s1 + $0x278] sm:$0xff]
  %v101 = vld [vmem:[%s1 + $0x280] sm:$0xff]
  %v102 = vld [vmem:[%s1 + $0x288] sm:$0xff]
  %v103 = vld [vmem:[%s1 + $0x290] sm:$0xff]
  %v104 = vld [vmem:[%s1 + $0x298] sm:$0xff]
  %v105 = vld [vmem:[%s1 + $0x2a0] sm:$0xff]
  %v106 = vld [vmem:[%s1 + $0x2a8] sm:$0xff]
  %v107 = vld [vmem:[%s1 + $0x2b0] sm:$0xff]
  %v108 = vld [vmem:[%s1 + $0x2b8] sm:$0xff]
  %v109 = vld [vmem:[%s1 + $0x2c0] sm:$0xff]
  %v110 = vld [vmem:[%s1 + $0x2c8] sm:$0xff]
  %v111 = vld [vmem:[%s1 + $0x2d0] sm:$0xff]
  %v112 = vld [vmem:[%s1 + $0x2d8] sm:$0xff]
  %v113 = vld [vmem:[%s1 + $0x2e0] sm:$0xff]
  %v114 = vld [vmem:[%s1 + $0x2e8] sm:$0xff]
  %v115 = vld [vmem:[%s1 + $0x2f0] sm:$0xff]
  %v116 = vld [vmem:[%s1 + $0x2f8] sm:$0xff]
  %v117 = vld [vmem:[%s1 + $0x300] sm:$0xff]
  %v118 = vld [vmem:[%s1 + $0x308] sm:$0xff]
  %v119 = vld [vmem:[%s1 + $0x310] sm:$0xff]
  %v120 = vld [vmem:[%s1 + $0x318] sm:$0xff]
  %v121 = vld [vmem:[%s1 + $0x320] sm:$0xff]
  %v122 = vld [vmem:[%s1 + $0x328] sm:$0xff]
  %v123 = vld [vmem:[%s1 + $0x330] sm:$0xff]
  %v124 = vld [vmem:[%s1 + $0x338] sm:$0xff]
  %v125 = vld [vmem:[%s1 + $0x340] sm:$0xff]
  %v126 = vld [vmem:[%s1 + $0x348] sm:$0xff]
  %v127 = vld [vmem:[%s1 + $0x350] sm:$0xff]
  %v128 = vld [vmem:[%s1 + $0x358] sm:$0xff]
  %v129 = vld [vmem:[%s1 + $0x360] sm:$0xff]
  %v130 = vld [vmem:[%s1 + $0x368] sm:$0xff]
  %v131 = vld [vmem:[%s1 + $0x370] sm:$0xff]
  %v132 = vld [vmem:[%s1 + $0x378] sm:$0xff]
  %v133 = vld [vmem:[%s1 + $0x380] sm:$0xff]
  %v134 = vld [vmem:[%s1 + $0x388] sm:$0xff]
  %v135 = vld [vmem:[%s1 + $0x390] sm:$0xff]
  %v136 = vld [vmem:[%s1 + $0x398] sm:$0xff]
  %v137 = vld [vmem:[%s1 + $0x3a0] sm:$0xff]
  %v138 = vld [vmem:[%s1 + $0x3a8] sm:$0xff]
  %v139 = vld [vmem:[%s1 + $0x3b0] sm:$0xff]
  %v140 = vld [vmem:[%s1 + $0x3b8] sm:$0xff]
  %v141 = vld [vmem:[%s1 + $0x3c0] sm:$0xff]
  %v142 = vld [vmem:[%s1 + $0x3c8] sm:$0xff]
  %v143 = vld [vmem:[%s1 + $0x3d0] sm:$0xff]
  %v144 = vld [vmem:[%s1 + $0x3d8] sm:$0xff]
  %v145 = vld [vmem:[%s1 + $0x3e0] sm:$0xff]
  %v146 = vld [vmem:[%s1 + $0x3e8] sm:$0xff]
  %v147 = vld [vmem:[%s1 + $0x3f0] sm:$0xff]
  %v148 = vld [vmem:[%s1 + $0x3f8] sm:$0xff]
  %v153 = vunpack.c.l.b16 %v17
  %v154 = vunpack.c.h.b16 %v17
  %v155 = vunpack.c.l.b16 %v18
  %v156 = vunpack.c.h.b16 %v18
  %v157 = vunpack.c.l.b16 %v19
  %v158 = vunpack.c.h.b16 %v19
  %v159 = vunpack.c.l.b16 %v20
  %v160 = vunpack.c.h.b16 %v20
  %v161 = vpack.c.b16 %v157, %v153
  %v162 = vpack.c.b16 %v158, %v154
  %v163 = vpack.c.b16 %v159, %v155
  %v164 = vpack.c.b16 %v160, %v156
  %v297 = vunpack.c.l.b16 %v21
  %v298 = vunpack.c.h.b16 %v21
  %v299 = vunpack.c.l.b16 %v22
  %v300 = vunpack.c.h.b16 %v22
  %v301 = vunpack.c.l.b16 %v23
  %v302 = vunpack.c.h.b16 %v23
  %v303 = vunpack.c.l.b16 %v24
  %v304 = vunpack.c.h.b16 %v24
  %v305 = vunpack.c.l.b16 %v25
  %v306 = vunpack.c.h.b16 %v25
  %v307 = vunpack.c.l.b16 %v26
  %v308 = vunpack.c.h.b16 %v26
  %v309 = vunpack.c.l.b16 %v27
  %v310 = vunpack.c.h.b16 %v27
  %v311 = vunpack.c.l.b16 %v28
  %v312 = vunpack.c.h.b16 %v28
  %v313 = vunpack.c.l.b16 %v29
  %v314 = vunpack.c.h.b16 %v29
  %v315 = vunpack.c.l.b16 %v30
  %v316 = vunpack.c.h.b16 %v30
  %v317 = vunpack.c.l.b16 %v31
  %v318 = vunpack.c.h.b16 %v31
  %v319 = vunpack.c.l.b16 %v32
  %v320 = vunpack.c.h.b16 %v32
  %v321 = vunpack.c.l.b16 %v33
  %v322 = vunpack.c.h.b16 %v33
  %v323 = vunpack.c.l.b16 %v34
  %v324 = vunpack.c.h.b16 %v34
  %v325 = vunpack.c.l.b16 %v35
  %v326 = vunpack.c.h.b16 %v35
  %v327 = vunpack.c.l.b16 %v36
  %v328 = vunpack.c.h.b16 %v36
  %v329 = vunpack.c.l.b16 %v37
  %v330 = vunpack.c.h.b16 %v37
  %v331 = vunpack.c.l.b16 %v38
  %v332 = vunpack.c.h.b16 %v38
  %v333 = vunpack.c.l.b16 %v39
  %v334 = vunpack.c.h.b16 %v39
  %v335 = vunpack.c.l.b16 %v40
  %v336 = vunpack.c.h.b16 %v40
  %v337 = vunpack.c.l.b16 %v41
  %v338 = vunpack.c.h.b16 %v41
  %v339 = vunpack.c.l.b16 %v42
  %v340 = vunpack.c.h.b16 %v42
  %v341 = vunpack.c.l.b16 %v43
  %v342 = vunpack.c.h.b16 %v43
  %v343 = vunpack.c.l.b16 %v44
  %v344 = vunpack.c.h.b16 %v44
  %v345 = vunpack.c.l.b16 %v45
  %v346 = vunpack.c.h.b16 %v45
  %v347 = vunpack.c.l.b16 %v46
  %v348 = vunpack.c.h.b16 %v46
  %v349 = vunpack.c.l.b16 %v47
  %v350 = vunpack.c.h.b16 %v47
  %v351 = vunpack.c.l.b16 %v48
  %v352 = vunpack.c.h.b16 %v48
  %v353 = vunpack.c.l.b16 %v49
  %v354 = vunpack.c.h.b16 %v49
  %v355 = vunpack.c.l.b16 %v50
  %v356 = vunpack.c.h.b16 %v50
  %v357 = vunpack.c.l.b16 %v51
  %v358 = vunpack.c.h.b16 %v51
  %v359 = vunpack.c.l.b16 %v52
  %v360 = vunpack.c.h.b16 %v52
  %v361 = vunpack.c.l.b16 %v53
  %v362 = vunpack.c.h.b16 %v53
  %v363 = vunpack.c.l.b16 %v54
  %v364 = vunpack.c.h.b16 %v54
  %v365 = vunpack.c.l.b16 %v55
  %v366 = vunpack.c.h.b16 %v55
  %v367 = vunpack.c.l.b16 %v56
  %v368 = vunpack.c.h.b16 %v56
  %v369 = vunpack.c.l.b16 %v57
  %v370 = vunpack.c.h.b16 %v57
  %v371 = vunpack.c.l.b16 %v58
  %v372 = vunpack.c.h.b16 %v58
  %v373 = vunpack.c.l.b16 %v59
  %v374 = vunpack.c.h.b16 %v59
  %v375 = vunpack.c.l.b16 %v60
  %v376 = vunpack.c.h.b16 %v60
  %v377 = vunpack.c.l.b16 %v61
  %v378 = vunpack.c.h.b16 %v61
  %v379 = vunpack.c.l.b16 %v62
  %v380 = vunpack.c.h.b16 %v62
  %v381 = vunpack.c.l.b16 %v63
  %v382 = vunpack.c.h.b16 %v63
  %v383 = vunpack.c.l.b16 %v64
  %v384 = vunpack.c.h.b16 %v64
  %v385 = vunpack.c.l.b16 %v65
  %v386 = vunpack.c.h.b16 %v65
  %v387 = vunpack.c.l.b16 %v66
  %v388 = vunpack.c.h.b16 %v66
  %v389 = vunpack.c.l.b16 %v67
  %v390 = vunpack.c.h.b16 %v67
  %v391 = vunpack.c.l.b16 %v68
  %v392 = vunpack.c.h.b16 %v68
  %v393 = vunpack.c.l.b16 %v69
  %v394 = vunpack.c.h.b16 %v69
  %v395 = vunpack.c.l.b16 %v70
  %v396 = vunpack.c.h.b16 %v70
  %v397 = vunpack.c.l.b16 %v71
  %v398 = vunpack.c.h.b16 %v71
  %v399 = vunpack.c.l.b16 %v72
  %v400 = vunpack.c.h.b16 %v72
  %v401 = vunpack.c.l.b16 %v73
  %v402 = vunpack.c.h.b16 %v73
  %v403 = vunpack.c.l.b16 %v74
  %v404 = vunpack.c.h.b16 %v74
  %v405 = vunpack.c.l.b16 %v75
  %v406 = vunpack.c.h.b16 %v75
  %v407 = vunpack.c.l.b16 %v76
  %v408 = vunpack.c.h.b16 %v76
  %v409 = vunpack.c.l.b16 %v77
  %v410 = vunpack.c.h.b16 %v77
  %v411 = vunpack.c.l.b16 %v78
  %v412 = vunpack.c.h.b16 %v78
  %v413 = vunpack.c.l.b16 %v79
  %v414 = vunpack.c.h.b16 %v79
  %v415 = vunpack.c.l.b16 %v80
  %v416 = vunpack.c.h.b16 %v80
  %v417 = vunpack.c.l.b16 %v81
  %v418 = vunpack.c.h.b16 %v81
  %v419 = vunpack.c.l.b16 %v82
  %v420 = vunpack.c.h.b16 %v82
  %v421 = vunpack.c.l.b16 %v83
  %v422 = vunpack.c.h.b16 %v83
  %v423 = vunpack.c.l.b16 %v84
  %v424 = vunpack.c.h.b16 %v84
  %v425 = vunpack.c.l.b16 %v85
  %v426 = vunpack.c.h.b16 %v85
  %v427 = vunpack.c.l.b16 %v86
  %v428 = vunpack.c.h.b16 %v86
  %v429 = vunpack.c.l.b16 %v87
  %v430 = vunpack.c.h.b16 %v87
  %v431 = vunpack.c.l.b16 %v88
  %v432 = vunpack.c.h.b16 %v88
  %v433 = vunpack.c.l.b16 %v89
  %v434 = vunpack.c.h.b16 %v89
  %v435 = vunpack.c.l.b16 %v90
  %v436 = vunpack.c.h.b16 %v90
  %v437 = vunpack.c.l.b16 %v91
  %v438 = vunpack.c.h.b16 %v91
  %v439 = vunpack.c.l.b16 %v92
  %v440 = vunpack.c.h.b16 %v92
  %v441 = vunpack.c.l.b16 %v93
  %v442 = vunpack.c.h.b16 %v93
  %v443 = vunpack.c.l.b16 %v94
  %v444 = vunpack.c.h.b16 %v94
  %v445 = vunpack.c.l.b16 %v95
  %v446 = vunpack.c.h.b16 %v95
  %v447 = vunpack.c.l.b16 %v96
  %v448 = vunpack.c.h.b16 %v96
  %v449 = vunpack.c.l.b16 %v97
  %v450 = vunpack.c.h.b16 %v97
  %v451 = vunpack.c.l.b16 %v98
  %v452 = vunpack.c.h.b16 %v98
  %v453 = vunpack.c.l.b16 %v99
  %v454 = vunpack.c.h.b16 %v99
  %v455 = vunpack.c.l.b16 %v100
  %v456 = vunpack.c.h.b16 %v100
  %v457 = vunpack.c.l.b16 %v101
  %v458 = vunpack.c.h.b16 %v101
  %v459 = vunpack.c.l.b16 %v102
  %v460 = vunpack.c.h.b16 %v102
  %v461 = vunpack.c.l.b16 %v103
  %v462 = vunpack.c.h.b16 %v103
  %v463 = vunpack.c.l.b16 %v104
  %v464 = vunpack.c.h.b16 %v104
  %v465 = vunpack.c.l.b16 %v105
  %v466 = vunpack.c.h.b16 %v105
  %v467 = vunpack.c.l.b16 %v106
  %v468 = vunpack.c.h.b16 %v106
  %v469 = vunpack.c.l.b16 %v107
  %v470 = vunpack.c.h.b16 %v107
  %v471 = vunpack.c.l.b16 %v108
  %v472 = vunpack.c.h.b16 %v108
  %v473 = vunpack.c.l.b16 %v109
  %v474 = vunpack.c.h.b16 %v109
  %v475 = vunpack.c.l.b16 %v110
  %v476 = vunpack.c.h.b16 %v110
  %v477 = vunpack.c.l.b16 %v111
  %v478 = vunpack.c.h.b16 %v111
  %v479 = vunpack.c.l.b16 %v112
  %v480 = vunpack.c.h.b16 %v112
  %v481 = vunpack.c.l.b16 %v113
  %v482 = vunpack.c.h.b16 %v113
  %v483 = vunpack.c.l.b16 %v114
  %v484 = vunpack.c.h.b16 %v114
  %v485 = vunpack.c.l.b16 %v115
  %v486 = vunpack.c.h.b16 %v115
  %v487 = vunpack.c.l.b16 %v116
  %v488 = vunpack.c.h.b16 %v116
  %v489 = vunpack.c.l.b16 %v117
  %v490 = vunpack.c.h.b16 %v117
  %v491 = vunpack.c.l.b16 %v118
  %v492 = vunpack.c.h.b16 %v118
  %v493 = vunpack.c.l.b16 %v119
  %v494 = vunpack.c.h.b16 %v119
  %v495 = vunpack.c.l.b16 %v120
  %v496 = vunpack.c.h.b16 %v120
  %v497 = vunpack.c.l.b16 %v121
  %v498 = vunpack.c.h.b16 %v121
  %v499 = vunpack.c.l.b16 %v122
  %v500 = vunpack.c.h.b16 %v122
  %v501 = vunpack.c.l.b16 %v123
  %v502 = vunpack.c.h.b16 %v123
  %v503 = vunpack.c.l.b16 %v124
  %v504 = vunpack.c.h.b16 %v124
  %v505 = vunpack.c.l.b16 %v125
  %v506 = vunpack.c.h.b16 %v125
  %v507 = vunpack.c.l.b16 %v126
  %v508 = vunpack.c.h.b16 %v126
  %v509 = vunpack.c.l.b16 %v127
  %v510 = vunpack.c.h.b16 %v127
  %v511 = vunpack.c.l.b16 %v128
  %v512 = vunpack.c.h.b16 %v128
  %v513 = vunpack.c.l.b16 %v129
  %v514 = vunpack.c.h.b16 %v129
  %v515 = vunpack.c.l.b16 %v130
  %v516 = vunpack.c.h.b16 %v130
  %v517 = vunpack.c.l.b16 %v131
  %v518 = vunpack.c.h.b16 %v131
  %v519 = vunpack.c.l.b16 %v132
  %v520 = vunpack.c.h.b16 %v132
  %v521 = vunpack.c.l.b16 %v133
  %v522 = vunpack.c.h.b16 %v133
  %v523 = vunpack.c.l.b16 %v134
  %v524 = vunpack.c.h.b16 %v134
  %v525 = vunpack.c.l.b16 %v135
  %v526 = vunpack.c.h.b16 %v135
  %v527 = vunpack.c.l.b16 %v136
  %v528 = vunpack.c.h.b16 %v136
  %v529 = vunpack.c.l.b16 %v137
  %v530 = vunpack.c.h.b16 %v137
  %v531 = vunpack.c.l.b16 %v138
  %v532 = vunpack.c.h.b16 %v138
  %v533 = vunpack.c.l.b16 %v139
  %v534 = vunpack.c.h.b16 %v139
  %v535 = vunpack.c.l.b16 %v140
  %v536 = vunpack.c.h.b16 %v140
  %v537 = vunpack.c.l.b16 %v141
  %v538 = vunpack.c.h.b16 %v141
  %v539 = vunpack.c.l.b16 %v142
  %v540 = vunpack.c.h.b16 %v142
  %v541 = vunpack.c.l.b16 %v143
  %v542 = vunpack.c.h.b16 %v143
  %v543 = vunpack.c.l.b16 %v144
  %v544 = vunpack.c.h.b16 %v144
  %v545 = vunpack.c.l.b16 %v145
  %v546 = vunpack.c.h.b16 %v145
  %v547 = vunpack.c.l.b16 %v146
  %v548 = vunpack.c.h.b16 %v146
  %v549 = vunpack.c.l.b16 %v147
  %v550 = vunpack.c.h.b16 %v147
  %v551 = vunpack.c.l.b16 %v148
  %v552 = vunpack.c.h.b16 %v148
  %v553 = vpack.c.b16 %v301, %v297
  %v554 = vpack.c.b16 %v302, %v298
  %v555 = vpack.c.b16 %v303, %v299
  %v556 = vpack.c.b16 %v304, %v300
  %v557 = vpack.c.b16 %v309, %v305
  %v558 = vpack.c.b16 %v310, %v306
  %v559 = vpack.c.b16 %v311, %v307
  %v560 = vpack.c.b16 %v312, %v308
  %v561 = vpack.c.b16 %v317, %v313
  %v562 = vpack.c.b16 %v318, %v314
  %v563 = vpack.c.b16 %v319, %v315
  %v564 = vpack.c.b16 %v320, %v316
  %v565 = vpack.c.b16 %v325, %v321
  %v566 = vpack.c.b16 %v326, %v322
  %v567 = vpack.c.b16 %v327, %v323
  %v568 = vpack.c.b16 %v328, %v324
  %v569 = vpack.c.b16 %v333, %v329
  %v570 = vpack.c.b16 %v334, %v330
  %v571 = vpack.c.b16 %v335, %v331
  %v572 = vpack.c.b16 %v336, %v332
  %v573 = vpack.c.b16 %v341, %v337
  %v574 = vpack.c.b16 %v342, %v338
  %v575 = vpack.c.b16 %v343, %v339
  %v576 = vpack.c.b16 %v344, %v340
  %v577 = vpack.c.b16 %v349, %v345
  %v578 = vpack.c.b16 %v350, %v346
  %v579 = vpack.c.b16 %v351, %v347
  %v580 = vpack.c.b16 %v352, %v348
  %v581 = vpack.c.b16 %v357, %v353
  %v582 = vpack.c.b16 %v358, %v354
  %v583 = vpack.c.b16 %v359, %v355
  %v584 = vpack.c.b16 %v360, %v356
  %v585 = vpack.c.b16 %v365, %v361
  %v586 = vpack.c.b16 %v366, %v362
  %v587 = vpack.c.b16 %v367, %v363
  %v588 = vpack.c.b16 %v368, %v364
  %v589 = vpack.c.b16 %v373, %v369
  %v590 = vpack.c.b16 %v374, %v370
  %v591 = vpack.c.b16 %v375, %v371
  %v592 = vpack.c.b16 %v376, %v372
  %v593 = vpack.c.b16 %v381, %v377
  %v594 = vpack.c.b16 %v382, %v378
  %v595 = vpack.c.b16 %v383, %v379
  %v596 = vpack.c.b16 %v384, %v380
  %v597 = vpack.c.b16 %v389, %v385
  %v598 = vpack.c.b16 %v390, %v386
  %v599 = vpack.c.b16 %v391, %v387
  %v600 = vpack.c.b16 %v392, %v388
  %v601 = vpack.c.b16 %v397, %v393
  %v602 = vpack.c.b16 %v398, %v394
  %v603 = vpack.c.b16 %v399, %v395
  %v604 = vpack.c.b16 %v400, %v396
  %v605 = vpack.c.b16 %v405, %v401
  %v606 = vpack.c.b16 %v406, %v402
  %v607 = vpack.c.b16 %v407, %v403
  %v608 = vpack.c.b16 %v408, %v404
  %v609 = vpack.c.b16 %v413, %v409
  %v610 = vpack.c.b16 %v414, %v410
  %v611 = vpack.c.b16 %v415, %v411
  %v612 = vpack.c.b16 %v416, %v412
  %v613 = vpack.c.b16 %v421, %v417
  %v614 = vpack.c.b16 %v422, %v418
  %v615 = vpack.c.b16 %v423, %v419
  %v616 = vpack.c.b16 %v424, %v420
  %v617 = vpack.c.b16 %v429, %v425
  %v618 = vpack.c.b16 %v430, %v426
  %v619 = vpack.c.b16 %v431, %v427
  %v620 = vpack.c.b16 %v432, %v428
  %v621 = vpack.c.b16 %v437, %v433
  %v622 = vpack.c.b16 %v438, %v434
  %v623 = vpack.c.b16 %v439, %v435
  %v624 = vpack.c.b16 %v440, %v436
  %v625 = vpack.c.b16 %v445, %v441
  %v626 = vpack.c.b16 %v446, %v442
  %v627 = vpack.c.b16 %v447, %v443
  %v628 = vpack.c.b16 %v448, %v444
  %v629 = vpack.c.b16 %v453, %v449
  %v630 = vpack.c.b16 %v454, %v450
  %v631 = vpack.c.b16 %v455, %v451
  %v632 = vpack.c.b16 %v456, %v452
  %v633 = vpack.c.b16 %v461, %v457
  %v634 = vpack.c.b16 %v462, %v458
  %v635 = vpack.c.b16 %v463, %v459
  %v636 = vpack.c.b16 %v464, %v460
  %v637 = vpack.c.b16 %v469, %v465
  %v638 = vpack.c.b16 %v470, %v466
  %v639 = vpack.c.b16 %v471, %v467
  %v640 = vpack.c.b16 %v472, %v468
  %v641 = vpack.c.b16 %v477, %v473
  %v642 = vpack.c.b16 %v478, %v474
  %v643 = vpack.c.b16 %v479, %v475
  %v644 = vpack.c.b16 %v480, %v476
  %v645 = vpack.c.b16 %v485, %v481
  %v646 = vpack.c.b16 %v486, %v482
  %v647 = vpack.c.b16 %v487, %v483
  %v648 = vpack.c.b16 %v488, %v484
  %v649 = vpack.c.b16 %v493, %v489
  %v650 = vpack.c.b16 %v494, %v490
  %v651 = vpack.c.b16 %v495, %v491
  %v652 = vpack.c.b16 %v496, %v492
  %v653 = vpack.c.b16 %v501, %v497
  %v654 = vpack.c.b16 %v502, %v498
  %v655 = vpack.c.b16 %v503, %v499
  %v656 = vpack.c.b16 %v504, %v500
  %v657 = vpack.c.b16 %v509, %v505
  %v658 = vpack.c.b16 %v510, %v506
  %v659 = vpack.c.b16 %v511, %v507
  %v660 = vpack.c.b16 %v512, %v508
  %v661 = vpack.c.b16 %v517, %v513
  %v662 = vpack.c.b16 %v518, %v514
  %v663 = vpack.c.b16 %v519, %v515
  %v664 = vpack.c.b16 %v520, %v516
  %v665 = vpack.c.b16 %v525, %v521
  %v666 = vpack.c.b16 %v526, %v522
  %v667 = vpack.c.b16 %v527, %v523
  %v668 = vpack.c.b16 %v528, %v524
  %v669 = vpack.c.b16 %v533, %v529
  %v670 = vpack.c.b16 %v534, %v530
  %v671 = vpack.c.b16 %v535, %v531
  %v672 = vpack.c.b16 %v536, %v532
  %v673 = vpack.c.b16 %v541, %v537
  %v674 = vpack.c.b16 %v542, %v538
  %v675 = vpack.c.b16 %v543, %v539
  %v676 = vpack.c.b16 %v544, %v540
  %v677 = vpack.c.b16 %v549, %v545
  %v678 = vpack.c.b16 %v550, %v546
  %v679 = vpack.c.b16 %v551, %v547
  %v680 = vpack.c.b16 %v552, %v548
  %809 = vmatprep.subr.bf16.mxu0 %v554
  %810 = vmatpush1.bf16.msra.mxu0 %v553
  %811 = vmatprep.subr.bf16.mxu0 %v558
  %812 = vmatpush1.bf16.msra.mxu0 %v557
  %813 = vmatprep.subr.bf16.mxu0 %v562
  %814 = vmatpush1.bf16.msra.mxu0 %v561
  %815 = vmatprep.subr.bf16.mxu0 %v566
  %816 = vmatpush1.bf16.msra.mxu0 %v565
  %817 = vmatprep.subr.bf16.mxu0 %v570
  %818 = vmatpush1.bf16.msra.mxu0 %v569
  %819 = vmatprep.subr.bf16.mxu0 %v574
  %820 = vmatpush1.bf16.msra.mxu0 %v573
  %821 = vmatprep.subr.bf16.mxu0 %v578
  %822 = vmatpush1.bf16.msra.mxu0 %v577
  %823 = vmatprep.subr.bf16.mxu0 %v582
  %824 = vmatpush1.bf16.msra.mxu0 %v581
  %825 = vmatprep.subr.bf16.mxu0 %v586
  %826 = vmatpush1.bf16.msra.mxu0 %v585
  %827 = vmatprep.subr.bf16.mxu0 %v590
  %828 = vmatpush1.bf16.msra.mxu0 %v589
  %829 = vmatprep.subr.bf16.mxu0 %v594
  %830 = vmatpush1.bf16.msra.mxu0 %v593
  %831 = vmatprep.subr.bf16.mxu0 %v598
  %832 = vmatpush1.bf16.msra.mxu0 %v597
  %833 = vmatprep.subr.bf16.mxu0 %v602
  %834 = vmatpush1.bf16.msra.mxu0 %v601
  %835 = vmatprep.subr.bf16.mxu0 %v606
  %836 = vmatpush1.bf16.msra.mxu0 %v605
  %837 = vmatprep.subr.bf16.mxu0 %v610
  %838 = vmatpush1.bf16.msra.mxu0 %v609
  %839 = vmatprep.subr.bf16.mxu0 %v614
  %840 = vmatpush1.bf16.msra.mxu0 %v613
  %841 = vmatprep.mubr.bf16.mxu0 %v162
  %842 = vmatmul.mubr.bf16.gmra.mrb[0].mxu0 %v161
  %v843 = vpop.f32.mrb[0].mxu0
  %v844 = vadd.f32 0.0, %v843
  %v845 = vpop.f32.mrb[0].mxu0
  %v846 = vadd.f32 0.0, %v845
  %v847 = vpop.f32.mrb[0].mxu0
  %v848 = vadd.f32 0.0, %v847
  %v849 = vpop.f32.mrb[0].mxu0
  %v850 = vadd.f32 0.0, %v849
  %851 = vdwg.mxu0
  %852 = vmatprep.subr.bf16.mxu0 %v618
  %853 = vmatpush1.bf16.msra.mxu0 %v617
  %854 = vmatprep.subr.bf16.mxu0 %v622
  %855 = vmatpush1.bf16.msra.mxu0 %v621
  %856 = vmatprep.subr.bf16.mxu0 %v626
  %857 = vmatpush1.bf16.msra.mxu0 %v625
  %858 = vmatprep.subr.bf16.mxu0 %v630
  %859 = vmatpush1.bf16.msra.mxu0 %v629
  %860 = vmatprep.subr.bf16.mxu0 %v634
  %861 = vmatpush1.bf16.msra.mxu0 %v633
  %862 = vmatprep.subr.bf16.mxu0 %v638
  %863 = vmatpush1.bf16.msra.mxu0 %v637
  %864 = vmatprep.subr.bf16.mxu0 %v642
  %865 = vmatpush1.bf16.msra.mxu0 %v641
  %866 = vmatprep.subr.bf16.mxu0 %v646
  %867 = vmatpush1.bf16.msra.mxu0 %v645
  %868 = vmatprep.subr.bf16.mxu0 %v650
  %869 = vmatpush1.bf16.msra.mxu0 %v649
  %870 = vmatprep.subr.bf16.mxu0 %v654
  %871 = vmatpush1.bf16.msra.mxu0 %v653
  %872 = vmatprep.subr.bf16.mxu0 %v658
  %873 = vmatpush1.bf16.msra.mxu0 %v657
  %874 = vmatprep.subr.bf16.mxu0 %v662
  %875 = vmatpush1.bf16.msra.mxu0 %v661
  %876 = vmatprep.subr.bf16.mxu0 %v666
  %877 = vmatpush1.bf16.msra.mxu0 %v665
  %878 = vmatprep.subr.bf16.mxu0 %v670
  %879 = vmatpush1.bf16.msra.mxu0 %v669
  %880 = vmatprep.subr.bf16.mxu0 %v674
  %881 = vmatpush1.bf16.msra.mxu0 %v673
  %882 = vmatprep.subr.bf16.mxu0 %v678
  %883 = vmatpush1.bf16.msra.mxu0 %v677
  %884 = vmatprep.mubr.bf16.mxu0 %v164
  %885 = vmatmul.mubr.bf16.gmra.mrb[0].mxu0 %v163
  %v886 = vpop.f32.mrb[0].mxu0
  %v887 = vadd.f32 %v844, %v886
  %v888 = vpop.f32.mrb[0].mxu0
  %v889 = vadd.f32 %v846, %v888
  %v890 = vpop.f32.mrb[0].mxu0
  %v891 = vadd.f32 %v848, %v890
  %v892 = vpop.f32.mrb[0].mxu0
  %v893 = vadd.f32 %v850, %v892
  %894 = vdwg.mxu0
  %895 = vmatprep.subr.bf16.mxu0 %v556
  %896 = vmatpush1.bf16.msra.mxu0 %v555
  %897 = vmatprep.subr.bf16.mxu0 %v560
  %898 = vmatpush1.bf16.msra.mxu0 %v559
  %899 = vmatprep.subr.bf16.mxu0 %v564
  %900 = vmatpush1.bf16.msra.mxu0 %v563
  %901 = vmatprep.subr.bf16.mxu0 %v568
  %902 = vmatpush1.bf16.msra.mxu0 %v567
  %903 = vmatprep.subr.bf16.mxu0 %v572
  %904 = vmatpush1.bf16.msra.mxu0 %v571
  %905 = vmatprep.subr.bf16.mxu0 %v576
  %906 = vmatpush1.bf16.msra.mxu0 %v575
  %907 = vmatprep.subr.bf16.mxu0 %v580
  %908 = vmatpush1.bf16.msra.mxu0 %v579
  %909 = vmatprep.subr.bf16.mxu0 %v584
  %910 = vmatpush1.bf16.msra.mxu0 %v583
  %911 = vmatprep.subr.bf16.mxu0 %v588
  %912 = vmatpush1.bf16.msra.mxu0 %v587
  %913 = vmatprep.subr.bf16.mxu0 %v592
  %914 = vmatpush1.bf16.msra.mxu0 %v591
  %915 = vmatprep.subr.bf16.mxu0 %v596
  %916 = vmatpush1.bf16.msra.mxu0 %v595
  %917 = vmatprep.subr.bf16.mxu0 %v600
  %918 = vmatpush1.bf16.msra.mxu0 %v599
  %919 = vmatprep.subr.bf16.mxu0 %v604
  %920 = vmatpush1.bf16.msra.mxu0 %v603
  %921 = vmatprep.subr.bf16.mxu0 %v608
  %922 = vmatpush1.bf16.msra.mxu0 %v607
  %923 = vmatprep.subr.bf16.mxu0 %v612
  %924 = vmatpush1.bf16.msra.mxu0 %v611
  %925 = vmatprep.subr.bf16.mxu0 %v616
  %926 = vmatpush1.bf16.msra.mxu0 %v615
  %927 = vmatprep.mubr.bf16.mxu0 %v162
  %928 = vmatmul.mubr.bf16.gmra.mrb[0].mxu0 %v161
  %v929 = vpop.f32.mrb[0].mxu0
  %v930 = vadd.f32 0.0, %v929
  %v931 = vpop.f32.mrb[0].mxu0
  %v932 = vadd.f32 0.0, %v931
  %v933 = vpop.f32.mrb[0].mxu0
  %v934 = vadd.f32 0.0, %v933
  %v935 = vpop.f32.mrb[0].mxu0
  %v936 = vadd.f32 0.0, %v935
  %937 = vdwg.mxu0
  %938 = vmatprep.subr.bf16.mxu0 %v620
  %939 = vmatpush1.bf16.msra.mxu0 %v619
  %940 = vmatprep.subr.bf16.mxu0 %v624
  %941 = vmatpush1.bf16.msra.mxu0 %v623
  %942 = vmatprep.subr.bf16.mxu0 %v628
  %943 = vmatpush1.bf16.msra.mxu0 %v627
  %944 = vmatprep.subr.bf16.mxu0 %v632
  %945 = vmatpush1.bf16.msra.mxu0 %v631
  %946 = vmatprep.subr.bf16.mxu0 %v636
  %947 = vmatpush1.bf16.msra.mxu0 %v635
  %948 = vmatprep.subr.bf16.mxu0 %v640
  %949 = vmatpush1.bf16.msra.mxu0 %v639
  %950 = vmatprep.subr.bf16.mxu0 %v644
  %951 = vmatpush1.bf16.msra.mxu0 %v643
  %952 = vmatprep.subr.bf16.mxu0 %v648
  %953 = vmatpush1.bf16.msra.mxu0 %v647
  %954 = vmatprep.subr.bf16.mxu0 %v652
  %955 = vmatpush1.bf16.msra.mxu0 %v651
  %956 = vmatprep.subr.bf16.mxu0 %v656
  %957 = vmatpush1.bf16.msra.mxu0 %v655
  %958 = vmatprep.subr.bf16.mxu0 %v660
  %959 = vmatpush1.bf16.msra.mxu0 %v659
  %960 = vmatprep.subr.bf16.mxu0 %v664
  %961 = vmatpush1.bf16.msra.mxu0 %v663
  %962 = vmatprep.subr.bf16.mxu0 %v668
  %963 = vmatpush1.bf16.msra.mxu0 %v667
  %964 = vmatprep.subr.bf16.mxu0 %v672
  %965 = vmatpush1.bf16.msra.mxu0 %v671
  %966 = vmatprep.subr.bf16.mxu0 %v676
  %967 = vmatpush1.bf16.msra.mxu0 %v675
  %968 = vmatprep.subr.bf16.mxu0 %v680
  %969 = vmatpush1.bf16.msra.mxu0 %v679
  %970 = vmatprep.mubr.bf16.mxu0 %v164
  %971 = vmatmul.mubr.bf16.gmra.mrb[0].mxu0 %v163
  %v972 = vpop.f32.mrb[0].mxu0
  %v973 = vadd.f32 %v930, %v972
  %v974 = vpop.f32.mrb[0].mxu0
  %v975 = vadd.f32 %v932, %v974
  %v976 = vpop.f32.mrb[0].mxu0
  %v977 = vadd.f32 %v934, %v976
  %v978 = vpop.f32.mrb[0].mxu0
  %v979 = vadd.f32 %v936, %v978
  %980 = vdwg.mxu0
  %v981 = vld [vmem:[%s2] sm:$0xf]
  %v982 = vld [vmem:[%s3] sm:$0xf]
  %v983 = vadd.f32 %v887, %v891
  %v984 = vrot.slane %v983, 4
  %v985 = vadd.f32 %v983, %v984
  %v986 = vrot.slane %v985, 2
  %v987 = vadd.f32 %v985, %v986
  %v988 = vrot.slane %v987, 1
  %v989 = vadd.f32 %v987, %v988
  %v990 = vadd.f32 %v889, %v893
  %v991 = vrot.slane %v990, 4
  %v992 = vadd.f32 %v990, %v991
  %v993 = vrot.slane %v992, 2
  %v994 = vadd.f32 %v992, %v993
  %v995 = vrot.slane %v994, 1
  %v996 = vadd.f32 %v994, %v995
  %v997 = vadd.f32 %v973, %v977
  %v998 = vrot.slane %v997, 4
  %v999 = vadd.f32 %v997, %v998
  %v1000 = vrot.slane %v999, 2
  %v1001 = vadd.f32 %v999, %v1000
  %v1002 = vrot.slane %v1001, 1
  %v1003 = vadd.f32 %v1001, %v1002
  %v1004 = vadd.f32 %v975, %v979
  %v1005 = vrot.slane %v1004, 4
  %v1006 = vadd.f32 %v1004, %v1005
  %v1007 = vrot.slane %v1006, 2
  %v1008 = vadd.f32 %v1006, %v1007
  %v1009 = vrot.slane %v1008, 1
  %v1010 = vadd.f32 %v1008, %v1009
  %v1011 = vrcp.pop 2.0
  %v1012 = vmul.f32 %v989, %v1011
  %v1013 = vmul.f32 %v996, %v1011
  %v1014 = vmul.f32 %v1003, %v1011
  %v1015 = vmul.f32 %v1010, %v1011
  %v1016 = vmul.f32 %v887, %v887
  %v1017 = vmul.f32 %v889, %v889
  %v1018 = vmul.f32 %v973, %v973
  %v1019 = vmul.f32 %v975, %v975
  %v1020 = vmul.f32 %v891, %v891
  %v1021 = vmul.f32 %v893, %v893
  %v1022 = vmul.f32 %v977, %v977
  %v1023 = vmul.f32 %v979, %v979
  %v1024 = vadd.f32 %v1016, %v1020
  %v1025 = vrot.slane %v1024, 4
  %v1026 = vadd.f32 %v1024, %v1025
  %v1027 = vrot.slane %v1026, 2
  %v1028 = vadd.f32 %v1026, %v1027
  %v1029 = vrot.slane %v1028, 1
  %v1030 = vadd.f32 %v1028, %v1029
  %v1031 = vadd.f32 %v1017, %v1021
  %v1032 = vrot.slane %v1031, 4
  %v1033 = vadd.f32 %v1031, %v1032
  %v1034 = vrot.slane %v1033, 2
  %v1035 = vadd.f32 %v1033, %v1034
  %v1036 = vrot.slane %v1035, 1
  %v1037 = vadd.f32 %v1035, %v1036
  %v1038 = vadd.f32 %v1018, %v1022
  %v1039 = vrot.slane %v1038, 4
  %v1040 = vadd.f32 %v1038, %v1039
  %v1041 = vrot.slane %v1040, 2
  %v1042 = vadd.f32 %v1040, %v1041
  %v1043 = vrot.slane %v1042, 1
  %v1044 = vadd.f32 %v1042, %v1043
  %v1045 = vadd.f32 %v1019, %v1023
  %v1046 = vrot.slane %v1045, 4
  %v1047 = vadd.f32 %v1045, %v1046
  %v1048 = vrot.slane %v1047, 2
  %v1049 = vadd.f32 %v1047, %v1048
  %v1050 = vrot.slane %v1049, 1
  %v1051 = vadd.f32 %v1049, %v1050
  %v1052 = vmul.f32 %v1030, %v1011
  %v1053 = vmul.f32 %v1037, %v1011
  %v1054 = vmul.f32 %v1044, %v1011
  %v1055 = vmul.f32 %v1051, %v1011
  %v1056 = vmul.f32 %v1012, %v1012
  %v1057 = vmul.f32 %v1013, %v1013
  %v1058 = vmul.f32 %v1014, %v1014
  %v1059 = vmul.f32 %v1015, %v1015
  %v1060 = vsub.f32 %v1052, %v1056
  %v1061 = vsub.f32 %v1053, %v1057
  %v1062 = vsub.f32 %v1054, %v1058
  %v1063 = vsub.f32 %v1055, %v1059
  %v1064 = vmax.f32 %v1060, 0.0
  %v1065 = vmax.f32 %v1061, 0.0
  %v1066 = vmax.f32 %v1062, 0.0
  %v1067 = vmax.f32 %v1063, 0.0
  %v1068 = vsub.f32 %v887, %v1012
  %v1069 = vsub.f32 %v889, %v1013
  %v1070 = vsub.f32 %v973, %v1014
  %v1071 = vsub.f32 %v975, %v1015
  %v1072 = vsub.f32 %v891, %v1012
  %v1073 = vsub.f32 %v893, %v1013
  %v1074 = vsub.f32 %v977, %v1014
  %v1075 = vsub.f32 %v979, %v1015
  %v1076 = vadd.f32 %v1064, 1e-05
  %v1077 = vadd.f32 %v1065, 1e-05
  %v1078 = vadd.f32 %v1066, 1e-05
  %v1079 = vadd.f32 %v1067, 1e-05
  %v1080 = vrsqrt.pop %v1076
  %v1081 = vrsqrt.pop %v1077
  %v1082 = vrsqrt.pop %v1078
  %v1083 = vrsqrt.pop %v1079
  %v1084 = vmul.f32 %v1068, %v1080
  %v1085 = vmul.f32 %v1069, %v1081
  %v1086 = vmul.f32 %v1070, %v1082
  %v1087 = vmul.f32 %v1071, %v1083
  %v1088 = vmul.f32 %v1072, %v1080
  %v1089 = vmul.f32 %v1073, %v1081
  %v1090 = vmul.f32 %v1074, %v1082
  %v1091 = vmul.f32 %v1075, %v1083
  %v1093 = vlaneseq
  %v1094 = vshrl.u32 %v1093, 7
  %v1095 = vsub.s32 0, %v1094
  %v1096 = vrot.slane %v981, %v1095
  %v1097 = vlaneseq
  %v1098 = vshrl.u32 %v1097, 7
  %v1099 = vsub.s32 1, %v1098
  %v1100 = vrot.slane %v981, %v1099
  %v1101 = vlaneseq
  %v1102 = vshrl.u32 %v1101, 7
  %v1103 = vsub.s32 2, %v1102
  %v1104 = vrot.slane %v981, %v1103
  %v1105 = vlaneseq
  %v1106 = vshrl.u32 %v1105, 7
  %v1107 = vsub.s32 3, %v1106
  %v1108 = vrot.slane %v981, %v1107
  %v1113 = vmul.f32 %v1084, %v1096
  %v1114 = vmul.f32 %v1085, %v1100
  %v1115 = vmul.f32 %v1086, %v1104
  %v1116 = vmul.f32 %v1087, %v1108
  %v1117 = vmul.f32 %v1088, %v1096
  %v1118 = vmul.f32 %v1089, %v1100
  %v1119 = vmul.f32 %v1090, %v1104
  %v1120 = vmul.f32 %v1091, %v1108
  %v1122 = vlaneseq
  %v1123 = vshrl.u32 %v1122, 7
  %v1124 = vsub.s32 0, %v1123
  %v1125 = vrot.slane %v982, %v1124
  %v1126 = vlaneseq
  %v1127 = vshrl.u32 %v1126, 7
  %v1128 = vsub.s32 1, %v1127
  %v1129 = vrot.slane %v982, %v1128
  %v1130 = vlaneseq
  %v1131 = vshrl.u32 %v1130, 7
  %v1132 = vsub.s32 2, %v1131
  %v1133 = vrot.slane %v982, %v1132
  %v1134 = vlaneseq
  %v1135 = vshrl.u32 %v1134, 7
  %v1136 = vsub.s32 3, %v1135
  %v1137 = vrot.slane %v982, %v1136
  %v1142 = vadd.f32 %v1113, %v1125
  %v1143 = vadd.f32 %v1114, %v1129
  %v1144 = vadd.f32 %v1115, %v1133
  %v1145 = vadd.f32 %v1116, %v1137
  %v1146 = vadd.f32 %v1117, %v1125
  %v1147 = vadd.f32 %v1118, %v1129
  %v1148 = vadd.f32 %v1119, %v1133
  %v1149 = vadd.f32 %v1120, %v1137
  %v1150 = vmax.f32 %v1142, 0.0
  %v1151 = vmax.f32 %v1143, 0.0
  %v1152 = vmax.f32 %v1144, 0.0
  %v1153 = vmax.f32 %v1145, 0.0
  %v1154 = vmax.f32 %v1146, 0.0
  %v1155 = vmax.f32 %v1147, 0.0
  %v1156 = vmax.f32 %v1148, 0.0
  %v1157 = vmax.f32 %v1149, 0.0
  %v1158 = vpack.c.bf16 %v1154, %v1150
  %v1159 = vpack.c.bf16 %v1155, %v1151
  %v1160 = vpack.c.bf16 %v1156, %v1152
  %v1161 = vpack.c.bf16 %v1157, %v1153
  %v1166 = vunpack.c.l.b16 %v1158
  %v1167 = vunpack.c.l.b16 %v1159
  %v1168 = vunpack.c.l.b16 %v1160
  %v1169 = vunpack.c.l.b16 %v1161
  %v1170 = vunpack.c.h.b16 %v1158
  %v1171 = vunpack.c.h.b16 %v1159
  %v1172 = vunpack.c.h.b16 %v1160
  %v1173 = vunpack.c.h.b16 %v1161
  %v1174 = vpack.c.b16 %v1167, %v1166
  %v1175 = vpack.c.b16 %v1169, %v1168
  %v1176 = vpack.c.b16 %v1171, %v1170
  %v1177 = vpack.c.b16 %v1173, %v1172
  %1182 = vst [vmem:[%s4] sm:$0xff] %v1174
  %1183 = vst [vmem:[%s4 + $0x8] sm:$0xff] %v1175
  %1184 = vst [vmem:[%s4 + $0x10] sm:$0xff] %v1176
  %1185 = vst [vmem:[%s4 + $0x18] sm:$0xff] %v1177
  // Predicated region
  $region18: #{resnet18_forward.33} parent=0 // pred_check
    _
  $region19: #{resnet18_forward.33} parent=0 // pred_check_branch
    %1187 = sbr.rel (0) target = $region21
  $region20: #{resnet18_forward.33} parent=0 // pred_region
    _
  $region21: #{resnet18_forward.33} parent=0 // pred_fallthru
    _
  // Predicated region
  $region22: #{resnet18_forward.33} parent=0 // pred_check
    _
  $region23: #{resnet18_forward.33} parent=0 // pred_check_branch
    %1189 = sbr.rel (0) target = $region25
  $region24: #{resnet18_forward.33} parent=0 // pred_region
    _
  $region25: #{resnet18_forward.33} parent=0 // pred_fallthru
    _

// kernel: resnet18_forward.34
$region0: #{resnet18_forward.34}
  #allocation0 [shape = 'u32[]', space=smem, size = 0x4, offset = 0x4, fixed_abs, tag = 'smem constant byte address 0x4 - core index']
  #allocation1 [shape = 'u32[144,128]{1,0:T(1,128)}', space=vmem, size = 0x12000, scoped, tag = 'internal scratch']
  %s0 = inlined_call_operand.vmem [shape: bf16[16,512], index: 0, kind: input, shape index: {}]
  %s1 = inlined_call_operand.vmem [shape: bf16[512,512], index: 1, kind: input, shape index: {}]
  %s2 = inlined_call_operand.vmem [shape: f32[1,512], index: 2, kind: input, shape index: {}]
  %s3 = inlined_call_operand.vmem [shape: f32[1,512], index: 3, kind: input, shape index: {}]
  %s4 = inlined_call_operand.vmem [shape: bf16[16,512], index: 4, kind: input, shape index: {}]
  %s5 = inlined_call_operand.vmem [shape: bf16[16,512], index: 5, kind: output, shape index: {}]
  %s6 = sld [smem:[#allocation0]]
  $region30: #{resnet18_forward.34} parent=0
    _
  %s8 = ssub.s32 1, %s6
  %s9 = scalar_select 0, %s8, %s6
  // Predicated region
  $region2: #{resnet18_forward.34} parent=0 // pred_check
    _
  $region3: #{resnet18_forward.34} parent=0 // pred_check_branch
    %11 = sbr.rel (0) target = $region5
  $region4: #{resnet18_forward.34} parent=0 // pred_region
    _
  $region5: #{resnet18_forward.34} parent=0 // pred_fallthru
    _
  // Predicated region
  $region6: #{resnet18_forward.34} parent=0 // pred_check
    _
  $region7: #{resnet18_forward.34} parent=0 // pred_check_branch
    %13 = sbr.rel (0) target = $region9
  $region8: #{resnet18_forward.34} parent=0 // pred_region
    _
  $region9: #{resnet18_forward.34} parent=0 // pred_fallthru
    _
  // Predicated region
  $region10: #{resnet18_forward.34} parent=0 // pred_check
    _
  $region11: #{resnet18_forward.34} parent=0 // pred_check_branch
    %15 = sbr.rel (0) target = $region13
  $region12: #{resnet18_forward.34} parent=0 // pred_region
    _
  $region13: #{resnet18_forward.34} parent=0 // pred_fallthru
    _
  // Predicated region
  $region14: #{resnet18_forward.34} parent=0 // pred_check
    _
  $region15: #{resnet18_forward.34} parent=0 // pred_check_branch
    %17 = sbr.rel (0) target = $region17
  $region16: #{resnet18_forward.34} parent=0 // pred_region
    _
  $region17: #{resnet18_forward.34} parent=0 // pred_fallthru
    _
  // Predicated region
  $region18: #{resnet18_forward.34} parent=0 // pred_check
    _
  $region19: #{resnet18_forward.34} parent=0 // pred_check_branch
    %19 = sbr.rel (0) target = $region21
  $region20: #{resnet18_forward.34} parent=0 // pred_region
    _
  $region21: #{resnet18_forward.34} parent=0 // pred_fallthru
    _
  %v20 = vld [vmem:[%s0] sm:$0xff]
  %v21 = vld [vmem:[%s0 + $0x8] sm:$0xff]
  %v22 = vld [vmem:[%s0 + $0x10] sm:$0xff]
  %v23 = vld [vmem:[%s0 + $0x18] sm:$0xff]
  %v24 = vld [vmem:[%s1] sm:$0xff]
  %v25 = vld [vmem:[%s1 + $0x8] sm:$0xff]
  %v26 = vld [vmem:[%s1 + $0x10] sm:$0xff]
  %v27 = vld [vmem:[%s1 + $0x18] sm:$0xff]
  %v28 = vld [vmem:[%s1 + $0x20] sm:$0xff]
  %v29 = vld [vmem:[%s1 + $0x28] sm:$0xff]
  %v30 = vld [vmem:[%s1 + $0x30] sm:$0xff]
  %v31 = vld [vmem:[%s1 + $0x38] sm:$0xff]
  %v32 = vld [vmem:[%s1 + $0x40] sm:$0xff]
  %v33 = vld [vmem:[%s1 + $0x48] sm:$0xff]
  %v34 = vld [vmem:[%s1 + $0x50] sm:$0xff]
  %v35 = vld [vmem:[%s1 + $0x58] sm:$0xff]
  %v36 = vld [vmem:[%s1 + $0x60] sm:$0xff]
  %v37 = vld [vmem:[%s1 + $0x68] sm:$0xff]
  %v38 = vld [vmem:[%s1 + $0x70] sm:$0xff]
  %v39 = vld [vmem:[%s1 + $0x78] sm:$0xff]
  %v40 = vld [vmem:[%s1 + $0x80] sm:$0xff]
  %v41 = vld [vmem:[%s1 + $0x88] sm:$0xff]
  %v42 = vld [vmem:[%s1 + $0x90] sm:$0xff]
  %v43 = vld [vmem:[%s1 + $0x98] sm:$0xff]
  %v44 = vld [vmem:[%s1 + $0xa0] sm:$0xff]
  %v45 = vld [vmem:[%s1 + $0xa8] sm:$0xff]
  %v46 = vld [vmem:[%s1 + $0xb0] sm:$0xff]
  %v47 = vld [vmem:[%s1 + $0xb8] sm:$0xff]
  %v48 = vld [vmem:[%s1 + $0xc0] sm:$0xff]
  %v49 = vld [vmem:[%s1 + $0xc8] sm:$0xff]
  %v50 = vld [vmem:[%s1 + $0xd0] sm:$0xff]
  %v51 = vld [vmem:[%s1 + $0xd8] sm:$0xff]
  %v52 = vld [vmem:[%s1 + $0xe0] sm:$0xff]
  %v53 = vld [vmem:[%s1 + $0xe8] sm:$0xff]
  %v54 = vld [vmem:[%s1 + $0xf0] sm:$0xff]
  %v55 = vld [vmem:[%s1 + $0xf8] sm:$0xff]
  %v56 = vld [vmem:[%s1 + $0x100] sm:$0xff]
  %v57 = vld [vmem:[%s1 + $0x108] sm:$0xff]
  %v58 = vld [vmem:[%s1 + $0x110] sm:$0xff]
  %v59 = vld [vmem:[%s1 + $0x118] sm:$0xff]
  %v60 = vld [vmem:[%s1 + $0x120] sm:$0xff]
  %v61 = vld [vmem:[%s1 + $0x128] sm:$0xff]
  %v62 = vld [vmem:[%s1 + $0x130] sm:$0xff]
  %v63 = vld [vmem:[%s1 + $0x138] sm:$0xff]
  %v64 = vld [vmem:[%s1 + $0x140] sm:$0xff]
  %v65 = vld [vmem:[%s1 + $0x148] sm:$0xff]
  %v66 = vld [vmem:[%s1 + $0x150] sm:$0xff]
  %v67 = vld [vmem:[%s1 + $0x158] sm:$0xff]
  %v68 = vld [vmem:[%s1 + $0x160] sm:$0xff]
  %v69 = vld [vmem:[%s1 + $0x168] sm:$0xff]
  %v70 = vld [vmem:[%s1 + $0x170] sm:$0xff]
  %v71 = vld [vmem:[%s1 + $0x178] sm:$0xff]
  %v72 = vld [vmem:[%s1 + $0x180] sm:$0xff]
  %v73 = vld [vmem:[%s1 + $0x188] sm:$0xff]
  %v74 = vld [vmem:[%s1 + $0x190] sm:$0xff]
  %v75 = vld [vmem:[%s1 + $0x198] sm:$0xff]
  %v76 = vld [vmem:[%s1 + $0x1a0] sm:$0xff]
  %v77 = vld [vmem:[%s1 + $0x1a8] sm:$0xff]
  %v78 = vld [vmem:[%s1 + $0x1b0] sm:$0xff]
  %v79 = vld [vmem:[%s1 + $0x1b8] sm:$0xff]
  %v80 = vld [vmem:[%s1 + $0x1c0] sm:$0xff]
  %v81 = vld [vmem:[%s1 + $0x1c8] sm:$0xff]
  %v82 = vld [vmem:[%s1 + $0x1d0] sm:$0xff]
  %v83 = vld [vmem:[%s1 + $0x1d8] sm:$0xff]
  %v84 = vld [vmem:[%s1 + $0x1e0] sm:$0xff]
  %v85 = vld [vmem:[%s1 + $0x1e8] sm:$0xff]
  %v86 = vld [vmem:[%s1 + $0x1f0] sm:$0xff]
  %v87 = vld [vmem:[%s1 + $0x1f8] sm:$0xff]
  %v88 = vld [vmem:[%s1 + $0x200] sm:$0xff]
  %v89 = vld [vmem:[%s1 + $0x208] sm:$0xff]
  %v90 = vld [vmem:[%s1 + $0x210] sm:$0xff]
  %v91 = vld [vmem:[%s1 + $0x218] sm:$0xff]
  %v92 = vld [vmem:[%s1 + $0x220] sm:$0xff]
  %v93 = vld [vmem:[%s1 + $0x228] sm:$0xff]
  %v94 = vld [vmem:[%s1 + $0x230] sm:$0xff]
  %v95 = vld [vmem:[%s1 + $0x238] sm:$0xff]
  %v96 = vld [vmem:[%s1 + $0x240] sm:$0xff]
  %v97 = vld [vmem:[%s1 + $0x248] sm:$0xff]
  %v98 = vld [vmem:[%s1 + $0x250] sm:$0xff]
  %v99 = vld [vmem:[%s1 + $0x258] sm:$0xff]
  %v100 = vld [vmem:[%s1 + $0x260] sm:$0xff]
  %v101 = vld [vmem:[%s1 + $0x268] sm:$0xff]
  %v102 = vld [vmem:[%s1 + $0x270] sm:$0xff]
  %v103 = vld [vmem:[%s1 + $0x278] sm:$0xff]
  %v104 = vld [vmem:[%s1 + $0x280] sm:$0xff]
  %v105 = vld [vmem:[%s1 + $0x288] sm:$0xff]
  %v106 = vld [vmem:[%s1 + $0x290] sm:$0xff]
  %v107 = vld [vmem:[%s1 + $0x298] sm:$0xff]
  %v108 = vld [vmem:[%s1 + $0x2a0] sm:$0xff]
  %v109 = vld [vmem:[%s1 + $0x2a8] sm:$0xff]
  %v110 = vld [vmem:[%s1 + $0x2b0] sm:$0xff]
  %v111 = vld [vmem:[%s1 + $0x2b8] sm:$0xff]
  %v112 = vld [vmem:[%s1 + $0x2c0] sm:$0xff]
  %v113 = vld [vmem:[%s1 + $0x2c8] sm:$0xff]
  %v114 = vld [vmem:[%s1 + $0x2d0] sm:$0xff]
  %v115 = vld [vmem:[%s1 + $0x2d8] sm:$0xff]
  %v116 = vld [vmem:[%s1 + $0x2e0] sm:$0xff]
  %v117 = vld [vmem:[%s1 + $0x2e8] sm:$0xff]
  %v118 = vld [vmem:[%s1 + $0x2f0] sm:$0xff]
  %v119 = vld [vmem:[%s1 + $0x2f8] sm:$0xff]
  %v120 = vld [vmem:[%s1 + $0x300] sm:$0xff]
  %v121 = vld [vmem:[%s1 + $0x308] sm:$0xff]
  %v122 = vld [vmem:[%s1 + $0x310] sm:$0xff]
  %v123 = vld [vmem:[%s1 + $0x318] sm:$0xff]
  %v124 = vld [vmem:[%s1 + $0x320] sm:$0xff]
  %v125 = vld [vmem:[%s1 + $0x328] sm:$0xff]
  %v126 = vld [vmem:[%s1 + $0x330] sm:$0xff]
  %v127 = vld [vmem:[%s1 + $0x338] sm:$0xff]
  %v128 = vld [vmem:[%s1 + $0x340] sm:$0xff]
  %v129 = vld [vmem:[%s1 + $0x348] sm:$0xff]
  %v130 = vld [vmem:[%s1 + $0x350] sm:$0xff]
  %v131 = vld [vmem:[%s1 + $0x358] sm:$0xff]
  %v132 = vld [vmem:[%s1 + $0x360] sm:$0xff]
  %v133 = vld [vmem:[%s1 + $0x368] sm:$0xff]
  %v134 = vld [vmem:[%s1 + $0x370] sm:$0xff]
  %v135 = vld [vmem:[%s1 + $0x378] sm:$0xff]
  %v136 = vld [vmem:[%s1 + $0x380] sm:$0xff]
  %v137 = vld [vmem:[%s1 + $0x388] sm:$0xff]
  %v138 = vld [vmem:[%s1 + $0x390] sm:$0xff]
  %v139 = vld [vmem:[%s1 + $0x398] sm:$0xff]
  %v140 = vld [vmem:[%s1 + $0x3a0] sm:$0xff]
  %v141 = vld [vmem:[%s1 + $0x3a8] sm:$0xff]
  %v142 = vld [vmem:[%s1 + $0x3b0] sm:$0xff]
  %v143 = vld [vmem:[%s1 + $0x3b8] sm:$0xff]
  %v144 = vld [vmem:[%s1 + $0x3c0] sm:$0xff]
  %v145 = vld [vmem:[%s1 + $0x3c8] sm:$0xff]
  %v146 = vld [vmem:[%s1 + $0x3d0] sm:$0xff]
  %v147 = vld [vmem:[%s1 + $0x3d8] sm:$0xff]
  %v148 = vld [vmem:[%s1 + $0x3e0] sm:$0xff]
  %v149 = vld [vmem:[%s1 + $0x3e8] sm:$0xff]
  %v150 = vld [vmem:[%s1 + $0x3f0] sm:$0xff]
  %v151 = vld [vmem:[%s1 + $0x3f8] sm:$0xff]
  %v156 = vunpack.c.l.b16 %v20
  %v157 = vunpack.c.h.b16 %v20
  %v158 = vunpack.c.l.b16 %v21
  %v159 = vunpack.c.h.b16 %v21
  %v160 = vunpack.c.l.b16 %v22
  %v161 = vunpack.c.h.b16 %v22
  %v162 = vunpack.c.l.b16 %v23
  %v163 = vunpack.c.h.b16 %v23
  %v164 = vpack.c.b16 %v160, %v156
  %v165 = vpack.c.b16 %v161, %v157
  %v166 = vpack.c.b16 %v162, %v158
  %v167 = vpack.c.b16 %v163, %v159
  %v300 = vunpack.c.l.b16 %v24
  %v301 = vunpack.c.h.b16 %v24
  %v302 = vunpack.c.l.b16 %v25
  %v303 = vunpack.c.h.b16 %v25
  %v304 = vunpack.c.l.b16 %v26
  %v305 = vunpack.c.h.b16 %v26
  %v306 = vunpack.c.l.b16 %v27
  %v307 = vunpack.c.h.b16 %v27
  %v308 = vunpack.c.l.b16 %v28
  %v309 = vunpack.c.h.b16 %v28
  %v310 = vunpack.c.l.b16 %v29
  %v311 = vunpack.c.h.b16 %v29
  %v312 = vunpack.c.l.b16 %v30
  %v313 = vunpack.c.h.b16 %v30
  %v314 = vunpack.c.l.b16 %v31
  %v315 = vunpack.c.h.b16 %v31
  %v316 = vunpack.c.l.b16 %v32
  %v317 = vunpack.c.h.b16 %v32
  %v318 = vunpack.c.l.b16 %v33
  %v319 = vunpack.c.h.b16 %v33
  %v320 = vunpack.c.l.b16 %v34
  %v321 = vunpack.c.h.b16 %v34
  %v322 = vunpack.c.l.b16 %v35
  %v323 = vunpack.c.h.b16 %v35
  %v324 = vunpack.c.l.b16 %v36
  %v325 = vunpack.c.h.b16 %v36
  %v326 = vunpack.c.l.b16 %v37
  %v327 = vunpack.c.h.b16 %v37
  %v328 = vunpack.c.l.b16 %v38
  %v329 = vunpack.c.h.b16 %v38
  %v330 = vunpack.c.l.b16 %v39
  %v331 = vunpack.c.h.b16 %v39
  %v332 = vunpack.c.l.b16 %v40
  %v333 = vunpack.c.h.b16 %v40
  %v334 = vunpack.c.l.b16 %v41
  %v335 = vunpack.c.h.b16 %v41
  %v336 = vunpack.c.l.b16 %v42
  %v337 = vunpack.c.h.b16 %v42
  %v338 = vunpack.c.l.b16 %v43
  %v339 = vunpack.c.h.b16 %v43
  %v340 = vunpack.c.l.b16 %v44
  %v341 = vunpack.c.h.b16 %v44
  %v342 = vunpack.c.l.b16 %v45
  %v343 = vunpack.c.h.b16 %v45
  %v344 = vunpack.c.l.b16 %v46
  %v345 = vunpack.c.h.b16 %v46
  %v346 = vunpack.c.l.b16 %v47
  %v347 = vunpack.c.h.b16 %v47
  %v348 = vunpack.c.l.b16 %v48
  %v349 = vunpack.c.h.b16 %v48
  %v350 = vunpack.c.l.b16 %v49
  %v351 = vunpack.c.h.b16 %v49
  %v352 = vunpack.c.l.b16 %v50
  %v353 = vunpack.c.h.b16 %v50
  %v354 = vunpack.c.l.b16 %v51
  %v355 = vunpack.c.h.b16 %v51
  %v356 = vunpack.c.l.b16 %v52
  %v357 = vunpack.c.h.b16 %v52
  %v358 = vunpack.c.l.b16 %v53
  %v359 = vunpack.c.h.b16 %v53
  %v360 = vunpack.c.l.b16 %v54
  %v361 = vunpack.c.h.b16 %v54
  %v362 = vunpack.c.l.b16 %v55
  %v363 = vunpack.c.h.b16 %v55
  %v364 = vunpack.c.l.b16 %v56
  %v365 = vunpack.c.h.b16 %v56
  %v366 = vunpack.c.l.b16 %v57
  %v367 = vunpack.c.h.b16 %v57
  %v368 = vunpack.c.l.b16 %v58
  %v369 = vunpack.c.h.b16 %v58
  %v370 = vunpack.c.l.b16 %v59
  %v371 = vunpack.c.h.b16 %v59
  %v372 = vunpack.c.l.b16 %v60
  %v373 = vunpack.c.h.b16 %v60
  %v374 = vunpack.c.l.b16 %v61
  %v375 = vunpack.c.h.b16 %v61
  %v376 = vunpack.c.l.b16 %v62
  %v377 = vunpack.c.h.b16 %v62
  %v378 = vunpack.c.l.b16 %v63
  %v379 = vunpack.c.h.b16 %v63
  %v380 = vunpack.c.l.b16 %v64
  %v381 = vunpack.c.h.b16 %v64
  %v382 = vunpack.c.l.b16 %v65
  %v383 = vunpack.c.h.b16 %v65
  %v384 = vunpack.c.l.b16 %v66
  %v385 = vunpack.c.h.b16 %v66
  %v386 = vunpack.c.l.b16 %v67
  %v387 = vunpack.c.h.b16 %v67
  %v388 = vunpack.c.l.b16 %v68
  %v389 = vunpack.c.h.b16 %v68
  %v390 = vunpack.c.l.b16 %v69
  %v391 = vunpack.c.h.b16 %v69
  %v392 = vunpack.c.l.b16 %v70
  %v393 = vunpack.c.h.b16 %v70
  %v394 = vunpack.c.l.b16 %v71
  %v395 = vunpack.c.h.b16 %v71
  %v396 = vunpack.c.l.b16 %v72
  %v397 = vunpack.c.h.b16 %v72
  %v398 = vunpack.c.l.b16 %v73
  %v399 = vunpack.c.h.b16 %v73
  %v400 = vunpack.c.l.b16 %v74
  %v401 = vunpack.c.h.b16 %v74
  %v402 = vunpack.c.l.b16 %v75
  %v403 = vunpack.c.h.b16 %v75
  %v404 = vunpack.c.l.b16 %v76
  %v405 = vunpack.c.h.b16 %v76
  %v406 = vunpack.c.l.b16 %v77
  %v407 = vunpack.c.h.b16 %v77
  %v408 = vunpack.c.l.b16 %v78
  %v409 = vunpack.c.h.b16 %v78
  %v410 = vunpack.c.l.b16 %v79
  %v411 = vunpack.c.h.b16 %v79
  %v412 = vunpack.c.l.b16 %v80
  %v413 = vunpack.c.h.b16 %v80
  %v414 = vunpack.c.l.b16 %v81
  %v415 = vunpack.c.h.b16 %v81
  %v416 = vunpack.c.l.b16 %v82
  %v417 = vunpack.c.h.b16 %v82
  %v418 = vunpack.c.l.b16 %v83
  %v419 = vunpack.c.h.b16 %v83
  %v420 = vunpack.c.l.b16 %v84
  %v421 = vunpack.c.h.b16 %v84
  %v422 = vunpack.c.l.b16 %v85
  %v423 = vunpack.c.h.b16 %v85
  %v424 = vunpack.c.l.b16 %v86
  %v425 = vunpack.c.h.b16 %v86
  %v426 = vunpack.c.l.b16 %v87
  %v427 = vunpack.c.h.b16 %v87
  %v428 = vunpack.c.l.b16 %v88
  %v429 = vunpack.c.h.b16 %v88
  %v430 = vunpack.c.l.b16 %v89
  %v431 = vunpack.c.h.b16 %v89
  %v432 = vunpack.c.l.b16 %v90
  %v433 = vunpack.c.h.b16 %v90
  %v434 = vunpack.c.l.b16 %v91
  %v435 = vunpack.c.h.b16 %v91
  %v436 = vunpack.c.l.b16 %v92
  %v437 = vunpack.c.h.b16 %v92
  %v438 = vunpack.c.l.b16 %v93
  %v439 = vunpack.c.h.b16 %v93
  %v440 = vunpack.c.l.b16 %v94
  %v441 = vunpack.c.h.b16 %v94
  %v442 = vunpack.c.l.b16 %v95
  %v443 = vunpack.c.h.b16 %v95
  %v444 = vunpack.c.l.b16 %v96
  %v445 = vunpack.c.h.b16 %v96
  %v446 = vunpack.c.l.b16 %v97
  %v447 = vunpack.c.h.b16 %v97
  %v448 = vunpack.c.l.b16 %v98
  %v449 = vunpack.c.h.b16 %v98
  %v450 = vunpack.c.l.b16 %v99
  %v451 = vunpack.c.h.b16 %v99
  %v452 = vunpack.c.l.b16 %v100
  %v453 = vunpack.c.h.b16 %v100
  %v454 = vunpack.c.l.b16 %v101
  %v455 = vunpack.c.h.b16 %v101
  %v456 = vunpack.c.l.b16 %v102
  %v457 = vunpack.c.h.b16 %v102
  %v458 = vunpack.c.l.b16 %v103
  %v459 = vunpack.c.h.b16 %v103
  %v460 = vunpack.c.l.b16 %v104
  %v461 = vunpack.c.h.b16 %v104
  %v462 = vunpack.c.l.b16 %v105
  %v463 = vunpack.c.h.b16 %v105
  %v464 = vunpack.c.l.b16 %v106
  %v465 = vunpack.c.h.b16 %v106
  %v466 = vunpack.c.l.b16 %v107
  %v467 = vunpack.c.h.b16 %v107
  %v468 = vunpack.c.l.b16 %v108
  %v469 = vunpack.c.h.b16 %v108
  %v470 = vunpack.c.l.b16 %v109
  %v471 = vunpack.c.h.b16 %v109
  %v472 = vunpack.c.l.b16 %v110
  %v473 = vunpack.c.h.b16 %v110
  %v474 = vunpack.c.l.b16 %v111
  %v475 = vunpack.c.h.b16 %v111
  %v476 = vunpack.c.l.b16 %v112
  %v477 = vunpack.c.h.b16 %v112
  %v478 = vunpack.c.l.b16 %v113
  %v479 = vunpack.c.h.b16 %v113
  %v480 = vunpack.c.l.b16 %v114
  %v481 = vunpack.c.h.b16 %v114
  %v482 = vunpack.c.l.b16 %v115
  %v483 = vunpack.c.h.b16 %v115
  %v484 = vunpack.c.l.b16 %v116
  %v485 = vunpack.c.h.b16 %v116
  %v486 = vunpack.c.l.b16 %v117
  %v487 = vunpack.c.h.b16 %v117
  %v488 = vunpack.c.l.b16 %v118
  %v489 = vunpack.c.h.b16 %v118
  %v490 = vunpack.c.l.b16 %v119
  %v491 = vunpack.c.h.b16 %v119
  %v492 = vunpack.c.l.b16 %v120
  %v493 = vunpack.c.h.b16 %v120
  %v494 = vunpack.c.l.b16 %v121
  %v495 = vunpack.c.h.b16 %v121
  %v496 = vunpack.c.l.b16 %v122
  %v497 = vunpack.c.h.b16 %v122
  %v498 = vunpack.c.l.b16 %v123
  %v499 = vunpack.c.h.b16 %v123
  %v500 = vunpack.c.l.b16 %v124
  %v501 = vunpack.c.h.b16 %v124
  %v502 = vunpack.c.l.b16 %v125
  %v503 = vunpack.c.h.b16 %v125
  %v504 = vunpack.c.l.b16 %v126
  %v505 = vunpack.c.h.b16 %v126
  %v506 = vunpack.c.l.b16 %v127
  %v507 = vunpack.c.h.b16 %v127
  %v508 = vunpack.c.l.b16 %v128
  %v509 = vunpack.c.h.b16 %v128
  %v510 = vunpack.c.l.b16 %v129
  %v511 = vunpack.c.h.b16 %v129
  %v512 = vunpack.c.l.b16 %v130
  %v513 = vunpack.c.h.b16 %v130
  %v514 = vunpack.c.l.b16 %v131
  %v515 = vunpack.c.h.b16 %v131
  %v516 = vunpack.c.l.b16 %v132
  %v517 = vunpack.c.h.b16 %v132
  %v518 = vunpack.c.l.b16 %v133
  %v519 = vunpack.c.h.b16 %v133
  %v520 = vunpack.c.l.b16 %v134
  %v521 = vunpack.c.h.b16 %v134
  %v522 = vunpack.c.l.b16 %v135
  %v523 = vunpack.c.h.b16 %v135
  %v524 = vunpack.c.l.b16 %v136
  %v525 = vunpack.c.h.b16 %v136
  %v526 = vunpack.c.l.b16 %v137
  %v527 = vunpack.c.h.b16 %v137
  %v528 = vunpack.c.l.b16 %v138
  %v529 = vunpack.c.h.b16 %v138
  %v530 = vunpack.c.l.b16 %v139
  %v531 = vunpack.c.h.b16 %v139
  %v532 = vunpack.c.l.b16 %v140
  %v533 = vunpack.c.h.b16 %v140
  %v534 = vunpack.c.l.b16 %v141
  %v535 = vunpack.c.h.b16 %v141
  %v536 = vunpack.c.l.b16 %v142
  %v537 = vunpack.c.h.b16 %v142
  %v538 = vunpack.c.l.b16 %v143
  %v539 = vunpack.c.h.b16 %v143
  %v540 = vunpack.c.l.b16 %v144
  %v541 = vunpack.c.h.b16 %v144
  %v542 = vunpack.c.l.b16 %v145
  %v543 = vunpack.c.h.b16 %v145
  %v544 = vunpack.c.l.b16 %v146
  %v545 = vunpack.c.h.b16 %v146
  %v546 = vunpack.c.l.b16 %v147
  %v547 = vunpack.c.h.b16 %v147
  %v548 = vunpack.c.l.b16 %v148
  %v549 = vunpack.c.h.b16 %v148
  %v550 = vunpack.c.l.b16 %v149
  %v551 = vunpack.c.h.b16 %v149
  %v552 = vunpack.c.l.b16 %v150
  %v553 = vunpack.c.h.b16 %v150
  %v554 = vunpack.c.l.b16 %v151
  %v555 = vunpack.c.h.b16 %v151
  %v556 = vpack.c.b16 %v304, %v300
  %v557 = vpack.c.b16 %v305, %v301
  %v558 = vpack.c.b16 %v306, %v302
  %v559 = vpack.c.b16 %v307, %v303
  %v560 = vpack.c.b16 %v312, %v308
  %v561 = vpack.c.b16 %v313, %v309
  %v562 = vpack.c.b16 %v314, %v310
  %v563 = vpack.c.b16 %v315, %v311
  %v564 = vpack.c.b16 %v320, %v316
  %v565 = vpack.c.b16 %v321, %v317
  %v566 = vpack.c.b16 %v322, %v318
  %v567 = vpack.c.b16 %v323, %v319
  %v568 = vpack.c.b16 %v328, %v324
  %v569 = vpack.c.b16 %v329, %v325
  %v570 = vpack.c.b16 %v330, %v326
  %v571 = vpack.c.b16 %v331, %v327
  %v572 = vpack.c.b16 %v336, %v332
  %v573 = vpack.c.b16 %v337, %v333
  %v574 = vpack.c.b16 %v338, %v334
  %v575 = vpack.c.b16 %v339, %v335
  %v576 = vpack.c.b16 %v344, %v340
  %v577 = vpack.c.b16 %v345, %v341
  %v578 = vpack.c.b16 %v346, %v342
  %v579 = vpack.c.b16 %v347, %v343
  %v580 = vpack.c.b16 %v352, %v348
  %v581 = vpack.c.b16 %v353, %v349
  %v582 = vpack.c.b16 %v354, %v350
  %v583 = vpack.c.b16 %v355, %v351
  %v584 = vpack.c.b16 %v360, %v356
  %v585 = vpack.c.b16 %v361, %v357
  %v586 = vpack.c.b16 %v362, %v358
  %v587 = vpack.c.b16 %v363, %v359
  %v588 = vpack.c.b16 %v368, %v364
  %v589 = vpack.c.b16 %v369, %v365
  %v590 = vpack.c.b16 %v370, %v366
  %v591 = vpack.c.b16 %v371, %v367
  %v592 = vpack.c.b16 %v376, %v372
  %v593 = vpack.c.b16 %v377, %v373
  %v594 = vpack.c.b16 %v378, %v374
  %v595 = vpack.c.b16 %v379, %v375
  %v596 = vpack.c.b16 %v384, %v380
  %v597 = vpack.c.b16 %v385, %v381
  %v598 = vpack.c.b16 %v386, %v382
  %v599 = vpack.c.b16 %v387, %v383
  %v600 = vpack.c.b16 %v392, %v388
  %v601 = vpack.c.b16 %v393, %v389
  %v602 = vpack.c.b16 %v394, %v390
  %v603 = vpack.c.b16 %v395, %v391
  %v604 = vpack.c.b16 %v400, %v396
  %v605 = vpack.c.b16 %v401, %v397
  %v606 = vpack.c.b16 %v402, %v398
  %v607 = vpack.c.b16 %v403, %v399
  %v608 = vpack.c.b16 %v408, %v404
  %v609 = vpack.c.b16 %v409, %v405
  %v610 = vpack.c.b16 %v410, %v406
  %v611 = vpack.c.b16 %v411, %v407
  %v612 = vpack.c.b16 %v416, %v412
  %v613 = vpack.c.b16 %v417, %v413
  %v614 = vpack.c.b16 %v418, %v414
  %v615 = vpack.c.b16 %v419, %v415
  %v616 = vpack.c.b16 %v424, %v420
  %v617 = vpack.c.b16 %v425, %v421
  %v618 = vpack.c.b16 %v426, %v422
  %v619 = vpack.c.b16 %v427, %v423
  %v620 = vpack.c.b16 %v432, %v428
  %v621 = vpack.c.b16 %v433, %v429
  %v622 = vpack.c.b16 %v434, %v430
  %v623 = vpack.c.b16 %v435, %v431
  %v624 = vpack.c.b16 %v440, %v436
  %v625 = vpack.c.b16 %v441, %v437
  %v626 = vpack.c.b16 %v442, %v438
  %v627 = vpack.c.b16 %v443, %v439
  %v628 = vpack.c.b16 %v448, %v444
  %v629 = vpack.c.b16 %v449, %v445
  %v630 = vpack.c.b16 %v450, %v446
  %v631 = vpack.c.b16 %v451, %v447
  %v632 = vpack.c.b16 %v456, %v452
  %v633 = vpack.c.b16 %v457, %v453
  %v634 = vpack.c.b16 %v458, %v454
  %v635 = vpack.c.b16 %v459, %v455
  %v636 = vpack.c.b16 %v464, %v460
  %v637 = vpack.c.b16 %v465, %v461
  %v638 = vpack.c.b16 %v466, %v462
  %v639 = vpack.c.b16 %v467, %v463
  %v640 = vpack.c.b16 %v472, %v468
  %v641 = vpack.c.b16 %v473, %v469
  %v642 = vpack.c.b16 %v474, %v470
  %v643 = vpack.c.b16 %v475, %v471
  %v644 = vpack.c.b16 %v480, %v476
  %v645 = vpack.c.b16 %v481, %v477
  %v646 = vpack.c.b16 %v482, %v478
  %v647 = vpack.c.b16 %v483, %v479
  %v648 = vpack.c.b16 %v488, %v484
  %v649 = vpack.c.b16 %v489, %v485
  %v650 = vpack.c.b16 %v490, %v486
  %v651 = vpack.c.b16 %v491, %v487
  %v652 = vpack.c.b16 %v496, %v492
  %v653 = vpack.c.b16 %v497, %v493
  %v654 = vpack.c.b16 %v498, %v494
  %v655 = vpack.c.b16 %v499, %v495
  %v656 = vpack.c.b16 %v504, %v500
  %v657 = vpack.c.b16 %v505, %v501
  %v658 = vpack.c.b16 %v506, %v502
  %v659 = vpack.c.b16 %v507, %v503
  %v660 = vpack.c.b16 %v512, %v508
  %v661 = vpack.c.b16 %v513, %v509
  %v662 = vpack.c.b16 %v514, %v510
  %v663 = vpack.c.b16 %v515, %v511
  %v664 = vpack.c.b16 %v520, %v516
  %v665 = vpack.c.b16 %v521, %v517
  %v666 = vpack.c.b16 %v522, %v518
  %v667 = vpack.c.b16 %v523, %v519
  %v668 = vpack.c.b16 %v528, %v524
  %v669 = vpack.c.b16 %v529, %v525
  %v670 = vpack.c.b16 %v530, %v526
  %v671 = vpack.c.b16 %v531, %v527
  %v672 = vpack.c.b16 %v536, %v532
  %v673 = vpack.c.b16 %v537, %v533
  %v674 = vpack.c.b16 %v538, %v534
  %v675 = vpack.c.b16 %v539, %v535
  %v676 = vpack.c.b16 %v544, %v540
  %v677 = vpack.c.b16 %v545, %v541
  %v678 = vpack.c.b16 %v546, %v542
  %v679 = vpack.c.b16 %v547, %v543
  %v680 = vpack.c.b16 %v552, %v548
  %v681 = vpack.c.b16 %v553, %v549
  %v682 = vpack.c.b16 %v554, %v550
  %v683 = vpack.c.b16 %v555, %v551
  %812 = vmatprep.subr.bf16.mxu0 %v557
  %813 = vmatpush1.bf16.msra.mxu0 %v556
  %814 = vmatprep.subr.bf16.mxu0 %v561
  %815 = vmatpush1.bf16.msra.mxu0 %v560
  %816 = vmatprep.subr.bf16.mxu0 %v565
  %817 = vmatpush1.bf16.msra.mxu0 %v564
  %818 = vmatprep.subr.bf16.mxu0 %v569
  %819 = vmatpush1.bf16.msra.mxu0 %v568
  %820 = vmatprep.subr.bf16.mxu0 %v573
  %821 = vmatpush1.bf16.msra.mxu0 %v572
  %822 = vmatprep.subr.bf16.mxu0 %v577
  %823 = vmatpush1.bf16.msra.mxu0 %v576
  %824 = vmatprep.subr.bf16.mxu0 %v581
  %825 = vmatpush1.bf16.msra.mxu0 %v580
  %826 = vmatprep.subr.bf16.mxu0 %v585
  %827 = vmatpush1.bf16.msra.mxu0 %v584
  %828 = vmatprep.subr.bf16.mxu0 %v589
  %829 = vmatpush1.bf16.msra.mxu0 %v588
  %830 = vmatprep.subr.bf16.mxu0 %v593
  %831 = vmatpush1.bf16.msra.mxu0 %v592
  %832 = vmatprep.subr.bf16.mxu0 %v597
  %833 = vmatpush1.bf16.msra.mxu0 %v596
  %834 = vmatprep.subr.bf16.mxu0 %v601
  %835 = vmatpush1.bf16.msra.mxu0 %v600
  %836 = vmatprep.subr.bf16.mxu0 %v605
  %837 = vmatpush1.bf16.msra.mxu0 %v604
  %838 = vmatprep.subr.bf16.mxu0 %v609
  %839 = vmatpush1.bf16.msra.mxu0 %v608
  %840 = vmatprep.subr.bf16.mxu0 %v613
  %841 = vmatpush1.bf16.msra.mxu0 %v612
  %842 = vmatprep.subr.bf16.mxu0 %v617
  %843 = vmatpush1.bf16.msra.mxu0 %v616
  %844 = vmatprep.mubr.bf16.mxu0 %v165
  %845 = vmatmul.mubr.bf16.gmra.mrb[0].mxu0 %v164
  %v846 = vpop.f32.mrb[0].mxu0
  %v847 = vadd.f32 0.0, %v846
  %v848 = vpop.f32.mrb[0].mxu0
  %v849 = vadd.f32 0.0, %v848
  %v850 = vpop.f32.mrb[0].mxu0
  %v851 = vadd.f32 0.0, %v850
  %v852 = vpop.f32.mrb[0].mxu0
  %v853 = vadd.f32 0.0, %v852
  %854 = vdwg.mxu0
  %855 = vmatprep.subr.bf16.mxu0 %v621
  %856 = vmatpush1.bf16.msra.mxu0 %v620
  %857 = vmatprep.subr.bf16.mxu0 %v625
  %858 = vmatpush1.bf16.msra.mxu0 %v624
  %859 = vmatprep.subr.bf16.mxu0 %v629
  %860 = vmatpush1.bf16.msra.mxu0 %v628
  %861 = vmatprep.subr.bf16.mxu0 %v633
  %862 = vmatpush1.bf16.msra.mxu0 %v632
  %863 = vmatprep.subr.bf16.mxu0 %v637
  %864 = vmatpush1.bf16.msra.mxu0 %v636
  %865 = vmatprep.subr.bf16.mxu0 %v641
  %866 = vmatpush1.bf16.msra.mxu0 %v640
  %867 = vmatprep.subr.bf16.mxu0 %v645
  %868 = vmatpush1.bf16.msra.mxu0 %v644
  %869 = vmatprep.subr.bf16.mxu0 %v649
  %870 = vmatpush1.bf16.msra.mxu0 %v648
  %871 = vmatprep.subr.bf16.mxu0 %v653
  %872 = vmatpush1.bf16.msra.mxu0 %v652
  %873 = vmatprep.subr.bf16.mxu0 %v657
  %874 = vmatpush1.bf16.msra.mxu0 %v656
  %875 = vmatprep.subr.bf16.mxu0 %v661
  %876 = vmatpush1.bf16.msra.mxu0 %v660
  %877 = vmatprep.subr.bf16.mxu0 %v665
  %878 = vmatpush1.bf16.msra.mxu0 %v664
  %879 = vmatprep.subr.bf16.mxu0 %v669
  %880 = vmatpush1.bf16.msra.mxu0 %v668
  %881 = vmatprep.subr.bf16.mxu0 %v673
  %882 = vmatpush1.bf16.msra.mxu0 %v672
  %883 = vmatprep.subr.bf16.mxu0 %v677
  %884 = vmatpush1.bf16.msra.mxu0 %v676
  %885 = vmatprep.subr.bf16.mxu0 %v681
  %886 = vmatpush1.bf16.msra.mxu0 %v680
  %887 = vmatprep.mubr.bf16.mxu0 %v167
  %888 = vmatmul.mubr.bf16.gmra.mrb[0].mxu0 %v166
  %v889 = vpop.f32.mrb[0].mxu0
  %v890 = vadd.f32 %v847, %v889
  %v891 = vpop.f32.mrb[0].mxu0
  %v892 = vadd.f32 %v849, %v891
  %v893 = vpop.f32.mrb[0].mxu0
  %v894 = vadd.f32 %v851, %v893
  %v895 = vpop.f32.mrb[0].mxu0
  %v896 = vadd.f32 %v853, %v895
  %897 = vdwg.mxu0
  %898 = vmatprep.subr.bf16.mxu0 %v559
  %899 = vmatpush1.bf16.msra.mxu0 %v558
  %900 = vmatprep.subr.bf16.mxu0 %v563
  %901 = vmatpush1.bf16.msra.mxu0 %v562
  %902 = vmatprep.subr.bf16.mxu0 %v567
  %903 = vmatpush1.bf16.msra.mxu0 %v566
  %904 = vmatprep.subr.bf16.mxu0 %v571
  %905 = vmatpush1.bf16.msra.mxu0 %v570
  %906 = vmatprep.subr.bf16.mxu0 %v575
  %907 = vmatpush1.bf16.msra.mxu0 %v574
  %908 = vmatprep.subr.bf16.mxu0 %v579
  %909 = vmatpush1.bf16.msra.mxu0 %v578
  %910 = vmatprep.subr.bf16.mxu0 %v583
  %911 = vmatpush1.bf16.msra.mxu0 %v582
  %912 = vmatprep.subr.bf16.mxu0 %v587
  %913 = vmatpush1.bf16.msra.mxu0 %v586
  %914 = vmatprep.subr.bf16.mxu0 %v591
  %915 = vmatpush1.bf16.msra.mxu0 %v590
  %916 = vmatprep.subr.bf16.mxu0 %v595
  %917 = vmatpush1.bf16.msra.mxu0 %v594
  %918 = vmatprep.subr.bf16.mxu0 %v599
  %919 = vmatpush1.bf16.msra.mxu0 %v598
  %920 = vmatprep.subr.bf16.mxu0 %v603
  %921 = vmatpush1.bf16.msra.mxu0 %v602
  %922 = vmatprep.subr.bf16.mxu0 %v607
  %923 = vmatpush1.bf16.msra.mxu0 %v606
  %924 = vmatprep.subr.bf16.mxu0 %v611
  %925 = vmatpush1.bf16.msra.mxu0 %v610
  %926 = vmatprep.subr.bf16.mxu0 %v615
  %927 = vmatpush1.bf16.msra.mxu0 %v614
  %928 = vmatprep.subr.bf16.mxu0 %v619
  %929 = vmatpush1.bf16.msra.mxu0 %v618
  %930 = vmatprep.mubr.bf16.mxu0 %v165
  %931 = vmatmul.mubr.bf16.gmra.mrb[0].mxu0 %v164
  %v932 = vpop.f32.mrb[0].mxu0
  %v933 = vadd.f32 0.0, %v932
  %v934 = vpop.f32.mrb[0].mxu0
  %v935 = vadd.f32 0.0, %v934
  %v936 = vpop.f32.mrb[0].mxu0
  %v937 = vadd.f32 0.0, %v936
  %v938 = vpop.f32.mrb[0].mxu0
  %v939 = vadd.f32 0.0, %v938
  %940 = vdwg.mxu0
  %941 = vmatprep.subr.bf16.mxu0 %v623
  %942 = vmatpush1.bf16.msra.mxu0 %v622
  %943 = vmatprep.subr.bf16.mxu0 %v627
  %944 = vmatpush1.bf16.msra.mxu0 %v626
  %945 = vmatprep.subr.bf16.mxu0 %v631
  %946 = vmatpush1.bf16.msra.mxu0 %v630
  %947 = vmatprep.subr.bf16.mxu0 %v635
  %948 = vmatpush1.bf16.msra.mxu0 %v634
  %949 = vmatprep.subr.bf16.mxu0 %v639
  %950 = vmatpush1.bf16.msra.mxu0 %v638
  %951 = vmatprep.subr.bf16.mxu0 %v643
  %952 = vmatpush1.bf16.msra.mxu0 %v642
  %953 = vmatprep.subr.bf16.mxu0 %v647
  %954 = vmatpush1.bf16.msra.mxu0 %v646
  %955 = vmatprep.subr.bf16.mxu0 %v651
  %956 = vmatpush1.bf16.msra.mxu0 %v650
  %957 = vmatprep.subr.bf16.mxu0 %v655
  %958 = vmatpush1.bf16.msra.mxu0 %v654
  %959 = vmatprep.subr.bf16.mxu0 %v659
  %960 = vmatpush1.bf16.msra.mxu0 %v658
  %961 = vmatprep.subr.bf16.mxu0 %v663
  %962 = vmatpush1.bf16.msra.mxu0 %v662
  %963 = vmatprep.subr.bf16.mxu0 %v667
  %964 = vmatpush1.bf16.msra.mxu0 %v666
  %965 = vmatprep.subr.bf16.mxu0 %v671
  %966 = vmatpush1.bf16.msra.mxu0 %v670
  %967 = vmatprep.subr.bf16.mxu0 %v675
  %968 = vmatpush1.bf16.msra.mxu0 %v674
  %969 = vmatprep.subr.bf16.mxu0 %v679
  %970 = vmatpush1.bf16.msra.mxu0 %v678
  %971 = vmatprep.subr.bf16.mxu0 %v683
  %972 = vmatpush1.bf16.msra.mxu0 %v682
  %973 = vmatprep.mubr.bf16.mxu0 %v167
  %974 = vmatmul.mubr.bf16.gmra.mrb[0].mxu0 %v166
  %v975 = vpop.f32.mrb[0].mxu0
  %v976 = vadd.f32 %v933, %v975
  %v977 = vpop.f32.mrb[0].mxu0
  %v978 = vadd.f32 %v935, %v977
  %v979 = vpop.f32.mrb[0].mxu0
  %v980 = vadd.f32 %v937, %v979
  %v981 = vpop.f32.mrb[0].mxu0
  %v982 = vadd.f32 %v939, %v981
  %983 = vdwg.mxu0
  %v984 = vld [vmem:[%s2] sm:$0xf]
  %v985 = vld [vmem:[%s3] sm:$0xf]
  %v986 = vadd.f32 %v890, %v894
  %v987 = vrot.slane %v986, 4
  %v988 = vadd.f32 %v986, %v987
  %v989 = vrot.slane %v988, 2
  %v990 = vadd.f32 %v988, %v989
  %v991 = vrot.slane %v990, 1
  %v992 = vadd.f32 %v990, %v991
  %v993 = vadd.f32 %v892, %v896
  %v994 = vrot.slane %v993, 4
  %v995 = vadd.f32 %v993, %v994
  %v996 = vrot.slane %v995, 2
  %v997 = vadd.f32 %v995, %v996
  %v998 = vrot.slane %v997, 1
  %v999 = vadd.f32 %v997, %v998
  %v1000 = vadd.f32 %v976, %v980
  %v1001 = vrot.slane %v1000, 4
  %v1002 = vadd.f32 %v1000, %v1001
  %v1003 = vrot.slane %v1002, 2
  %v1004 = vadd.f32 %v1002, %v1003
  %v1005 = vrot.slane %v1004, 1
  %v1006 = vadd.f32 %v1004, %v1005
  %v1007 = vadd.f32 %v978, %v982
  %v1008 = vrot.slane %v1007, 4
  %v1009 = vadd.f32 %v1007, %v1008
  %v1010 = vrot.slane %v1009, 2
  %v1011 = vadd.f32 %v1009, %v1010
  %v1012 = vrot.slane %v1011, 1
  %v1013 = vadd.f32 %v1011, %v1012
  %v1014 = vrcp.pop 2.0
  %v1015 = vmul.f32 %v992, %v1014
  %v1016 = vmul.f32 %v999, %v1014
  %v1017 = vmul.f32 %v1006, %v1014
  %v1018 = vmul.f32 %v1013, %v1014
  %v1019 = vmul.f32 %v890, %v890
  %v1020 = vmul.f32 %v892, %v892
  %v1021 = vmul.f32 %v976, %v976
  %v1022 = vmul.f32 %v978, %v978
  %v1023 = vmul.f32 %v894, %v894
  %v1024 = vmul.f32 %v896, %v896
  %v1025 = vmul.f32 %v980, %v980
  %v1026 = vmul.f32 %v982, %v982
  %v1027 = vadd.f32 %v1019, %v1023
  %v1028 = vrot.slane %v1027, 4
  %v1029 = vadd.f32 %v1027, %v1028
  %v1030 = vrot.slane %v1029, 2
  %v1031 = vadd.f32 %v1029, %v1030
  %v1032 = vrot.slane %v1031, 1
  %v1033 = vadd.f32 %v1031, %v1032
  %v1034 = vadd.f32 %v1020, %v1024
  %v1035 = vrot.slane %v1034, 4
  %v1036 = vadd.f32 %v1034, %v1035
  %v1037 = vrot.slane %v1036, 2
  %v1038 = vadd.f32 %v1036, %v1037
  %v1039 = vrot.slane %v1038, 1
  %v1040 = vadd.f32 %v1038, %v1039
  %v1041 = vadd.f32 %v1021, %v1025
  %v1042 = vrot.slane %v1041, 4
  %v1043 = vadd.f32 %v1041, %v1042
  %v1044 = vrot.slane %v1043, 2
  %v1045 = vadd.f32 %v1043, %v1044
  %v1046 = vrot.slane %v1045, 1
  %v1047 = vadd.f32 %v1045, %v1046
  %v1048 = vadd.f32 %v1022, %v1026
  %v1049 = vrot.slane %v1048, 4
  %v1050 = vadd.f32 %v1048, %v1049
  %v1051 = vrot.slane %v1050, 2
  %v1052 = vadd.f32 %v1050, %v1051
  %v1053 = vrot.slane %v1052, 1
  %v1054 = vadd.f32 %v1052, %v1053
  %v1055 = vmul.f32 %v1033, %v1014
  %v1056 = vmul.f32 %v1040, %v1014
  %v1057 = vmul.f32 %v1047, %v1014
  %v1058 = vmul.f32 %v1054, %v1014
  %v1059 = vmul.f32 %v1015, %v1015
  %v1060 = vmul.f32 %v1016, %v1016
  %v1061 = vmul.f32 %v1017, %v1017
  %v1062 = vmul.f32 %v1018, %v1018
  %v1063 = vsub.f32 %v1055, %v1059
  %v1064 = vsub.f32 %v1056, %v1060
  %v1065 = vsub.f32 %v1057, %v1061
  %v1066 = vsub.f32 %v1058, %v1062
  %v1067 = vmax.f32 %v1063, 0.0
  %v1068 = vmax.f32 %v1064, 0.0
  %v1069 = vmax.f32 %v1065, 0.0
  %v1070 = vmax.f32 %v1066, 0.0
  %v1071 = vsub.f32 %v890, %v1015
  %v1072 = vsub.f32 %v892, %v1016
  %v1073 = vsub.f32 %v976, %v1017
  %v1074 = vsub.f32 %v978, %v1018
  %v1075 = vsub.f32 %v894, %v1015
  %v1076 = vsub.f32 %v896, %v1016
  %v1077 = vsub.f32 %v980, %v1017
  %v1078 = vsub.f32 %v982, %v1018
  %v1079 = vadd.f32 %v1067, 1e-05
  %v1080 = vadd.f32 %v1068, 1e-05
  %v1081 = vadd.f32 %v1069, 1e-05
  %v1082 = vadd.f32 %v1070, 1e-05
  %v1083 = vrsqrt.pop %v1079
  %v1084 = vrsqrt.pop %v1080
  %v1085 = vrsqrt.pop %v1081
  %v1086 = vrsqrt.pop %v1082
  %v1087 = vmul.f32 %v1071, %v1083
  %v1088 = vmul.f32 %v1072, %v1084
  %v1089 = vmul.f32 %v1073, %v1085
  %v1090 = vmul.f32 %v1074, %v1086
  %v1091 = vmul.f32 %v1075, %v1083
  %v1092 = vmul.f32 %v1076, %v1084
  %v1093 = vmul.f32 %v1077, %v1085
  %v1094 = vmul.f32 %v1078, %v1086
  %v1096 = vlaneseq
  %v1097 = vshrl.u32 %v1096, 7
  %v1098 = vsub.s32 0, %v1097
  %v1099 = vrot.slane %v984, %v1098
  %v1100 = vlaneseq
  %v1101 = vshrl.u32 %v1100, 7
  %v1102 = vsub.s32 1, %v1101
  %v1103 = vrot.slane %v984, %v1102
  %v1104 = vlaneseq
  %v1105 = vshrl.u32 %v1104, 7
  %v1106 = vsub.s32 2, %v1105
  %v1107 = vrot.slane %v984, %v1106
  %v1108 = vlaneseq
  %v1109 = vshrl.u32 %v1108, 7
  %v1110 = vsub.s32 3, %v1109
  %v1111 = vrot.slane %v984, %v1110
  %v1116 = vmul.f32 %v1087, %v1099
  %v1117 = vmul.f32 %v1088, %v1103
  %v1118 = vmul.f32 %v1089, %v1107
  %v1119 = vmul.f32 %v1090, %v1111
  %v1120 = vmul.f32 %v1091, %v1099
  %v1121 = vmul.f32 %v1092, %v1103
  %v1122 = vmul.f32 %v1093, %v1107
  %v1123 = vmul.f32 %v1094, %v1111
  %v1125 = vlaneseq
  %v1126 = vshrl.u32 %v1125, 7
  %v1127 = vsub.s32 0, %v1126
  %v1128 = vrot.slane %v985, %v1127
  %v1129 = vlaneseq
  %v1130 = vshrl.u32 %v1129, 7
  %v1131 = vsub.s32 1, %v1130
  %v1132 = vrot.slane %v985, %v1131
  %v1133 = vlaneseq
  %v1134 = vshrl.u32 %v1133, 7
  %v1135 = vsub.s32 2, %v1134
  %v1136 = vrot.slane %v985, %v1135
  %v1137 = vlaneseq
  %v1138 = vshrl.u32 %v1137, 7
  %v1139 = vsub.s32 3, %v1138
  %v1140 = vrot.slane %v985, %v1139
  %v1145 = vadd.f32 %v1116, %v1128
  %v1146 = vadd.f32 %v1117, %v1132
  %v1147 = vadd.f32 %v1118, %v1136
  %v1148 = vadd.f32 %v1119, %v1140
  %v1149 = vadd.f32 %v1120, %v1128
  %v1150 = vadd.f32 %v1121, %v1132
  %v1151 = vadd.f32 %v1122, %v1136
  %v1152 = vadd.f32 %v1123, %v1140
  %v1153 = vld [vmem:[%s4] sm:$0xff]
  %v1154 = vld [vmem:[%s4 + $0x8] sm:$0xff]
  %v1155 = vld [vmem:[%s4 + $0x10] sm:$0xff]
  %v1156 = vld [vmem:[%s4 + $0x18] sm:$0xff]
  %v1157 = vunpack.c.l.bf16 %v1153
  %v1158 = vunpack.c.h.bf16 %v1153
  %v1159 = vunpack.c.l.bf16 %v1154
  %v1160 = vunpack.c.h.bf16 %v1154
  %v1161 = vunpack.c.l.bf16 %v1155
  %v1162 = vunpack.c.h.bf16 %v1155
  %v1163 = vunpack.c.l.bf16 %v1156
  %v1164 = vunpack.c.h.bf16 %v1156
  %v1165 = vadd.f32 %v1145, %v1157
  %v1166 = vadd.f32 %v1146, %v1158
  %v1167 = vadd.f32 %v1147, %v1159
  %v1168 = vadd.f32 %v1148, %v1160
  %v1169 = vadd.f32 %v1149, %v1161
  %v1170 = vadd.f32 %v1150, %v1162
  %v1171 = vadd.f32 %v1151, %v1163
  %v1172 = vadd.f32 %v1152, %v1164
  %v1173 = vmax.f32 %v1165, 0.0
  %v1174 = vmax.f32 %v1166, 0.0
  %v1175 = vmax.f32 %v1167, 0.0
  %v1176 = vmax.f32 %v1168, 0.0
  %v1177 = vmax.f32 %v1169, 0.0
  %v1178 = vmax.f32 %v1170, 0.0
  %v1179 = vmax.f32 %v1171, 0.0
  %v1180 = vmax.f32 %v1172, 0.0
  %v1181 = vpack.c.bf16 %v1177, %v1173
  %v1182 = vpack.c.bf16 %v1178, %v1174
  %v1183 = vpack.c.bf16 %v1179, %v1175
  %v1184 = vpack.c.bf16 %v1180, %v1176
  %v1189 = vunpack.c.l.b16 %v1181
  %v1190 = vunpack.c.l.b16 %v1182
  %v1191 = vunpack.c.l.b16 %v1183
  %v1192 = vunpack.c.l.b16 %v1184
  %v1193 = vunpack.c.h.b16 %v1181
  %v1194 = vunpack.c.h.b16 %v1182
  %v1195 = vunpack.c.h.b16 %v1183
  %v1196 = vunpack.c.h.b16 %v1184
  %v1197 = vpack.c.b16 %v1190, %v1189
  %v1198 = vpack.c.b16 %v1192, %v1191
  %v1199 = vpack.c.b16 %v1194, %v1193
  %v1200 = vpack.c.b16 %v1196, %v1195
  %1205 = vst [vmem:[%s5] sm:$0xff] %v1197
  %1206 = vst [vmem:[%s5 + $0x8] sm:$0xff] %v1198
  %1207 = vst [vmem:[%s5 + $0x10] sm:$0xff] %v1199
  %1208 = vst [vmem:[%s5 + $0x18] sm:$0xff] %v1200
  // Predicated region
  $region22: #{resnet18_forward.34} parent=0 // pred_check
    _
  $region23: #{resnet18_forward.34} parent=0 // pred_check_branch
    %1210 = sbr.rel (0) target = $region25
  $region24: #{resnet18_forward.34} parent=0 // pred_region
    _
  $region25: #{resnet18_forward.34} parent=0 // pred_fallthru
    _
  // Predicated region
  $region26: #{resnet18_forward.34} parent=0 // pred_check
    _
  $region27: #{resnet18_forward.34} parent=0 // pred_check_branch
    %1212 = sbr.rel (0) target = $region29
  $region28: #{resnet18_forward.34} parent=0 // pred_region
    _
  $region29: #{resnet18_forward.34} parent=0 // pred_fallthru
    _

// kernel: resnet18_forward.32
$region0: #{resnet18_forward.32}
  #allocation0 [shape = 'u32[]', space=smem, size = 0x4, offset = 0x4, fixed_abs, tag = 'smem constant byte address 0x4 - core index']
  #allocation1 [shape = 'u32[144,128]{1,0:T(1,128)}', space=vmem, size = 0x12000, scoped, tag = 'internal scratch']
  %s0 = inlined_call_operand.vmem [shape: bf16[16,512], index: 0, kind: input, shape index: {}]
  %s1 = inlined_call_operand.vmem [shape: bf16[512,512], index: 1, kind: input, shape index: {}]
  %s2 = inlined_call_operand.vmem [shape: f32[1,512], index: 2, kind: input, shape index: {}]
  %s3 = inlined_call_operand.vmem [shape: f32[1,512], index: 3, kind: input, shape index: {}]
  %s4 = inlined_call_operand.vmem [shape: bf16[16,256], index: 4, kind: input, shape index: {}]
  %s5 = inlined_call_operand.vmem [shape: bf16[256,512], index: 5, kind: input, shape index: {}]
  %s6 = inlined_call_operand.vmem [shape: f32[1,512], index: 6, kind: input, shape index: {}]
  %s7 = inlined_call_operand.vmem [shape: f32[1,512], index: 7, kind: input, shape index: {}]
  %s8 = inlined_call_operand.vmem [shape: bf16[16,512], index: 8, kind: output, shape index: {}]
  %s9 = sld [smem:[#allocation0]]
  $region42: #{resnet18_forward.32} parent=0
    _
  %s11 = ssub.s32 1, %s9
  %s12 = scalar_select 0, %s11, %s9
  // Predicated region
  $region2: #{resnet18_forward.32} parent=0 // pred_check
    _
  $region3: #{resnet18_forward.32} parent=0 // pred_check_branch
    %14 = sbr.rel (0) target = $region5
  $region4: #{resnet18_forward.32} parent=0 // pred_region
    _
  $region5: #{resnet18_forward.32} parent=0 // pred_fallthru
    _
  // Predicated region
  $region6: #{resnet18_forward.32} parent=0 // pred_check
    _
  $region7: #{resnet18_forward.32} parent=0 // pred_check_branch
    %16 = sbr.rel (0) target = $region9
  $region8: #{resnet18_forward.32} parent=0 // pred_region
    _
  $region9: #{resnet18_forward.32} parent=0 // pred_fallthru
    _
  // Predicated region
  $region10: #{resnet18_forward.32} parent=0 // pred_check
    _
  $region11: #{resnet18_forward.32} parent=0 // pred_check_branch
    %18 = sbr.rel (0) target = $region13
  $region12: #{resnet18_forward.32} parent=0 // pred_region
    _
  $region13: #{resnet18_forward.32} parent=0 // pred_fallthru
    _
  // Predicated region
  $region14: #{resnet18_forward.32} parent=0 // pred_check
    _
  $region15: #{resnet18_forward.32} parent=0 // pred_check_branch
    %20 = sbr.rel (0) target = $region17
  $region16: #{resnet18_forward.32} parent=0 // pred_region
    _
  $region17: #{resnet18_forward.32} parent=0 // pred_fallthru
    _
  // Predicated region
  $region18: #{resnet18_forward.32} parent=0 // pred_check
    _
  $region19: #{resnet18_forward.32} parent=0 // pred_check_branch
    %22 = sbr.rel (0) target = $region21
  $region20: #{resnet18_forward.32} parent=0 // pred_region
    _
  $region21: #{resnet18_forward.32} parent=0 // pred_fallthru
    _
  // Predicated region
  $region22: #{resnet18_forward.32} parent=0 // pred_check
    _
  $region23: #{resnet18_forward.32} parent=0 // pred_check_branch
    %24 = sbr.rel (0) target = $region25
  $region24: #{resnet18_forward.32} parent=0 // pred_region
    _
  $region25: #{resnet18_forward.32} parent=0 // pred_fallthru
    _
  // Predicated region
  $region26: #{resnet18_forward.32} parent=0 // pred_check
    _
  $region27: #{resnet18_forward.32} parent=0 // pred_check_branch
    %26 = sbr.rel (0) target = $region29
  $region28: #{resnet18_forward.32} parent=0 // pred_region
    _
  $region29: #{resnet18_forward.32} parent=0 // pred_fallthru
    _
  // Predicated region
  $region30: #{resnet18_forward.32} parent=0 // pred_check
    _
  $region31: #{resnet18_forward.32} parent=0 // pred_check_branch
    %28 = sbr.rel (0) target = $region33
  $region32: #{resnet18_forward.32} parent=0 // pred_region
    _
  $region33: #{resnet18_forward.32} parent=0 // pred_fallthru
    _
  %v29 = vld [vmem:[%s0] sm:$0xff]
  %v30 = vld [vmem:[%s0 + $0x8] sm:$0xff]
  %v31 = vld [vmem:[%s0 + $0x10] sm:$0xff]
  %v32 = vld [vmem:[%s0 + $0x18] sm:$0xff]
  %v33 = vld [vmem:[%s1] sm:$0xff]
  %v34 = vld [vmem:[%s1 + $0x8] sm:$0xff]
  %v35 = vld [vmem:[%s1 + $0x10] sm:$0xff]
  %v36 = vld [vmem:[%s1 + $0x18] sm:$0xff]
  %v37 = vld [vmem:[%s1 + $0x20] sm:$0xff]
  %v38 = vld [vmem:[%s1 + $0x28] sm:$0xff]
  %v39 = vld [vmem:[%s1 + $0x30] sm:$0xff]
  %v40 = vld [vmem:[%s1 + $0x38] sm:$0xff]
  %v41 = vld [vmem:[%s1 + $0x40] sm:$0xff]
  %v42 = vld [vmem:[%s1 + $0x48] sm:$0xff]
  %v43 = vld [vmem:[%s1 + $0x50] sm:$0xff]
  %v44 = vld [vmem:[%s1 + $0x58] sm:$0xff]
  %v45 = vld [vmem:[%s1 + $0x60] sm:$0xff]
  %v46 = vld [vmem:[%s1 + $0x68] sm:$0xff]
  %v47 = vld [vmem:[%s1 + $0x70] sm:$0xff]
  %v48 = vld [vmem:[%s1 + $0x78] sm:$0xff]
  %v49 = vld [vmem:[%s1 + $0x80] sm:$0xff]
  %v50 = vld [vmem:[%s1 + $0x88] sm:$0xff]
  %v51 = vld [vmem:[%s1 + $0x90] sm:$0xff]
  %v52 = vld [vmem:[%s1 + $0x98] sm:$0xff]
  %v53 = vld [vmem:[%s1 + $0xa0] sm:$0xff]
  %v54 = vld [vmem:[%s1 + $0xa8] sm:$0xff]
  %v55 = vld [vmem:[%s1 + $0xb0] sm:$0xff]
  %v56 = vld [vmem:[%s1 + $0xb8] sm:$0xff]
  %v57 = vld [vmem:[%s1 + $0xc0] sm:$0xff]
  %v58 = vld [vmem:[%s1 + $0xc8] sm:$0xff]
  %v59 = vld [vmem:[%s1 + $0xd0] sm:$0xff]
  %v60 = vld [vmem:[%s1 + $0xd8] sm:$0xff]
  %v61 = vld [vmem:[%s1 + $0xe0] sm:$0xff]
  %v62 = vld [vmem:[%s1 + $0xe8] sm:$0xff]
  %v63 = vld [vmem:[%s1 + $0xf0] sm:$0xff]
  %v64 = vld [vmem:[%s1 + $0xf8] sm:$0xff]
  %v65 = vld [vmem:[%s1 + $0x100] sm:$0xff]
  %v66 = vld [vmem:[%s1 + $0x108] sm:$0xff]
  %v67 = vld [vmem:[%s1 + $0x110] sm:$0xff]
  %v68 = vld [vmem:[%s1 + $0x118] sm:$0xff]
  %v69 = vld [vmem:[%s1 + $0x120] sm:$0xff]
  %v70 = vld [vmem:[%s1 + $0x128] sm:$0xff]
  %v71 = vld [vmem:[%s1 + $0x130] sm:$0xff]
  %v72 = vld [vmem:[%s1 + $0x138] sm:$0xff]
  %v73 = vld [vmem:[%s1 + $0x140] sm:$0xff]
  %v74 = vld [vmem:[%s1 + $0x148] sm:$0xff]
  %v75 = vld [vmem:[%s1 + $0x150] sm:$0xff]
  %v76 = vld [vmem:[%s1 + $0x158] sm:$0xff]
  %v77 = vld [vmem:[%s1 + $0x160] sm:$0xff]
  %v78 = vld [vmem:[%s1 + $0x168] sm:$0xff]
  %v79 = vld [vmem:[%s1 + $0x170] sm:$0xff]
  %v80 = vld [vmem:[%s1 + $0x178] sm:$0xff]
  %v81 = vld [vmem:[%s1 + $0x180] sm:$0xff]
  %v82 = vld [vmem:[%s1 + $0x188] sm:$0xff]
  %v83 = vld [vmem:[%s1 + $0x190] sm:$0xff]
  %v84 = vld [vmem:[%s1 + $0x198] sm:$0xff]
  %v85 = vld [vmem:[%s1 + $0x1a0] sm:$0xff]
  %v86 = vld [vmem:[%s1 + $0x1a8] sm:$0xff]
  %v87 = vld [vmem:[%s1 + $0x1b0] sm:$0xff]
  %v88 = vld [vmem:[%s1 + $0x1b8] sm:$0xff]
  %v89 = vld [vmem:[%s1 + $0x1c0] sm:$0xff]
  %v90 = vld [vmem:[%s1 + $0x1c8] sm:$0xff]
  %v91 = vld [vmem:[%s1 + $0x1d0] sm:$0xff]
  %v92 = vld [vmem:[%s1 + $0x1d8] sm:$0xff]
  %v93 = vld [vmem:[%s1 + $0x1e0] sm:$0xff]
  %v94 = vld [vmem:[%s1 + $0x1e8] sm:$0xff]
  %v95 = vld [vmem:[%s1 + $0x1f0] sm:$0xff]
  %v96 = vld [vmem:[%s1 + $0x1f8] sm:$0xff]
  %v97 = vld [vmem:[%s1 + $0x200] sm:$0xff]
  %v98 = vld [vmem:[%s1 + $0x208] sm:$0xff]
  %v99 = vld [vmem:[%s1 + $0x210] sm:$0xff]
  %v100 = vld [vmem:[%s1 + $0x218] sm:$0xff]
  %v101 = vld [vmem:[%s1 + $0x220] sm:$0xff]
  %v102 = vld [vmem:[%s1 + $0x228] sm:$0xff]
  %v103 = vld [vmem:[%s1 + $0x230] sm:$0xff]
  %v104 = vld [vmem:[%s1 + $0x238] sm:$0xff]
  %v105 = vld [vmem:[%s1 + $0x240] sm:$0xff]
  %v106 = vld [vmem:[%s1 + $0x248] sm:$0xff]
  %v107 = vld [vmem:[%s1 + $0x250] sm:$0xff]
  %v108 = vld [vmem:[%s1 + $0x258] sm:$0xff]
  %v109 = vld [vmem:[%s1 + $0x260] sm:$0xff]
  %v110 = vld [vmem:[%s1 + $0x268] sm:$0xff]
  %v111 = vld [vmem:[%s1 + $0x270] sm:$0xff]
  %v112 = vld [vmem:[%s1 + $0x278] sm:$0xff]
  %v113 = vld [vmem:[%s1 + $0x280] sm:$0xff]
  %v114 = vld [vmem:[%s1 + $0x288] sm:$0xff]
  %v115 = vld [vmem:[%s1 + $0x290] sm:$0xff]
  %v116 = vld [vmem:[%s1 + $0x298] sm:$0xff]
  %v117 = vld [vmem:[%s1 + $0x2a0] sm:$0xff]
  %v118 = vld [vmem:[%s1 + $0x2a8] sm:$0xff]
  %v119 = vld [vmem:[%s1 + $0x2b0] sm:$0xff]
  %v120 = vld [vmem:[%s1 + $0x2b8] sm:$0xff]
  %v121 = vld [vmem:[%s1 + $0x2c0] sm:$0xff]
  %v122 = vld [vmem:[%s1 + $0x2c8] sm:$0xff]
  %v123 = vld [vmem:[%s1 + $0x2d0] sm:$0xff]
  %v124 = vld [vmem:[%s1 + $0x2d8] sm:$0xff]
  %v125 = vld [vmem:[%s1 + $0x2e0] sm:$0xff]
  %v126 = vld [vmem:[%s1 + $0x2e8] sm:$0xff]
  %v127 = vld [vmem:[%s1 + $0x2f0] sm:$0xff]
  %v128 = vld [vmem:[%s1 + $0x2f8] sm:$0xff]
  %v129 = vld [vmem:[%s1 + $0x300] sm:$0xff]
  %v130 = vld [vmem:[%s1 + $0x308] sm:$0xff]
  %v131 = vld [vmem:[%s1 + $0x310] sm:$0xff]
  %v132 = vld [vmem:[%s1 + $0x318] sm:$0xff]
  %v133 = vld [vmem:[%s1 + $0x320] sm:$0xff]
  %v134 = vld [vmem:[%s1 + $0x328] sm:$0xff]
  %v135 = vld [vmem:[%s1 + $0x330] sm:$0xff]
  %v136 = vld [vmem:[%s1 + $0x338] sm:$0xff]
  %v137 = vld [vmem:[%s1 + $0x340] sm:$0xff]
  %v138 = vld [vmem:[%s1 + $0x348] sm:$0xff]
  %v139 = vld [vmem:[%s1 + $0x350] sm:$0xff]
  %v140 = vld [vmem:[%s1 + $0x358] sm:$0xff]
  %v141 = vld [vmem:[%s1 + $0x360] sm:$0xff]
  %v142 = vld [vmem:[%s1 + $0x368] sm:$0xff]
  %v143 = vld [vmem:[%s1 + $0x370] sm:$0xff]
  %v144 = vld [vmem:[%s1 + $0x378] sm:$0xff]
  %v145 = vld [vmem:[%s1 + $0x380] sm:$0xff]
  %v146 = vld [vmem:[%s1 + $0x388] sm:$0xff]
  %v147 = vld [vmem:[%s1 + $0x390] sm:$0xff]
  %v148 = vld [vmem:[%s1 + $0x398] sm:$0xff]
  %v149 = vld [vmem:[%s1 + $0x3a0] sm:$0xff]
  %v150 = vld [vmem:[%s1 + $0x3a8] sm:$0xff]
  %v151 = vld [vmem:[%s1 + $0x3b0] sm:$0xff]
  %v152 = vld [vmem:[%s1 + $0x3b8] sm:$0xff]
  %v153 = vld [vmem:[%s1 + $0x3c0] sm:$0xff]
  %v154 = vld [vmem:[%s1 + $0x3c8] sm:$0xff]
  %v155 = vld [vmem:[%s1 + $0x3d0] sm:$0xff]
  %v156 = vld [vmem:[%s1 + $0x3d8] sm:$0xff]
  %v157 = vld [vmem:[%s1 + $0x3e0] sm:$0xff]
  %v158 = vld [vmem:[%s1 + $0x3e8] sm:$0xff]
  %v159 = vld [vmem:[%s1 + $0x3f0] sm:$0xff]
  %v160 = vld [vmem:[%s1 + $0x3f8] sm:$0xff]
  %v165 = vunpack.c.l.b16 %v29
  %v166 = vunpack.c.h.b16 %v29
  %v167 = vunpack.c.l.b16 %v30
  %v168 = vunpack.c.h.b16 %v30
  %v169 = vunpack.c.l.b16 %v31
  %v170 = vunpack.c.h.b16 %v31
  %v171 = vunpack.c.l.b16 %v32
  %v172 = vunpack.c.h.b16 %v32
  %v173 = vpack.c.b16 %v169, %v165
  %v174 = vpack.c.b16 %v170, %v166
  %v175 = vpack.c.b16 %v171, %v167
  %v176 = vpack.c.b16 %v172, %v168
  %v309 = vunpack.c.l.b16 %v33
  %v310 = vunpack.c.h.b16 %v33
  %v311 = vunpack.c.l.b16 %v34
  %v312 = vunpack.c.h.b16 %v34
  %v313 = vunpack.c.l.b16 %v35
  %v314 = vunpack.c.h.b16 %v35
  %v315 = vunpack.c.l.b16 %v36
  %v316 = vunpack.c.h.b16 %v36
  %v317 = vunpack.c.l.b16 %v37
  %v318 = vunpack.c.h.b16 %v37
  %v319 = vunpack.c.l.b16 %v38
  %v320 = vunpack.c.h.b16 %v38
  %v321 = vunpack.c.l.b16 %v39
  %v322 = vunpack.c.h.b16 %v39
  %v323 = vunpack.c.l.b16 %v40
  %v324 = vunpack.c.h.b16 %v40
  %v325 = vunpack.c.l.b16 %v41
  %v326 = vunpack.c.h.b16 %v41
  %v327 = vunpack.c.l.b16 %v42
  %v328 = vunpack.c.h.b16 %v42
  %v329 = vunpack.c.l.b16 %v43
  %v330 = vunpack.c.h.b16 %v43
  %v331 = vunpack.c.l.b16 %v44
  %v332 = vunpack.c.h.b16 %v44
  %v333 = vunpack.c.l.b16 %v45
  %v334 = vunpack.c.h.b16 %v45
  %v335 = vunpack.c.l.b16 %v46
  %v336 = vunpack.c.h.b16 %v46
  %v337 = vunpack.c.l.b16 %v47
  %v338 = vunpack.c.h.b16 %v47
  %v339 = vunpack.c.l.b16 %v48
  %v340 = vunpack.c.h.b16 %v48
  %v341 = vunpack.c.l.b16 %v49
  %v342 = vunpack.c.h.b16 %v49
  %v343 = vunpack.c.l.b16 %v50
  %v344 = vunpack.c.h.b16 %v50
  %v345 = vunpack.c.l.b16 %v51
  %v346 = vunpack.c.h.b16 %v51
  %v347 = vunpack.c.l.b16 %v52
  %v348 = vunpack.c.h.b16 %v52
  %v349 = vunpack.c.l.b16 %v53
  %v350 = vunpack.c.h.b16 %v53
  %v351 = vunpack.c.l.b16 %v54
  %v352 = vunpack.c.h.b16 %v54
  %v353 = vunpack.c.l.b16 %v55
  %v354 = vunpack.c.h.b16 %v55
  %v355 = vunpack.c.l.b16 %v56
  %v356 = vunpack.c.h.b16 %v56
  %v357 = vunpack.c.l.b16 %v57
  %v358 = vunpack.c.h.b16 %v57
  %v359 = vunpack.c.l.b16 %v58
  %v360 = vunpack.c.h.b16 %v58
  %v361 = vunpack.c.l.b16 %v59
  %v362 = vunpack.c.h.b16 %v59
  %v363 = vunpack.c.l.b16 %v60
  %v364 = vunpack.c.h.b16 %v60
  %v365 = vunpack.c.l.b16 %v61
  %v366 = vunpack.c.h.b16 %v61
  %v367 = vunpack.c.l.b16 %v62
  %v368 = vunpack.c.h.b16 %v62
  %v369 = vunpack.c.l.b16 %v63
  %v370 = vunpack.c.h.b16 %v63
  %v371 = vunpack.c.l.b16 %v64
  %v372 = vunpack.c.h.b16 %v64
  %v373 = vunpack.c.l.b16 %v65
  %v374 = vunpack.c.h.b16 %v65
  %v375 = vunpack.c.l.b16 %v66
  %v376 = vunpack.c.h.b16 %v66
  %v377 = vunpack.c.l.b16 %v67
  %v378 = vunpack.c.h.b16 %v67
  %v379 = vunpack.c.l.b16 %v68
  %v380 = vunpack.c.h.b16 %v68
  %v381 = vunpack.c.l.b16 %v69
  %v382 = vunpack.c.h.b16 %v69
  %v383 = vunpack.c.l.b16 %v70
  %v384 = vunpack.c.h.b16 %v70
  %v385 = vunpack.c.l.b16 %v71
  %v386 = vunpack.c.h.b16 %v71
  %v387 = vunpack.c.l.b16 %v72
  %v388 = vunpack.c.h.b16 %v72
  %v389 = vunpack.c.l.b16 %v73
  %v390 = vunpack.c.h.b16 %v73
  %v391 = vunpack.c.l.b16 %v74
  %v392 = vunpack.c.h.b16 %v74
  %v393 = vunpack.c.l.b16 %v75
  %v394 = vunpack.c.h.b16 %v75
  %v395 = vunpack.c.l.b16 %v76
  %v396 = vunpack.c.h.b16 %v76
  %v397 = vunpack.c.l.b16 %v77
  %v398 = vunpack.c.h.b16 %v77
  %v399 = vunpack.c.l.b16 %v78
  %v400 = vunpack.c.h.b16 %v78
  %v401 = vunpack.c.l.b16 %v79
  %v402 = vunpack.c.h.b16 %v79
  %v403 = vunpack.c.l.b16 %v80
  %v404 = vunpack.c.h.b16 %v80
  %v405 = vunpack.c.l.b16 %v81
  %v406 = vunpack.c.h.b16 %v81
  %v407 = vunpack.c.l.b16 %v82
  %v408 = vunpack.c.h.b16 %v82
  %v409 = vunpack.c.l.b16 %v83
  %v410 = vunpack.c.h.b16 %v83
  %v411 = vunpack.c.l.b16 %v84
  %v412 = vunpack.c.h.b16 %v84
  %v413 = vunpack.c.l.b16 %v85
  %v414 = vunpack.c.h.b16 %v85
  %v415 = vunpack.c.l.b16 %v86
  %v416 = vunpack.c.h.b16 %v86
  %v417 = vunpack.c.l.b16 %v87
  %v418 = vunpack.c.h.b16 %v87
  %v419 = vunpack.c.l.b16 %v88
  %v420 = vunpack.c.h.b16 %v88
  %v421 = vunpack.c.l.b16 %v89
  %v422 = vunpack.c.h.b16 %v89
  %v423 = vunpack.c.l.b16 %v90
  %v424 = vunpack.c.h.b16 %v90
  %v425 = vunpack.c.l.b16 %v91
  %v426 = vunpack.c.h.b16 %v91
  %v427 = vunpack.c.l.b16 %v92
  %v428 = vunpack.c.h.b16 %v92
  %v429 = vunpack.c.l.b16 %v93
  %v430 = vunpack.c.h.b16 %v93
  %v431 = vunpack.c.l.b16 %v94
  %v432 = vunpack.c.h.b16 %v94
  %v433 = vunpack.c.l.b16 %v95
  %v434 = vunpack.c.h.b16 %v95
  %v435 = vunpack.c.l.b16 %v96
  %v436 = vunpack.c.h.b16 %v96
  %v437 = vunpack.c.l.b16 %v97
  %v438 = vunpack.c.h.b16 %v97
  %v439 = vunpack.c.l.b16 %v98
  %v440 = vunpack.c.h.b16 %v98
  %v441 = vunpack.c.l.b16 %v99
  %v442 = vunpack.c.h.b16 %v99
  %v443 = vunpack.c.l.b16 %v100
  %v444 = vunpack.c.h.b16 %v100
  %v445 = vunpack.c.l.b16 %v101
  %v446 = vunpack.c.h.b16 %v101
  %v447 = vunpack.c.l.b16 %v102
  %v448 = vunpack.c.h.b16 %v102
  %v449 = vunpack.c.l.b16 %v103
  %v450 = vunpack.c.h.b16 %v103
  %v451 = vunpack.c.l.b16 %v104
  %v452 = vunpack.c.h.b16 %v104
  %v453 = vunpack.c.l.b16 %v105
  %v454 = vunpack.c.h.b16 %v105
  %v455 = vunpack.c.l.b16 %v106
  %v456 = vunpack.c.h.b16 %v106
  %v457 = vunpack.c.l.b16 %v107
  %v458 = vunpack.c.h.b16 %v107
  %v459 = vunpack.c.l.b16 %v108
  %v460 = vunpack.c.h.b16 %v108
  %v461 = vunpack.c.l.b16 %v109
  %v462 = vunpack.c.h.b16 %v109
  %v463 = vunpack.c.l.b16 %v110
  %v464 = vunpack.c.h.b16 %v110
  %v465 = vunpack.c.l.b16 %v111
  %v466 = vunpack.c.h.b16 %v111
  %v467 = vunpack.c.l.b16 %v112
  %v468 = vunpack.c.h.b16 %v112
  %v469 = vunpack.c.l.b16 %v113
  %v470 = vunpack.c.h.b16 %v113
  %v471 = vunpack.c.l.b16 %v114
  %v472 = vunpack.c.h.b16 %v114
  %v473 = vunpack.c.l.b16 %v115
  %v474 = vunpack.c.h.b16 %v115
  %v475 = vunpack.c.l.b16 %v116
  %v476 = vunpack.c.h.b16 %v116
  %v477 = vunpack.c.l.b16 %v117
  %v478 = vunpack.c.h.b16 %v117
  %v479 = vunpack.c.l.b16 %v118
  %v480 = vunpack.c.h.b16 %v118
  %v481 = vunpack.c.l.b16 %v119
  %v482 = vunpack.c.h.b16 %v119
  %v483 = vunpack.c.l.b16 %v120
  %v484 = vunpack.c.h.b16 %v120
  %v485 = vunpack.c.l.b16 %v121
  %v486 = vunpack.c.h.b16 %v121
  %v487 = vunpack.c.l.b16 %v122
  %v488 = vunpack.c.h.b16 %v122
  %v489 = vunpack.c.l.b16 %v123
  %v490 = vunpack.c.h.b16 %v123
  %v491 = vunpack.c.l.b16 %v124
  %v492 = vunpack.c.h.b16 %v124
  %v493 = vunpack.c.l.b16 %v125
  %v494 = vunpack.c.h.b16 %v125
  %v495 = vunpack.c.l.b16 %v126
  %v496 = vunpack.c.h.b16 %v126
  %v497 = vunpack.c.l.b16 %v127
  %v498 = vunpack.c.h.b16 %v127
  %v499 = vunpack.c.l.b16 %v128
  %v500 = vunpack.c.h.b16 %v128
  %v501 = vunpack.c.l.b16 %v129
  %v502 = vunpack.c.h.b16 %v129
  %v503 = vunpack.c.l.b16 %v130
  %v504 = vunpack.c.h.b16 %v130
  %v505 = vunpack.c.l.b16 %v131
  %v506 = vunpack.c.h.b16 %v131
  %v507 = vunpack.c.l.b16 %v132
  %v508 = vunpack.c.h.b16 %v132
  %v509 = vunpack.c.l.b16 %v133
  %v510 = vunpack.c.h.b16 %v133
  %v511 = vunpack.c.l.b16 %v134
  %v512 = vunpack.c.h.b16 %v134
  %v513 = vunpack.c.l.b16 %v135
  %v514 = vunpack.c.h.b16 %v135
  %v515 = vunpack.c.l.b16 %v136
  %v516 = vunpack.c.h.b16 %v136
  %v517 = vunpack.c.l.b16 %v137
  %v518 = vunpack.c.h.b16 %v137
  %v519 = vunpack.c.l.b16 %v138
  %v520 = vunpack.c.h.b16 %v138
  %v521 = vunpack.c.l.b16 %v139
  %v522 = vunpack.c.h.b16 %v139
  %v523 = vunpack.c.l.b16 %v140
  %v524 = vunpack.c.h.b16 %v140
  %v525 = vunpack.c.l.b16 %v141
  %v526 = vunpack.c.h.b16 %v141
  %v527 = vunpack.c.l.b16 %v142
  %v528 = vunpack.c.h.b16 %v142
  %v529 = vunpack.c.l.b16 %v143
  %v530 = vunpack.c.h.b16 %v143
  %v531 = vunpack.c.l.b16 %v144
  %v532 = vunpack.c.h.b16 %v144
  %v533 = vunpack.c.l.b16 %v145
  %v534 = vunpack.c.h.b16 %v145
  %v535 = vunpack.c.l.b16 %v146
  %v536 = vunpack.c.h.b16 %v146
  %v537 = vunpack.c.l.b16 %v147
  %v538 = vunpack.c.h.b16 %v147
  %v539 = vunpack.c.l.b16 %v148
  %v540 = vunpack.c.h.b16 %v148
  %v541 = vunpack.c.l.b16 %v149
  %v542 = vunpack.c.h.b16 %v149
  %v543 = vunpack.c.l.b16 %v150
  %v544 = vunpack.c.h.b16 %v150
  %v545 = vunpack.c.l.b16 %v151
  %v546 = vunpack.c.h.b16 %v151
  %v547 = vunpack.c.l.b16 %v152
  %v548 = vunpack.c.h.b16 %v152
  %v549 = vunpack.c.l.b16 %v153
  %v550 = vunpack.c.h.b16 %v153
  %v551 = vunpack.c.l.b16 %v154
  %v552 = vunpack.c.h.b16 %v154
  %v553 = vunpack.c.l.b16 %v155
  %v554 = vunpack.c.h.b16 %v155
  %v555 = vunpack.c.l.b16 %v156
  %v556 = vunpack.c.h.b16 %v156
  %v557 = vunpack.c.l.b16 %v157
  %v558 = vunpack.c.h.b16 %v157
  %v559 = vunpack.c.l.b16 %v158
  %v560 = vunpack.c.h.b16 %v158
  %v561 = vunpack.c.l.b16 %v159
  %v562 = vunpack.c.h.b16 %v159
  %v563 = vunpack.c.l.b16 %v160
  %v564 = vunpack.c.h.b16 %v160
  %v565 = vpack.c.b16 %v313, %v309
  %v566 = vpack.c.b16 %v314, %v310
  %v567 = vpack.c.b16 %v315, %v311
  %v568 = vpack.c.b16 %v316, %v312
  %v569 = vpack.c.b16 %v321, %v317
  %v570 = vpack.c.b16 %v322, %v318
  %v571 = vpack.c.b16 %v323, %v319
  %v572 = vpack.c.b16 %v324, %v320
  %v573 = vpack.c.b16 %v329, %v325
  %v574 = vpack.c.b16 %v330, %v326
  %v575 = vpack.c.b16 %v331, %v327
  %v576 = vpack.c.b16 %v332, %v328
  %v577 = vpack.c.b16 %v337, %v333
  %v578 = vpack.c.b16 %v338, %v334
  %v579 = vpack.c.b16 %v339, %v335
  %v580 = vpack.c.b16 %v340, %v336
  %v581 = vpack.c.b16 %v345, %v341
  %v582 = vpack.c.b16 %v346, %v342
  %v583 = vpack.c.b16 %v347, %v343
  %v584 = vpack.c.b16 %v348, %v344
  %v585 = vpack.c.b16 %v353, %v349
  %v586 = vpack.c.b16 %v354, %v350
  %v587 = vpack.c.b16 %v355, %v351
  %v588 = vpack.c.b16 %v356, %v352
  %v589 = vpack.c.b16 %v361, %v357
  %v590 = vpack.c.b16 %v362, %v358
  %v591 = vpack.c.b16 %v363, %v359
  %v592 = vpack.c.b16 %v364, %v360
  %v593 = vpack.c.b16 %v369, %v365
  %v594 = vpack.c.b16 %v370, %v366
  %v595 = vpack.c.b16 %v371, %v367
  %v596 = vpack.c.b16 %v372, %v368
  %v597 = vpack.c.b16 %v377, %v373
  %v598 = vpack.c.b16 %v378, %v374
  %v599 = vpack.c.b16 %v379, %v375
  %v600 = vpack.c.b16 %v380, %v376
  %v601 = vpack.c.b16 %v385, %v381
  %v602 = vpack.c.b16 %v386, %v382
  %v603 = vpack.c.b16 %v387, %v383
  %v604 = vpack.c.b16 %v388, %v384
  %v605 = vpack.c.b16 %v393, %v389
  %v606 = vpack.c.b16 %v394, %v390
  %v607 = vpack.c.b16 %v395, %v391
  %v608 = vpack.c.b16 %v396, %v392
  %v609 = vpack.c.b16 %v401, %v397
  %v610 = vpack.c.b16 %v402, %v398
  %v611 = vpack.c.b16 %v403, %v399
  %v612 = vpack.c.b16 %v404, %v400
  %v613 = vpack.c.b16 %v409, %v405
  %v614 = vpack.c.b16 %v410, %v406
  %v615 = vpack.c.b16 %v411, %v407
  %v616 = vpack.c.b16 %v412, %v408
  %v617 = vpack.c.b16 %v417, %v413
  %v618 = vpack.c.b16 %v418, %v414
  %v619 = vpack.c.b16 %v419, %v415
  %v620 = vpack.c.b16 %v420, %v416
  %v621 = vpack.c.b16 %v425, %v421
  %v622 = vpack.c.b16 %v426, %v422
  %v623 = vpack.c.b16 %v427, %v423
  %v624 = vpack.c.b16 %v428, %v424
  %v625 = vpack.c.b16 %v433, %v429
  %v626 = vpack.c.b16 %v434, %v430
  %v627 = vpack.c.b16 %v435, %v431
  %v628 = vpack.c.b16 %v436, %v432
  %v629 = vpack.c.b16 %v441, %v437
  %v630 = vpack.c.b16 %v442, %v438
  %v631 = vpack.c.b16 %v443, %v439
  %v632 = vpack.c.b16 %v444, %v440
  %v633 = vpack.c.b16 %v449, %v445
  %v634 = vpack.c.b16 %v450, %v446
  %v635 = vpack.c.b16 %v451, %v447
  %v636 = vpack.c.b16 %v452, %v448
  %v637 = vpack.c.b16 %v457, %v453
  %v638 = vpack.c.b16 %v458, %v454
  %v639 = vpack.c.b16 %v459, %v455
  %v640 = vpack.c.b16 %v460, %v456
  %v641 = vpack.c.b16 %v465, %v461
  %v642 = vpack.c.b16 %v466, %v462
  %v643 = vpack.c.b16 %v467, %v463
  %v644 = vpack.c.b16 %v468, %v464
  %v645 = vpack.c.b16 %v473, %v469
  %v646 = vpack.c.b16 %v474, %v470
  %v647 = vpack.c.b16 %v475, %v471
  %v648 = vpack.c.b16 %v476, %v472
  %v649 = vpack.c.b16 %v481, %v477
  %v650 = vpack.c.b16 %v482, %v478
  %v651 = vpack.c.b16 %v483, %v479
  %v652 = vpack.c.b16 %v484, %v480
  %v653 = vpack.c.b16 %v489, %v485
  %v654 = vpack.c.b16 %v490, %v486
  %v655 = vpack.c.b16 %v491, %v487
  %v656 = vpack.c.b16 %v492, %v488
  %v657 = vpack.c.b16 %v497, %v493
  %v658 = vpack.c.b16 %v498, %v494
  %v659 = vpack.c.b16 %v499, %v495
  %v660 = vpack.c.b16 %v500, %v496
  %v661 = vpack.c.b16 %v505, %v501
  %v662 = vpack.c.b16 %v506, %v502
  %v663 = vpack.c.b16 %v507, %v503
  %v664 = vpack.c.b16 %v508, %v504
  %v665 = vpack.c.b16 %v513, %v509
  %v666 = vpack.c.b16 %v514, %v510
  %v667 = vpack.c.b16 %v515, %v511
  %v668 = vpack.c.b16 %v516, %v512
  %v669 = vpack.c.b16 %v521, %v517
  %v670 = vpack.c.b16 %v522, %v518
  %v671 = vpack.c.b16 %v523, %v519
  %v672 = vpack.c.b16 %v524, %v520
  %v673 = vpack.c.b16 %v529, %v525
  %v674 = vpack.c.b16 %v530, %v526
  %v675 = vpack.c.b16 %v531, %v527
  %v676 = vpack.c.b16 %v532, %v528
  %v677 = vpack.c.b16 %v537, %v533
  %v678 = vpack.c.b16 %v538, %v534
  %v679 = vpack.c.b16 %v539, %v535
  %v680 = vpack.c.b16 %v540, %v536
  %v681 = vpack.c.b16 %v545, %v541
  %v682 = vpack.c.b16 %v546, %v542
  %v683 = vpack.c.b16 %v547, %v543
  %v684 = vpack.c.b16 %v548, %v544
  %v685 = vpack.c.b16 %v553, %v549
  %v686 = vpack.c.b16 %v554, %v550
  %v687 = vpack.c.b16 %v555, %v551
  %v688 = vpack.c.b16 %v556, %v552
  %v689 = vpack.c.b16 %v561, %v557
  %v690 = vpack.c.b16 %v562, %v558
  %v691 = vpack.c.b16 %v563, %v559
  %v692 = vpack.c.b16 %v564, %v560
  %821 = vmatprep.subr.bf16.mxu0 %v566
  %822 = vmatpush1.bf16.msra.mxu0 %v565
  %823 = vmatprep.subr.bf16.mxu0 %v570
  %824 = vmatpush1.bf16.msra.mxu0 %v569
  %825 = vmatprep.subr.bf16.mxu0 %v574
  %826 = vmatpush1.bf16.msra.mxu0 %v573
  %827 = vmatprep.subr.bf16.mxu0 %v578
  %828 = vmatpush1.bf16.msra.mxu0 %v577
  %829 = vmatprep.subr.bf16.mxu0 %v582
  %830 = vmatpush1.bf16.msra.mxu0 %v581
  %831 = vmatprep.subr.bf16.mxu0 %v586
  %832 = vmatpush1.bf16.msra.mxu0 %v585
  %833 = vmatprep.subr.bf16.mxu0 %v590
  %834 = vmatpush1.bf16.msra.mxu0 %v589
  %835 = vmatprep.subr.bf16.mxu0 %v594
  %836 = vmatpush1.bf16.msra.mxu0 %v593
  %837 = vmatprep.subr.bf16.mxu0 %v598
  %838 = vmatpush1.bf16.msra.mxu0 %v597
  %839 = vmatprep.subr.bf16.mxu0 %v602
  %840 = vmatpush1.bf16.msra.mxu0 %v601
  %841 = vmatprep.subr.bf16.mxu0 %v606
  %842 = vmatpush1.bf16.msra.mxu0 %v605
  %843 = vmatprep.subr.bf16.mxu0 %v610
  %844 = vmatpush1.bf16.msra.mxu0 %v609
  %845 = vmatprep.subr.bf16.mxu0 %v614
  %846 = vmatpush1.bf16.msra.mxu0 %v613
  %847 = vmatprep.subr.bf16.mxu0 %v618
  %848 = vmatpush1.bf16.msra.mxu0 %v617
  %849 = vmatprep.subr.bf16.mxu0 %v622
  %850 = vmatpush1.bf16.msra.mxu0 %v621
  %851 = vmatprep.subr.bf16.mxu0 %v626
  %852 = vmatpush1.bf16.msra.mxu0 %v625
  %853 = vmatprep.mubr.bf16.mxu0 %v174
  %854 = vmatmul.mubr.bf16.gmra.mrb[0].mxu0 %v173
  %v855 = vpop.f32.mrb[0].mxu0
  %v856 = vadd.f32 0.0, %v855
  %v857 = vpop.f32.mrb[0].mxu0
  %v858 = vadd.f32 0.0, %v857
  %v859 = vpop.f32.mrb[0].mxu0
  %v860 = vadd.f32 0.0, %v859
  %v861 = vpop.f32.mrb[0].mxu0
  %v862 = vadd.f32 0.0, %v861
  %863 = vdwg.mxu0
  %864 = vmatprep.subr.bf16.mxu0 %v630
  %865 = vmatpush1.bf16.msra.mxu0 %v629
  %866 = vmatprep.subr.bf16.mxu0 %v634
  %867 = vmatpush1.bf16.msra.mxu0 %v633
  %868 = vmatprep.subr.bf16.mxu0 %v638
  %869 = vmatpush1.bf16.msra.mxu0 %v637
  %870 = vmatprep.subr.bf16.mxu0 %v642
  %871 = vmatpush1.bf16.msra.mxu0 %v641
  %872 = vmatprep.subr.bf16.mxu0 %v646
  %873 = vmatpush1.bf16.msra.mxu0 %v645
  %874 = vmatprep.subr.bf16.mxu0 %v650
  %875 = vmatpush1.bf16.msra.mxu0 %v649
  %876 = vmatprep.subr.bf16.mxu0 %v654
  %877 = vmatpush1.bf16.msra.mxu0 %v653
  %878 = vmatprep.subr.bf16.mxu0 %v658
  %879 = vmatpush1.bf16.msra.mxu0 %v657
  %880 = vmatprep.subr.bf16.mxu0 %v662
  %881 = vmatpush1.bf16.msra.mxu0 %v661
  %882 = vmatprep.subr.bf16.mxu0 %v666
  %883 = vmatpush1.bf16.msra.mxu0 %v665
  %884 = vmatprep.subr.bf16.mxu0 %v670
  %885 = vmatpush1.bf16.msra.mxu0 %v669
  %886 = vmatprep.subr.bf16.mxu0 %v674
  %887 = vmatpush1.bf16.msra.mxu0 %v673
  %888 = vmatprep.subr.bf16.mxu0 %v678
  %889 = vmatpush1.bf16.msra.mxu0 %v677
  %890 = vmatprep.subr.bf16.mxu0 %v682
  %891 = vmatpush1.bf16.msra.mxu0 %v681
  %892 = vmatprep.subr.bf16.mxu0 %v686
  %893 = vmatpush1.bf16.msra.mxu0 %v685
  %894 = vmatprep.subr.bf16.mxu0 %v690
  %895 = vmatpush1.bf16.msra.mxu0 %v689
  %896 = vmatprep.mubr.bf16.mxu0 %v176
  %897 = vmatmul.mubr.bf16.gmra.mrb[0].mxu0 %v175
  %v898 = vpop.f32.mrb[0].mxu0
  %v899 = vadd.f32 %v856, %v898
  %v900 = vpop.f32.mrb[0].mxu0
  %v901 = vadd.f32 %v858, %v900
  %v902 = vpop.f32.mrb[0].mxu0
  %v903 = vadd.f32 %v860, %v902
  %v904 = vpop.f32.mrb[0].mxu0
  %v905 = vadd.f32 %v862, %v904
  %906 = vdwg.mxu0
  %907 = vmatprep.subr.bf16.mxu0 %v568
  %908 = vmatpush1.bf16.msra.mxu0 %v567
  %909 = vmatprep.subr.bf16.mxu0 %v572
  %910 = vmatpush1.bf16.msra.mxu0 %v571
  %911 = vmatprep.subr.bf16.mxu0 %v576
  %912 = vmatpush1.bf16.msra.mxu0 %v575
  %913 = vmatprep.subr.bf16.mxu0 %v580
  %914 = vmatpush1.bf16.msra.mxu0 %v579
  %915 = vmatprep.subr.bf16.mxu0 %v584
  %916 = vmatpush1.bf16.msra.mxu0 %v583
  %917 = vmatprep.subr.bf16.mxu0 %v588
  %918 = vmatpush1.bf16.msra.mxu0 %v587
  %919 = vmatprep.subr.bf16.mxu0 %v592
  %920 = vmatpush1.bf16.msra.mxu0 %v591
  %921 = vmatprep.subr.bf16.mxu0 %v596
  %922 = vmatpush1.bf16.msra.mxu0 %v595
  %923 = vmatprep.subr.bf16.mxu0 %v600
  %924 = vmatpush1.bf16.msra.mxu0 %v599
  %925 = vmatprep.subr.bf16.mxu0 %v604
  %926 = vmatpush1.bf16.msra.mxu0 %v603
  %927 = vmatprep.subr.bf16.mxu0 %v608
  %928 = vmatpush1.bf16.msra.mxu0 %v607
  %929 = vmatprep.subr.bf16.mxu0 %v612
  %930 = vmatpush1.bf16.msra.mxu0 %v611
  %931 = vmatprep.subr.bf16.mxu0 %v616
  %932 = vmatpush1.bf16.msra.mxu0 %v615
  %933 = vmatprep.subr.bf16.mxu0 %v620
  %934 = vmatpush1.bf16.msra.mxu0 %v619
  %935 = vmatprep.subr.bf16.mxu0 %v624
  %936 = vmatpush1.bf16.msra.mxu0 %v623
  %937 = vmatprep.subr.bf16.mxu0 %v628
  %938 = vmatpush1.bf16.msra.mxu0 %v627
  %939 = vmatprep.mubr.bf16.mxu0 %v174
  %940 = vmatmul.mubr.bf16.gmra.mrb[0].mxu0 %v173
  %v941 = vpop.f32.mrb[0].mxu0
  %v942 = vadd.f32 0.0, %v941
  %v943 = vpop.f32.mrb[0].mxu0
  %v944 = vadd.f32 0.0, %v943
  %v945 = vpop.f32.mrb[0].mxu0
  %v946 = vadd.f32 0.0, %v945
  %v947 = vpop.f32.mrb[0].mxu0
  %v948 = vadd.f32 0.0, %v947
  %949 = vdwg.mxu0
  %950 = vmatprep.subr.bf16.mxu0 %v632
  %951 = vmatpush1.bf16.msra.mxu0 %v631
  %952 = vmatprep.subr.bf16.mxu0 %v636
  %953 = vmatpush1.bf16.msra.mxu0 %v635
  %954 = vmatprep.subr.bf16.mxu0 %v640
  %955 = vmatpush1.bf16.msra.mxu0 %v639
  %956 = vmatprep.subr.bf16.mxu0 %v644
  %957 = vmatpush1.bf16.msra.mxu0 %v643
  %958 = vmatprep.subr.bf16.mxu0 %v648
  %959 = vmatpush1.bf16.msra.mxu0 %v647
  %960 = vmatprep.subr.bf16.mxu0 %v652
  %961 = vmatpush1.bf16.msra.mxu0 %v651
  %962 = vmatprep.subr.bf16.mxu0 %v656
  %963 = vmatpush1.bf16.msra.mxu0 %v655
  %964 = vmatprep.subr.bf16.mxu0 %v660
  %965 = vmatpush1.bf16.msra.mxu0 %v659
  %966 = vmatprep.subr.bf16.mxu0 %v664
  %967 = vmatpush1.bf16.msra.mxu0 %v663
  %968 = vmatprep.subr.bf16.mxu0 %v668
  %969 = vmatpush1.bf16.msra.mxu0 %v667
  %970 = vmatprep.subr.bf16.mxu0 %v672
  %971 = vmatpush1.bf16.msra.mxu0 %v671
  %972 = vmatprep.subr.bf16.mxu0 %v676
  %973 = vmatpush1.bf16.msra.mxu0 %v675
  %974 = vmatprep.subr.bf16.mxu0 %v680
  %975 = vmatpush1.bf16.msra.mxu0 %v679
  %976 = vmatprep.subr.bf16.mxu0 %v684
  %977 = vmatpush1.bf16.msra.mxu0 %v683
  %978 = vmatprep.subr.bf16.mxu0 %v688
  %979 = vmatpush1.bf16.msra.mxu0 %v687
  %980 = vmatprep.subr.bf16.mxu0 %v692
  %981 = vmatpush1.bf16.msra.mxu0 %v691
  %982 = vmatprep.mubr.bf16.mxu0 %v176
  %983 = vmatmul.mubr.bf16.gmra.mrb[0].mxu0 %v175
  %v984 = vpop.f32.mrb[0].mxu0
  %v985 = vadd.f32 %v942, %v984
  %v986 = vpop.f32.mrb[0].mxu0
  %v987 = vadd.f32 %v944, %v986
  %v988 = vpop.f32.mrb[0].mxu0
  %v989 = vadd.f32 %v946, %v988
  %v990 = vpop.f32.mrb[0].mxu0
  %v991 = vadd.f32 %v948, %v990
  %992 = vdwg.mxu0
  %v993 = vld [vmem:[%s2] sm:$0xf]
  %v994 = vld [vmem:[%s3] sm:$0xf]
  %v995 = vadd.f32 %v899, %v903
  %v996 = vrot.slane %v995, 4
  %v997 = vadd.f32 %v995, %v996
  %v998 = vrot.slane %v997, 2
  %v999 = vadd.f32 %v997, %v998
  %v1000 = vrot.slane %v999, 1
  %v1001 = vadd.f32 %v999, %v1000
  %v1002 = vadd.f32 %v901, %v905
  %v1003 = vrot.slane %v1002, 4
  %v1004 = vadd.f32 %v1002, %v1003
  %v1005 = vrot.slane %v1004, 2
  %v1006 = vadd.f32 %v1004, %v1005
  %v1007 = vrot.slane %v1006, 1
  %v1008 = vadd.f32 %v1006, %v1007
  %v1009 = vadd.f32 %v985, %v989
  %v1010 = vrot.slane %v1009, 4
  %v1011 = vadd.f32 %v1009, %v1010
  %v1012 = vrot.slane %v1011, 2
  %v1013 = vadd.f32 %v1011, %v1012
  %v1014 = vrot.slane %v1013, 1
  %v1015 = vadd.f32 %v1013, %v1014
  %v1016 = vadd.f32 %v987, %v991
  %v1017 = vrot.slane %v1016, 4
  %v1018 = vadd.f32 %v1016, %v1017
  %v1019 = vrot.slane %v1018, 2
  %v1020 = vadd.f32 %v1018, %v1019
  %v1021 = vrot.slane %v1020, 1
  %v1022 = vadd.f32 %v1020, %v1021
  %v1023 = vrcp.pop 2.0
  %v1024 = vmul.f32 %v1001, %v1023
  %v1025 = vmul.f32 %v1008, %v1023
  %v1026 = vmul.f32 %v1015, %v1023
  %v1027 = vmul.f32 %v1022, %v1023
  %v1028 = vmul.f32 %v899, %v899
  %v1029 = vmul.f32 %v901, %v901
  %v1030 = vmul.f32 %v985, %v985
  %v1031 = vmul.f32 %v987, %v987
  %v1032 = vmul.f32 %v903, %v903
  %v1033 = vmul.f32 %v905, %v905
  %v1034 = vmul.f32 %v989, %v989
  %v1035 = vmul.f32 %v991, %v991
  %v1036 = vadd.f32 %v1028, %v1032
  %v1037 = vrot.slane %v1036, 4
  %v1038 = vadd.f32 %v1036, %v1037
  %v1039 = vrot.slane %v1038, 2
  %v1040 = vadd.f32 %v1038, %v1039
  %v1041 = vrot.slane %v1040, 1
  %v1042 = vadd.f32 %v1040, %v1041
  %v1043 = vadd.f32 %v1029, %v1033
  %v1044 = vrot.slane %v1043, 4
  %v1045 = vadd.f32 %v1043, %v1044
  %v1046 = vrot.slane %v1045, 2
  %v1047 = vadd.f32 %v1045, %v1046
  %v1048 = vrot.slane %v1047, 1
  %v1049 = vadd.f32 %v1047, %v1048
  %v1050 = vadd.f32 %v1030, %v1034
  %v1051 = vrot.slane %v1050, 4
  %v1052 = vadd.f32 %v1050, %v1051
  %v1053 = vrot.slane %v1052, 2
  %v1054 = vadd.f32 %v1052, %v1053
  %v1055 = vrot.slane %v1054, 1
  %v1056 = vadd.f32 %v1054, %v1055
  %v1057 = vadd.f32 %v1031, %v1035
  %v1058 = vrot.slane %v1057, 4
  %v1059 = vadd.f32 %v1057, %v1058
  %v1060 = vrot.slane %v1059, 2
  %v1061 = vadd.f32 %v1059, %v1060
  %v1062 = vrot.slane %v1061, 1
  %v1063 = vadd.f32 %v1061, %v1062
  %v1064 = vmul.f32 %v1042, %v1023
  %v1065 = vmul.f32 %v1049, %v1023
  %v1066 = vmul.f32 %v1056, %v1023
  %v1067 = vmul.f32 %v1063, %v1023
  %v1068 = vmul.f32 %v1024, %v1024
  %v1069 = vmul.f32 %v1025, %v1025
  %v1070 = vmul.f32 %v1026, %v1026
  %v1071 = vmul.f32 %v1027, %v1027
  %v1072 = vsub.f32 %v1064, %v1068
  %v1073 = vsub.f32 %v1065, %v1069
  %v1074 = vsub.f32 %v1066, %v1070
  %v1075 = vsub.f32 %v1067, %v1071
  %v1076 = vmax.f32 %v1072, 0.0
  %v1077 = vmax.f32 %v1073, 0.0
  %v1078 = vmax.f32 %v1074, 0.0
  %v1079 = vmax.f32 %v1075, 0.0
  %v1080 = vsub.f32 %v899, %v1024
  %v1081 = vsub.f32 %v901, %v1025
  %v1082 = vsub.f32 %v985, %v1026
  %v1083 = vsub.f32 %v987, %v1027
  %v1084 = vsub.f32 %v903, %v1024
  %v1085 = vsub.f32 %v905, %v1025
  %v1086 = vsub.f32 %v989, %v1026
  %v1087 = vsub.f32 %v991, %v1027
  %v1088 = vadd.f32 %v1076, 1e-05
  %v1089 = vadd.f32 %v1077, 1e-05
  %v1090 = vadd.f32 %v1078, 1e-05
  %v1091 = vadd.f32 %v1079, 1e-05
  %v1092 = vrsqrt.pop %v1088
  %v1093 = vrsqrt.pop %v1089
  %v1094 = vrsqrt.pop %v1090
  %v1095 = vrsqrt.pop %v1091
  %v1096 = vmul.f32 %v1080, %v1092
  %v1097 = vmul.f32 %v1081, %v1093
  %v1098 = vmul.f32 %v1082, %v1094
  %v1099 = vmul.f32 %v1083, %v1095
  %v1100 = vmul.f32 %v1084, %v1092
  %v1101 = vmul.f32 %v1085, %v1093
  %v1102 = vmul.f32 %v1086, %v1094
  %v1103 = vmul.f32 %v1087, %v1095
  %v1105 = vlaneseq
  %v1106 = vshrl.u32 %v1105, 7
  %v1107 = vsub.s32 0, %v1106
  %v1108 = vrot.slane %v993, %v1107
  %v1109 = vlaneseq
  %v1110 = vshrl.u32 %v1109, 7
  %v1111 = vsub.s32 1, %v1110
  %v1112 = vrot.slane %v993, %v1111
  %v1113 = vlaneseq
  %v1114 = vshrl.u32 %v1113, 7
  %v1115 = vsub.s32 2, %v1114
  %v1116 = vrot.slane %v993, %v1115
  %v1117 = vlaneseq
  %v1118 = vshrl.u32 %v1117, 7
  %v1119 = vsub.s32 3, %v1118
  %v1120 = vrot.slane %v993, %v1119
  %v1125 = vmul.f32 %v1096, %v1108
  %v1126 = vmul.f32 %v1097, %v1112
  %v1127 = vmul.f32 %v1098, %v1116
  %v1128 = vmul.f32 %v1099, %v1120
  %v1129 = vmul.f32 %v1100, %v1108
  %v1130 = vmul.f32 %v1101, %v1112
  %v1131 = vmul.f32 %v1102, %v1116
  %v1132 = vmul.f32 %v1103, %v1120
  %v1134 = vlaneseq
  %v1135 = vshrl.u32 %v1134, 7
  %v1136 = vsub.s32 0, %v1135
  %v1137 = vrot.slane %v994, %v1136
  %v1138 = vlaneseq
  %v1139 = vshrl.u32 %v1138, 7
  %v1140 = vsub.s32 1, %v1139
  %v1141 = vrot.slane %v994, %v1140
  %v1142 = vlaneseq
  %v1143 = vshrl.u32 %v1142, 7
  %v1144 = vsub.s32 2, %v1143
  %v1145 = vrot.slane %v994, %v1144
  %v1146 = vlaneseq
  %v1147 = vshrl.u32 %v1146, 7
  %v1148 = vsub.s32 3, %v1147
  %v1149 = vrot.slane %v994, %v1148
  %v1154 = vadd.f32 %v1125, %v1137
  %v1155 = vadd.f32 %v1126, %v1141
  %v1156 = vadd.f32 %v1127, %v1145
  %v1157 = vadd.f32 %v1128, %v1149
  %v1158 = vadd.f32 %v1129, %v1137
  %v1159 = vadd.f32 %v1130, %v1141
  %v1160 = vadd.f32 %v1131, %v1145
  %v1161 = vadd.f32 %v1132, %v1149
  %v1162 = vld [vmem:[%s4] sm:$0xff]
  %v1163 = vld [vmem:[%s4 + $0x8] sm:$0xff]
  %v1164 = vld [vmem:[%s5] sm:$0xff]
  %v1165 = vld [vmem:[%s5 + $0x8] sm:$0xff]
  %v1166 = vld [vmem:[%s5 + $0x10] sm:$0xff]
  %v1167 = vld [vmem:[%s5 + $0x18] sm:$0xff]
  %v1168 = vld [vmem:[%s5 + $0x20] sm:$0xff]
  %v1169 = vld [vmem:[%s5 + $0x28] sm:$0xff]
  %v1170 = vld [vmem:[%s5 + $0x30] sm:$0xff]
  %v1171 = vld [vmem:[%s5 + $0x38] sm:$0xff]
  %v1172 = vld [vmem:[%s5 + $0x40] sm:$0xff]
  %v1173 = vld [vmem:[%s5 + $0x48] sm:$0xff]
  %v1174 = vld [vmem:[%s5 + $0x50] sm:$0xff]
  %v1175 = vld [vmem:[%s5 + $0x58] sm:$0xff]
  %v1176 = vld [vmem:[%s5 + $0x60] sm:$0xff]
  %v1177 = vld [vmem:[%s5 + $0x68] sm:$0xff]
  %v1178 = vld [vmem:[%s5 + $0x70] sm:$0xff]
  %v1179 = vld [vmem:[%s5 + $0x78] sm:$0xff]
  %v1180 = vld [vmem:[%s5 + $0x80] sm:$0xff]
  %v1181 = vld [vmem:[%s5 + $0x88] sm:$0xff]
  %v1182 = vld [vmem:[%s5 + $0x90] sm:$0xff]
  %v1183 = vld [vmem:[%s5 + $0x98] sm:$0xff]
  %v1184 = vld [vmem:[%s5 + $0xa0] sm:$0xff]
  %v1185 = vld [vmem:[%s5 + $0xa8] sm:$0xff]
  %v1186 = vld [vmem:[%s5 + $0xb0] sm:$0xff]
  %v1187 = vld [vmem:[%s5 + $0xb8] sm:$0xff]
  %v1188 = vld [vmem:[%s5 + $0xc0] sm:$0xff]
  %v1189 = vld [vmem:[%s5 + $0xc8] sm:$0xff]
  %v1190 = vld [vmem:[%s5 + $0xd0] sm:$0xff]
  %v1191 = vld [vmem:[%s5 + $0xd8] sm:$0xff]
  %v1192 = vld [vmem:[%s5 + $0xe0] sm:$0xff]
  %v1193 = vld [vmem:[%s5 + $0xe8] sm:$0xff]
  %v1194 = vld [vmem:[%s5 + $0xf0] sm:$0xff]
  %v1195 = vld [vmem:[%s5 + $0xf8] sm:$0xff]
  %v1196 = vld [vmem:[%s5 + $0x100] sm:$0xff]
  %v1197 = vld [vmem:[%s5 + $0x108] sm:$0xff]
  %v1198 = vld [vmem:[%s5 + $0x110] sm:$0xff]
  %v1199 = vld [vmem:[%s5 + $0x118] sm:$0xff]
  %v1200 = vld [vmem:[%s5 + $0x120] sm:$0xff]
  %v1201 = vld [vmem:[%s5 + $0x128] sm:$0xff]
  %v1202 = vld [vmem:[%s5 + $0x130] sm:$0xff]
  %v1203 = vld [vmem:[%s5 + $0x138] sm:$0xff]
  %v1204 = vld [vmem:[%s5 + $0x140] sm:$0xff]
  %v1205 = vld [vmem:[%s5 + $0x148] sm:$0xff]
  %v1206 = vld [vmem:[%s5 + $0x150] sm:$0xff]
  %v1207 = vld [vmem:[%s5 + $0x158] sm:$0xff]
  %v1208 = vld [vmem:[%s5 + $0x160] sm:$0xff]
  %v1209 = vld [vmem:[%s5 + $0x168] sm:$0xff]
  %v1210 = vld [vmem:[%s5 + $0x170] sm:$0xff]
  %v1211 = vld [vmem:[%s5 + $0x178] sm:$0xff]
  %v1212 = vld [vmem:[%s5 + $0x180] sm:$0xff]
  %v1213 = vld [vmem:[%s5 + $0x188] sm:$0xff]
  %v1214 = vld [vmem:[%s5 + $0x190] sm:$0xff]
  %v1215 = vld [vmem:[%s5 + $0x198] sm:$0xff]
  %v1216 = vld [vmem:[%s5 + $0x1a0] sm:$0xff]
  %v1217 = vld [vmem:[%s5 + $0x1a8] sm:$0xff]
  %v1218 = vld [vmem:[%s5 + $0x1b0] sm:$0xff]
  %v1219 = vld [vmem:[%s5 + $0x1b8] sm:$0xff]
  %v1220 = vld [vmem:[%s5 + $0x1c0] sm:$0xff]
  %v1221 = vld [vmem:[%s5 + $0x1c8] sm:$0xff]
  %v1222 = vld [vmem:[%s5 + $0x1d0] sm:$0xff]
  %v1223 = vld [vmem:[%s5 + $0x1d8] sm:$0xff]
  %v1224 = vld [vmem:[%s5 + $0x1e0] sm:$0xff]
  %v1225 = vld [vmem:[%s5 + $0x1e8] sm:$0xff]
  %v1226 = vld [vmem:[%s5 + $0x1f0] sm:$0xff]
  %v1227 = vld [vmem:[%s5 + $0x1f8] sm:$0xff]
  %v1230 = vunpack.c.l.b16 %v1162
  %v1231 = vunpack.c.h.b16 %v1162
  %v1232 = vunpack.c.l.b16 %v1163
  %v1233 = vunpack.c.h.b16 %v1163
  %v1234 = vpack.c.b16 %v1232, %v1230
  %v1235 = vpack.c.b16 %v1233, %v1231
  %v1302 = vunpack.c.l.b16 %v1164
  %v1303 = vunpack.c.h.b16 %v1164
  %v1304 = vunpack.c.l.b16 %v1165
  %v1305 = vunpack.c.h.b16 %v1165
  %v1306 = vunpack.c.l.b16 %v1166
  %v1307 = vunpack.c.h.b16 %v1166
  %v1308 = vunpack.c.l.b16 %v1167
  %v1309 = vunpack.c.h.b16 %v1167
  %v1310 = vunpack.c.l.b16 %v1168
  %v1311 = vunpack.c.h.b16 %v1168
  %v1312 = vunpack.c.l.b16 %v1169
  %v1313 = vunpack.c.h.b16 %v1169
  %v1314 = vunpack.c.l.b16 %v1170
  %v1315 = vunpack.c.h.b16 %v1170
  %v1316 = vunpack.c.l.b16 %v1171
  %v1317 = vunpack.c.h.b16 %v1171
  %v1318 = vunpack.c.l.b16 %v1172
  %v1319 = vunpack.c.h.b16 %v1172
  %v1320 = vunpack.c.l.b16 %v1173
  %v1321 = vunpack.c.h.b16 %v1173
  %v1322 = vunpack.c.l.b16 %v1174
  %v1323 = vunpack.c.h.b16 %v1174
  %v1324 = vunpack.c.l.b16 %v1175
  %v1325 = vunpack.c.h.b16 %v1175
  %v1326 = vunpack.c.l.b16 %v1176
  %v1327 = vunpack.c.h.b16 %v1176
  %v1328 = vunpack.c.l.b16 %v1177
  %v1329 = vunpack.c.h.b16 %v1177
  %v1330 = vunpack.c.l.b16 %v1178
  %v1331 = vunpack.c.h.b16 %v1178
  %v1332 = vunpack.c.l.b16 %v1179
  %v1333 = vunpack.c.h.b16 %v1179
  %v1334 = vunpack.c.l.b16 %v1180
  %v1335 = vunpack.c.h.b16 %v1180
  %v1336 = vunpack.c.l.b16 %v1181
  %v1337 = vunpack.c.h.b16 %v1181
  %v1338 = vunpack.c.l.b16 %v1182
  %v1339 = vunpack.c.h.b16 %v1182
  %v1340 = vunpack.c.l.b16 %v1183
  %v1341 = vunpack.c.h.b16 %v1183
  %v1342 = vunpack.c.l.b16 %v1184
  %v1343 = vunpack.c.h.b16 %v1184
  %v1344 = vunpack.c.l.b16 %v1185
  %v1345 = vunpack.c.h.b16 %v1185
  %v1346 = vunpack.c.l.b16 %v1186
  %v1347 = vunpack.c.h.b16 %v1186
  %v1348 = vunpack.c.l.b16 %v1187
  %v1349 = vunpack.c.h.b16 %v1187
  %v1350 = vunpack.c.l.b16 %v1188
  %v1351 = vunpack.c.h.b16 %v1188
  %v1352 = vunpack.c.l.b16 %v1189
  %v1353 = vunpack.c.h.b16 %v1189
  %v1354 = vunpack.c.l.b16 %v1190
  %v1355 = vunpack.c.h.b16 %v1190
  %v1356 = vunpack.c.l.b16 %v1191
  %v1357 = vunpack.c.h.b16 %v1191
  %v1358 = vunpack.c.l.b16 %v1192
  %v1359 = vunpack.c.h.b16 %v1192
  %v1360 = vunpack.c.l.b16 %v1193
  %v1361 = vunpack.c.h.b16 %v1193
  %v1362 = vunpack.c.l.b16 %v1194
  %v1363 = vunpack.c.h.b16 %v1194
  %v1364 = vunpack.c.l.b16 %v1195
  %v1365 = vunpack.c.h.b16 %v1195
  %v1366 = vunpack.c.l.b16 %v1196
  %v1367 = vunpack.c.h.b16 %v1196
  %v1368 = vunpack.c.l.b16 %v1197
  %v1369 = vunpack.c.h.b16 %v1197
  %v1370 = vunpack.c.l.b16 %v1198
  %v1371 = vunpack.c.h.b16 %v1198
  %v1372 = vunpack.c.l.b16 %v1199
  %v1373 = vunpack.c.h.b16 %v1199
  %v1374 = vunpack.c.l.b16 %v1200
  %v1375 = vunpack.c.h.b16 %v1200
  %v1376 = vunpack.c.l.b16 %v1201
  %v1377 = vunpack.c.h.b16 %v1201
  %v1378 = vunpack.c.l.b16 %v1202
  %v1379 = vunpack.c.h.b16 %v1202
  %v1380 = vunpack.c.l.b16 %v1203
  %v1381 = vunpack.c.h.b16 %v1203
  %v1382 = vunpack.c.l.b16 %v1204
  %v1383 = vunpack.c.h.b16 %v1204
  %v1384 = vunpack.c.l.b16 %v1205
  %v1385 = vunpack.c.h.b16 %v1205
  %v1386 = vunpack.c.l.b16 %v1206
  %v1387 = vunpack.c.h.b16 %v1206
  %v1388 = vunpack.c.l.b16 %v1207
  %v1389 = vunpack.c.h.b16 %v1207
  %v1390 = vunpack.c.l.b16 %v1208
  %v1391 = vunpack.c.h.b16 %v1208
  %v1392 = vunpack.c.l.b16 %v1209
  %v1393 = vunpack.c.h.b16 %v1209
  %v1394 = vunpack.c.l.b16 %v1210
  %v1395 = vunpack.c.h.b16 %v1210
  %v1396 = vunpack.c.l.b16 %v1211
  %v1397 = vunpack.c.h.b16 %v1211
  %v1398 = vunpack.c.l.b16 %v1212
  %v1399 = vunpack.c.h.b16 %v1212
  %v1400 = vunpack.c.l.b16 %v1213
  %v1401 = vunpack.c.h.b16 %v1213
  %v1402 = vunpack.c.l.b16 %v1214
  %v1403 = vunpack.c.h.b16 %v1214
  %v1404 = vunpack.c.l.b16 %v1215
  %v1405 = vunpack.c.h.b16 %v1215
  %v1406 = vunpack.c.l.b16 %v1216
  %v1407 = vunpack.c.h.b16 %v1216
  %v1408 = vunpack.c.l.b16 %v1217
  %v1409 = vunpack.c.h.b16 %v1217
  %v1410 = vunpack.c.l.b16 %v1218
  %v1411 = vunpack.c.h.b16 %v1218
  %v1412 = vunpack.c.l.b16 %v1219
  %v1413 = vunpack.c.h.b16 %v1219
  %v1414 = vunpack.c.l.b16 %v1220
  %v1415 = vunpack.c.h.b16 %v1220
  %v1416 = vunpack.c.l.b16 %v1221
  %v1417 = vunpack.c.h.b16 %v1221
  %v1418 = vunpack.c.l.b16 %v1222
  %v1419 = vunpack.c.h.b16 %v1222
  %v1420 = vunpack.c.l.b16 %v1223
  %v1421 = vunpack.c.h.b16 %v1223
  %v1422 = vunpack.c.l.b16 %v1224
  %v1423 = vunpack.c.h.b16 %v1224
  %v1424 = vunpack.c.l.b16 %v1225
  %v1425 = vunpack.c.h.b16 %v1225
  %v1426 = vunpack.c.l.b16 %v1226
  %v1427 = vunpack.c.h.b16 %v1226
  %v1428 = vunpack.c.l.b16 %v1227
  %v1429 = vunpack.c.h.b16 %v1227
  %v1430 = vpack.c.b16 %v1306, %v1302
  %v1431 = vpack.c.b16 %v1307, %v1303
  %v1432 = vpack.c.b16 %v1308, %v1304
  %v1433 = vpack.c.b16 %v1309, %v1305
  %v1434 = vpack.c.b16 %v1314, %v1310
  %v1435 = vpack.c.b16 %v1315, %v1311
  %v1436 = vpack.c.b16 %v1316, %v1312
  %v1437 = vpack.c.b16 %v1317, %v1313
  %v1438 = vpack.c.b16 %v1322, %v1318
  %v1439 = vpack.c.b16 %v1323, %v1319
  %v1440 = vpack.c.b16 %v1324, %v1320
  %v1441 = vpack.c.b16 %v1325, %v1321
  %v1442 = vpack.c.b16 %v1330, %v1326
  %v1443 = vpack.c.b16 %v1331, %v1327
  %v1444 = vpack.c.b16 %v1332, %v1328
  %v1445 = vpack.c.b16 %v1333, %v1329
  %v1446 = vpack.c.b16 %v1338, %v1334
  %v1447 = vpack.c.b16 %v1339, %v1335
  %v1448 = vpack.c.b16 %v1340, %v1336
  %v1449 = vpack.c.b16 %v1341, %v1337
  %v1450 = vpack.c.b16 %v1346, %v1342
  %v1451 = vpack.c.b16 %v1347, %v1343
  %v1452 = vpack.c.b16 %v1348, %v1344
  %v1453 = vpack.c.b16 %v1349, %v1345
  %v1454 = vpack.c.b16 %v1354, %v1350
  %v1455 = vpack.c.b16 %v1355, %v1351
  %v1456 = vpack.c.b16 %v1356, %v1352
  %v1457 = vpack.c.b16 %v1357, %v1353
  %v1458 = vpack.c.b16 %v1362, %v1358
  %v1459 = vpack.c.b16 %v1363, %v1359
  %v1460 = vpack.c.b16 %v1364, %v1360
  %v1461 = vpack.c.b16 %v1365, %v1361
  %v1462 = vpack.c.b16 %v1370, %v1366
  %v1463 = vpack.c.b16 %v1371, %v1367
  %v1464 = vpack.c.b16 %v1372, %v1368
  %v1465 = vpack.c.b16 %v1373, %v1369
  %v1466 = vpack.c.b16 %v1378, %v1374
  %v1467 = vpack.c.b16 %v1379, %v1375
  %v1468 = vpack.c.b16 %v1380, %v1376
  %v1469 = vpack.c.b16 %v1381, %v1377
  %v1470 = vpack.c.b16 %v1386, %v1382
  %v1471 = vpack.c.b16 %v1387, %v1383
  %v1472 = vpack.c.b16 %v1388, %v1384
  %v1473 = vpack.c.b16 %v1389, %v1385
  %v1474 = vpack.c.b16 %v1394, %v1390
  %v1475 = vpack.c.b16 %v1395, %v1391
  %v1476 = vpack.c.b16 %v1396, %v1392
  %v1477 = vpack.c.b16 %v1397, %v1393
  %v1478 = vpack.c.b16 %v1402, %v1398
  %v1479 = vpack.c.b16 %v1403, %v1399
  %v1480 = vpack.c.b16 %v1404, %v1400
  %v1481 = vpack.c.b16 %v1405, %v1401
  %v1482 = vpack.c.b16 %v1410, %v1406
  %v1483 = vpack.c.b16 %v1411, %v1407
  %v1484 = vpack.c.b16 %v1412, %v1408
  %v1485 = vpack.c.b16 %v1413, %v1409
  %v1486 = vpack.c.b16 %v1418, %v1414
  %v1487 = vpack.c.b16 %v1419, %v1415
  %v1488 = vpack.c.b16 %v1420, %v1416
  %v1489 = vpack.c.b16 %v1421, %v1417
  %v1490 = vpack.c.b16 %v1426, %v1422
  %v1491 = vpack.c.b16 %v1427, %v1423
  %v1492 = vpack.c.b16 %v1428, %v1424
  %v1493 = vpack.c.b16 %v1429, %v1425
  %1558 = vmatprep.subr.bf16.mxu0 %v1431
  %1559 = vmatpush1.bf16.msra.mxu0 %v1430
  %1560 = vmatprep.subr.bf16.mxu0 %v1435
  %1561 = vmatpush1.bf16.msra.mxu0 %v1434
  %1562 = vmatprep.subr.bf16.mxu0 %v1439
  %1563 = vmatpush1.bf16.msra.mxu0 %v1438
  %1564 = vmatprep.subr.bf16.mxu0 %v1443
  %1565 = vmatpush1.bf16.msra.mxu0 %v1442
  %1566 = vmatprep.subr.bf16.mxu0 %v1447
  %1567 = vmatpush1.bf16.msra.mxu0 %v1446
  %1568 = vmatprep.subr.bf16.mxu0 %v1451
  %1569 = vmatpush1.bf16.msra.mxu0 %v1450
  %1570 = vmatprep.subr.bf16.mxu0 %v1455
  %1571 = vmatpush1.bf16.msra.mxu0 %v1454
  %1572 = vmatprep.subr.bf16.mxu0 %v1459
  %1573 = vmatpush1.bf16.msra.mxu0 %v1458
  %1574 = vmatprep.subr.bf16.mxu0 %v1463
  %1575 = vmatpush1.bf16.msra.mxu0 %v1462
  %1576 = vmatprep.subr.bf16.mxu0 %v1467
  %1577 = vmatpush1.bf16.msra.mxu0 %v1466
  %1578 = vmatprep.subr.bf16.mxu0 %v1471
  %1579 = vmatpush1.bf16.msra.mxu0 %v1470
  %1580 = vmatprep.subr.bf16.mxu0 %v1475
  %1581 = vmatpush1.bf16.msra.mxu0 %v1474
  %1582 = vmatprep.subr.bf16.mxu0 %v1479
  %1583 = vmatpush1.bf16.msra.mxu0 %v1478
  %1584 = vmatprep.subr.bf16.mxu0 %v1483
  %1585 = vmatpush1.bf16.msra.mxu0 %v1482
  %1586 = vmatprep.subr.bf16.mxu0 %v1487
  %1587 = vmatpush1.bf16.msra.mxu0 %v1486
  %1588 = vmatprep.subr.bf16.mxu0 %v1491
  %1589 = vmatpush1.bf16.msra.mxu0 %v1490
  %1590 = vmatprep.mubr.bf16.mxu0 %v1235
  %1591 = vmatmul.mubr.bf16.gmra.mrb[0].mxu0 %v1234
  %v1592 = vpop.f32.mrb[0].mxu0
  %v1593 = vadd.f32 0.0, %v1592
  %v1594 = vpop.f32.mrb[0].mxu0
  %v1595 = vadd.f32 0.0, %v1594
  %v1596 = vpop.f32.mrb[0].mxu0
  %v1597 = vadd.f32 0.0, %v1596
  %v1598 = vpop.f32.mrb[0].mxu0
  %v1599 = vadd.f32 0.0, %v1598
  %1600 = vdwg.mxu0
  %1601 = vmatprep.subr.bf16.mxu0 %v1433
  %1602 = vmatpush1.bf16.msra.mxu0 %v1432
  %1603 = vmatprep.subr.bf16.mxu0 %v1437
  %1604 = vmatpush1.bf16.msra.mxu0 %v1436
  %1605 = vmatprep.subr.bf16.mxu0 %v1441
  %1606 = vmatpush1.bf16.msra.mxu0 %v1440
  %1607 = vmatprep.subr.bf16.mxu0 %v1445
  %1608 = vmatpush1.bf16.msra.mxu0 %v1444
  %1609 = vmatprep.subr.bf16.mxu0 %v1449
  %1610 = vmatpush1.bf16.msra.mxu0 %v1448
  %1611 = vmatprep.subr.bf16.mxu0 %v1453
  %1612 = vmatpush1.bf16.msra.mxu0 %v1452
  %1613 = vmatprep.subr.bf16.mxu0 %v1457
  %1614 = vmatpush1.bf16.msra.mxu0 %v1456
  %1615 = vmatprep.subr.bf16.mxu0 %v1461
  %1616 = vmatpush1.bf16.msra.mxu0 %v1460
  %1617 = vmatprep.subr.bf16.mxu0 %v1465
  %1618 = vmatpush1.bf16.msra.mxu0 %v1464
  %1619 = vmatprep.subr.bf16.mxu0 %v1469
  %1620 = vmatpush1.bf16.msra.mxu0 %v1468
  %1621 = vmatprep.subr.bf16.mxu0 %v1473
  %1622 = vmatpush1.bf16.msra.mxu0 %v1472
  %1623 = vmatprep.subr.bf16.mxu0 %v1477
  %1624 = vmatpush1.bf16.msra.mxu0 %v1476
  %1625 = vmatprep.subr.bf16.mxu0 %v1481
  %1626 = vmatpush1.bf16.msra.mxu0 %v1480
  %1627 = vmatprep.subr.bf16.mxu0 %v1485
  %1628 = vmatpush1.bf16.msra.mxu0 %v1484
  %1629 = vmatprep.subr.bf16.mxu0 %v1489
  %1630 = vmatpush1.bf16.msra.mxu0 %v1488
  %1631 = vmatprep.subr.bf16.mxu0 %v1493
  %1632 = vmatpush1.bf16.msra.mxu0 %v1492
  %1633 = vmatprep.mubr.bf16.mxu0 %v1235
  %1634 = vmatmul.mubr.bf16.gmra.mrb[0].mxu0 %v1234
  %v1635 = vpop.f32.mrb[0].mxu0
  %v1636 = vadd.f32 0.0, %v1635
  %v1637 = vpop.f32.mrb[0].mxu0
  %v1638 = vadd.f32 0.0, %v1637
  %v1639 = vpop.f32.mrb[0].mxu0
  %v1640 = vadd.f32 0.0, %v1639
  %v1641 = vpop.f32.mrb[0].mxu0
  %v1642 = vadd.f32 0.0, %v1641
  %1643 = vdwg.mxu0
  %v1644 = vld [vmem:[%s6] sm:$0xf]
  %v1645 = vld [vmem:[%s7] sm:$0xf]
  %v1646 = vadd.f32 %v1593, %v1597
  %v1647 = vrot.slane %v1646, 4
  %v1648 = vadd.f32 %v1646, %v1647
  %v1649 = vrot.slane %v1648, 2
  %v1650 = vadd.f32 %v1648, %v1649
  %v1651 = vrot.slane %v1650, 1
  %v1652 = vadd.f32 %v1650, %v1651
  %v1653 = vadd.f32 %v1595, %v1599
  %v1654 = vrot.slane %v1653, 4
  %v1655 = vadd.f32 %v1653, %v1654
  %v1656 = vrot.slane %v1655, 2
  %v1657 = vadd.f32 %v1655, %v1656
  %v1658 = vrot.slane %v1657, 1
  %v1659 = vadd.f32 %v1657, %v1658
  %v1660 = vadd.f32 %v1636, %v1640
  %v1661 = vrot.slane %v1660, 4
  %v1662 = vadd.f32 %v1660, %v1661
  %v1663 = vrot.slane %v1662, 2
  %v1664 = vadd.f32 %v1662, %v1663
  %v1665 = vrot.slane %v1664, 1
  %v1666 = vadd.f32 %v1664, %v1665
  %v1667 = vadd.f32 %v1638, %v1642
  %v1668 = vrot.slane %v1667, 4
  %v1669 = vadd.f32 %v1667, %v1668
  %v1670 = vrot.slane %v1669, 2
  %v1671 = vadd.f32 %v1669, %v1670
  %v1672 = vrot.slane %v1671, 1
  %v1673 = vadd.f32 %v1671, %v1672
  %v1674 = vmul.f32 %v1652, %v1023
  %v1675 = vmul.f32 %v1659, %v1023
  %v1676 = vmul.f32 %v1666, %v1023
  %v1677 = vmul.f32 %v1673, %v1023
  %v1678 = vmul.f32 %v1593, %v1593
  %v1679 = vmul.f32 %v1595, %v1595
  %v1680 = vmul.f32 %v1636, %v1636
  %v1681 = vmul.f32 %v1638, %v1638
  %v1682 = vmul.f32 %v1597, %v1597
  %v1683 = vmul.f32 %v1599, %v1599
  %v1684 = vmul.f32 %v1640, %v1640
  %v1685 = vmul.f32 %v1642, %v1642
  %v1686 = vadd.f32 %v1678, %v1682
  %v1687 = vrot.slane %v1686, 4
  %v1688 = vadd.f32 %v1686, %v1687
  %v1689 = vrot.slane %v1688, 2
  %v1690 = vadd.f32 %v1688, %v1689
  %v1691 = vrot.slane %v1690, 1
  %v1692 = vadd.f32 %v1690, %v1691
  %v1693 = vadd.f32 %v1679, %v1683
  %v1694 = vrot.slane %v1693, 4
  %v1695 = vadd.f32 %v1693, %v1694
  %v1696 = vrot.slane %v1695, 2
  %v1697 = vadd.f32 %v1695, %v1696
  %v1698 = vrot.slane %v1697, 1
  %v1699 = vadd.f32 %v1697, %v1698
  %v1700 = vadd.f32 %v1680, %v1684
  %v1701 = vrot.slane %v1700, 4
  %v1702 = vadd.f32 %v1700, %v1701
  %v1703 = vrot.slane %v1702, 2
  %v1704 = vadd.f32 %v1702, %v1703
  %v1705 = vrot.slane %v1704, 1
  %v1706 = vadd.f32 %v1704, %v1705
  %v1707 = vadd.f32 %v1681, %v1685
  %v1708 = vrot.slane %v1707, 4
  %v1709 = vadd.f32 %v1707, %v1708
  %v1710 = vrot.slane %v1709, 2
  %v1711 = vadd.f32 %v1709, %v1710
  %v1712 = vrot.slane %v1711, 1
  %v1713 = vadd.f32 %v1711, %v1712
  %v1714 = vmul.f32 %v1692, %v1023
  %v1715 = vmul.f32 %v1699, %v1023
  %v1716 = vmul.f32 %v1706, %v1023
  %v1717 = vmul.f32 %v1713, %v1023
  %v1718 = vmul.f32 %v1674, %v1674
  %v1719 = vmul.f32 %v1675, %v1675
  %v1720 = vmul.f32 %v1676, %v1676
  %v1721 = vmul.f32 %v1677, %v1677
  %v1722 = vsub.f32 %v1714, %v1718
  %v1723 = vsub.f32 %v1715, %v1719
  %v1724 = vsub.f32 %v1716, %v1720
  %v1725 = vsub.f32 %v1717, %v1721
  %v1726 = vmax.f32 %v1722, 0.0
  %v1727 = vmax.f32 %v1723, 0.0
  %v1728 = vmax.f32 %v1724, 0.0
  %v1729 = vmax.f32 %v1725, 0.0
  %v1730 = vsub.f32 %v1593, %v1674
  %v1731 = vsub.f32 %v1595, %v1675
  %v1732 = vsub.f32 %v1636, %v1676
  %v1733 = vsub.f32 %v1638, %v1677
  %v1734 = vsub.f32 %v1597, %v1674
  %v1735 = vsub.f32 %v1599, %v1675
  %v1736 = vsub.f32 %v1640, %v1676
  %v1737 = vsub.f32 %v1642, %v1677
  %v1738 = vadd.f32 %v1726, 1e-05
  %v1739 = vadd.f32 %v1727, 1e-05
  %v1740 = vadd.f32 %v1728, 1e-05
  %v1741 = vadd.f32 %v1729, 1e-05
  %v1742 = vrsqrt.pop %v1738
  %v1743 = vrsqrt.pop %v1739
  %v1744 = vrsqrt.pop %v1740
  %v1745 = vrsqrt.pop %v1741
  %v1746 = vmul.f32 %v1730, %v1742
  %v1747 = vmul.f32 %v1731, %v1743
  %v1748 = vmul.f32 %v1732, %v1744
  %v1749 = vmul.f32 %v1733, %v1745
  %v1750 = vmul.f32 %v1734, %v1742
  %v1751 = vmul.f32 %v1735, %v1743
  %v1752 = vmul.f32 %v1736, %v1744
  %v1753 = vmul.f32 %v1737, %v1745
  %v1755 = vlaneseq
  %v1756 = vshrl.u32 %v1755, 7
  %v1757 = vsub.s32 0, %v1756
  %v1758 = vrot.slane %v1644, %v1757
  %v1759 = vlaneseq
  %v1760 = vshrl.u32 %v1759, 7
  %v1761 = vsub.s32 1, %v1760
  %v1762 = vrot.slane %v1644, %v1761
  %v1763 = vlaneseq
  %v1764 = vshrl.u32 %v1763, 7
  %v1765 = vsub.s32 2, %v1764
  %v1766 = vrot.slane %v1644, %v1765
  %v1767 = vlaneseq
  %v1768 = vshrl.u32 %v1767, 7
  %v1769 = vsub.s32 3, %v1768
  %v1770 = vrot.slane %v1644, %v1769
  %v1775 = vmul.f32 %v1746, %v1758
  %v1776 = vmul.f32 %v1747, %v1762
  %v1777 = vmul.f32 %v1748, %v1766
  %v1778 = vmul.f32 %v1749, %v1770
  %v1779 = vmul.f32 %v1750, %v1758
  %v1780 = vmul.f32 %v1751, %v1762
  %v1781 = vmul.f32 %v1752, %v1766
  %v1782 = vmul.f32 %v1753, %v1770
  %v1784 = vlaneseq
  %v1785 = vshrl.u32 %v1784, 7
  %v1786 = vsub.s32 0, %v1785
  %v1787 = vrot.slane %v1645, %v1786
  %v1788 = vlaneseq
  %v1789 = vshrl.u32 %v1788, 7
  %v1790 = vsub.s32 1, %v1789
  %v1791 = vrot.slane %v1645, %v1790
  %v1792 = vlaneseq
  %v1793 = vshrl.u32 %v1792, 7
  %v1794 = vsub.s32 2, %v1793
  %v1795 = vrot.slane %v1645, %v1794
  %v1796 = vlaneseq
  %v1797 = vshrl.u32 %v1796, 7
  %v1798 = vsub.s32 3, %v1797
  %v1799 = vrot.slane %v1645, %v1798
  %v1804 = vadd.f32 %v1775, %v1787
  %v1805 = vadd.f32 %v1776, %v1791
  %v1806 = vadd.f32 %v1777, %v1795
  %v1807 = vadd.f32 %v1778, %v1799
  %v1808 = vadd.f32 %v1779, %v1787
  %v1809 = vadd.f32 %v1780, %v1791
  %v1810 = vadd.f32 %v1781, %v1795
  %v1811 = vadd.f32 %v1782, %v1799
  %v1812 = vadd.f32 %v1154, %v1804
  %v1813 = vadd.f32 %v1155, %v1805
  %v1814 = vadd.f32 %v1156, %v1806
  %v1815 = vadd.f32 %v1157, %v1807
  %v1816 = vadd.f32 %v1158, %v1808
  %v1817 = vadd.f32 %v1159, %v1809
  %v1818 = vadd.f32 %v1160, %v1810
  %v1819 = vadd.f32 %v1161, %v1811
  %v1820 = vmax.f32 %v1812, 0.0
  %v1821 = vmax.f32 %v1813, 0.0
  %v1822 = vmax.f32 %v1814, 0.0
  %v1823 = vmax.f32 %v1815, 0.0
  %v1824 = vmax.f32 %v1816, 0.0
  %v1825 = vmax.f32 %v1817, 0.0
  %v1826 = vmax.f32 %v1818, 0.0
  %v1827 = vmax.f32 %v1819, 0.0
  %v1828 = vpack.c.bf16 %v1824, %v1820
  %v1829 = vpack.c.bf16 %v1825, %v1821
  %v1830 = vpack.c.bf16 %v1826, %v1822
  %v1831 = vpack.c.bf16 %v1827, %v1823
  %v1836 = vunpack.c.l.b16 %v1828
  %v1837 = vunpack.c.l.b16 %v1829
  %v1838 = vunpack.c.l.b16 %v1830
  %v1839 = vunpack.c.l.b16 %v1831
  %v1840 = vunpack.c.h.b16 %v1828
  %v1841 = vunpack.c.h.b16 %v1829
  %v1842 = vunpack.c.h.b16 %v1830
  %v1843 = vunpack.c.h.b16 %v1831
  %v1844 = vpack.c.b16 %v1837, %v1836
  %v1845 = vpack.c.b16 %v1839, %v1838
  %v1846 = vpack.c.b16 %v1841, %v1840
  %v1847 = vpack.c.b16 %v1843, %v1842
  %1852 = vst [vmem:[%s8] sm:$0xff] %v1844
  %1853 = vst [vmem:[%s8 + $0x8] sm:$0xff] %v1845
  %1854 = vst [vmem:[%s8 + $0x10] sm:$0xff] %v1846
  %1855 = vst [vmem:[%s8 + $0x18] sm:$0xff] %v1847
  // Predicated region
  $region34: #{resnet18_forward.32} parent=0 // pred_check
    _
  $region35: #{resnet18_forward.32} parent=0 // pred_check_branch
    %1857 = sbr.rel (0) target = $region37
  $region36: #{resnet18_forward.32} parent=0 // pred_region
    _
  $region37: #{resnet18_forward.32} parent=0 // pred_fallthru
    _
  // Predicated region
  $region38: #{resnet18_forward.32} parent=0 // pred_check
    _
  $region39: #{resnet18_forward.32} parent=0 // pred_check_branch
    %1859 = sbr.rel (0) target = $region41
  $region40: #{resnet18_forward.32} parent=0 // pred_region
    _
  $region41: #{resnet18_forward.32} parent=0 // pred_fallthru
    _

// kernel: resnet18_forward.35
$region0: #{resnet18_forward.35}
  #allocation0 [shape = 'u32[]', space=smem, size = 0x4, offset = 0x4, fixed_abs, tag = 'smem constant byte address 0x4 - core index']
  #allocation1 [shape = 'u32[144,128]{1,0:T(1,128)}', space=vmem, size = 0x12000, scoped, tag = 'internal scratch']
  %s0 = inlined_call_operand.vmem [shape: f32[8,8,512], index: 0, kind: input, shape index: {}]
  %s1 = inlined_call_operand.vmem [shape: f32[512,128], index: 1, kind: input, shape index: {}]
  %s2 = inlined_call_operand.vmem [shape: f32[1,128], index: 2, kind: input, shape index: {}]
  %s3 = inlined_call_operand.vmem [shape: f32[8,1], index: 3, kind: input, shape index: {}]
  %s4 = inlined_call_operand.vmem [shape: f32[8,128], index: 4, kind: output, shape index: {}]
  %s5 = sld [smem:[#allocation0]]
  $region26: #{resnet18_forward.35} parent=0
    _
  %s7 = ssub.s32 1, %s5
  %s8 = scalar_select 0, %s7, %s5
  // Predicated region
  $region2: #{resnet18_forward.35} parent=0 // pred_check
    _
  $region3: #{resnet18_forward.35} parent=0 // pred_check_branch
    %10 = sbr.rel (0) target = $region5
  $region4: #{resnet18_forward.35} parent=0 // pred_region
    _
  $region5: #{resnet18_forward.35} parent=0 // pred_fallthru
    _
  // Predicated region
  $region6: #{resnet18_forward.35} parent=0 // pred_check
    _
  $region7: #{resnet18_forward.35} parent=0 // pred_check_branch
    %12 = sbr.rel (0) target = $region9
  $region8: #{resnet18_forward.35} parent=0 // pred_region
    _
  $region9: #{resnet18_forward.35} parent=0 // pred_fallthru
    _
  // Predicated region
  $region10: #{resnet18_forward.35} parent=0 // pred_check
    _
  $region11: #{resnet18_forward.35} parent=0 // pred_check_branch
    %14 = sbr.rel (0) target = $region13
  $region12: #{resnet18_forward.35} parent=0 // pred_region
    _
  $region13: #{resnet18_forward.35} parent=0 // pred_fallthru
    _
  // Predicated region
  $region14: #{resnet18_forward.35} parent=0 // pred_check
    _
  $region15: #{resnet18_forward.35} parent=0 // pred_check_branch
    %16 = sbr.rel (0) target = $region17
  $region16: #{resnet18_forward.35} parent=0 // pred_region
    _
  $region17: #{resnet18_forward.35} parent=0 // pred_fallthru
    _
  %v17 = vld [vmem:[%s0] sm:$0xff]
  %v18 = vld [vmem:[%s0 + $0x8] sm:$0xff]
  %v19 = vld [vmem:[%s0 + $0x10] sm:$0xff]
  %v20 = vld [vmem:[%s0 + $0x18] sm:$0xff]
  %v21 = vld [vmem:[%s0 + $0x20] sm:$0xff]
  %v22 = vld [vmem:[%s0 + $0x28] sm:$0xff]
  %v23 = vld [vmem:[%s0 + $0x30] sm:$0xff]
  %v24 = vld [vmem:[%s0 + $0x38] sm:$0xff]
  %v25 = vld [vmem:[%s0 + $0x40] sm:$0xff]
  %v26 = vld [vmem:[%s0 + $0x48] sm:$0xff]
  %v27 = vld [vmem:[%s0 + $0x50] sm:$0xff]
  %v28 = vld [vmem:[%s0 + $0x58] sm:$0xff]
  %v29 = vld [vmem:[%s0 + $0x60] sm:$0xff]
  %v30 = vld [vmem:[%s0 + $0x68] sm:$0xff]
  %v31 = vld [vmem:[%s0 + $0x70] sm:$0xff]
  %v32 = vld [vmem:[%s0 + $0x78] sm:$0xff]
  %v33 = vld [vmem:[%s0 + $0x80] sm:$0xff]
  %v34 = vld [vmem:[%s0 + $0x88] sm:$0xff]
  %v35 = vld [vmem:[%s0 + $0x90] sm:$0xff]
  %v36 = vld [vmem:[%s0 + $0x98] sm:$0xff]
  %v37 = vld [vmem:[%s0 + $0xa0] sm:$0xff]
  %v38 = vld [vmem:[%s0 + $0xa8] sm:$0xff]
  %v39 = vld [vmem:[%s0 + $0xb0] sm:$0xff]
  %v40 = vld [vmem:[%s0 + $0xb8] sm:$0xff]
  %v41 = vld [vmem:[%s0 + $0xc0] sm:$0xff]
  %v42 = vld [vmem:[%s0 + $0xc8] sm:$0xff]
  %v43 = vld [vmem:[%s0 + $0xd0] sm:$0xff]
  %v44 = vld [vmem:[%s0 + $0xd8] sm:$0xff]
  %v45 = vld [vmem:[%s0 + $0xe0] sm:$0xff]
  %v46 = vld [vmem:[%s0 + $0xe8] sm:$0xff]
  %v47 = vld [vmem:[%s0 + $0xf0] sm:$0xff]
  %v48 = vld [vmem:[%s0 + $0xf8] sm:$0xff]
  %v49 = vrot.slane %v17, 4
  %v50 = vadd.f32 %v17, %v49
  %v51 = vrot.slane %v50, 2
  %v52 = vadd.f32 %v50, %v51
  %v53 = vrot.slane %v52, 1
  %v54 = vadd.f32 %v52, %v53
  %v55 = vrot.slane %v18, 4
  %v56 = vadd.f32 %v18, %v55
  %v57 = vrot.slane %v56, 2
  %v58 = vadd.f32 %v56, %v57
  %v59 = vrot.slane %v58, 1
  %v60 = vadd.f32 %v58, %v59
  %v61 = vrot.slane %v19, 4
  %v62 = vadd.f32 %v19, %v61
  %v63 = vrot.slane %v62, 2
  %v64 = vadd.f32 %v62, %v63
  %v65 = vrot.slane %v64, 1
  %v66 = vadd.f32 %v64, %v65
  %v67 = vrot.slane %v20, 4
  %v68 = vadd.f32 %v20, %v67
  %v69 = vrot.slane %v68, 2
  %v70 = vadd.f32 %v68, %v69
  %v71 = vrot.slane %v70, 1
  %v72 = vadd.f32 %v70, %v71
  %v73 = vrot.slane %v21, 4
  %v74 = vadd.f32 %v21, %v73
  %v75 = vrot.slane %v74, 2
  %v76 = vadd.f32 %v74, %v75
  %v77 = vrot.slane %v76, 1
  %v78 = vadd.f32 %v76, %v77
  %v79 = vrot.slane %v22, 4
  %v80 = vadd.f32 %v22, %v79
  %v81 = vrot.slane %v80, 2
  %v82 = vadd.f32 %v80, %v81
  %v83 = vrot.slane %v82, 1
  %v84 = vadd.f32 %v82, %v83
  %v85 = vrot.slane %v23, 4
  %v86 = vadd.f32 %v23, %v85
  %v87 = vrot.slane %v86, 2
  %v88 = vadd.f32 %v86, %v87
  %v89 = vrot.slane %v88, 1
  %v90 = vadd.f32 %v88, %v89
  %v91 = vrot.slane %v24, 4
  %v92 = vadd.f32 %v24, %v91
  %v93 = vrot.slane %v92, 2
  %v94 = vadd.f32 %v92, %v93
  %v95 = vrot.slane %v94, 1
  %v96 = vadd.f32 %v94, %v95
  %v97 = vrot.slane %v25, 4
  %v98 = vadd.f32 %v25, %v97
  %v99 = vrot.slane %v98, 2
  %v100 = vadd.f32 %v98, %v99
  %v101 = vrot.slane %v100, 1
  %v102 = vadd.f32 %v100, %v101
  %v103 = vrot.slane %v26, 4
  %v104 = vadd.f32 %v26, %v103
  %v105 = vrot.slane %v104, 2
  %v106 = vadd.f32 %v104, %v105
  %v107 = vrot.slane %v106, 1
  %v108 = vadd.f32 %v106, %v107
  %v109 = vrot.slane %v27, 4
  %v110 = vadd.f32 %v27, %v109
  %v111 = vrot.slane %v110, 2
  %v112 = vadd.f32 %v110, %v111
  %v113 = vrot.slane %v112, 1
  %v114 = vadd.f32 %v112, %v113
  %v115 = vrot.slane %v28, 4
  %v116 = vadd.f32 %v28, %v115
  %v117 = vrot.slane %v116, 2
  %v118 = vadd.f32 %v116, %v117
  %v119 = vrot.slane %v118, 1
  %v120 = vadd.f32 %v118, %v119
  %v121 = vrot.slane %v29, 4
  %v122 = vadd.f32 %v29, %v121
  %v123 = vrot.slane %v122, 2
  %v124 = vadd.f32 %v122, %v123
  %v125 = vrot.slane %v124, 1
  %v126 = vadd.f32 %v124, %v125
  %v127 = vrot.slane %v30, 4
  %v128 = vadd.f32 %v30, %v127
  %v129 = vrot.slane %v128, 2
  %v130 = vadd.f32 %v128, %v129
  %v131 = vrot.slane %v130, 1
  %v132 = vadd.f32 %v130, %v131
  %v133 = vrot.slane %v31, 4
  %v134 = vadd.f32 %v31, %v133
  %v135 = vrot.slane %v134, 2
  %v136 = vadd.f32 %v134, %v135
  %v137 = vrot.slane %v136, 1
  %v138 = vadd.f32 %v136, %v137
  %v139 = vrot.slane %v32, 4
  %v140 = vadd.f32 %v32, %v139
  %v141 = vrot.slane %v140, 2
  %v142 = vadd.f32 %v140, %v141
  %v143 = vrot.slane %v142, 1
  %v144 = vadd.f32 %v142, %v143
  %v145 = vrot.slane %v33, 4
  %v146 = vadd.f32 %v33, %v145
  %v147 = vrot.slane %v146, 2
  %v148 = vadd.f32 %v146, %v147
  %v149 = vrot.slane %v148, 1
  %v150 = vadd.f32 %v148, %v149
  %v151 = vrot.slane %v34, 4
  %v152 = vadd.f32 %v34, %v151
  %v153 = vrot.slane %v152, 2
  %v154 = vadd.f32 %v152, %v153
  %v155 = vrot.slane %v154, 1
  %v156 = vadd.f32 %v154, %v155
  %v157 = vrot.slane %v35, 4
  %v158 = vadd.f32 %v35, %v157
  %v159 = vrot.slane %v158, 2
  %v160 = vadd.f32 %v158, %v159
  %v161 = vrot.slane %v160, 1
  %v162 = vadd.f32 %v160, %v161
  %v163 = vrot.slane %v36, 4
  %v164 = vadd.f32 %v36, %v163
  %v165 = vrot.slane %v164, 2
  %v166 = vadd.f32 %v164, %v165
  %v167 = vrot.slane %v166, 1
  %v168 = vadd.f32 %v166, %v167
  %v169 = vrot.slane %v37, 4
  %v170 = vadd.f32 %v37, %v169
  %v171 = vrot.slane %v170, 2
  %v172 = vadd.f32 %v170, %v171
  %v173 = vrot.slane %v172, 1
  %v174 = vadd.f32 %v172, %v173
  %v175 = vrot.slane %v38, 4
  %v176 = vadd.f32 %v38, %v175
  %v177 = vrot.slane %v176, 2
  %v178 = vadd.f32 %v176, %v177
  %v179 = vrot.slane %v178, 1
  %v180 = vadd.f32 %v178, %v179
  %v181 = vrot.slane %v39, 4
  %v182 = vadd.f32 %v39, %v181
  %v183 = vrot.slane %v182, 2
  %v184 = vadd.f32 %v182, %v183
  %v185 = vrot.slane %v184, 1
  %v186 = vadd.f32 %v184, %v185
  %v187 = vrot.slane %v40, 4
  %v188 = vadd.f32 %v40, %v187
  %v189 = vrot.slane %v188, 2
  %v190 = vadd.f32 %v188, %v189
  %v191 = vrot.slane %v190, 1
  %v192 = vadd.f32 %v190, %v191
  %v193 = vrot.slane %v41, 4
  %v194 = vadd.f32 %v41, %v193
  %v195 = vrot.slane %v194, 2
  %v196 = vadd.f32 %v194, %v195
  %v197 = vrot.slane %v196, 1
  %v198 = vadd.f32 %v196, %v197
  %v199 = vrot.slane %v42, 4
  %v200 = vadd.f32 %v42, %v199
  %v201 = vrot.slane %v200, 2
  %v202 = vadd.f32 %v200, %v201
  %v203 = vrot.slane %v202, 1
  %v204 = vadd.f32 %v202, %v203
  %v205 = vrot.slane %v43, 4
  %v206 = vadd.f32 %v43, %v205
  %v207 = vrot.slane %v206, 2
  %v208 = vadd.f32 %v206, %v207
  %v209 = vrot.slane %v208, 1
  %v210 = vadd.f32 %v208, %v209
  %v211 = vrot.slane %v44, 4
  %v212 = vadd.f32 %v44, %v211
  %v213 = vrot.slane %v212, 2
  %v214 = vadd.f32 %v212, %v213
  %v215 = vrot.slane %v214, 1
  %v216 = vadd.f32 %v214, %v215
  %v217 = vrot.slane %v45, 4
  %v218 = vadd.f32 %v45, %v217
  %v219 = vrot.slane %v218, 2
  %v220 = vadd.f32 %v218, %v219
  %v221 = vrot.slane %v220, 1
  %v222 = vadd.f32 %v220, %v221
  %v223 = vrot.slane %v46, 4
  %v224 = vadd.f32 %v46, %v223
  %v225 = vrot.slane %v224, 2
  %v226 = vadd.f32 %v224, %v225
  %v227 = vrot.slane %v226, 1
  %v228 = vadd.f32 %v226, %v227
  %v229 = vrot.slane %v47, 4
  %v230 = vadd.f32 %v47, %v229
  %v231 = vrot.slane %v230, 2
  %v232 = vadd.f32 %v230, %v231
  %v233 = vrot.slane %v232, 1
  %v234 = vadd.f32 %v232, %v233
  %v235 = vrot.slane %v48, 4
  %v236 = vadd.f32 %v48, %v235
  %v237 = vrot.slane %v236, 2
  %v238 = vadd.f32 %v236, %v237
  %v239 = vrot.slane %v238, 1
  %v240 = vadd.f32 %v238, %v239
  %v241 = vld [vmem:[%s1] sm:$0xff]
  %v242 = vld [vmem:[%s1 + $0x8] sm:$0xff]
  %v243 = vld [vmem:[%s1 + $0x10] sm:$0xff]
  %v244 = vld [vmem:[%s1 + $0x18] sm:$0xff]
  %v245 = vld [vmem:[%s1 + $0x20] sm:$0xff]
  %v246 = vld [vmem:[%s1 + $0x28] sm:$0xff]
  %v247 = vld [vmem:[%s1 + $0x30] sm:$0xff]
  %v248 = vld [vmem:[%s1 + $0x38] sm:$0xff]
  %v249 = vld [vmem:[%s1 + $0x40] sm:$0xff]
  %v250 = vld [vmem:[%s1 + $0x48] sm:$0xff]
  %v251 = vld [vmem:[%s1 + $0x50] sm:$0xff]
  %v252 = vld [vmem:[%s1 + $0x58] sm:$0xff]
  %v253 = vld [vmem:[%s1 + $0x60] sm:$0xff]
  %v254 = vld [vmem:[%s1 + $0x68] sm:$0xff]
  %v255 = vld [vmem:[%s1 + $0x70] sm:$0xff]
  %v256 = vld [vmem:[%s1 + $0x78] sm:$0xff]
  %v257 = vld [vmem:[%s1 + $0x80] sm:$0xff]
  %v258 = vld [vmem:[%s1 + $0x88] sm:$0xff]
  %v259 = vld [vmem:[%s1 + $0x90] sm:$0xff]
  %v260 = vld [vmem:[%s1 + $0x98] sm:$0xff]
  %v261 = vld [vmem:[%s1 + $0xa0] sm:$0xff]
  %v262 = vld [vmem:[%s1 + $0xa8] sm:$0xff]
  %v263 = vld [vmem:[%s1 + $0xb0] sm:$0xff]
  %v264 = vld [vmem:[%s1 + $0xb8] sm:$0xff]
  %v265 = vld [vmem:[%s1 + $0xc0] sm:$0xff]
  %v266 = vld [vmem:[%s1 + $0xc8] sm:$0xff]
  %v267 = vld [vmem:[%s1 + $0xd0] sm:$0xff]
  %v268 = vld [vmem:[%s1 + $0xd8] sm:$0xff]
  %v269 = vld [vmem:[%s1 + $0xe0] sm:$0xff]
  %v270 = vld [vmem:[%s1 + $0xe8] sm:$0xff]
  %v271 = vld [vmem:[%s1 + $0xf0] sm:$0xff]
  %v272 = vld [vmem:[%s1 + $0xf8] sm:$0xff]
  %v273 = vld [vmem:[%s1 + $0x100] sm:$0xff]
  %v274 = vld [vmem:[%s1 + $0x108] sm:$0xff]
  %v275 = vld [vmem:[%s1 + $0x110] sm:$0xff]
  %v276 = vld [vmem:[%s1 + $0x118] sm:$0xff]
  %v277 = vld [vmem:[%s1 + $0x120] sm:$0xff]
  %v278 = vld [vmem:[%s1 + $0x128] sm:$0xff]
  %v279 = vld [vmem:[%s1 + $0x130] sm:$0xff]
  %v280 = vld [vmem:[%s1 + $0x138] sm:$0xff]
  %v281 = vld [vmem:[%s1 + $0x140] sm:$0xff]
  %v282 = vld [vmem:[%s1 + $0x148] sm:$0xff]
  %v283 = vld [vmem:[%s1 + $0x150] sm:$0xff]
  %v284 = vld [vmem:[%s1 + $0x158] sm:$0xff]
  %v285 = vld [vmem:[%s1 + $0x160] sm:$0xff]
  %v286 = vld [vmem:[%s1 + $0x168] sm:$0xff]
  %v287 = vld [vmem:[%s1 + $0x170] sm:$0xff]
  %v288 = vld [vmem:[%s1 + $0x178] sm:$0xff]
  %v289 = vld [vmem:[%s1 + $0x180] sm:$0xff]
  %v290 = vld [vmem:[%s1 + $0x188] sm:$0xff]
  %v291 = vld [vmem:[%s1 + $0x190] sm:$0xff]
  %v292 = vld [vmem:[%s1 + $0x198] sm:$0xff]
  %v293 = vld [vmem:[%s1 + $0x1a0] sm:$0xff]
  %v294 = vld [vmem:[%s1 + $0x1a8] sm:$0xff]
  %v295 = vld [vmem:[%s1 + $0x1b0] sm:$0xff]
  %v296 = vld [vmem:[%s1 + $0x1b8] sm:$0xff]
  %v297 = vld [vmem:[%s1 + $0x1c0] sm:$0xff]
  %v298 = vld [vmem:[%s1 + $0x1c8] sm:$0xff]
  %v299 = vld [vmem:[%s1 + $0x1d0] sm:$0xff]
  %v300 = vld [vmem:[%s1 + $0x1d8] sm:$0xff]
  %v301 = vld [vmem:[%s1 + $0x1e0] sm:$0xff]
  %v302 = vld [vmem:[%s1 + $0x1e8] sm:$0xff]
  %v303 = vld [vmem:[%s1 + $0x1f0] sm:$0xff]
  %v304 = vld [vmem:[%s1 + $0x1f8] sm:$0xff]
  %v305 = vld [vmem:[%s2] sm:$0x1]
  %v307 = vlaneseq
  %v308 = vshrl.u32 %v307, 7
  %v309 = vsub.s32 0, %v308
  %v310 = vrot.slane %v305, %v309
  %vm344 = vcmask 1041409
  %v345 = vsel %vm344, %v78, %v54
  %vm346 = vcmask 1042434
  %v347 = vsel %vm346, %v102, %v345
  %vm348 = vcmask 1043459
  %v349 = vsel %vm348, %v126, %v347
  %vm350 = vcmask 1044484
  %v351 = vsel %vm350, %v150, %v349
  %vm352 = vcmask 1045509
  %v353 = vsel %vm352, %v174, %v351
  %vm354 = vcmask 1046534
  %v355 = vsel %vm354, %v198, %v353
  %vm356 = vcmask 1047559
  %v357 = vsel %vm356, %v222, %v355
  %v358 = vsel %vm344, %v84, %v60
  %v359 = vsel %vm346, %v108, %v358
  %v360 = vsel %vm348, %v132, %v359
  %v361 = vsel %vm350, %v156, %v360
  %v362 = vsel %vm352, %v180, %v361
  %v363 = vsel %vm354, %v204, %v362
  %v364 = vsel %vm356, %v228, %v363
  %v365 = vsel %vm344, %v90, %v66
  %v366 = vsel %vm346, %v114, %v365
  %v367 = vsel %vm348, %v138, %v366
  %v368 = vsel %vm350, %v162, %v367
  %v369 = vsel %vm352, %v186, %v368
  %v370 = vsel %vm354, %v210, %v369
  %v371 = vsel %vm356, %v234, %v370
  %v372 = vsel %vm344, %v96, %v72
  %v373 = vsel %vm346, %v120, %v372
  %v374 = vsel %vm348, %v144, %v373
  %v375 = vsel %vm350, %v168, %v374
  %v376 = vsel %vm352, %v192, %v375
  %v377 = vsel %vm354, %v216, %v376
  %v378 = vsel %vm356, %v240, %v377
  %383 = vmatprep.subr.mxu0 0.0
  %384 = vmatpush1.msra.mxu0 %v241
  %385 = vmatprep.subr.mxu0 0.0
  %386 = vmatpush1.msra.mxu0 %v242
  %387 = vmatprep.subr.mxu0 0.0
  %388 = vmatpush1.msra.mxu0 %v243
  %389 = vmatprep.subr.mxu0 0.0
  %390 = vmatpush1.msra.mxu0 %v244
  %391 = vmatprep.subr.mxu0 0.0
  %392 = vmatpush1.msra.mxu0 %v245
  %393 = vmatprep.subr.mxu0 0.0
  %394 = vmatpush1.msra.mxu0 %v246
  %395 = vmatprep.subr.mxu0 0.0
  %396 = vmatpush1.msra.mxu0 %v247
  %397 = vmatprep.subr.mxu0 0.0
  %398 = vmatpush1.msra.mxu0 %v248
  %399 = vmatprep.subr.mxu0 0.0
  %400 = vmatpush1.msra.mxu0 %v249
  %401 = vmatprep.subr.mxu0 0.0
  %402 = vmatpush1.msra.mxu0 %v250
  %403 = vmatprep.subr.mxu0 0.0
  %404 = vmatpush1.msra.mxu0 %v251
  %405 = vmatprep.subr.mxu0 0.0
  %406 = vmatpush1.msra.mxu0 %v252
  %407 = vmatprep.subr.mxu0 0.0
  %408 = vmatpush1.msra.mxu0 %v253
  %409 = vmatprep.subr.mxu0 0.0
  %410 = vmatpush1.msra.mxu0 %v254
  %411 = vmatprep.subr.mxu0 0.0
  %412 = vmatpush1.msra.mxu0 %v255
  %413 = vmatprep.subr.mxu0 0.0
  %414 = vmatpush1.msra.mxu0 %v256
  %415 = vmatprep.subr.mxu0 0.0
  %416 = vmatpush1.msra.mxu0 %v257
  %417 = vmatprep.subr.mxu0 0.0
  %418 = vmatpush1.msra.mxu0 %v258
  %419 = vmatprep.subr.mxu0 0.0
  %420 = vmatpush1.msra.mxu0 %v259
  %421 = vmatprep.subr.mxu0 0.0
  %422 = vmatpush1.msra.mxu0 %v260
  %423 = vmatprep.subr.mxu0 0.0
  %424 = vmatpush1.msra.mxu0 %v261
  %425 = vmatprep.subr.mxu0 0.0
  %426 = vmatpush1.msra.mxu0 %v262
  %427 = vmatprep.subr.mxu0 0.0
  %428 = vmatpush1.msra.mxu0 %v263
  %429 = vmatprep.subr.mxu0 0.0
  %430 = vmatpush1.msra.mxu0 %v264
  %431 = vmatprep.subr.mxu0 0.0
  %432 = vmatpush1.msra.mxu0 %v265
  %433 = vmatprep.subr.mxu0 0.0
  %434 = vmatpush1.msra.mxu0 %v266
  %435 = vmatprep.subr.mxu0 0.0
  %436 = vmatpush1.msra.mxu0 %v267
  %437 = vmatprep.subr.mxu0 0.0
  %438 = vmatpush1.msra.mxu0 %v268
  %439 = vmatprep.subr.mxu0 0.0
  %440 = vmatpush1.msra.mxu0 %v269
  %441 = vmatprep.subr.mxu0 0.0
  %442 = vmatpush1.msra.mxu0 %v270
  %443 = vmatprep.subr.mxu0 0.0
  %444 = vmatpush1.msra.mxu0 %v271
  %445 = vmatprep.subr.mxu0 0.0
  %446 = vmatpush1.msra.mxu0 %v272
  %447 = vmatprep.mubr.f32.mxu0 %v364
  %448 = vmatmul.mubr.f32.gmra.mrb[0].mxu0 %v357
  %v449 = vpop.f32.mrb[0].mxu0
  %v450 = vadd.f32 %v310, %v449
  %v451 = vpop.f32.mrb[0].mxu0
  %452 = vdwg.mxu0
  %453 = vmatprep.subr.mxu0 0.0
  %454 = vmatpush1.msra.mxu0 %v273
  %455 = vmatprep.subr.mxu0 0.0
  %456 = vmatpush1.msra.mxu0 %v274
  %457 = vmatprep.subr.mxu0 0.0
  %458 = vmatpush1.msra.mxu0 %v275
  %459 = vmatprep.subr.mxu0 0.0
  %460 = vmatpush1.msra.mxu0 %v276
  %461 = vmatprep.subr.mxu0 0.0
  %462 = vmatpush1.msra.mxu0 %v277
  %463 = vmatprep.subr.mxu0 0.0
  %464 = vmatpush1.msra.mxu0 %v278
  %465 = vmatprep.subr.mxu0 0.0
  %466 = vmatpush1.msra.mxu0 %v279
  %467 = vmatprep.subr.mxu0 0.0
  %468 = vmatpush1.msra.mxu0 %v280
  %469 = vmatprep.subr.mxu0 0.0
  %470 = vmatpush1.msra.mxu0 %v281
  %471 = vmatprep.subr.mxu0 0.0
  %472 = vmatpush1.msra.mxu0 %v282
  %473 = vmatprep.subr.mxu0 0.0
  %474 = vmatpush1.msra.mxu0 %v283
  %475 = vmatprep.subr.mxu0 0.0
  %476 = vmatpush1.msra.mxu0 %v284
  %477 = vmatprep.subr.mxu0 0.0
  %478 = vmatpush1.msra.mxu0 %v285
  %479 = vmatprep.subr.mxu0 0.0
  %480 = vmatpush1.msra.mxu0 %v286
  %481 = vmatprep.subr.mxu0 0.0
  %482 = vmatpush1.msra.mxu0 %v287
  %483 = vmatprep.subr.mxu0 0.0
  %484 = vmatpush1.msra.mxu0 %v288
  %485 = vmatprep.subr.mxu0 0.0
  %486 = vmatpush1.msra.mxu0 %v289
  %487 = vmatprep.subr.mxu0 0.0
  %488 = vmatpush1.msra.mxu0 %v290
  %489 = vmatprep.subr.mxu0 0.0
  %490 = vmatpush1.msra.mxu0 %v291
  %491 = vmatprep.subr.mxu0 0.0
  %492 = vmatpush1.msra.mxu0 %v292
  %493 = vmatprep.subr.mxu0 0.0
  %494 = vmatpush1.msra.mxu0 %v293
  %495 = vmatprep.subr.mxu0 0.0
  %496 = vmatpush1.msra.mxu0 %v294
  %497 = vmatprep.subr.mxu0 0.0
  %498 = vmatpush1.msra.mxu0 %v295
  %499 = vmatprep.subr.mxu0 0.0
  %500 = vmatpush1.msra.mxu0 %v296
  %501 = vmatprep.subr.mxu0 0.0
  %502 = vmatpush1.msra.mxu0 %v297
  %503 = vmatprep.subr.mxu0 0.0
  %504 = vmatpush1.msra.mxu0 %v298
  %505 = vmatprep.subr.mxu0 0.0
  %506 = vmatpush1.msra.mxu0 %v299
  %507 = vmatprep.subr.mxu0 0.0
  %508 = vmatpush1.msra.mxu0 %v300
  %509 = vmatprep.subr.mxu0 0.0
  %510 = vmatpush1.msra.mxu0 %v301
  %511 = vmatprep.subr.mxu0 0.0
  %512 = vmatpush1.msra.mxu0 %v302
  %513 = vmatprep.subr.mxu0 0.0
  %514 = vmatpush1.msra.mxu0 %v303
  %515 = vmatprep.subr.mxu0 0.0
  %516 = vmatpush1.msra.mxu0 %v304
  %517 = vmatprep.mubr.f32.mxu0 %v378
  %518 = vmatmul.mubr.f32.gmra.mrb[0].mxu0 %v371
  %v519 = vpop.f32.mrb[0].mxu0
  %v520 = vadd.f32 %v450, %v519
  %v521 = vpop.f32.mrb[0].mxu0
  %522 = vdwg.mxu0
  %v523 = vld [vmem:[%s3] sm:$0xff]
  %v524 = vmax.f32 %v523, 0.1
  %526 = vset.pattern.permute.xlu0 0
  %527 = vperm.xlu0 %526, %v524
  %v528 = vpop.permute.xlu0 %527
  %v530 = vrcp.pop %v528
  %v531 = vmul.f32 %v520, %v530
  %532 = vst [vmem:[%s4] sm:$0xff] %v531
  // Predicated region
  $region18: #{resnet18_forward.35} parent=0 // pred_check
    _
  $region19: #{resnet18_forward.35} parent=0 // pred_check_branch
    %534 = sbr.rel (0) target = $region21
  $region20: #{resnet18_forward.35} parent=0 // pred_region
    _
  $region21: #{resnet18_forward.35} parent=0 // pred_fallthru
    _
  // Predicated region
  $region22: #{resnet18_forward.35} parent=0 // pred_check
    _
  $region23: #{resnet18_forward.35} parent=0 // pred_check_branch
    %536 = sbr.rel (0) target = $region25
  $region24: #{resnet18_forward.35} parent=0 // pred_region
    _
  $region25: #{resnet18_forward.35} parent=0 // pred_fallthru
    _

</llo_original>
